<compile_context>
chip_gen: v5e
topology: v5e:2x2
jax: 0.10.0
libtpu: 0.0.40
codegen_flags: <defaults>
</compile_context>

<pallas_src>
import functools
import math

import jax
import jax.numpy as jnp
from jax import lax
from jax.experimental import pallas as pl
from jax.experimental.pallas import tpu as pltpu

NEG_INF = -1e9   # finite mask bias: fully-masked rows give a uniform distribution (see notes)
LN_EPS = 1e-5    # PyTorch nn.LayerNorm default


# --------------------------------------------------------------------------- helpers

def _pick_tile(n, preferred=512):
    """Largest of (preferred, 256, 128) that divides n, else n (static Python int)."""
    for t in (preferred, 256, 128):
        if n >= t and n % t == 0:
            return t
    return n


def _layernorm(x, g, b, eps=LN_EPS):
    mu = jnp.mean(x, axis=-1, keepdims=True)
    var = jnp.mean(jnp.square(x - mu), axis=-1, keepdims=True)
    return (x - mu) * lax.rsqrt(var + eps) * g + b


def _split_heads(x, num_heads, use_einshape):
    """(T, H) -> (NH, T, dh). Lane-aligned when dh % 128 == 0."""
    T, H = x.shape
    dh = H // num_heads
    if use_einshape:
        # Layout-aware relayout: no per-head stack copies, keeps 128-lane alignment.
        return pltpu.einshape("t(hd)->htd", x, h=num_heads)
    # Fallback: lane-aligned slices stacked on a new leading (head) axis.
    return jnp.stack([x[:, h * dh:(h + 1) * dh] for h in range(num_heads)], axis=0)


def _merge_heads(o, use_einshape):
    """(NH, T, dh) -> (T, H)."""
    if use_einshape:
        return pltpu.einshape("htd->t(hd)", o)
    return jnp.concatenate([o[h] for h in range(o.shape[0])], axis=-1)


def _mha_flash(q, k, v, bias, num_heads, *, in_kernel, use_einshape):
    """Online-softmax (flash-style) multi-head attention.

    q: (T, H) f32, k/v: (S, H) f32, bias: (T, S) f32 additive mask (0 / NEG_INF).
    The 1/sqrt(dh) scale is already folded into the projection weights, so no runtime
    score scaling is needed. K/V are consumed in tiles so the full (NH, T, S) score
    tensor is never materialized.
    """
    T, H = q.shape
    S = k.shape[0]
    dh = H // num_heads
    kv_tile = _pick_tile(S)

    qh = _split_heads(q, num_heads, use_einshape).astype(jnp.bfloat16)   # (NH, T, dh)
    kh = _split_heads(k, num_heads, use_einshape).astype(jnp.bfloat16)   # (NH, S, dh)
    vh = _split_heads(v, num_heads, use_einshape).astype(jnp.bfloat16)   # (NH, S, dh)

    m = jnp.full((num_heads, T, 1), -1e30, jnp.float32)
    l = jnp.zeros((num_heads, T, 1), jnp.float32)
    acc = jnp.zeros((num_heads, T, dh), jnp.float32)

    for j in range(S // kv_tile):
        lo, hi = j * kv_tile, (j + 1) * kv_tile
        kj = kh[:, lo:hi, :]                       # (NH, kt, dh)
        vj = vh[:, lo:hi, :]
        bj = bias[:, lo:hi]                        # (T, kt)

        # Head-batched QK^T on the MXU, f32 accumulation.
        s = lax.dot_general(qh, kj, (((2,), (2,)), ((0,), (0,))),
                            preferred_element_type=jnp.float32)
        s = s + bj[None]                           # additive mask, broadcast over heads

        m_new = jnp.maximum(m, jnp.max(s, axis=-1, keepdims=True))
        corr = jnp.exp(m - m_new)
        p = jnp.exp(s - m_new)
        l = l * corr + jnp.sum(p, axis=-1, keepdims=True)
        acc = acc * corr + lax.dot_general(p.astype(jnp.bfloat16), vj,
                                           (((2,), (1,)), ((0,), (0,))),
                                           preferred_element_type=jnp.float32)
        m = m_new

    inv = pl.reciprocal(l, approx=True) if in_kernel else 1.0 / l   # EUP slot inside the kernel
    return _merge_heads(acc * inv, use_einshape)                    # (T, H) f32


def _decoder_block_math(x, tkeep, enc, ikeep, p, num_heads, *, in_kernel, use_einshape):
    """Shared math for the Pallas kernel body and the pure-JAX reference.

    x: (T, H) bf16, enc: (S, H) bf16, tkeep: (1, T) bool, ikeep: (1, S) bool.
    `p` maps names to VMEM refs (kernel) or arrays (reference); only __getitem__ loads are used.
    """
    T, H = x.shape
    S = enc.shape[0]
    F = p["ff_w1"].shape[1]
    f_tile = _pick_tile(F)

    x_f32 = x.astype(jnp.float32)

    # Additive mask biases, built once per block (only the mask part is batch-dependent).
    row = lax.broadcasted_iota(jnp.int32, (T, T), 0)
    col = lax.broadcasted_iota(jnp.int32, (T, T), 1)
    self_keep = jnp.logical_and(jnp.broadcast_to(tkeep, (T, T)), col <= row)
    self_bias = jnp.where(self_keep, 0.0, NEG_INF).astype(jnp.float32)
    cross_bias = jnp.where(jnp.broadcast_to(ikeep, (T, S)), 0.0, NEG_INF).astype(jnp.float32)

    # --- Self-attention: fused QKV projection (bf16 MXU inputs, f32 accumulation) ------------
    qkv = jnp.dot(x, p["qkv_w"][...], preferred_element_type=jnp.float32) + p["qkv_b"][...]
    attn = _mha_flash(qkv[:, 0:H], qkv[:, H:2 * H], qkv[:, 2 * H:3 * H], self_bias,
                      num_heads, in_kernel=in_kernel, use_einshape=use_einshape)
    h1 = _layernorm(x_f32 + attn, p["ln_g"][0:1, :], p["ln_b"][0:1, :])

    # --- Cross-attention: query is h1 directly (per the module forward); fused K/V projection -
    ekv = jnp.dot(enc, p["ekv_w"][...], preferred_element_type=jnp.float32) + p["ekv_b"][...]
    xattn = _mha_flash(h1, ekv[:, 0:H], ekv[:, H:2 * H], cross_bias,
                       num_heads, in_kernel=in_kernel, use_einshape=use_einshape)
    h2 = _layernorm(h1 + xattn, p["ln_g"][1:2, :], p["ln_b"][1:2, :])

    # --- Feed-forward streamed over F tiles: only a (T, f_tile) hidden slab lives at a time ---
    h2_bf = h2.astype(jnp.bfloat16)
    ff = jnp.zeros((T, H), jnp.float32)
    for j in range(F // f_tile):
        lo, hi = j * f_tile, (j + 1) * f_tile
        hid = jnp.maximum(
            jnp.dot(h2_bf, p["ff_w1"][:, lo:hi], preferred_element_type=jnp.float32)
            + p["ff_b1"][:, lo:hi], 0.0)
        ff = ff + jnp.dot(hid.astype(jnp.bfloat16), p["ff_w2"][lo:hi, :],
                          preferred_element_type=jnp.float32)
    ff = ff + p["ff_b2"][...]
    return _layernorm(h2 + ff, p["ln_g"][2:3, :], p["ln_b"][2:3, :])


# --------------------------------------------------------------------------- kernel + wrapper

PARAM_ORDER = ("qkv_w", "qkv_b", "ekv_w", "ekv_b",
               "ff_w1", "ff_b1", "ff_w2", "ff_b2",
               "ln_g", "ln_b")


def decoder_block_kernel(num_heads, use_einshape, x_ref, tmask_ref, enc_ref, imask_ref, *rest):
    param_refs = rest[:len(PARAM_ORDER)]
    out_ref = rest[len(PARAM_ORDER)]

    x = x_ref[0]                       # (T, H) bf16
    enc = enc_ref[0]                   # (S, H) bf16
    tkeep = tmask_ref[0] > 0.0         # (1, T) bool
    ikeep = imask_ref[0] > 0.0         # (1, S) bool

    params = dict(zip(PARAM_ORDER, param_refs))
    out = _decoder_block_math(x, tkeep, enc, ikeep, params, num_heads,
                              in_kernel=True, use_einshape=use_einshape)
    out_ref[0] = out.astype(out_ref.dtype)


def _vmem_cap_bytes():
    try:
        return int(pltpu.get_tpu_info().vmem_capacity_bytes)
    except Exception:
        return 64 << 20   # conservative default (v7x per-TensorCore VMEM)


def _vmem_limit_bytes(T, S, H, F, num_heads):
    f32, bf16 = 4, 2
    kt = _pick_tile(max(T, S))
    ft = _pick_tile(F)
    # Double-buffered pipelined activation blocks (bf16) + masks.
    acts = 2 * bf16 * (T * H + S * H + T * H) + 2 * f32 * (T + S)
    # Single-buffered whole-array params (memory_space=VMEM, not pipelined).
    weights = (bf16 * (3 * H * H + 2 * H * H + 2 * H * F)
               + f32 * (3 * H + 2 * H + F + H + 6 * H))
    # In-kernel intermediates (streamed score/prob tiles, fused projections, streamed FF tile,
    # mask biases, residual/LN/flash accumulators).
    inter = f32 * (4 * num_heads * T * kt + T * 3 * H + S * 2 * H
                   + 2 * T * ft + T * T + T * S + 8 * T * H)
    est = acts + weights + inter + (4 << 20)
    cap = _vmem_cap_bytes() - (8 << 20)      # leave headroom for compiler scratch / semaphores
    return int(min(max(est, 32 << 20), cap))


def transformer_decoder_block(target_x, target_mask, encoder_attention, input_mask,
                              params, num_heads, *, use_einshape=None):
    if use_einshape is None:
        use_einshape = hasattr(pltpu, "einshape")

    B, T, H = target_x.shape
    S = encoder_attention.shape[1]
    F = params["ff_w1"].shape[1]

    # bf16 activations at the HBM boundary (halves activation DMA); masks stay f32 (tiny).
    x = target_x.astype(jnp.bfloat16)
    enc = encoder_attention.astype(jnp.bfloat16)
    tm = target_mask.astype(jnp.float32)
    im = input_mask.astype(jnp.float32)
    param_vals = [params[n] for n in PARAM_ORDER]

    in_specs = [
        pl.BlockSpec((1, T, H), lambda b: (b, 0, 0)),   # target_x
        pl.BlockSpec((1, 1, T), lambda b: (b, 0, 0)),   # target_mask
        pl.BlockSpec((1, S, H), lambda b: (b, 0, 0)),   # encoder_attention
        pl.BlockSpec((1, 1, S), lambda b: (b, 0, 0)),   # input_mask
    ] + [
        # Params: whole-array, single-buffered VMEM residents. Their block index is
        # grid-invariant, so pipelined double-buffering would only double weight VMEM.
        pl.BlockSpec(memory_space=pltpu.MemorySpace.VMEM) for _ in param_vals
    ]
    out_spec = pl.BlockSpec((1, T, H), lambda b: (b, 0, 0))

    kernel = functools.partial(decoder_block_kernel, num_heads, use_einshape)
    return pl.pallas_call(
        kernel,
        out_shape=jax.ShapeDtypeStruct((B, T, H), jnp.bfloat16),
        grid_spec=pltpu.PrefetchScalarGridSpec(
            num_scalar_prefetch=0,
            grid=(B,),
            in_specs=in_specs,
            out_specs=out_spec,
        ),
        compiler_params=pltpu.CompilerParams(
            # NOTE(v7x): grid=(B,) is "parallel"; keep B >= 2 (preferably even) so both
            # TensorCores get work. For B == 1 add a parallel query-tile axis instead.
            dimension_semantics=("parallel",),
            vmem_limit_bytes=_vmem_limit_bytes(T, S, H, F, num_heads),
        ),
    )(x, tm, enc, im, *param_vals)


# --------------------------------------------------------------------------- reference / init

def reference(target_x, target_mask, encoder_attention, input_mask, params, num_heads):
    outs = []
    for b in range(target_x.shape[0]):
        outs.append(_decoder_block_math(
            target_x[b].astype(jnp.bfloat16),
            target_mask[b] > 0.0,
            encoder_attention[b].astype(jnp.bfloat16),
            input_mask[b] > 0.0,
            params, num_heads, in_kernel=False, use_einshape=False))
    return jnp.stack(outs, axis=0)


def init_params(key, hidden_dim, ff_dim, num_heads):
    keys = jax.random.split(key, 14)

    def linear(kw, kb, fan_in, fan_out):
        w = (jax.random.normal(kw, (fan_in, fan_out), jnp.float32)
             / jnp.sqrt(jnp.float32(fan_in)))
        b = jax.random.normal(kb, (1, fan_out), jnp.float32) * 0.01
        return w, b

    q_w, q_b = linear(keys[0], keys[1], hidden_dim, hidden_dim)
    k_w, k_b = linear(keys[2], keys[3], hidden_dim, hidden_dim)
    v_w, v_b = linear(keys[4], keys[5], hidden_dim, hidden_dim)
    ek_w, ek_b = linear(keys[6], keys[7], hidden_dim, hidden_dim)
    ev_w, ev_b = linear(keys[8], keys[9], hidden_dim, hidden_dim)
    ff_w1, ff_b1 = linear(keys[10], keys[11], hidden_dim, ff_dim)
    ff_w2, ff_b2 = linear(keys[12], keys[13], ff_dim, hidden_dim)

    # Fold the 1/sqrt(dh) attention scale into the self-attn Q projection and the cross-attn
    # K projection (the cross-attn query is the un-projected h1), so the kernel never
    # multiplies the score tensor by a scalar. Numerically equivalent to scaling the scores.
    scale = 1.0 / math.sqrt(hidden_dim // num_heads)
    q_w, q_b = q_w * scale, q_b * scale
    ek_w, ek_b = ek_w * scale, ek_b * scale

    return {
        # Fused projections; weights bf16 (MXU-native, halves weight DMA/VMEM), biases f32.
        "qkv_w": jnp.concatenate([q_w, k_w, v_w], axis=1).astype(jnp.bfloat16),
        "qkv_b": jnp.concatenate([q_b, k_b, v_b], axis=1),
        "ekv_w": jnp.concatenate([ek_w, ev_w], axis=1).astype(jnp.bfloat16),
        "ekv_b": jnp.concatenate([ek_b, ev_b], axis=1),
        "ff_w1": ff_w1.astype(jnp.bfloat16),
        "ff_b1": ff_b1,
        "ff_w2": ff_w2.astype(jnp.bfloat16),
        "ff_b2": ff_b2,
        # LayerNorm params (PyTorch default init), stacked as rows [ln1; ln2; ln3].
        "ln_g": jnp.ones((3, hidden_dim), jnp.float32),
        "ln_b": jnp.zeros((3, hidden_dim), jnp.float32),
    }


if __name__ == "__main__":
    # Small but layout-friendly demo shapes: dh = H / NH = 128 keeps head slices 128-lane
    # aligned (MXU-friendly), and B = 2 gives each v7x TensorCore a grid step.
    B, T, S, H, NH, F = 2, 128, 128, 256, 2, 512

    key = jax.random.PRNGKey(0)
    k_x, k_enc, k_params = jax.random.split(key, 3)

    target_x = jax.random.normal(k_x, (B, T, H), jnp.float32)
    encoder_attention = jax.random.normal(k_enc, (B, S, H), jnp.float32)

    # Key-padding masks: last 16 target positions and last 8 source positions are padding.
    t_pos = lax.broadcasted_iota(jnp.int32, (B, 1, T), 2)
    s_pos = lax.broadcasted_iota(jnp.int32, (B, 1, S), 2)
    target_mask = (t_pos < T - 16).astype(jnp.float32)
    input_mask = (s_pos < S - 8).astype(jnp.float32)

    params = init_params(k_params, H, F, NH)

    try:
        out = jax.block_until_ready(
            transformer_decoder_block(target_x, target_mask, encoder_attention,
                                      input_mask, params, NH))
    except Exception:
        # Fallback for Mosaic builds without grouped-einshape support for the head split/merge:
        # lane-aligned slice+stack path (identical numerics, slightly more VMEM copies).
        out = jax.block_until_ready(
            transformer_decoder_block(target_x, target_mask, encoder_attention,
                                      input_mask, params, NH, use_einshape=False))

    ref = reference(target_x, target_mask, encoder_attention, input_mask, params, NH)
    assert out.shape == (B, T, H)
    # Kernel and reference share identical bf16-matmul / flash-softmax math; intended divergences
    # are the approximate EUP reciprocal and the bf16 output cast, hence the tolerance.
    assert jnp.allclose(out.astype(jnp.float32), ref, atol=3e-2, rtol=3e-2), \
        "Pallas output mismatch vs JAX reference"

    print("KERNEL_OK")
</pallas_src>

<mosaic_0001>
module attributes {stable_mosaic.version = 11 : i64} {
  func.func @decoder_block_kernel(%arg0: i32, %arg1: memref<1x128x256xbf16, #tpu.memory_space<vmem>>, %arg2: memref<1x1x128xf32, #tpu.memory_space<vmem>>, %arg3: memref<1x128x256xbf16, #tpu.memory_space<vmem>>, %arg4: memref<1x1x128xf32, #tpu.memory_space<vmem>>, %arg5: memref<256x768xbf16, #tpu.memory_space<vmem>>, %arg6: memref<1x768xf32, #tpu.memory_space<vmem>>, %arg7: memref<256x512xbf16, #tpu.memory_space<vmem>>, %arg8: memref<1x512xf32, #tpu.memory_space<vmem>>, %arg9: memref<256x512xbf16, #tpu.memory_space<vmem>>, %arg10: memref<1x512xf32, #tpu.memory_space<vmem>>, %arg11: memref<512x256xbf16, #tpu.memory_space<vmem>>, %arg12: memref<1x256xf32, #tpu.memory_space<vmem>>, %arg13: memref<3x256xf32, #tpu.memory_space<vmem>>, %arg14: memref<3x256xf32, #tpu.memory_space<vmem>>, %arg15: memref<1x128x256xbf16, #tpu.memory_space<vmem>>) attributes {dimension_semantics = [#tpu.dimension_semantics<parallel>], iteration_bounds = array<i64: 2>, scalar_prefetch = 0 : i64, scratch_operands = 0 : i64, tpu.core_type = #tpu.core_type<tc>, window_params = [{transform_indices = @transform_0, window_bounds = array<i64: 1, 128, 256>}, {transform_indices = @transform_1, window_bounds = array<i64: 1, 1, 128>}, {transform_indices = @transform_2, window_bounds = array<i64: 1, 128, 256>}, {transform_indices = @transform_3, window_bounds = array<i64: 1, 1, 128>}, {pipeline_mode = #tpu.pipeline_mode<synchronous>, transform_indices = @transform_4, window_bounds = array<i64: 256, 768>}, {pipeline_mode = #tpu.pipeline_mode<synchronous>, transform_indices = @transform_5, window_bounds = array<i64: 1, 768>}, {pipeline_mode = #tpu.pipeline_mode<synchronous>, transform_indices = @transform_6, window_bounds = array<i64: 256, 512>}, {pipeline_mode = #tpu.pipeline_mode<synchronous>, transform_indices = @transform_7, window_bounds = array<i64: 1, 512>}, {pipeline_mode = #tpu.pipeline_mode<synchronous>, transform_indices = @transform_8, window_bounds = array<i64: 256, 512>}, {pipeline_mode = #tpu.pipeline_mode<synchronous>, transform_indices = @transform_9, window_bounds = array<i64: 1, 512>}, {pipeline_mode = #tpu.pipeline_mode<synchronous>, transform_indices = @transform_10, window_bounds = array<i64: 512, 256>}, {pipeline_mode = #tpu.pipeline_mode<synchronous>, transform_indices = @transform_11, window_bounds = array<i64: 1, 256>}, {pipeline_mode = #tpu.pipeline_mode<synchronous>, transform_indices = @transform_12, window_bounds = array<i64: 3, 256>}, {pipeline_mode = #tpu.pipeline_mode<synchronous>, transform_indices = @transform_13, window_bounds = array<i64: 3, 256>}, {transform_indices = @transform_14, window_bounds = array<i64: 1, 128, 256>}]} {
    %c0 = arith.constant 0 : index
    %c0_0 = arith.constant 0 : index
    %c0_1 = arith.constant 0 : index
    %0 = vector.load %arg1[%c0, %c0_0, %c0_1] : memref<1x128x256xbf16, #tpu.memory_space<vmem>>, vector<1x128x256xbf16>
    %1 = vector.shape_cast %0 : vector<1x128x256xbf16> to vector<128x256xbf16>
    %c0_2 = arith.constant 0 : index
    %c0_3 = arith.constant 0 : index
    %c0_4 = arith.constant 0 : index
    %2 = vector.load %arg3[%c0_2, %c0_3, %c0_4] : memref<1x128x256xbf16, #tpu.memory_space<vmem>>, vector<1x128x256xbf16>
    %3 = vector.shape_cast %2 : vector<1x128x256xbf16> to vector<128x256xbf16>
    %c0_5 = arith.constant 0 : index
    %c0_6 = arith.constant 0 : index
    %c0_7 = arith.constant 0 : index
    %4 = vector.load %arg2[%c0_5, %c0_6, %c0_7] : memref<1x1x128xf32, #tpu.memory_space<vmem>>, vector<1x1x128xf32>
    %5 = vector.shape_cast %4 : vector<1x1x128xf32> to vector<1x128xf32>
    %cst = arith.constant 0.000000e+00 : f32
    %6 = vector.broadcast %cst : f32 to vector<1x128xf32>
    %7 = arith.cmpf ogt, %5, %6 : vector<1x128xf32>
    %c0_8 = arith.constant 0 : index
    %c0_9 = arith.constant 0 : index
    %c0_10 = arith.constant 0 : index
    %8 = vector.load %arg4[%c0_8, %c0_9, %c0_10] : memref<1x1x128xf32, #tpu.memory_space<vmem>>, vector<1x1x128xf32>
    %9 = vector.shape_cast %8 : vector<1x1x128xf32> to vector<1x128xf32>
    %cst_11 = arith.constant 0.000000e+00 : f32
    %10 = vector.broadcast %cst_11 : f32 to vector<1x128xf32>
    %11 = arith.cmpf ogt, %9, %10 : vector<1x128xf32>
    %12 = arith.extf %1 : vector<128x256xbf16> to vector<128x256xf32>
    %13 = tpu.iota {dimensions = array<i32: 0>} : vector<128x128xi32>
    %14 = tpu.iota {dimensions = array<i32: 1>} : vector<128x128xi32>
    %15 = vector.shape_cast %7 : vector<1x128xi1> to vector<1x128xi1>
    %16 = vector.broadcast %15 : vector<1x128xi1> to vector<128x128xi1>
    %17 = arith.cmpi sle, %14, %13 : vector<128x128xi32>
    %18 = arith.andi %16, %17 : vector<128x128xi1>
    %cst_12 = arith.constant 0.000000e+00 : f32
    %cst_13 = arith.constant -1.000000e+09 : f32
    %19 = vector.broadcast %cst_12 : f32 to vector<128x128xf32>
    %20 = vector.broadcast %cst_13 : f32 to vector<128x128xf32>
    %21 = arith.select %18, %19, %20 : vector<128x128xi1>, vector<128x128xf32>
    %22 = vector.shape_cast %11 : vector<1x128xi1> to vector<1x128xi1>
    %23 = vector.broadcast %22 : vector<1x128xi1> to vector<128x128xi1>
    %cst_14 = arith.constant 0.000000e+00 : f32
    %cst_15 = arith.constant -1.000000e+09 : f32
    %24 = vector.broadcast %cst_14 : f32 to vector<128x128xf32>
    %25 = vector.broadcast %cst_15 : f32 to vector<128x128xf32>
    %26 = arith.select %23, %24, %25 : vector<128x128xi1>, vector<128x128xf32>
    %c0_16 = arith.constant 0 : index
    %c0_17 = arith.constant 0 : index
    %27 = vector.load %arg5[%c0_16, %c0_17] : memref<256x768xbf16, #tpu.memory_space<vmem>>, vector<256x768xbf16>
    %cst_18 = arith.constant dense<0.000000e+00> : vector<128x768xf32>
    %28 = tpu.matmul %1, %27, %cst_18 {dimension_numbers = #tpu.dot_dimension_numbers<[1], [0], [0], [1], [0, 0, 1, 1], [], []>} : vector<128x256xbf16>, vector<256x768xbf16>, vector<128x768xf32> -> vector<128x768xf32>
    %c0_19 = arith.constant 0 : index
    %c0_20 = arith.constant 0 : index
    %29 = vector.load %arg6[%c0_19, %c0_20] : memref<1x768xf32, #tpu.memory_space<vmem>>, vector<1x768xf32>
    %30 = vector.broadcast %29 : vector<1x768xf32> to vector<128x768xf32>
    %31 = arith.addf %28, %30 : vector<128x768xf32>
    %32 = vector.extract_strided_slice %31 {offsets = [0, 0], sizes = [128, 256], strides = [1, 1]} : vector<128x768xf32> to vector<128x256xf32>
    %33 = vector.extract_strided_slice %31 {offsets = [0, 256], sizes = [128, 256], strides = [1, 1]} : vector<128x768xf32> to vector<128x256xf32>
    %34 = vector.extract_strided_slice %31 {offsets = [0, 512], sizes = [128, 256], strides = [1, 1]} : vector<128x768xf32> to vector<128x256xf32>
    %35 = vector.extract_strided_slice %32 {offsets = [0, 0], sizes = [128, 128], strides = [1, 1]} : vector<128x256xf32> to vector<128x128xf32>
    %36 = vector.extract_strided_slice %32 {offsets = [0, 128], sizes = [128, 128], strides = [1, 1]} : vector<128x256xf32> to vector<128x128xf32>
    %37 = vector.shape_cast %35 : vector<128x128xf32> to vector<1x128x128xf32>
    %38 = vector.shape_cast %36 : vector<128x128xf32> to vector<1x128x128xf32>
    %39 = tpu.concatenate %37, %38 in 0 : vector<1x128x128xf32>, vector<1x128x128xf32> -> vector<2x128x128xf32>
    %40 = arith.truncf %39 : vector<2x128x128xf32> to vector<2x128x128xbf16>
    %41 = vector.extract_strided_slice %33 {offsets = [0, 0], sizes = [128, 128], strides = [1, 1]} : vector<128x256xf32> to vector<128x128xf32>
    %42 = vector.extract_strided_slice %33 {offsets = [0, 128], sizes = [128, 128], strides = [1, 1]} : vector<128x256xf32> to vector<128x128xf32>
    %43 = vector.shape_cast %41 : vector<128x128xf32> to vector<1x128x128xf32>
    %44 = vector.shape_cast %42 : vector<128x128xf32> to vector<1x128x128xf32>
    %45 = tpu.concatenate %43, %44 in 0 : vector<1x128x128xf32>, vector<1x128x128xf32> -> vector<2x128x128xf32>
    %46 = arith.truncf %45 : vector<2x128x128xf32> to vector<2x128x128xbf16>
    %47 = vector.extract_strided_slice %34 {offsets = [0, 0], sizes = [128, 128], strides = [1, 1]} : vector<128x256xf32> to vector<128x128xf32>
    %48 = vector.extract_strided_slice %34 {offsets = [0, 128], sizes = [128, 128], strides = [1, 1]} : vector<128x256xf32> to vector<128x128xf32>
    %49 = vector.shape_cast %47 : vector<128x128xf32> to vector<1x128x128xf32>
    %50 = vector.shape_cast %48 : vector<128x128xf32> to vector<1x128x128xf32>
    %51 = tpu.concatenate %49, %50 in 0 : vector<1x128x128xf32>, vector<1x128x128xf32> -> vector<2x128x128xf32>
    %52 = arith.truncf %51 : vector<2x128x128xf32> to vector<2x128x128xbf16>
    %cst_21 = arith.constant -1.000000e+30 : f32
    %53 = vector.broadcast %cst_21 : f32 to vector<2x128x1xf32>
    %cst_22 = arith.constant 0.000000e+00 : f32
    %54 = vector.broadcast %cst_22 : f32 to vector<2x128x1xf32>
    %cst_23 = arith.constant 0.000000e+00 : f32
    %55 = vector.broadcast %cst_23 : f32 to vector<2x128x128xf32>
    %cst_24 = arith.constant dense<0.000000e+00> : vector<2x128x128xf32>
    %56 = tpu.matmul %40, %46, %cst_24 {dimension_numbers = #tpu.dot_dimension_numbers<[2], [2], [1], [1], [0, 0, 0, 1, 1, 1], [0], [0]>} : vector<2x128x128xbf16>, vector<2x128x128xbf16>, vector<2x128x128xf32> -> vector<2x128x128xf32>
    %57 = vector.shape_cast %21 : vector<128x128xf32> to vector<1x128x128xf32>
    %58 = vector.broadcast %57 : vector<1x128x128xf32> to vector<2x128x128xf32>
    %59 = arith.addf %56, %58 : vector<2x128x128xf32>
    %cst_25 = arith.constant dense<0xFF800000> : vector<2x128xf32>
    %60 = vector.multi_reduction <maximumf>, %59, %cst_25 [2] : vector<2x128x128xf32> to vector<2x128xf32>
    %61 = vector.shape_cast %60 : vector<2x128xf32> to vector<2x128x1xf32>
    %62 = arith.maximumf %53, %61 : vector<2x128x1xf32>
    %63 = arith.subf %53, %62 : vector<2x128x1xf32>
    %64 = math.exp %63 : vector<2x128x1xf32>
    %65 = vector.broadcast %62 : vector<2x128x1xf32> to vector<2x128x128xf32>
    %66 = arith.subf %59, %65 : vector<2x128x128xf32>
    %67 = math.exp %66 : vector<2x128x128xf32>
    %68 = arith.mulf %54, %64 : vector<2x128x1xf32>
    %cst_26 = arith.constant dense<0.000000e+00> : vector<2x128xf32>
    %69 = vector.multi_reduction <add>, %67, %cst_26 [2] : vector<2x128x128xf32> to vector<2x128xf32>
    %70 = vector.shape_cast %69 : vector<2x128xf32> to vector<2x128x1xf32>
    %71 = arith.addf %68, %70 : vector<2x128x1xf32>
    %72 = vector.broadcast %64 : vector<2x128x1xf32> to vector<2x128x128xf32>
    %73 = arith.mulf %55, %72 : vector<2x128x128xf32>
    %74 = arith.truncf %67 : vector<2x128x128xf32> to vector<2x128x128xbf16>
    %cst_27 = arith.constant dense<0.000000e+00> : vector<2x128x128xf32>
    %75 = tpu.matmul %74, %52, %cst_27 {dimension_numbers = #tpu.dot_dimension_numbers<[2], [1], [1], [2], [0, 0, 0, 1, 1, 2], [0], [0]>} : vector<2x128x128xbf16>, vector<2x128x128xbf16>, vector<2x128x128xf32> -> vector<2x128x128xf32>
    %76 = arith.addf %73, %75 : vector<2x128x128xf32>
    %77 = tpu.reciprocal %71 {approx = true} : vector<2x128x1xf32> -> vector<2x128x1xf32>
    %78 = vector.broadcast %77 : vector<2x128x1xf32> to vector<2x128x128xf32>
    %79 = arith.mulf %76, %78 : vector<2x128x128xf32>
    %80 = vector.extract_strided_slice %79 {offsets = [0, 0, 0], sizes = [1, 128, 128], strides = [1, 1, 1]} : vector<2x128x128xf32> to vector<1x128x128xf32>
    %81 = vector.shape_cast %80 : vector<1x128x128xf32> to vector<128x128xf32>
    %82 = vector.extract_strided_slice %79 {offsets = [1, 0, 0], sizes = [1, 128, 128], strides = [1, 1, 1]} : vector<2x128x128xf32> to vector<1x128x128xf32>
    %83 = vector.shape_cast %82 : vector<1x128x128xf32> to vector<128x128xf32>
    %84 = tpu.concatenate %81, %83 in 1 : vector<128x128xf32>, vector<128x128xf32> -> vector<128x256xf32>
    %85 = arith.addf %12, %84 : vector<128x256xf32>
    %c0_28 = arith.constant 0 : index
    %c0_29 = arith.constant 0 : index
    %86 = vector.load %arg13[%c0_28, %c0_29] : memref<3x256xf32, #tpu.memory_space<vmem>>, vector<1x256xf32>
    %c0_30 = arith.constant 0 : index
    %c0_31 = arith.constant 0 : index
    %87 = vector.load %arg14[%c0_30, %c0_31] : memref<3x256xf32, #tpu.memory_space<vmem>>, vector<1x256xf32>
    %cst_32 = arith.constant dense<0.000000e+00> : vector<128xf32>
    %88 = vector.multi_reduction <add>, %85, %cst_32 [1] : vector<128x256xf32> to vector<128xf32>
    %89 = vector.shape_cast %88 : vector<128xf32> to vector<128x1xf32>
    %cst_33 = arith.constant 2.560000e+02 : f32
    %90 = vector.broadcast %cst_33 : f32 to vector<128x1xf32>
    %91 = arith.divf %89, %90 : vector<128x1xf32>
    %92 = vector.broadcast %91 : vector<128x1xf32> to vector<128x256xf32>
    %93 = arith.subf %85, %92 : vector<128x256xf32>
    %94 = arith.mulf %93, %93 : vector<128x256xf32>
    %cst_34 = arith.constant dense<0.000000e+00> : vector<128xf32>
    %95 = vector.multi_reduction <add>, %94, %cst_34 [1] : vector<128x256xf32> to vector<128xf32>
    %96 = vector.shape_cast %95 : vector<128xf32> to vector<128x1xf32>
    %cst_35 = arith.constant 2.560000e+02 : f32
    %97 = vector.broadcast %cst_35 : f32 to vector<128x1xf32>
    %98 = arith.divf %96, %97 : vector<128x1xf32>
    %99 = vector.broadcast %91 : vector<128x1xf32> to vector<128x256xf32>
    %100 = arith.subf %85, %99 : vector<128x256xf32>
    %cst_36 = arith.constant 9.99999974E-6 : f32
    %101 = vector.broadcast %cst_36 : f32 to vector<128x1xf32>
    %102 = arith.addf %98, %101 : vector<128x1xf32>
    %103 = math.rsqrt %102 : vector<128x1xf32>
    %104 = vector.broadcast %103 : vector<128x1xf32> to vector<128x256xf32>
    %105 = arith.mulf %100, %104 : vector<128x256xf32>
    %106 = vector.broadcast %86 : vector<1x256xf32> to vector<128x256xf32>
    %107 = arith.mulf %105, %106 : vector<128x256xf32>
    %108 = vector.broadcast %87 : vector<1x256xf32> to vector<128x256xf32>
    %109 = arith.addf %107, %108 : vector<128x256xf32>
    %c0_37 = arith.constant 0 : index
    %c0_38 = arith.constant 0 : index
    %110 = vector.load %arg7[%c0_37, %c0_38] : memref<256x512xbf16, #tpu.memory_space<vmem>>, vector<256x512xbf16>
    %cst_39 = arith.constant dense<0.000000e+00> : vector<128x512xf32>
    %111 = tpu.matmul %3, %110, %cst_39 {dimension_numbers = #tpu.dot_dimension_numbers<[1], [0], [0], [1], [0, 0, 1, 1], [], []>} : vector<128x256xbf16>, vector<256x512xbf16>, vector<128x512xf32> -> vector<128x512xf32>
    %c0_40 = arith.constant 0 : index
    %c0_41 = arith.constant 0 : index
    %112 = vector.load %arg8[%c0_40, %c0_41] : memref<1x512xf32, #tpu.memory_space<vmem>>, vector<1x512xf32>
    %113 = vector.broadcast %112 : vector<1x512xf32> to vector<128x512xf32>
    %114 = arith.addf %111, %113 : vector<128x512xf32>
    %115 = vector.extract_strided_slice %114 {offsets = [0, 0], sizes = [128, 256], strides = [1, 1]} : vector<128x512xf32> to vector<128x256xf32>
    %116 = vector.extract_strided_slice %114 {offsets = [0, 256], sizes = [128, 256], strides = [1, 1]} : vector<128x512xf32> to vector<128x256xf32>
    %117 = vector.extract_strided_slice %109 {offsets = [0, 0], sizes = [128, 128], strides = [1, 1]} : vector<128x256xf32> to vector<128x128xf32>
    %118 = vector.extract_strided_slice %109 {offsets = [0, 128], sizes = [128, 128], strides = [1, 1]} : vector<128x256xf32> to vector<128x128xf32>
    %119 = vector.shape_cast %117 : vector<128x128xf32> to vector<1x128x128xf32>
    %120 = vector.shape_cast %118 : vector<128x128xf32> to vector<1x128x128xf32>
    %121 = tpu.concatenate %119, %120 in 0 : vector<1x128x128xf32>, vector<1x128x128xf32> -> vector<2x128x128xf32>
    %122 = arith.truncf %121 : vector<2x128x128xf32> to vector<2x128x128xbf16>
    %123 = vector.extract_strided_slice %115 {offsets = [0, 0], sizes = [128, 128], strides = [1, 1]} : vector<128x256xf32> to vector<128x128xf32>
    %124 = vector.extract_strided_slice %115 {offsets = [0, 128], sizes = [128, 128], strides = [1, 1]} : vector<128x256xf32> to vector<128x128xf32>
    %125 = vector.shape_cast %123 : vector<128x128xf32> to vector<1x128x128xf32>
    %126 = vector.shape_cast %124 : vector<128x128xf32> to vector<1x128x128xf32>
    %127 = tpu.concatenate %125, %126 in 0 : vector<1x128x128xf32>, vector<1x128x128xf32> -> vector<2x128x128xf32>
    %128 = arith.truncf %127 : vector<2x128x128xf32> to vector<2x128x128xbf16>
    %129 = vector.extract_strided_slice %116 {offsets = [0, 0], sizes = [128, 128], strides = [1, 1]} : vector<128x256xf32> to vector<128x128xf32>
    %130 = vector.extract_strided_slice %116 {offsets = [0, 128], sizes = [128, 128], strides = [1, 1]} : vector<128x256xf32> to vector<128x128xf32>
    %131 = vector.shape_cast %129 : vector<128x128xf32> to vector<1x128x128xf32>
    %132 = vector.shape_cast %130 : vector<128x128xf32> to vector<1x128x128xf32>
    %133 = tpu.concatenate %131, %132 in 0 : vector<1x128x128xf32>, vector<1x128x128xf32> -> vector<2x128x128xf32>
    %134 = arith.truncf %133 : vector<2x128x128xf32> to vector<2x128x128xbf16>
    %cst_42 = arith.constant -1.000000e+30 : f32
    %135 = vector.broadcast %cst_42 : f32 to vector<2x128x1xf32>
    %cst_43 = arith.constant 0.000000e+00 : f32
    %136 = vector.broadcast %cst_43 : f32 to vector<2x128x1xf32>
    %cst_44 = arith.constant 0.000000e+00 : f32
    %137 = vector.broadcast %cst_44 : f32 to vector<2x128x128xf32>
    %cst_45 = arith.constant dense<0.000000e+00> : vector<2x128x128xf32>
    %138 = tpu.matmul %122, %128, %cst_45 {dimension_numbers = #tpu.dot_dimension_numbers<[2], [2], [1], [1], [0, 0, 0, 1, 1, 1], [0], [0]>} : vector<2x128x128xbf16>, vector<2x128x128xbf16>, vector<2x128x128xf32> -> vector<2x128x128xf32>
    %139 = vector.shape_cast %26 : vector<128x128xf32> to vector<1x128x128xf32>
    %140 = vector.broadcast %139 : vector<1x128x128xf32> to vector<2x128x128xf32>
    %141 = arith.addf %138, %140 : vector<2x128x128xf32>
    %cst_46 = arith.constant dense<0xFF800000> : vector<2x128xf32>
    %142 = vector.multi_reduction <maximumf>, %141, %cst_46 [2] : vector<2x128x128xf32> to vector<2x128xf32>
    %143 = vector.shape_cast %142 : vector<2x128xf32> to vector<2x128x1xf32>
    %144 = arith.maximumf %135, %143 : vector<2x128x1xf32>
    %145 = arith.subf %135, %144 : vector<2x128x1xf32>
    %146 = math.exp %145 : vector<2x128x1xf32>
    %147 = vector.broadcast %144 : vector<2x128x1xf32> to vector<2x128x128xf32>
    %148 = arith.subf %141, %147 : vector<2x128x128xf32>
    %149 = math.exp %148 : vector<2x128x128xf32>
    %150 = arith.mulf %136, %146 : vector<2x128x1xf32>
    %cst_47 = arith.constant dense<0.000000e+00> : vector<2x128xf32>
    %151 = vector.multi_reduction <add>, %149, %cst_47 [2] : vector<2x128x128xf32> to vector<2x128xf32>
    %152 = vector.shape_cast %151 : vector<2x128xf32> to vector<2x128x1xf32>
    %153 = arith.addf %150, %152 : vector<2x128x1xf32>
    %154 = vector.broadcast %146 : vector<2x128x1xf32> to vector<2x128x128xf32>
    %155 = arith.mulf %137, %154 : vector<2x128x128xf32>
    %156 = arith.truncf %149 : vector<2x128x128xf32> to vector<2x128x128xbf16>
    %cst_48 = arith.constant dense<0.000000e+00> : vector<2x128x128xf32>
    %157 = tpu.matmul %156, %134, %cst_48 {dimension_numbers = #tpu.dot_dimension_numbers<[2], [1], [1], [2], [0, 0, 0, 1, 1, 2], [0], [0]>} : vector<2x128x128xbf16>, vector<2x128x128xbf16>, vector<2x128x128xf32> -> vector<2x128x128xf32>
    %158 = arith.addf %155, %157 : vector<2x128x128xf32>
    %159 = tpu.reciprocal %153 {approx = true} : vector<2x128x1xf32> -> vector<2x128x1xf32>
    %160 = vector.broadcast %159 : vector<2x128x1xf32> to vector<2x128x128xf32>
    %161 = arith.mulf %158, %160 : vector<2x128x128xf32>
    %162 = vector.extract_strided_slice %161 {offsets = [0, 0, 0], sizes = [1, 128, 128], strides = [1, 1, 1]} : vector<2x128x128xf32> to vector<1x128x128xf32>
    %163 = vector.shape_cast %162 : vector<1x128x128xf32> to vector<128x128xf32>
    %164 = vector.extract_strided_slice %161 {offsets = [1, 0, 0], sizes = [1, 128, 128], strides = [1, 1, 1]} : vector<2x128x128xf32> to vector<1x128x128xf32>
    %165 = vector.shape_cast %164 : vector<1x128x128xf32> to vector<128x128xf32>
    %166 = tpu.concatenate %163, %165 in 1 : vector<128x128xf32>, vector<128x128xf32> -> vector<128x256xf32>
    %167 = arith.addf %109, %166 : vector<128x256xf32>
    %c1 = arith.constant 1 : index
    %c0_49 = arith.constant 0 : index
    %168 = vector.load %arg13[%c1, %c0_49] : memref<3x256xf32, #tpu.memory_space<vmem>>, vector<1x256xf32>
    %c1_50 = arith.constant 1 : index
    %c0_51 = arith.constant 0 : index
    %169 = vector.load %arg14[%c1_50, %c0_51] : memref<3x256xf32, #tpu.memory_space<vmem>>, vector<1x256xf32>
    %cst_52 = arith.constant dense<0.000000e+00> : vector<128xf32>
    %170 = vector.multi_reduction <add>, %167, %cst_52 [1] : vector<128x256xf32> to vector<128xf32>
    %171 = vector.shape_cast %170 : vector<128xf32> to vector<128x1xf32>
    %cst_53 = arith.constant 2.560000e+02 : f32
    %172 = vector.broadcast %cst_53 : f32 to vector<128x1xf32>
    %173 = arith.divf %171, %172 : vector<128x1xf32>
    %174 = vector.broadcast %173 : vector<128x1xf32> to vector<128x256xf32>
    %175 = arith.subf %167, %174 : vector<128x256xf32>
    %176 = arith.mulf %175, %175 : vector<128x256xf32>
    %cst_54 = arith.constant dense<0.000000e+00> : vector<128xf32>
    %177 = vector.multi_reduction <add>, %176, %cst_54 [1] : vector<128x256xf32> to vector<128xf32>
    %178 = vector.shape_cast %177 : vector<128xf32> to vector<128x1xf32>
    %cst_55 = arith.constant 2.560000e+02 : f32
    %179 = vector.broadcast %cst_55 : f32 to vector<128x1xf32>
    %180 = arith.divf %178, %179 : vector<128x1xf32>
    %181 = vector.broadcast %173 : vector<128x1xf32> to vector<128x256xf32>
    %182 = arith.subf %167, %181 : vector<128x256xf32>
    %cst_56 = arith.constant 9.99999974E-6 : f32
    %183 = vector.broadcast %cst_56 : f32 to vector<128x1xf32>
    %184 = arith.addf %180, %183 : vector<128x1xf32>
    %185 = math.rsqrt %184 : vector<128x1xf32>
    %186 = vector.broadcast %185 : vector<128x1xf32> to vector<128x256xf32>
    %187 = arith.mulf %182, %186 : vector<128x256xf32>
    %188 = vector.broadcast %168 : vector<1x256xf32> to vector<128x256xf32>
    %189 = arith.mulf %187, %188 : vector<128x256xf32>
    %190 = vector.broadcast %169 : vector<1x256xf32> to vector<128x256xf32>
    %191 = arith.addf %189, %190 : vector<128x256xf32>
    %192 = arith.truncf %191 : vector<128x256xf32> to vector<128x256xbf16>
    %cst_57 = arith.constant 0.000000e+00 : f32
    %193 = vector.broadcast %cst_57 : f32 to vector<128x256xf32>
    %c0_58 = arith.constant 0 : index
    %c0_59 = arith.constant 0 : index
    %194 = vector.load %arg9[%c0_58, %c0_59] : memref<256x512xbf16, #tpu.memory_space<vmem>>, vector<256x512xbf16>
    %cst_60 = arith.constant dense<0.000000e+00> : vector<128x512xf32>
    %195 = tpu.matmul %192, %194, %cst_60 {dimension_numbers = #tpu.dot_dimension_numbers<[1], [0], [0], [1], [0, 0, 1, 1], [], []>} : vector<128x256xbf16>, vector<256x512xbf16>, vector<128x512xf32> -> vector<128x512xf32>
    %c0_61 = arith.constant 0 : index
    %c0_62 = arith.constant 0 : index
    %196 = vector.load %arg10[%c0_61, %c0_62] : memref<1x512xf32, #tpu.memory_space<vmem>>, vector<1x512xf32>
    %197 = vector.broadcast %196 : vector<1x512xf32> to vector<128x512xf32>
    %198 = arith.addf %195, %197 : vector<128x512xf32>
    %cst_63 = arith.constant 0.000000e+00 : f32
    %199 = vector.broadcast %cst_63 : f32 to vector<128x512xf32>
    %200 = arith.maximumf %198, %199 : vector<128x512xf32>
    %201 = arith.truncf %200 : vector<128x512xf32> to vector<128x512xbf16>
    %c0_64 = arith.constant 0 : index
    %c0_65 = arith.constant 0 : index
    %202 = vector.load %arg11[%c0_64, %c0_65] : memref<512x256xbf16, #tpu.memory_space<vmem>>, vector<512x256xbf16>
    %cst_66 = arith.constant dense<0.000000e+00> : vector<128x256xf32>
    %203 = tpu.matmul %201, %202, %cst_66 {dimension_numbers = #tpu.dot_dimension_numbers<[1], [0], [0], [1], [0, 0, 1, 1], [], []>} : vector<128x512xbf16>, vector<512x256xbf16>, vector<128x256xf32> -> vector<128x256xf32>
    %204 = arith.addf %193, %203 : vector<128x256xf32>
    %c0_67 = arith.constant 0 : index
    %c0_68 = arith.constant 0 : index
    %205 = vector.load %arg12[%c0_67, %c0_68] : memref<1x256xf32, #tpu.memory_space<vmem>>, vector<1x256xf32>
    %206 = vector.broadcast %205 : vector<1x256xf32> to vector<128x256xf32>
    %207 = arith.addf %204, %206 : vector<128x256xf32>
    %208 = arith.addf %191, %207 : vector<128x256xf32>
    %c2 = arith.constant 2 : index
    %c0_69 = arith.constant 0 : index
    %209 = vector.load %arg13[%c2, %c0_69] : memref<3x256xf32, #tpu.memory_space<vmem>>, vector<1x256xf32>
    %c2_70 = arith.constant 2 : index
    %c0_71 = arith.constant 0 : index
    %210 = vector.load %arg14[%c2_70, %c0_71] : memref<3x256xf32, #tpu.memory_space<vmem>>, vector<1x256xf32>
    %cst_72 = arith.constant dense<0.000000e+00> : vector<128xf32>
    %211 = vector.multi_reduction <add>, %208, %cst_72 [1] : vector<128x256xf32> to vector<128xf32>
    %212 = vector.shape_cast %211 : vector<128xf32> to vector<128x1xf32>
    %cst_73 = arith.constant 2.560000e+02 : f32
    %213 = vector.broadcast %cst_73 : f32 to vector<128x1xf32>
    %214 = arith.divf %212, %213 : vector<128x1xf32>
    %215 = vector.broadcast %214 : vector<128x1xf32> to vector<128x256xf32>
    %216 = arith.subf %208, %215 : vector<128x256xf32>
    %217 = arith.mulf %216, %216 : vector<128x256xf32>
    %cst_74 = arith.constant dense<0.000000e+00> : vector<128xf32>
    %218 = vector.multi_reduction <add>, %217, %cst_74 [1] : vector<128x256xf32> to vector<128xf32>
    %219 = vector.shape_cast %218 : vector<128xf32> to vector<128x1xf32>
    %cst_75 = arith.constant 2.560000e+02 : f32
    %220 = vector.broadcast %cst_75 : f32 to vector<128x1xf32>
    %221 = arith.divf %219, %220 : vector<128x1xf32>
    %222 = vector.broadcast %214 : vector<128x1xf32> to vector<128x256xf32>
    %223 = arith.subf %208, %222 : vector<128x256xf32>
    %cst_76 = arith.constant 9.99999974E-6 : f32
    %224 = vector.broadcast %cst_76 : f32 to vector<128x1xf32>
    %225 = arith.addf %221, %224 : vector<128x1xf32>
    %226 = math.rsqrt %225 : vector<128x1xf32>
    %227 = vector.broadcast %226 : vector<128x1xf32> to vector<128x256xf32>
    %228 = arith.mulf %223, %227 : vector<128x256xf32>
    %229 = vector.broadcast %209 : vector<1x256xf32> to vector<128x256xf32>
    %230 = arith.mulf %228, %229 : vector<128x256xf32>
    %231 = vector.broadcast %210 : vector<1x256xf32> to vector<128x256xf32>
    %232 = arith.addf %230, %231 : vector<128x256xf32>
    %233 = arith.truncf %232 : vector<128x256xf32> to vector<128x256xbf16>
    %c0_77 = arith.constant 0 : index
    %c0_78 = arith.constant 0 : index
    %c0_79 = arith.constant 0 : index
    %234 = vector.load %arg15[%c0_77, %c0_78, %c0_79] : memref<1x128x256xbf16, #tpu.memory_space<vmem>>, vector<1x128x256xbf16>
    %235 = vector.shape_cast %234 : vector<1x128x256xbf16> to vector<128x256xbf16>
    %236 = vector.shape_cast %233 : vector<128x256xbf16> to vector<1x128x256xbf16>
    tpu.vector_store %arg15[%c0_77, %c0_78, %c0_79], %236 {strides = array<i32>} : memref<1x128x256xbf16, #tpu.memory_space<vmem>>, vector<1x128x256xbf16>,
    return
  }
  func.func @transform_0(%arg0: i32) -> (i32, i32, i32) {
    %c0_i32 = arith.constant 0 : i32
    %c0_i32_0 = arith.constant 0 : i32
    %c0_i32_1 = arith.constant 0 : i32
    return %arg0, %c0_i32, %c0_i32_0 : i32, i32, i32
  }
  func.func @transform_1(%arg0: i32) -> (i32, i32, i32) {
    %c0_i32 = arith.constant 0 : i32
    %c0_i32_0 = arith.constant 0 : i32
    %c0_i32_1 = arith.constant 0 : i32
    return %arg0, %c0_i32, %c0_i32_0 : i32, i32, i32
  }
  func.func @transform_2(%arg0: i32) -> (i32, i32, i32) {
    %c0_i32 = arith.constant 0 : i32
    %c0_i32_0 = arith.constant 0 : i32
    %c0_i32_1 = arith.constant 0 : i32
    return %arg0, %c0_i32, %c0_i32_0 : i32, i32, i32
  }
  func.func @transform_3(%arg0: i32) -> (i32, i32, i32) {
    %c0_i32 = arith.constant 0 : i32
    %c0_i32_0 = arith.constant 0 : i32
    %c0_i32_1 = arith.constant 0 : i32
    return %arg0, %c0_i32, %c0_i32_0 : i32, i32, i32
  }
  func.func @transform_4(%arg0: i32) -> (i32, i32) {
    %c0_i32 = arith.constant 0 : i32
    %c0_i32_0 = arith.constant 0 : i32
    %c0_i32_1 = arith.constant 0 : i32
    return %c0_i32, %c0_i32_0 : i32, i32
  }
  func.func @transform_5(%arg0: i32) -> (i32, i32) {
    %c0_i32 = arith.constant 0 : i32
    %c0_i32_0 = arith.constant 0 : i32
    %c0_i32_1 = arith.constant 0 : i32
    return %c0_i32, %c0_i32_0 : i32, i32
  }
  func.func @transform_6(%arg0: i32) -> (i32, i32) {
    %c0_i32 = arith.constant 0 : i32
    %c0_i32_0 = arith.constant 0 : i32
    %c0_i32_1 = arith.constant 0 : i32
    return %c0_i32, %c0_i32_0 : i32, i32
  }
  func.func @transform_7(%arg0: i32) -> (i32, i32) {
    %c0_i32 = arith.constant 0 : i32
    %c0_i32_0 = arith.constant 0 : i32
    %c0_i32_1 = arith.constant 0 : i32
    return %c0_i32, %c0_i32_0 : i32, i32
  }
  func.func @transform_8(%arg0: i32) -> (i32, i32) {
    %c0_i32 = arith.constant 0 : i32
    %c0_i32_0 = arith.constant 0 : i32
    %c0_i32_1 = arith.constant 0 : i32
    return %c0_i32, %c0_i32_0 : i32, i32
  }
  func.func @transform_9(%arg0: i32) -> (i32, i32) {
    %c0_i32 = arith.constant 0 : i32
    %c0_i32_0 = arith.constant 0 : i32
    %c0_i32_1 = arith.constant 0 : i32
    return %c0_i32, %c0_i32_0 : i32, i32
  }
  func.func @transform_10(%arg0: i32) -> (i32, i32) {
    %c0_i32 = arith.constant 0 : i32
    %c0_i32_0 = arith.constant 0 : i32
    %c0_i32_1 = arith.constant 0 : i32
    return %c0_i32, %c0_i32_0 : i32, i32
  }
  func.func @transform_11(%arg0: i32) -> (i32, i32) {
    %c0_i32 = arith.constant 0 : i32
    %c0_i32_0 = arith.constant 0 : i32
    %c0_i32_1 = arith.constant 0 : i32
    return %c0_i32, %c0_i32_0 : i32, i32
  }
  func.func @transform_12(%arg0: i32) -> (i32, i32) {
    %c0_i32 = arith.constant 0 : i32
    %c0_i32_0 = arith.constant 0 : i32
    %c0_i32_1 = arith.constant 0 : i32
    return %c0_i32, %c0_i32_0 : i32, i32
  }
  func.func @transform_13(%arg0: i32) -> (i32, i32) {
    %c0_i32 = arith.constant 0 : i32
    %c0_i32_0 = arith.constant 0 : i32
    %c0_i32_1 = arith.constant 0 : i32
    return %c0_i32, %c0_i32_0 : i32, i32
  }
  func.func @transform_14(%arg0: i32) -> (i32, i32, i32) {
    %c0_i32 = arith.constant 0 : i32
    %c0_i32_0 = arith.constant 0 : i32
    %c0_i32_1 = arith.constant 0 : i32
    return %arg0, %c0_i32, %c0_i32_0 : i32, i32, i32
  }
}

</mosaic_0001>

<llo_original>
// kernel: tpu_custom_call.1
$region0: #{tpu_custom_call.1}
  #allocation0 [shape = 'u32[]', space=smem, size = 0x4, offset = 0x4, fixed_abs, tag = 'smem constant byte address 0x4 - core index']
  #allocation1 [shape = 'u32[72,128]{1,0:T(1,128)}', space=vmem, size = 0x9000, scoped, tag = 'internal scratch']
  %s0 = inlined_call_operand.hbm [shape: bf16[2,128,256], index: 0, kind: input, shape index: {}]
  %s1 = inlined_call_operand.hbm [shape: f32[2,1,128], index: 1, kind: input, shape index: {}]
  %s2 = inlined_call_operand.hbm [shape: bf16[2,128,256], index: 2, kind: input, shape index: {}]
  %s3 = inlined_call_operand.vmem [shape: f32[2,1,128], index: 3, kind: input, shape index: {}]
  %s4 = inlined_call_operand.hbm [shape: bf16[256,768], index: 4, kind: input, shape index: {}]
  %s5 = inlined_call_operand.hbm [shape: f32[1,768], index: 5, kind: input, shape index: {}]
  %s6 = inlined_call_operand.hbm [shape: bf16[256,512], index: 6, kind: input, shape index: {}]
  %s7 = inlined_call_operand.hbm [shape: f32[1,512], index: 7, kind: input, shape index: {}]
  %s8 = inlined_call_operand.hbm [shape: bf16[256,512], index: 8, kind: input, shape index: {}]
  %s9 = inlined_call_operand.hbm [shape: f32[1,512], index: 9, kind: input, shape index: {}]
  %s10 = inlined_call_operand.hbm [shape: bf16[512,256], index: 10, kind: input, shape index: {}]
  %s11 = inlined_call_operand.hbm [shape: f32[1,256], index: 11, kind: input, shape index: {}]
  %s12 = inlined_call_operand.vmem [shape: f32[3,256], index: 12, kind: input, shape index: {}]
  %s13 = inlined_call_operand.hbm [shape: f32[3,256], index: 13, kind: input, shape index: {}]
  %s14 = inlined_call_operand.hbm [shape: bf16[2,128,256], index: 14, kind: output, shape index: {}]
  %s15 = sld [smem:[#allocation0]]
  $region137: #{tpu_custom_call.1} parent=0
    _
  %s17 = ssub.s32 1, %s15
  %s18 = scalar_select 0, %s17, %s15
  $region1: #{tpu_custom_call.1} parent=0
    #allocation2 [shape = 'u8[131072]{0}', space=vmem, size = 0x20000, scoped, tag = 'input window, operand 0']
    #allocation3 [shape = 's32[2]{0}', space=sflag, size = 0x8, scoped, tag = 'scoped memory for tpu_custom_call.1']
    #allocation4 [shape = 's32[2]{0}', space=sflag, size = 0x8, scoped, tag = 'scoped memory for tpu_custom_call.1']
    #allocation5 [shape = 'u8[1024]{0}', space=vmem, size = 0x400, scoped, tag = 'input window, operand 1']
    #allocation6 [shape = 's32[2]{0}', space=sflag, size = 0x8, scoped, tag = 'scoped memory for tpu_custom_call.1']
    #allocation7 [shape = 'u8[131072]{0}', space=vmem, size = 0x20000, scoped, tag = 'input window, operand 2']
    #allocation8 [shape = 'u8[393216]{0}', space=vmem, size = 0x60000, scoped, tag = 'input window, operand 4, single buffered']
    #allocation9 [shape = 's32[1]{0}', space=sflag, size = 0x4, scoped, tag = 'scoped memory for tpu_custom_call.1']
    #allocation10 [shape = 'u8[3072]{0}', space=vmem, size = 0xc00, scoped, tag = 'input window, operand 5, single buffered']
    #allocation11 [shape = 'u8[262144]{0}', space=vmem, size = 0x40000, scoped, tag = 'input window, operand 6, single buffered']
    #allocation12 [shape = 's32[1]{0}', space=sflag, size = 0x4, scoped, tag = 'scoped memory for tpu_custom_call.1']
    #allocation13 [shape = 'u8[2048]{0}', space=vmem, size = 0x800, scoped, tag = 'input window, operand 7, single buffered']
    #allocation14 [shape = 'u8[262144]{0}', space=vmem, size = 0x40000, scoped, tag = 'input window, operand 8, single buffered']
    #allocation15 [shape = 's32[1]{0}', space=sflag, size = 0x4, scoped, tag = 'scoped memory for tpu_custom_call.1']
    #allocation16 [shape = 'u8[2048]{0}', space=vmem, size = 0x800, scoped, tag = 'input window, operand 9, single buffered']
    #allocation17 [shape = 'u8[262144]{0}', space=vmem, size = 0x40000, scoped, tag = 'input window, operand 10, single buffered']
    #allocation18 [shape = 's32[1]{0}', space=sflag, size = 0x4, scoped, tag = 'scoped memory for tpu_custom_call.1']
    #allocation19 [shape = 'u8[1024]{0}', space=vmem, size = 0x400, scoped, tag = 'input window, operand 11, single buffered']
    #allocation20 [shape = 'u8[4096]{0}', space=vmem, size = 0x1000, scoped, tag = 'input window, operand 13, single buffered']
    #allocation21 [shape = 's32[1]{0}', space=sflag, size = 0x4, scoped, tag = 'scoped memory for tpu_custom_call.1']
    #allocation22 [shape = 'u8[131072]{0}', space=vmem, size = 0x20000, scoped, tag = 'output window, operand 0']
    %19 = vsyncpa [#allocation3], 0
    %s20 = scalar_lea.sflag [#allocation3], 1
    %21 = vsyncpa %s20, 0
    %22 = vsyncpa [#allocation6], 0
    %s23 = scalar_lea.sflag [#allocation6], 1
    %24 = vsyncpa %s23, 0
    %25 = vsyncpa [#allocation9], 0
    %26 = vsyncpa [#allocation12], 0
    %27 = vsyncpa [#allocation15], 0
    %28 = vsyncpa [#allocation18], 0
    %29 = vsyncpa [#allocation21], 0
    %30 = vsyncpa [#allocation4], 0
    %s31 = scalar_lea.sflag [#allocation4], 1
    %32 = vsyncpa %s31, 0
    loop: start=0, step=1, limit=4
    $region2: #{tpu_custom_call.1} parent=1 // loop_pre_header
      _
    $region3: #{tpu_custom_call.1} parent=1 // loop_header
      %s34 = sphi 0, %s38
      %p35 = scmp.ge.s32.totalorder %s34, 4
      %s44 = sphi 0, %s46
      %s47 = sphi 0, %s44
      %s48 = sphi 0, %s47
      %s64 = sphi 0, %s48
      %s70 = sphi 0, %s72
      %s73 = sphi 0, %s70
      %s74 = sphi 0, %s73
      %s90 = sphi 0, %s74
      %s96 = sphi 0, %s98
      %s99 = sphi 0, %s96
      %s100 = sphi 0, %s99
      %s116 = sphi 0, %s100
      %s122 = sphi 0, %s124
      %s125 = sphi 0, %s122
      %s126 = sphi 0, %s125
      %s142 = sphi 0, %s126
      %s146 = sphi 0, %s146
      %s148 = sphi 0, %s146
      %s149 = sphi 0, %s148
      %s163 = sphi 0, %s149
      %s167 = sphi 0, %s167
      %s169 = sphi 0, %s167
      %s170 = sphi 0, %s169
      %s184 = sphi 0, %s170
      %s188 = sphi 0, %s188
      %s190 = sphi 0, %s188
      %s191 = sphi 0, %s190
      %s205 = sphi 0, %s191
      %s209 = sphi 0, %s209
      %s211 = sphi 0, %s209
      %s212 = sphi 0, %s211
      %s226 = sphi 0, %s212
      %s230 = sphi 0, %s230
      %s232 = sphi 0, %s230
      %s233 = sphi 0, %s232
      %s247 = sphi 0, %s233
      %s251 = sphi 0, %s251
      %s253 = sphi 0, %s251
      %s254 = sphi 0, %s253
      %s268 = sphi 0, %s254
      %s272 = sphi 0, %s272
      %s274 = sphi 0, %s272
      %s275 = sphi 0, %s274
      %s289 = sphi 0, %s275
      %s293 = sphi 0, %s293
      %s295 = sphi 0, %s293
      %s296 = sphi 0, %s295
      %s310 = sphi 0, %s296
      %s314 = sphi 0, %s314
      %s316 = sphi 0, %s314
      %s317 = sphi 0, %s316
      %s331 = sphi 0, %s317
      %s335 = sphi 0, %s335
      %s337 = sphi 0, %s335
      %s338 = sphi 0, %s337
      %s352 = sphi 0, %s338
      %s358 = sphi 0, %s360
      %s361 = sphi 0, %s358
      %s362 = sphi 0, %s361
      %s378 = sphi 0, %s362
    $region4: #{tpu_custom_call.1} parent=1 // loop_header_branch
      %37 = sbr.rel (%p35) target = $region8
    $region5: #{tpu_custom_call.1} parent=1 // loop_body
      %s39 = ssub.s32 %s34, 1
      %s40 = ssub.s32 %s34, 2
      %s41 = sadd.s32 %s34, 1
      %s42 = ssub.s32 %s34, %s41
      %p43 = scmp.eq.s32.totalorder %s42, 0
      %s45 = sadd.s32 %s44, 1
      %s46 = scalar_select %p43, %s44, %s45
      %p49 = pneg %p43
      %p50 = scmp.eq.s32.totalorder %s34, 1
      %p51 = por %p49, %p50
      %p52 = scmp.ne.s32.totalorder %s44, %s47
      %p53 = scmp.eq.s32.totalorder %s34, 0
      %p54 = por %p52, %p53
      %p55 = scmp.ne.s32.totalorder %s44, %s47
      %p56 = scmp.eq.s32.totalorder %s39, 1
      %p57 = por %p55, %p56
      %p58 = scmp.ne.s32.totalorder %s47, %s48
      %p59 = scmp.eq.s32.totalorder %s39, 0
      %p60 = por %p58, %p59
      %p61 = scmp.ne.s32.totalorder %s47, %s48
      %p62 = scmp.eq.s32.totalorder %s40, 1
      %p63 = por %p61, %p62
      %p65 = scmp.ne.s32.totalorder %s48, %s64
      %p66 = scmp.eq.s32.totalorder %s40, 0
      %p67 = por %p65, %p66
      %s68 = ssub.s32 %s34, %s41
      %p69 = scmp.eq.s32.totalorder %s68, 0
      %s71 = sadd.s32 %s70, 1
      %s72 = scalar_select %p69, %s70, %s71
      %p75 = pneg %p69
      %p76 = scmp.eq.s32.totalorder %s34, 1
      %p77 = por %p75, %p76
      %p78 = scmp.ne.s32.totalorder %s70, %s73
      %p79 = scmp.eq.s32.totalorder %s34, 0
      %p80 = por %p78, %p79
      %p81 = scmp.ne.s32.totalorder %s70, %s73
      %p82 = scmp.eq.s32.totalorder %s39, 1
      %p83 = por %p81, %p82
      %p84 = scmp.ne.s32.totalorder %s73, %s74
      %p85 = scmp.eq.s32.totalorder %s39, 0
      %p86 = por %p84, %p85
      %p87 = scmp.ne.s32.totalorder %s73, %s74
      %p88 = scmp.eq.s32.totalorder %s40, 1
      %p89 = por %p87, %p88
      %p91 = scmp.ne.s32.totalorder %s74, %s90
      %p92 = scmp.eq.s32.totalorder %s40, 0
      %p93 = por %p91, %p92
      %s94 = ssub.s32 %s34, %s41
      %p95 = scmp.eq.s32.totalorder %s94, 0
      %s97 = sadd.s32 %s96, 1
      %s98 = scalar_select %p95, %s96, %s97
      %p101 = pneg %p95
      %p102 = scmp.eq.s32.totalorder %s34, 1
      %p103 = por %p101, %p102
      %p104 = scmp.ne.s32.totalorder %s96, %s99
      %p105 = scmp.eq.s32.totalorder %s34, 0
      %p106 = por %p104, %p105
      %p107 = scmp.ne.s32.totalorder %s96, %s99
      %p108 = scmp.eq.s32.totalorder %s39, 1
      %p109 = por %p107, %p108
      %p110 = scmp.ne.s32.totalorder %s99, %s100
      %p111 = scmp.eq.s32.totalorder %s39, 0
      %p112 = por %p110, %p111
      %p113 = scmp.ne.s32.totalorder %s99, %s100
      %p114 = scmp.eq.s32.totalorder %s40, 1
      %p115 = por %p113, %p114
      %p117 = scmp.ne.s32.totalorder %s100, %s116
      %p118 = scmp.eq.s32.totalorder %s40, 0
      %p119 = por %p117, %p118
      %s120 = ssub.s32 %s34, %s41
      %p121 = scmp.eq.s32.totalorder %s120, 0
      %s123 = sadd.s32 %s122, 1
      %s124 = scalar_select %p121, %s122, %s123
      %p127 = pneg %p121
      %p128 = scmp.eq.s32.totalorder %s34, 1
      %p129 = por %p127, %p128
      %p130 = scmp.ne.s32.totalorder %s122, %s125
      %p131 = scmp.eq.s32.totalorder %s34, 0
      %p132 = por %p130, %p131
      %p133 = scmp.ne.s32.totalorder %s122, %s125
      %p134 = scmp.eq.s32.totalorder %s39, 1
      %p135 = por %p133, %p134
      %p136 = scmp.ne.s32.totalorder %s125, %s126
      %p137 = scmp.eq.s32.totalorder %s39, 0
      %p138 = por %p136, %p137
      %p139 = scmp.ne.s32.totalorder %s125, %s126
      %p140 = scmp.eq.s32.totalorder %s40, 1
      %p141 = por %p139, %p140
      %p143 = scmp.ne.s32.totalorder %s126, %s142
      %p144 = scmp.eq.s32.totalorder %s40, 0
      %p145 = por %p143, %p144
      %s147 = sadd.s32 %s146, 1
      %p150 = scmp.eq.s32.totalorder %s34, 1
      %p151 = scmp.ne.s32.totalorder %s146, %s148
      %p152 = scmp.eq.s32.totalorder %s34, 0
      %p153 = por %p151, %p152
      %p154 = scmp.ne.s32.totalorder %s146, %s148
      %p155 = scmp.eq.s32.totalorder %s39, 1
      %p156 = por %p154, %p155
      %p157 = scmp.ne.s32.totalorder %s148, %s149
      %p158 = scmp.eq.s32.totalorder %s39, 0
      %p159 = por %p157, %p158
      %p160 = scmp.ne.s32.totalorder %s148, %s149
      %p161 = scmp.eq.s32.totalorder %s40, 1
      %p162 = por %p160, %p161
      %p164 = scmp.ne.s32.totalorder %s149, %s163
      %p165 = scmp.eq.s32.totalorder %s40, 0
      %p166 = por %p164, %p165
      %s168 = sadd.s32 %s167, 1
      %p171 = scmp.eq.s32.totalorder %s34, 1
      %p172 = scmp.ne.s32.totalorder %s167, %s169
      %p173 = scmp.eq.s32.totalorder %s34, 0
      %p174 = por %p172, %p173
      %p175 = scmp.ne.s32.totalorder %s167, %s169
      %p176 = scmp.eq.s32.totalorder %s39, 1
      %p177 = por %p175, %p176
      %p178 = scmp.ne.s32.totalorder %s169, %s170
      %p179 = scmp.eq.s32.totalorder %s39, 0
      %p180 = por %p178, %p179
      %p181 = scmp.ne.s32.totalorder %s169, %s170
      %p182 = scmp.eq.s32.totalorder %s40, 1
      %p183 = por %p181, %p182
      %p185 = scmp.ne.s32.totalorder %s170, %s184
      %p186 = scmp.eq.s32.totalorder %s40, 0
      %p187 = por %p185, %p186
      %s189 = sadd.s32 %s188, 1
      %p192 = scmp.eq.s32.totalorder %s34, 1
      %p193 = scmp.ne.s32.totalorder %s188, %s190
      %p194 = scmp.eq.s32.totalorder %s34, 0
      %p195 = por %p193, %p194
      %p196 = scmp.ne.s32.totalorder %s188, %s190
      %p197 = scmp.eq.s32.totalorder %s39, 1
      %p198 = por %p196, %p197
      %p199 = scmp.ne.s32.totalorder %s190, %s191
      %p200 = scmp.eq.s32.totalorder %s39, 0
      %p201 = por %p199, %p200
      %p202 = scmp.ne.s32.totalorder %s190, %s191
      %p203 = scmp.eq.s32.totalorder %s40, 1
      %p204 = por %p202, %p203
      %p206 = scmp.ne.s32.totalorder %s191, %s205
      %p207 = scmp.eq.s32.totalorder %s40, 0
      %p208 = por %p206, %p207
      %s210 = sadd.s32 %s209, 1
      %p213 = scmp.eq.s32.totalorder %s34, 1
      %p214 = scmp.ne.s32.totalorder %s209, %s211
      %p215 = scmp.eq.s32.totalorder %s34, 0
      %p216 = por %p214, %p215
      %p217 = scmp.ne.s32.totalorder %s209, %s211
      %p218 = scmp.eq.s32.totalorder %s39, 1
      %p219 = por %p217, %p218
      %p220 = scmp.ne.s32.totalorder %s211, %s212
      %p221 = scmp.eq.s32.totalorder %s39, 0
      %p222 = por %p220, %p221
      %p223 = scmp.ne.s32.totalorder %s211, %s212
      %p224 = scmp.eq.s32.totalorder %s40, 1
      %p225 = por %p223, %p224
      %p227 = scmp.ne.s32.totalorder %s212, %s226
      %p228 = scmp.eq.s32.totalorder %s40, 0
      %p229 = por %p227, %p228
      %s231 = sadd.s32 %s230, 1
      %p234 = scmp.eq.s32.totalorder %s34, 1
      %p235 = scmp.ne.s32.totalorder %s230, %s232
      %p236 = scmp.eq.s32.totalorder %s34, 0
      %p237 = por %p235, %p236
      %p238 = scmp.ne.s32.totalorder %s230, %s232
      %p239 = scmp.eq.s32.totalorder %s39, 1
      %p240 = por %p238, %p239
      %p241 = scmp.ne.s32.totalorder %s232, %s233
      %p242 = scmp.eq.s32.totalorder %s39, 0
      %p243 = por %p241, %p242
      %p244 = scmp.ne.s32.totalorder %s232, %s233
      %p245 = scmp.eq.s32.totalorder %s40, 1
      %p246 = por %p244, %p245
      %p248 = scmp.ne.s32.totalorder %s233, %s247
      %p249 = scmp.eq.s32.totalorder %s40, 0
      %p250 = por %p248, %p249
      %s252 = sadd.s32 %s251, 1
      %p255 = scmp.eq.s32.totalorder %s34, 1
      %p256 = scmp.ne.s32.totalorder %s251, %s253
      %p257 = scmp.eq.s32.totalorder %s34, 0
      %p258 = por %p256, %p257
      %p259 = scmp.ne.s32.totalorder %s251, %s253
      %p260 = scmp.eq.s32.totalorder %s39, 1
      %p261 = por %p259, %p260
      %p262 = scmp.ne.s32.totalorder %s253, %s254
      %p263 = scmp.eq.s32.totalorder %s39, 0
      %p264 = por %p262, %p263
      %p265 = scmp.ne.s32.totalorder %s253, %s254
      %p266 = scmp.eq.s32.totalorder %s40, 1
      %p267 = por %p265, %p266
      %p269 = scmp.ne.s32.totalorder %s254, %s268
      %p270 = scmp.eq.s32.totalorder %s40, 0
      %p271 = por %p269, %p270
      %s273 = sadd.s32 %s272, 1
      %p276 = scmp.eq.s32.totalorder %s34, 1
      %p277 = scmp.ne.s32.totalorder %s272, %s274
      %p278 = scmp.eq.s32.totalorder %s34, 0
      %p279 = por %p277, %p278
      %p280 = scmp.ne.s32.totalorder %s272, %s274
      %p281 = scmp.eq.s32.totalorder %s39, 1
      %p282 = por %p280, %p281
      %p283 = scmp.ne.s32.totalorder %s274, %s275
      %p284 = scmp.eq.s32.totalorder %s39, 0
      %p285 = por %p283, %p284
      %p286 = scmp.ne.s32.totalorder %s274, %s275
      %p287 = scmp.eq.s32.totalorder %s40, 1
      %p288 = por %p286, %p287
      %p290 = scmp.ne.s32.totalorder %s275, %s289
      %p291 = scmp.eq.s32.totalorder %s40, 0
      %p292 = por %p290, %p291
      %s294 = sadd.s32 %s293, 1
      %p297 = scmp.eq.s32.totalorder %s34, 1
      %p298 = scmp.ne.s32.totalorder %s293, %s295
      %p299 = scmp.eq.s32.totalorder %s34, 0
      %p300 = por %p298, %p299
      %p301 = scmp.ne.s32.totalorder %s293, %s295
      %p302 = scmp.eq.s32.totalorder %s39, 1
      %p303 = por %p301, %p302
      %p304 = scmp.ne.s32.totalorder %s295, %s296
      %p305 = scmp.eq.s32.totalorder %s39, 0
      %p306 = por %p304, %p305
      %p307 = scmp.ne.s32.totalorder %s295, %s296
      %p308 = scmp.eq.s32.totalorder %s40, 1
      %p309 = por %p307, %p308
      %p311 = scmp.ne.s32.totalorder %s296, %s310
      %p312 = scmp.eq.s32.totalorder %s40, 0
      %p313 = por %p311, %p312
      %s315 = sadd.s32 %s314, 1
      %p318 = scmp.eq.s32.totalorder %s34, 1
      %p319 = scmp.ne.s32.totalorder %s314, %s316
      %p320 = scmp.eq.s32.totalorder %s34, 0
      %p321 = por %p319, %p320
      %p322 = scmp.ne.s32.totalorder %s314, %s316
      %p323 = scmp.eq.s32.totalorder %s39, 1
      %p324 = por %p322, %p323
      %p325 = scmp.ne.s32.totalorder %s316, %s317
      %p326 = scmp.eq.s32.totalorder %s39, 0
      %p327 = por %p325, %p326
      %p328 = scmp.ne.s32.totalorder %s316, %s317
      %p329 = scmp.eq.s32.totalorder %s40, 1
      %p330 = por %p328, %p329
      %p332 = scmp.ne.s32.totalorder %s317, %s331
      %p333 = scmp.eq.s32.totalorder %s40, 0
      %p334 = por %p332, %p333
      %s336 = sadd.s32 %s335, 1
      %p339 = scmp.eq.s32.totalorder %s34, 1
      %p340 = scmp.ne.s32.totalorder %s335, %s337
      %p341 = scmp.eq.s32.totalorder %s34, 0
      %p342 = por %p340, %p341
      %p343 = scmp.ne.s32.totalorder %s335, %s337
      %p344 = scmp.eq.s32.totalorder %s39, 1
      %p345 = por %p343, %p344
      %p346 = scmp.ne.s32.totalorder %s337, %s338
      %p347 = scmp.eq.s32.totalorder %s39, 0
      %p348 = por %p346, %p347
      %p349 = scmp.ne.s32.totalorder %s337, %s338
      %p350 = scmp.eq.s32.totalorder %s40, 1
      %p351 = por %p349, %p350
      %p353 = scmp.ne.s32.totalorder %s338, %s352
      %p354 = scmp.eq.s32.totalorder %s40, 0
      %p355 = por %p353, %p354
      %s356 = ssub.s32 %s34, %s41
      %p357 = scmp.eq.s32.totalorder %s356, 0
      %s359 = sadd.s32 %s358, 1
      %s360 = scalar_select %p357, %s358, %s359
      %p363 = pneg %p357
      %p364 = scmp.eq.s32.totalorder %s34, 1
      %p365 = por %p363, %p364
      %p366 = scmp.ne.s32.totalorder %s358, %s361
      %p367 = scmp.eq.s32.totalorder %s34, 0
      %p368 = por %p366, %p367
      %p369 = scmp.ne.s32.totalorder %s358, %s361
      %p370 = scmp.eq.s32.totalorder %s39, 1
      %p371 = por %p369, %p370
      %p372 = scmp.ne.s32.totalorder %s361, %s362
      %p373 = scmp.eq.s32.totalorder %s39, 0
      %p374 = por %p372, %p373
      %p375 = scmp.ne.s32.totalorder %s361, %s362
      %p376 = scmp.eq.s32.totalorder %s40, 1
      %p377 = por %p375, %p376
      %p379 = scmp.ne.s32.totalorder %s362, %s378
      %p380 = scmp.eq.s32.totalorder %s40, 0
      %p381 = por %p379, %p380
      %p382 = scmp.le.s32.totalorder 1, %s34
      %p383 = scmp.lt.s32.totalorder %s34, 3
      %p384 = pnand %p382, %p383
      %p385 = pneg %p384
      // Predicated region
      $region9: #{tpu_custom_call.1} parent=5 // pred_check
        _
      $region10: #{tpu_custom_call.1} parent=5 // pred_check_branch
        %387 = sbr.rel (%p384) target = $region12
      $region11: #{tpu_custom_call.1} parent=5 // pred_region
        %s388 = ssub.s32 %s34, 1
        // Predicated region
        $region13: #{tpu_custom_call.1} parent=11 // pred_check
          %p389 = pneg %p159
        $region14: #{tpu_custom_call.1} parent=11 // pred_check_branch
          %391 = sbr.rel (%p389) target = $region16
        $region15: #{tpu_custom_call.1} parent=11 // pred_region
          %393 = vsyncadd [#allocation9], 0
          %s394 = sshll.u32 %s4, 4
          %s395 = int_to_ptr.hbm [resolvable:$true] %s394
          %s396 = sshll.u32 [#allocation8], 4
          %s397 = int_to_ptr.vmem [resolvable:$true] %s396
          %402 = dma.hbm_to_vmem [thread:$0]  %s395, 12288, %s397, [#allocation9], 384, 384, 24
        $region16: #{tpu_custom_call.1} parent=11 // pred_fallthru
          _
        // Predicated region
        $region17: #{tpu_custom_call.1} parent=11 // pred_check
          %p403 = pneg %p180
        $region18: #{tpu_custom_call.1} parent=11 // pred_check_branch
          %405 = sbr.rel (%p403) target = $region20
        $region19: #{tpu_custom_call.1} parent=11 // pred_region
          %407 = vsyncadd [#allocation9], 0
          %s409 = sshll.u32 %s5, 4
          %s410 = int_to_ptr.hbm [resolvable:$true] %s409
          %s411 = sshll.u32 [#allocation10], 4
          %s412 = int_to_ptr.vmem [resolvable:$true] %s411
          %414 = dma.hbm_to_vmem [thread:$0]  %s410, 96, %s412, [#allocation9]
        $region20: #{tpu_custom_call.1} parent=11 // pred_fallthru
          _
        // Predicated region
        $region21: #{tpu_custom_call.1} parent=11 // pred_check
          %p415 = pneg %p201
        $region22: #{tpu_custom_call.1} parent=11 // pred_check_branch
          %417 = sbr.rel (%p415) target = $region24
        $region23: #{tpu_custom_call.1} parent=11 // pred_region
          %419 = vsyncadd [#allocation12], 0
          %s420 = sshll.u32 %s6, 4
          %s421 = int_to_ptr.hbm [resolvable:$true] %s420
          %s422 = sshll.u32 [#allocation11], 4
          %s423 = int_to_ptr.vmem [resolvable:$true] %s422
          %428 = dma.hbm_to_vmem [thread:$0]  %s421, 8192, %s423, [#allocation12], 256, 256, 16
        $region24: #{tpu_custom_call.1} parent=11 // pred_fallthru
          _
        // Predicated region
        $region25: #{tpu_custom_call.1} parent=11 // pred_check
          %p429 = pneg %p222
        $region26: #{tpu_custom_call.1} parent=11 // pred_check_branch
          %431 = sbr.rel (%p429) target = $region28
        $region27: #{tpu_custom_call.1} parent=11 // pred_region
          %433 = vsyncadd [#allocation12], 0
          %s435 = sshll.u32 %s7, 4
          %s436 = int_to_ptr.hbm [resolvable:$true] %s435
          %s437 = sshll.u32 [#allocation13], 4
          %s438 = int_to_ptr.vmem [resolvable:$true] %s437
          %440 = dma.hbm_to_vmem [thread:$0]  %s436, 64, %s438, [#allocation12]
        $region28: #{tpu_custom_call.1} parent=11 // pred_fallthru
          _
        // Predicated region
        $region29: #{tpu_custom_call.1} parent=11 // pred_check
          %p441 = pneg %p243
        $region30: #{tpu_custom_call.1} parent=11 // pred_check_branch
          %443 = sbr.rel (%p441) target = $region32
        $region31: #{tpu_custom_call.1} parent=11 // pred_region
          %445 = vsyncadd [#allocation15], 0
          %s446 = sshll.u32 %s8, 4
          %s447 = int_to_ptr.hbm [resolvable:$true] %s446
          %s448 = sshll.u32 [#allocation14], 4
          %s449 = int_to_ptr.vmem [resolvable:$true] %s448
          %454 = dma.hbm_to_vmem [thread:$0]  %s447, 8192, %s449, [#allocation15], 256, 256, 16
        $region32: #{tpu_custom_call.1} parent=11 // pred_fallthru
          _
        // Predicated region
        $region33: #{tpu_custom_call.1} parent=11 // pred_check
          %p455 = pneg %p264
        $region34: #{tpu_custom_call.1} parent=11 // pred_check_branch
          %457 = sbr.rel (%p455) target = $region36
        $region35: #{tpu_custom_call.1} parent=11 // pred_region
          %459 = vsyncadd [#allocation15], 0
          %s461 = sshll.u32 %s9, 4
          %s462 = int_to_ptr.hbm [resolvable:$true] %s461
          %s463 = sshll.u32 [#allocation16], 4
          %s464 = int_to_ptr.vmem [resolvable:$true] %s463
          %466 = dma.hbm_to_vmem [thread:$0]  %s462, 64, %s464, [#allocation15]
        $region36: #{tpu_custom_call.1} parent=11 // pred_fallthru
          _
        // Predicated region
        $region37: #{tpu_custom_call.1} parent=11 // pred_check
          %p467 = pneg %p285
        $region38: #{tpu_custom_call.1} parent=11 // pred_check_branch
          %469 = sbr.rel (%p467) target = $region40
        $region39: #{tpu_custom_call.1} parent=11 // pred_region
          %471 = vsyncadd [#allocation18], 0
          %s472 = sshll.u32 %s10, 4
          %s473 = int_to_ptr.hbm [resolvable:$true] %s472
          %s474 = sshll.u32 [#allocation17], 4
          %s475 = int_to_ptr.vmem [resolvable:$true] %s474
          %480 = dma.hbm_to_vmem [thread:$0]  %s473, 8192, %s475, [#allocation18], 128, 128, 8
        $region40: #{tpu_custom_call.1} parent=11 // pred_fallthru
          _
        // Predicated region
        $region41: #{tpu_custom_call.1} parent=11 // pred_check
          %p481 = pneg %p306
        $region42: #{tpu_custom_call.1} parent=11 // pred_check_branch
          %483 = sbr.rel (%p481) target = $region44
        $region43: #{tpu_custom_call.1} parent=11 // pred_region
          %485 = vsyncadd [#allocation18], 0
          %s487 = sshll.u32 %s11, 4
          %s488 = int_to_ptr.hbm [resolvable:$true] %s487
          %s489 = sshll.u32 [#allocation19], 4
          %s490 = int_to_ptr.vmem [resolvable:$true] %s489
          %492 = dma.hbm_to_vmem [thread:$0]  %s488, 32, %s490, [#allocation18]
        $region44: #{tpu_custom_call.1} parent=11 // pred_fallthru
          _
        // Predicated region
        $region45: #{tpu_custom_call.1} parent=11 // pred_check
          %p493 = pneg %p327
        $region46: #{tpu_custom_call.1} parent=11 // pred_check_branch
          %495 = sbr.rel (%p493) target = $region48
        $region47: #{tpu_custom_call.1} parent=11 // pred_region
          _
        $region48: #{tpu_custom_call.1} parent=11 // pred_fallthru
          _
        // Predicated region
        $region49: #{tpu_custom_call.1} parent=11 // pred_check
          %p496 = pneg %p348
        $region50: #{tpu_custom_call.1} parent=11 // pred_check_branch
          %498 = sbr.rel (%p496) target = $region52
        $region51: #{tpu_custom_call.1} parent=11 // pred_region
          %500 = vsyncadd [#allocation21], 0
          %s502 = sshll.u32 %s13, 4
          %s503 = int_to_ptr.hbm [resolvable:$true] %s502
          %s504 = sshll.u32 [#allocation20], 4
          %s505 = int_to_ptr.vmem [resolvable:$true] %s504
          %507 = dma.hbm_to_vmem [thread:$0]  %s503, 128, %s505, [#allocation21]
        $region52: #{tpu_custom_call.1} parent=11 // pred_fallthru
          _
      $region12: #{tpu_custom_call.1} parent=5 // pred_fallthru
        _
      %p508 = scmp.lt.s32.totalorder %s34, 2
      // Predicated region
      $region53: #{tpu_custom_call.1} parent=5 // pred_check
        %p509 = pneg %p508
      $region54: #{tpu_custom_call.1} parent=5 // pred_check_branch
        %511 = sbr.rel (%p509) target = $region56
      $region55: #{tpu_custom_call.1} parent=5 // pred_region
        // Predicated region
        $region57: #{tpu_custom_call.1} parent=55 // pred_check
          %p512 = pneg %p54
        $region58: #{tpu_custom_call.1} parent=55 // pred_check_branch
          %514 = sbr.rel (%p512) target = $region60
        $region59: #{tpu_custom_call.1} parent=55 // pred_region
          %s515 = sand.u32 %s44, 1
          %s516 = scalar_lea.sflag [#allocation3], %s515
          %s517 = sand.u32 %s44, 1
          %s518 = smul.addr %s517, 128
          %s519 = scalar_lea.vmem [#allocation2], %s518
          %521 = vsyncadd %s516, 0
          %s522 = smul.addr %s34, 32
          %s523 = smul.addr %s522, 4
          %s524 = scalar_lea.hbm %s0, %s523
          %s525 = sshll.u32 %s524, 4
          %s526 = int_to_ptr.hbm [resolvable:$true] %s525
          %s527 = sshll.u32 %s519, 4
          %s528 = int_to_ptr.vmem [resolvable:$true] %s527
          %533 = dma.hbm_to_vmem [thread:$0]  %s526, 2048, %s528, %s516, 128, 128, 8
        $region60: #{tpu_custom_call.1} parent=55 // pred_fallthru
          _
        // Predicated region
        $region61: #{tpu_custom_call.1} parent=55 // pred_check
          %p534 = pneg %p80
        $region62: #{tpu_custom_call.1} parent=55 // pred_check_branch
          %536 = sbr.rel (%p534) target = $region64
        $region63: #{tpu_custom_call.1} parent=55 // pred_region
          %s537 = sand.u32 %s34, 1
          %s538 = scalar_lea.sflag [#allocation6], %s537
          %s539 = sand.u32 %s70, 1
          %s540 = scalar_lea.vmem [#allocation5], %s539
          %542 = vsyncadd %s538, 0
          %s543 = scalar_lea.hbm %s1, %s34
          %s545 = sshll.u32 %s543, 4
          %s546 = int_to_ptr.hbm [resolvable:$true] %s545
          %s547 = sshll.u32 %s540, 4
          %s548 = int_to_ptr.vmem [resolvable:$true] %s547
          %550 = dma.hbm_to_vmem [thread:$0]  %s546, 16, %s548, %s538
        $region64: #{tpu_custom_call.1} parent=55 // pred_fallthru
          _
        // Predicated region
        $region65: #{tpu_custom_call.1} parent=55 // pred_check
          %p551 = pneg %p106
        $region66: #{tpu_custom_call.1} parent=55 // pred_check_branch
          %553 = sbr.rel (%p551) target = $region68
        $region67: #{tpu_custom_call.1} parent=55 // pred_region
          %s554 = sand.u32 %s34, 1
          %s555 = scalar_lea.sflag [#allocation6], %s554
          %s556 = sand.u32 %s96, 1
          %s557 = smul.addr %s556, 128
          %s558 = scalar_lea.vmem [#allocation7], %s557
          %560 = vsyncadd %s555, 0
          %s561 = smul.addr %s34, 32
          %s562 = smul.addr %s561, 4
          %s563 = scalar_lea.hbm %s2, %s562
          %s564 = sshll.u32 %s563, 4
          %s565 = int_to_ptr.hbm [resolvable:$true] %s564
          %s566 = sshll.u32 %s558, 4
          %s567 = int_to_ptr.vmem [resolvable:$true] %s566
          %572 = dma.hbm_to_vmem [thread:$0]  %s565, 2048, %s567, %s555, 128, 128, 8
        $region68: #{tpu_custom_call.1} parent=55 // pred_fallthru
          _
        // Predicated region
        $region69: #{tpu_custom_call.1} parent=55 // pred_check
          %p573 = pneg %p132
        $region70: #{tpu_custom_call.1} parent=55 // pred_check_branch
          %575 = sbr.rel (%p573) target = $region72
        $region71: #{tpu_custom_call.1} parent=55 // pred_region
          %p576 = scmp.lt.s32.totalorder %s34, 1
          %s577 = scalar_select %p576, %s34, 1
          %s578 = scalar_lea.vmem %s3, %s577
        $region72: #{tpu_custom_call.1} parent=55 // pred_fallthru
          _
      $region56: #{tpu_custom_call.1} parent=5 // pred_fallthru
        _
      %p579 = scmp.le.s32.totalorder 1, %s34
      %p580 = scmp.lt.s32.totalorder %s34, 3
      %p581 = pnand %p579, %p580
      %p582 = pneg %p581
      // Predicated region
      $region73: #{tpu_custom_call.1} parent=5 // pred_check
        _
      $region74: #{tpu_custom_call.1} parent=5 // pred_check_branch
        %584 = sbr.rel (%p581) target = $region76
      $region75: #{tpu_custom_call.1} parent=5 // pred_region
        %s585 = ssub.s32 %s34, 1
        %s586 = sand.u32 %s47, 1
        %s587 = scalar_lea.sflag [#allocation3], %s586
        %s588 = sand.u32 %s47, 1
        %s589 = smul.addr %s588, 128
        %s590 = scalar_lea.vmem [#allocation2], %s589
        // Predicated region
        $region77: #{tpu_custom_call.1} parent=75 // pred_check
          %p591 = pneg %p60
        $region78: #{tpu_custom_call.1} parent=75 // pred_check_branch
          %593 = sbr.rel (%p591) target = $region80
        $region79: #{tpu_custom_call.1} parent=75 // pred_region
          %595 = dma.done %s587, 2048
        $region80: #{tpu_custom_call.1} parent=75 // pred_fallthru
          _
        %s596 = sand.u32 %s39, 1
        %s597 = scalar_lea.sflag [#allocation6], %s596
        %s598 = sand.u32 %s73, 1
        %s599 = scalar_lea.vmem [#allocation5], %s598
        // Predicated region
        $region81: #{tpu_custom_call.1} parent=75 // pred_check
          %p600 = pneg %p86
        $region82: #{tpu_custom_call.1} parent=75 // pred_check_branch
          %602 = sbr.rel (%p600) target = $region84
        $region83: #{tpu_custom_call.1} parent=75 // pred_region
          %604 = dma.done %s597, 16
        $region84: #{tpu_custom_call.1} parent=75 // pred_fallthru
          _
        %s605 = sand.u32 %s39, 1
        %s606 = scalar_lea.sflag [#allocation6], %s605
        %s607 = sand.u32 %s99, 1
        %s608 = smul.addr %s607, 128
        %s609 = scalar_lea.vmem [#allocation7], %s608
        // Predicated region
        $region85: #{tpu_custom_call.1} parent=75 // pred_check
          %p610 = pneg %p112
        $region86: #{tpu_custom_call.1} parent=75 // pred_check_branch
          %612 = sbr.rel (%p610) target = $region88
        $region87: #{tpu_custom_call.1} parent=75 // pred_region
          %614 = dma.done %s606, 2048
        $region88: #{tpu_custom_call.1} parent=75 // pred_fallthru
          _
        // Predicated region
        $region89: #{tpu_custom_call.1} parent=75 // pred_check
          %p615 = pneg %p159
        $region90: #{tpu_custom_call.1} parent=75 // pred_check_branch
          %617 = sbr.rel (%p615) target = $region92
        $region91: #{tpu_custom_call.1} parent=75 // pred_region
          %619 = dma.done [#allocation9], 12288
        $region92: #{tpu_custom_call.1} parent=75 // pred_fallthru
          _
        // Predicated region
        $region93: #{tpu_custom_call.1} parent=75 // pred_check
          %p620 = pneg %p180
        $region94: #{tpu_custom_call.1} parent=75 // pred_check_branch
          %622 = sbr.rel (%p620) target = $region96
        $region95: #{tpu_custom_call.1} parent=75 // pred_region
          %624 = dma.done [#allocation9], 96
        $region96: #{tpu_custom_call.1} parent=75 // pred_fallthru
          _
        // Predicated region
        $region97: #{tpu_custom_call.1} parent=75 // pred_check
          %p625 = pneg %p201
        $region98: #{tpu_custom_call.1} parent=75 // pred_check_branch
          %627 = sbr.rel (%p625) target = $region100
        $region99: #{tpu_custom_call.1} parent=75 // pred_region
          %629 = dma.done [#allocation12], 8192
        $region100: #{tpu_custom_call.1} parent=75 // pred_fallthru
          _
        // Predicated region
        $region101: #{tpu_custom_call.1} parent=75 // pred_check
          %p630 = pneg %p222
        $region102: #{tpu_custom_call.1} parent=75 // pred_check_branch
          %632 = sbr.rel (%p630) target = $region104
        $region103: #{tpu_custom_call.1} parent=75 // pred_region
          %634 = dma.done [#allocation12], 64
        $region104: #{tpu_custom_call.1} parent=75 // pred_fallthru
          _
        // Predicated region
        $region105: #{tpu_custom_call.1} parent=75 // pred_check
          %p635 = pneg %p243
        $region106: #{tpu_custom_call.1} parent=75 // pred_check_branch
          %637 = sbr.rel (%p635) target = $region108
        $region107: #{tpu_custom_call.1} parent=75 // pred_region
          %639 = dma.done [#allocation15], 8192
        $region108: #{tpu_custom_call.1} parent=75 // pred_fallthru
          _
        // Predicated region
        $region109: #{tpu_custom_call.1} parent=75 // pred_check
          %p640 = pneg %p264
        $region110: #{tpu_custom_call.1} parent=75 // pred_check_branch
          %642 = sbr.rel (%p640) target = $region112
        $region111: #{tpu_custom_call.1} parent=75 // pred_region
          %644 = dma.done [#allocation15], 64
        $region112: #{tpu_custom_call.1} parent=75 // pred_fallthru
          _
        // Predicated region
        $region113: #{tpu_custom_call.1} parent=75 // pred_check
          %p645 = pneg %p285
        $region114: #{tpu_custom_call.1} parent=75 // pred_check_branch
          %647 = sbr.rel (%p645) target = $region116
        $region115: #{tpu_custom_call.1} parent=75 // pred_region
          %649 = dma.done [#allocation18], 8192
        $region116: #{tpu_custom_call.1} parent=75 // pred_fallthru
          _
        // Predicated region
        $region117: #{tpu_custom_call.1} parent=75 // pred_check
          %p650 = pneg %p306
        $region118: #{tpu_custom_call.1} parent=75 // pred_check_branch
          %652 = sbr.rel (%p650) target = $region120
        $region119: #{tpu_custom_call.1} parent=75 // pred_region
          %654 = dma.done [#allocation18], 32
        $region120: #{tpu_custom_call.1} parent=75 // pred_fallthru
          _
        // Predicated region
        $region121: #{tpu_custom_call.1} parent=75 // pred_check
          %p655 = pneg %p348
        $region122: #{tpu_custom_call.1} parent=75 // pred_check_branch
          %657 = sbr.rel (%p655) target = $region124
        $region123: #{tpu_custom_call.1} parent=75 // pred_region
          %659 = dma.done [#allocation21], 128
        $region124: #{tpu_custom_call.1} parent=75 // pred_fallthru
          _
        %s660 = sand.u32 %s47, 1
        %s661 = scalar_lea.sflag [#allocation3], %s660
        %s662 = sand.u32 %s47, 1
        %s663 = smul.addr %s662, 128
        %s664 = scalar_lea.vmem [#allocation2], %s663
        %p665 = pneg %p60
        %p666 = pneg %p57
        %s667 = sand.u32 %s39, 1
        %s668 = scalar_lea.sflag [#allocation6], %s667
        %s669 = sand.u32 %s73, 1
        %s670 = scalar_lea.vmem [#allocation5], %s669
        %p671 = pneg %p86
        %p672 = pneg %p83
        %s673 = sand.u32 %s39, 1
        %s674 = scalar_lea.sflag [#allocation6], %s673
        %s675 = sand.u32 %s99, 1
        %s676 = smul.addr %s675, 128
        %s677 = scalar_lea.vmem [#allocation7], %s676
        %p678 = pneg %p112
        %p679 = pneg %p109
        %p680 = scmp.lt.s32.totalorder %s39, 1
        %s681 = scalar_select %p680, %s39, 1
        %s682 = scalar_lea.vmem %s3, %s681
        %p683 = pneg %p138
        %p684 = pneg %p135
        %p685 = pneg %p159
        %p686 = pneg %p156
        %p687 = pneg %p180
        %p688 = pneg %p177
        %p689 = pneg %p201
        %p690 = pneg %p198
        %p691 = pneg %p222
        %p692 = pneg %p219
        %p693 = pneg %p243
        %p694 = pneg %p240
        %p695 = pneg %p264
        %p696 = pneg %p261
        %p697 = pneg %p285
        %p698 = pneg %p282
        %p699 = pneg %p306
        %p700 = pneg %p303
        %p701 = pneg %p327
        %p702 = pneg %p324
        %p703 = pneg %p348
        %p704 = pneg %p345
        %p705 = pneg %p374
        %p706 = pneg %p371
        %s707 = sand.u32 %s361, 1
        %s708 = scalar_lea.sflag [#allocation4], %s707
        %s709 = sand.u32 %s361, 1
        %s710 = smul.addr %s709, 128
        %s711 = scalar_lea.vmem [#allocation22], %s710
        %p712 = scmp.lt.s32.totalorder %s39, 1
        %s713 = scalar_select %p712, %s39, 1
        %s714 = scalar_lea.vmem %s3, %s713
        %v715 = vld [vmem:[%s590] sm:$0xff]
        %v716 = vld [vmem:[%s590 + $0x8] sm:$0xff]
        %v717 = vld [vmem:[%s590 + $0x10] sm:$0xff]
        %v718 = vld [vmem:[%s590 + $0x18] sm:$0xff]
        %v719 = vld [vmem:[%s590 + $0x20] sm:$0xff]
        %v720 = vld [vmem:[%s590 + $0x28] sm:$0xff]
        %v721 = vld [vmem:[%s590 + $0x30] sm:$0xff]
        %v722 = vld [vmem:[%s590 + $0x38] sm:$0xff]
        %v723 = vld [vmem:[%s590 + $0x40] sm:$0xff]
        %v724 = vld [vmem:[%s590 + $0x48] sm:$0xff]
        %v725 = vld [vmem:[%s590 + $0x50] sm:$0xff]
        %v726 = vld [vmem:[%s590 + $0x58] sm:$0xff]
        %v727 = vld [vmem:[%s590 + $0x60] sm:$0xff]
        %v728 = vld [vmem:[%s590 + $0x68] sm:$0xff]
        %v729 = vld [vmem:[%s590 + $0x70] sm:$0xff]
        %v730 = vld [vmem:[%s590 + $0x78] sm:$0xff]
        %v731 = vld [vmem:[%s609] sm:$0xff]
        %v732 = vld [vmem:[%s609 + $0x8] sm:$0xff]
        %v733 = vld [vmem:[%s609 + $0x10] sm:$0xff]
        %v734 = vld [vmem:[%s609 + $0x18] sm:$0xff]
        %v735 = vld [vmem:[%s609 + $0x20] sm:$0xff]
        %v736 = vld [vmem:[%s609 + $0x28] sm:$0xff]
        %v737 = vld [vmem:[%s609 + $0x30] sm:$0xff]
        %v738 = vld [vmem:[%s609 + $0x38] sm:$0xff]
        %v739 = vld [vmem:[%s609 + $0x40] sm:$0xff]
        %v740 = vld [vmem:[%s609 + $0x48] sm:$0xff]
        %v741 = vld [vmem:[%s609 + $0x50] sm:$0xff]
        %v742 = vld [vmem:[%s609 + $0x58] sm:$0xff]
        %v743 = vld [vmem:[%s609 + $0x60] sm:$0xff]
        %v744 = vld [vmem:[%s609 + $0x68] sm:$0xff]
        %v745 = vld [vmem:[%s609 + $0x70] sm:$0xff]
        %v746 = vld [vmem:[%s609 + $0x78] sm:$0xff]
        %v747 = vld [vmem:[%s599] sm:$0x1]
        %vm748 = vcmp.gt.f32.partialorder %v747, 0.0
        %v749 = vld [vmem:[%s714] sm:$0x1]
        %vm750 = vcmp.gt.f32.partialorder %v749, 0.0
        %v751 = vunpack.c.l.bf16 %v715
        %v752 = vunpack.c.h.bf16 %v715
        %v753 = vunpack.c.l.bf16 %v716
        %v754 = vunpack.c.h.bf16 %v716
        %v755 = vunpack.c.l.bf16 %v717
        %v756 = vunpack.c.h.bf16 %v717
        %v757 = vunpack.c.l.bf16 %v718
        %v758 = vunpack.c.h.bf16 %v718
        %v759 = vunpack.c.l.bf16 %v719
        %v760 = vunpack.c.h.bf16 %v719
        %v761 = vunpack.c.l.bf16 %v720
        %v762 = vunpack.c.h.bf16 %v720
        %v763 = vunpack.c.l.bf16 %v721
        %v764 = vunpack.c.h.bf16 %v721
        %v765 = vunpack.c.l.bf16 %v722
        %v766 = vunpack.c.h.bf16 %v722
        %v767 = vunpack.c.l.bf16 %v723
        %v768 = vunpack.c.h.bf16 %v723
        %v769 = vunpack.c.l.bf16 %v724
        %v770 = vunpack.c.h.bf16 %v724
        %v771 = vunpack.c.l.bf16 %v725
        %v772 = vunpack.c.h.bf16 %v725
        %v773 = vunpack.c.l.bf16 %v726
        %v774 = vunpack.c.h.bf16 %v726
        %v775 = vunpack.c.l.bf16 %v727
        %v776 = vunpack.c.h.bf16 %v727
        %v777 = vunpack.c.l.bf16 %v728
        %v778 = vunpack.c.h.bf16 %v728
        %v779 = vunpack.c.l.bf16 %v729
        %v780 = vunpack.c.h.bf16 %v729
        %v781 = vunpack.c.l.bf16 %v730
        %v782 = vunpack.c.h.bf16 %v730
        %v783 = vlaneseq
        %v784 = vshrl.u32 %v783, 7
        %v785 = vadd.s32 %v784, 8
        %v786 = vadd.s32 %v784, 16
        %v787 = vadd.s32 %v784, 24
        %v788 = vadd.s32 %v784, 32
        %v789 = vadd.s32 %v784, 40
        %v790 = vadd.s32 %v784, 48
        %v791 = vadd.s32 %v784, 56
        %v792 = vadd.s32 %v784, 64
        %v793 = vadd.s32 %v784, 72
        %v794 = vadd.s32 %v784, 80
        %v795 = vadd.s32 %v784, 88
        %v796 = vadd.s32 %v784, 96
        %v797 = vadd.s32 %v784, 104
        %v798 = vadd.s32 %v784, 112
        %v799 = vadd.s32 %v784, 120
        %v800 = vlaneseq
        %v801 = vand.u32 %v800, 127
        %v802 = vsel %vm748, 1, 0
        %v803 = vperm.slane %v802, 0
        %vm804 = vcmp.eq.s32.totalorder %v803, 1
        %vm805 = vcmp.le.s32.totalorder %v801, %v784
        %vm806 = vcmp.le.s32.totalorder %v801, %v785
        %vm807 = vcmp.le.s32.totalorder %v801, %v786
        %vm808 = vcmp.le.s32.totalorder %v801, %v787
        %vm809 = vcmp.le.s32.totalorder %v801, %v788
        %vm810 = vcmp.le.s32.totalorder %v801, %v789
        %vm811 = vcmp.le.s32.totalorder %v801, %v790
        %vm812 = vcmp.le.s32.totalorder %v801, %v791
        %vm813 = vcmp.le.s32.totalorder %v801, %v792
        %vm814 = vcmp.le.s32.totalorder %v801, %v793
        %vm815 = vcmp.le.s32.totalorder %v801, %v794
        %vm816 = vcmp.le.s32.totalorder %v801, %v795
        %vm817 = vcmp.le.s32.totalorder %v801, %v796
        %vm818 = vcmp.le.s32.totalorder %v801, %v797
        %vm819 = vcmp.le.s32.totalorder %v801, %v798
        %vm820 = vcmp.le.s32.totalorder %v801, %v799
        %vm821 = vmand %vm804, %vm805
        %vm822 = vmand %vm804, %vm806
        %vm823 = vmand %vm804, %vm807
        %vm824 = vmand %vm804, %vm808
        %vm825 = vmand %vm804, %vm809
        %vm826 = vmand %vm804, %vm810
        %vm827 = vmand %vm804, %vm811
        %vm828 = vmand %vm804, %vm812
        %vm829 = vmand %vm804, %vm813
        %vm830 = vmand %vm804, %vm814
        %vm831 = vmand %vm804, %vm815
        %vm832 = vmand %vm804, %vm816
        %vm833 = vmand %vm804, %vm817
        %vm834 = vmand %vm804, %vm818
        %vm835 = vmand %vm804, %vm819
        %vm836 = vmand %vm804, %vm820
        %v837 = vsel %vm821, 0.0, -1e+09
        %v838 = vsel %vm822, 0.0, -1e+09
        %v839 = vsel %vm823, 0.0, -1e+09
        %v840 = vsel %vm824, 0.0, -1e+09
        %v841 = vsel %vm825, 0.0, -1e+09
        %v842 = vsel %vm826, 0.0, -1e+09
        %v843 = vsel %vm827, 0.0, -1e+09
        %v844 = vsel %vm828, 0.0, -1e+09
        %v845 = vsel %vm829, 0.0, -1e+09
        %v846 = vsel %vm830, 0.0, -1e+09
        %v847 = vsel %vm831, 0.0, -1e+09
        %v848 = vsel %vm832, 0.0, -1e+09
        %v849 = vsel %vm833, 0.0, -1e+09
        %v850 = vsel %vm834, 0.0, -1e+09
        %v851 = vsel %vm835, 0.0, -1e+09
        %v852 = vsel %vm836, 0.0, -1e+09
        %v853 = vsel %vm750, 1, 0
        %v854 = vperm.slane %v853, 0
        %vm855 = vcmp.eq.s32.totalorder %v854, 1
        %v856 = vsel %vm855, 0.0, -1e+09
        %v857 = vld [vmem:[#allocation8] sm:$0xff]
        %v858 = vld [vmem:[#allocation8 + $0x8] sm:$0xff]
        %v859 = vld [vmem:[#allocation8 + $0x10] sm:$0xff]
        %v860 = vld [vmem:[#allocation8 + $0x18] sm:$0xff]
        %v861 = vld [vmem:[#allocation8 + $0x20] sm:$0xff]
        %v862 = vld [vmem:[#allocation8 + $0x28] sm:$0xff]
        %v863 = vld [vmem:[#allocation8 + $0x30] sm:$0xff]
        %v864 = vld [vmem:[#allocation8 + $0x38] sm:$0xff]
        %v865 = vld [vmem:[#allocation8 + $0x40] sm:$0xff]
        %v866 = vld [vmem:[#allocation8 + $0x48] sm:$0xff]
        %v867 = vld [vmem:[#allocation8 + $0x50] sm:$0xff]
        %v868 = vld [vmem:[#allocation8 + $0x58] sm:$0xff]
        %v869 = vld [vmem:[#allocation8 + $0x60] sm:$0xff]
        %v870 = vld [vmem:[#allocation8 + $0x68] sm:$0xff]
        %v871 = vld [vmem:[#allocation8 + $0x70] sm:$0xff]
        %v872 = vld [vmem:[#allocation8 + $0x78] sm:$0xff]
        %v873 = vld [vmem:[#allocation8 + $0x80] sm:$0xff]
        %v874 = vld [vmem:[#allocation8 + $0x88] sm:$0xff]
        %v875 = vld [vmem:[#allocation8 + $0x90] sm:$0xff]
        %v876 = vld [vmem:[#allocation8 + $0x98] sm:$0xff]
        %v877 = vld [vmem:[#allocation8 + $0xa0] sm:$0xff]
        %v878 = vld [vmem:[#allocation8 + $0xa8] sm:$0xff]
        %v879 = vld [vmem:[#allocation8 + $0xb0] sm:$0xff]
        %v880 = vld [vmem:[#allocation8 + $0xb8] sm:$0xff]
        %v881 = vld [vmem:[#allocation8 + $0xc0] sm:$0xff]
        %v882 = vld [vmem:[#allocation8 + $0xc8] sm:$0xff]
        %v883 = vld [vmem:[#allocation8 + $0xd0] sm:$0xff]
        %v884 = vld [vmem:[#allocation8 + $0xd8] sm:$0xff]
        %v885 = vld [vmem:[#allocation8 + $0xe0] sm:$0xff]
        %v886 = vld [vmem:[#allocation8 + $0xe8] sm:$0xff]
        %v887 = vld [vmem:[#allocation8 + $0xf0] sm:$0xff]
        %v888 = vld [vmem:[#allocation8 + $0xf8] sm:$0xff]
        %v889 = vld [vmem:[#allocation8 + $0x100] sm:$0xff]
        %v890 = vld [vmem:[#allocation8 + $0x108] sm:$0xff]
        %v891 = vld [vmem:[#allocation8 + $0x110] sm:$0xff]
        %v892 = vld [vmem:[#allocation8 + $0x118] sm:$0xff]
        %v893 = vld [vmem:[#allocation8 + $0x120] sm:$0xff]
        %v894 = vld [vmem:[#allocation8 + $0x128] sm:$0xff]
        %v895 = vld [vmem:[#allocation8 + $0x130] sm:$0xff]
        %v896 = vld [vmem:[#allocation8 + $0x138] sm:$0xff]
        %v897 = vld [vmem:[#allocation8 + $0x140] sm:$0xff]
        %v898 = vld [vmem:[#allocation8 + $0x148] sm:$0xff]
        %v899 = vld [vmem:[#allocation8 + $0x150] sm:$0xff]
        %v900 = vld [vmem:[#allocation8 + $0x158] sm:$0xff]
        %v901 = vld [vmem:[#allocation8 + $0x160] sm:$0xff]
        %v902 = vld [vmem:[#allocation8 + $0x168] sm:$0xff]
        %v903 = vld [vmem:[#allocation8 + $0x170] sm:$0xff]
        %v904 = vld [vmem:[#allocation8 + $0x178] sm:$0xff]
        %v905 = vld [vmem:[#allocation8 + $0x180] sm:$0xff]
        %v906 = vld [vmem:[#allocation8 + $0x188] sm:$0xff]
        %v907 = vld [vmem:[#allocation8 + $0x190] sm:$0xff]
        %v908 = vld [vmem:[#allocation8 + $0x198] sm:$0xff]
        %v909 = vld [vmem:[#allocation8 + $0x1a0] sm:$0xff]
        %v910 = vld [vmem:[#allocation8 + $0x1a8] sm:$0xff]
        %v911 = vld [vmem:[#allocation8 + $0x1b0] sm:$0xff]
        %v912 = vld [vmem:[#allocation8 + $0x1b8] sm:$0xff]
        %v913 = vld [vmem:[#allocation8 + $0x1c0] sm:$0xff]
        %v914 = vld [vmem:[#allocation8 + $0x1c8] sm:$0xff]
        %v915 = vld [vmem:[#allocation8 + $0x1d0] sm:$0xff]
        %v916 = vld [vmem:[#allocation8 + $0x1d8] sm:$0xff]
        %v917 = vld [vmem:[#allocation8 + $0x1e0] sm:$0xff]
        %v918 = vld [vmem:[#allocation8 + $0x1e8] sm:$0xff]
        %v919 = vld [vmem:[#allocation8 + $0x1f0] sm:$0xff]
        %v920 = vld [vmem:[#allocation8 + $0x1f8] sm:$0xff]
        %v921 = vld [vmem:[#allocation8 + $0x200] sm:$0xff]
        %v922 = vld [vmem:[#allocation8 + $0x208] sm:$0xff]
        %v923 = vld [vmem:[#allocation8 + $0x210] sm:$0xff]
        %v924 = vld [vmem:[#allocation8 + $0x218] sm:$0xff]
        %v925 = vld [vmem:[#allocation8 + $0x220] sm:$0xff]
        %v926 = vld [vmem:[#allocation8 + $0x228] sm:$0xff]
        %v927 = vld [vmem:[#allocation8 + $0x230] sm:$0xff]
        %v928 = vld [vmem:[#allocation8 + $0x238] sm:$0xff]
        %v929 = vld [vmem:[#allocation8 + $0x240] sm:$0xff]
        %v930 = vld [vmem:[#allocation8 + $0x248] sm:$0xff]
        %v931 = vld [vmem:[#allocation8 + $0x250] sm:$0xff]
        %v932 = vld [vmem:[#allocation8 + $0x258] sm:$0xff]
        %v933 = vld [vmem:[#allocation8 + $0x260] sm:$0xff]
        %v934 = vld [vmem:[#allocation8 + $0x268] sm:$0xff]
        %v935 = vld [vmem:[#allocation8 + $0x270] sm:$0xff]
        %v936 = vld [vmem:[#allocation8 + $0x278] sm:$0xff]
        %v937 = vld [vmem:[#allocation8 + $0x280] sm:$0xff]
        %v938 = vld [vmem:[#allocation8 + $0x288] sm:$0xff]
        %v939 = vld [vmem:[#allocation8 + $0x290] sm:$0xff]
        %v940 = vld [vmem:[#allocation8 + $0x298] sm:$0xff]
        %v941 = vld [vmem:[#allocation8 + $0x2a0] sm:$0xff]
        %v942 = vld [vmem:[#allocation8 + $0x2a8] sm:$0xff]
        %v943 = vld [vmem:[#allocation8 + $0x2b0] sm:$0xff]
        %v944 = vld [vmem:[#allocation8 + $0x2b8] sm:$0xff]
        %v945 = vld [vmem:[#allocation8 + $0x2c0] sm:$0xff]
        %v946 = vld [vmem:[#allocation8 + $0x2c8] sm:$0xff]
        %v947 = vld [vmem:[#allocation8 + $0x2d0] sm:$0xff]
        %v948 = vld [vmem:[#allocation8 + $0x2d8] sm:$0xff]
        %v949 = vld [vmem:[#allocation8 + $0x2e0] sm:$0xff]
        %v950 = vld [vmem:[#allocation8 + $0x2e8] sm:$0xff]
        %v951 = vld [vmem:[#allocation8 + $0x2f0] sm:$0xff]
        %v952 = vld [vmem:[#allocation8 + $0x2f8] sm:$0xff]
        %v953 = vld [vmem:[#allocation10] sm:$0x3f]
        %v955 = vperm.slane %v953, 0
        %v956 = vperm.slane %v953, 1
        %v957 = vperm.slane %v953, 2
        %v958 = vperm.slane %v953, 3
        %v959 = vperm.slane %v953, 4
        %v960 = vperm.slane %v953, 5
        %v983 = vunpack.c.l.b16 %v715
        %v984 = vunpack.c.h.b16 %v715
        %v985 = vunpack.c.l.b16 %v716
        %v986 = vunpack.c.h.b16 %v716
        %v987 = vunpack.c.l.b16 %v717
        %v988 = vunpack.c.h.b16 %v717
        %v989 = vunpack.c.l.b16 %v718
        %v990 = vunpack.c.h.b16 %v718
        %v991 = vunpack.c.l.b16 %v719
        %v992 = vunpack.c.h.b16 %v719
        %v993 = vunpack.c.l.b16 %v720
        %v994 = vunpack.c.h.b16 %v720
        %v995 = vunpack.c.l.b16 %v721
        %v996 = vunpack.c.h.b16 %v721
        %v997 = vunpack.c.l.b16 %v722
        %v998 = vunpack.c.h.b16 %v722
        %v999 = vunpack.c.l.b16 %v723
        %v1000 = vunpack.c.h.b16 %v723
        %v1001 = vunpack.c.l.b16 %v724
        %v1002 = vunpack.c.h.b16 %v724
        %v1003 = vunpack.c.l.b16 %v725
        %v1004 = vunpack.c.h.b16 %v725
        %v1005 = vunpack.c.l.b16 %v726
        %v1006 = vunpack.c.h.b16 %v726
        %v1007 = vunpack.c.l.b16 %v727
        %v1008 = vunpack.c.h.b16 %v727
        %v1009 = vunpack.c.l.b16 %v728
        %v1010 = vunpack.c.h.b16 %v728
        %v1011 = vunpack.c.l.b16 %v729
        %v1012 = vunpack.c.h.b16 %v729
        %v1013 = vunpack.c.l.b16 %v730
        %v1014 = vunpack.c.h.b16 %v730
        %v1015 = vpack.c.b16 %v985, %v983
        %v1016 = vpack.c.b16 %v986, %v984
        %v1017 = vpack.c.b16 %v989, %v987
        %v1018 = vpack.c.b16 %v990, %v988
        %v1019 = vpack.c.b16 %v993, %v991
        %v1020 = vpack.c.b16 %v994, %v992
        %v1021 = vpack.c.b16 %v997, %v995
        %v1022 = vpack.c.b16 %v998, %v996
        %v1023 = vpack.c.b16 %v1001, %v999
        %v1024 = vpack.c.b16 %v1002, %v1000
        %v1025 = vpack.c.b16 %v1005, %v1003
        %v1026 = vpack.c.b16 %v1006, %v1004
        %v1027 = vpack.c.b16 %v1009, %v1007
        %v1028 = vpack.c.b16 %v1010, %v1008
        %v1029 = vpack.c.b16 %v1013, %v1011
        %v1030 = vpack.c.b16 %v1014, %v1012
        %v1143 = vunpack.c.l.b16 %v857
        %v1144 = vunpack.c.h.b16 %v857
        %v1145 = vunpack.c.l.b16 %v858
        %v1146 = vunpack.c.h.b16 %v858
        %v1147 = vunpack.c.l.b16 %v859
        %v1148 = vunpack.c.h.b16 %v859
        %v1149 = vunpack.c.l.b16 %v860
        %v1150 = vunpack.c.h.b16 %v860
        %v1151 = vunpack.c.l.b16 %v861
        %v1152 = vunpack.c.h.b16 %v861
        %v1153 = vunpack.c.l.b16 %v862
        %v1154 = vunpack.c.h.b16 %v862
        %v1155 = vunpack.c.l.b16 %v863
        %v1156 = vunpack.c.h.b16 %v863
        %v1157 = vunpack.c.l.b16 %v864
        %v1158 = vunpack.c.h.b16 %v864
        %v1159 = vunpack.c.l.b16 %v865
        %v1160 = vunpack.c.h.b16 %v865
        %v1161 = vunpack.c.l.b16 %v866
        %v1162 = vunpack.c.h.b16 %v866
        %v1163 = vunpack.c.l.b16 %v867
        %v1164 = vunpack.c.h.b16 %v867
        %v1165 = vunpack.c.l.b16 %v868
        %v1166 = vunpack.c.h.b16 %v868
        %v1167 = vunpack.c.l.b16 %v869
        %v1168 = vunpack.c.h.b16 %v869
        %v1169 = vunpack.c.l.b16 %v870
        %v1170 = vunpack.c.h.b16 %v870
        %v1171 = vunpack.c.l.b16 %v871
        %v1172 = vunpack.c.h.b16 %v871
        %v1173 = vunpack.c.l.b16 %v872
        %v1174 = vunpack.c.h.b16 %v872
        %v1175 = vunpack.c.l.b16 %v873
        %v1176 = vunpack.c.h.b16 %v873
        %v1177 = vunpack.c.l.b16 %v874
        %v1178 = vunpack.c.h.b16 %v874
        %v1179 = vunpack.c.l.b16 %v875
        %v1180 = vunpack.c.h.b16 %v875
        %v1181 = vunpack.c.l.b16 %v876
        %v1182 = vunpack.c.h.b16 %v876
        %v1183 = vunpack.c.l.b16 %v877
        %v1184 = vunpack.c.h.b16 %v877
        %v1185 = vunpack.c.l.b16 %v878
        %v1186 = vunpack.c.h.b16 %v878
        %v1187 = vunpack.c.l.b16 %v879
        %v1188 = vunpack.c.h.b16 %v879
        %v1189 = vunpack.c.l.b16 %v880
        %v1190 = vunpack.c.h.b16 %v880
        %v1191 = vunpack.c.l.b16 %v881
        %v1192 = vunpack.c.h.b16 %v881
        %v1193 = vunpack.c.l.b16 %v882
        %v1194 = vunpack.c.h.b16 %v882
        %v1195 = vunpack.c.l.b16 %v883
        %v1196 = vunpack.c.h.b16 %v883
        %v1197 = vunpack.c.l.b16 %v884
        %v1198 = vunpack.c.h.b16 %v884
        %v1199 = vunpack.c.l.b16 %v885
        %v1200 = vunpack.c.h.b16 %v885
        %v1201 = vunpack.c.l.b16 %v886
        %v1202 = vunpack.c.h.b16 %v886
        %v1203 = vunpack.c.l.b16 %v887
        %v1204 = vunpack.c.h.b16 %v887
        %v1205 = vunpack.c.l.b16 %v888
        %v1206 = vunpack.c.h.b16 %v888
        %v1207 = vunpack.c.l.b16 %v889
        %v1208 = vunpack.c.h.b16 %v889
        %v1209 = vunpack.c.l.b16 %v890
        %v1210 = vunpack.c.h.b16 %v890
        %v1211 = vunpack.c.l.b16 %v891
        %v1212 = vunpack.c.h.b16 %v891
        %v1213 = vunpack.c.l.b16 %v892
        %v1214 = vunpack.c.h.b16 %v892
        %v1215 = vunpack.c.l.b16 %v893
        %v1216 = vunpack.c.h.b16 %v893
        %v1217 = vunpack.c.l.b16 %v894
        %v1218 = vunpack.c.h.b16 %v894
        %v1219 = vunpack.c.l.b16 %v895
        %v1220 = vunpack.c.h.b16 %v895
        %v1221 = vunpack.c.l.b16 %v896
        %v1222 = vunpack.c.h.b16 %v896
        %v1223 = vunpack.c.l.b16 %v897
        %v1224 = vunpack.c.h.b16 %v897
        %v1225 = vunpack.c.l.b16 %v898
        %v1226 = vunpack.c.h.b16 %v898
        %v1227 = vunpack.c.l.b16 %v899
        %v1228 = vunpack.c.h.b16 %v899
        %v1229 = vunpack.c.l.b16 %v900
        %v1230 = vunpack.c.h.b16 %v900
        %v1231 = vunpack.c.l.b16 %v901
        %v1232 = vunpack.c.h.b16 %v901
        %v1233 = vunpack.c.l.b16 %v902
        %v1234 = vunpack.c.h.b16 %v902
        %v1235 = vunpack.c.l.b16 %v903
        %v1236 = vunpack.c.h.b16 %v903
        %v1237 = vunpack.c.l.b16 %v904
        %v1238 = vunpack.c.h.b16 %v904
        %v1239 = vunpack.c.l.b16 %v905
        %v1240 = vunpack.c.h.b16 %v905
        %v1241 = vunpack.c.l.b16 %v906
        %v1242 = vunpack.c.h.b16 %v906
        %v1243 = vunpack.c.l.b16 %v907
        %v1244 = vunpack.c.h.b16 %v907
        %v1245 = vunpack.c.l.b16 %v908
        %v1246 = vunpack.c.h.b16 %v908
        %v1247 = vunpack.c.l.b16 %v909
        %v1248 = vunpack.c.h.b16 %v909
        %v1249 = vunpack.c.l.b16 %v910
        %v1250 = vunpack.c.h.b16 %v910
        %v1251 = vunpack.c.l.b16 %v911
        %v1252 = vunpack.c.h.b16 %v911
        %v1253 = vunpack.c.l.b16 %v912
        %v1254 = vunpack.c.h.b16 %v912
        %v1255 = vunpack.c.l.b16 %v913
        %v1256 = vunpack.c.h.b16 %v913
        %v1257 = vunpack.c.l.b16 %v914
        %v1258 = vunpack.c.h.b16 %v914
        %v1259 = vunpack.c.l.b16 %v915
        %v1260 = vunpack.c.h.b16 %v915
        %v1261 = vunpack.c.l.b16 %v916
        %v1262 = vunpack.c.h.b16 %v916
        %v1263 = vunpack.c.l.b16 %v917
        %v1264 = vunpack.c.h.b16 %v917
        %v1265 = vunpack.c.l.b16 %v918
        %v1266 = vunpack.c.h.b16 %v918
        %v1267 = vunpack.c.l.b16 %v919
        %v1268 = vunpack.c.h.b16 %v919
        %v1269 = vunpack.c.l.b16 %v920
        %v1270 = vunpack.c.h.b16 %v920
        %v1271 = vunpack.c.l.b16 %v921
        %v1272 = vunpack.c.h.b16 %v921
        %v1273 = vunpack.c.l.b16 %v922
        %v1274 = vunpack.c.h.b16 %v922
        %v1275 = vunpack.c.l.b16 %v923
        %v1276 = vunpack.c.h.b16 %v923
        %v1277 = vunpack.c.l.b16 %v924
        %v1278 = vunpack.c.h.b16 %v924
        %v1279 = vunpack.c.l.b16 %v925
        %v1280 = vunpack.c.h.b16 %v925
        %v1281 = vunpack.c.l.b16 %v926
        %v1282 = vunpack.c.h.b16 %v926
        %v1283 = vunpack.c.l.b16 %v927
        %v1284 = vunpack.c.h.b16 %v927
        %v1285 = vunpack.c.l.b16 %v928
        %v1286 = vunpack.c.h.b16 %v928
        %v1287 = vunpack.c.l.b16 %v929
        %v1288 = vunpack.c.h.b16 %v929
        %v1289 = vunpack.c.l.b16 %v930
        %v1290 = vunpack.c.h.b16 %v930
        %v1291 = vunpack.c.l.b16 %v931
        %v1292 = vunpack.c.h.b16 %v931
        %v1293 = vunpack.c.l.b16 %v932
        %v1294 = vunpack.c.h.b16 %v932
        %v1295 = vunpack.c.l.b16 %v933
        %v1296 = vunpack.c.h.b16 %v933
        %v1297 = vunpack.c.l.b16 %v934
        %v1298 = vunpack.c.h.b16 %v934
        %v1299 = vunpack.c.l.b16 %v935
        %v1300 = vunpack.c.h.b16 %v935
        %v1301 = vunpack.c.l.b16 %v936
        %v1302 = vunpack.c.h.b16 %v936
        %v1303 = vunpack.c.l.b16 %v937
        %v1304 = vunpack.c.h.b16 %v937
        %v1305 = vunpack.c.l.b16 %v938
        %v1306 = vunpack.c.h.b16 %v938
        %v1307 = vunpack.c.l.b16 %v939
        %v1308 = vunpack.c.h.b16 %v939
        %v1309 = vunpack.c.l.b16 %v940
        %v1310 = vunpack.c.h.b16 %v940
        %v1311 = vunpack.c.l.b16 %v941
        %v1312 = vunpack.c.h.b16 %v941
        %v1313 = vunpack.c.l.b16 %v942
        %v1314 = vunpack.c.h.b16 %v942
        %v1315 = vunpack.c.l.b16 %v943
        %v1316 = vunpack.c.h.b16 %v943
        %v1317 = vunpack.c.l.b16 %v944
        %v1318 = vunpack.c.h.b16 %v944
        %v1319 = vunpack.c.l.b16 %v945
        %v1320 = vunpack.c.h.b16 %v945
        %v1321 = vunpack.c.l.b16 %v946
        %v1322 = vunpack.c.h.b16 %v946
        %v1323 = vunpack.c.l.b16 %v947
        %v1324 = vunpack.c.h.b16 %v947
        %v1325 = vunpack.c.l.b16 %v948
        %v1326 = vunpack.c.h.b16 %v948
        %v1327 = vunpack.c.l.b16 %v949
        %v1328 = vunpack.c.h.b16 %v949
        %v1329 = vunpack.c.l.b16 %v950
        %v1330 = vunpack.c.h.b16 %v950
        %v1331 = vunpack.c.l.b16 %v951
        %v1332 = vunpack.c.h.b16 %v951
        %v1333 = vunpack.c.l.b16 %v952
        %v1334 = vunpack.c.h.b16 %v952
        %v1335 = vpack.c.b16 %v1149, %v1143
        %v1336 = vpack.c.b16 %v1150, %v1144
        %v1337 = vpack.c.b16 %v1151, %v1145
        %v1338 = vpack.c.b16 %v1152, %v1146
        %v1339 = vpack.c.b16 %v1153, %v1147
        %v1340 = vpack.c.b16 %v1154, %v1148
        %v1341 = vpack.c.b16 %v1161, %v1155
        %v1342 = vpack.c.b16 %v1162, %v1156
        %v1343 = vpack.c.b16 %v1163, %v1157
        %v1344 = vpack.c.b16 %v1164, %v1158
        %v1345 = vpack.c.b16 %v1165, %v1159
        %v1346 = vpack.c.b16 %v1166, %v1160
        %v1347 = vpack.c.b16 %v1173, %v1167
        %v1348 = vpack.c.b16 %v1174, %v1168
        %v1349 = vpack.c.b16 %v1175, %v1169
        %v1350 = vpack.c.b16 %v1176, %v1170
        %v1351 = vpack.c.b16 %v1177, %v1171
        %v1352 = vpack.c.b16 %v1178, %v1172
        %v1353 = vpack.c.b16 %v1185, %v1179
        %v1354 = vpack.c.b16 %v1186, %v1180
        %v1355 = vpack.c.b16 %v1187, %v1181
        %v1356 = vpack.c.b16 %v1188, %v1182
        %v1357 = vpack.c.b16 %v1189, %v1183
        %v1358 = vpack.c.b16 %v1190, %v1184
        %v1359 = vpack.c.b16 %v1197, %v1191
        %v1360 = vpack.c.b16 %v1198, %v1192
        %v1361 = vpack.c.b16 %v1199, %v1193
        %v1362 = vpack.c.b16 %v1200, %v1194
        %v1363 = vpack.c.b16 %v1201, %v1195
        %v1364 = vpack.c.b16 %v1202, %v1196
        %v1365 = vpack.c.b16 %v1209, %v1203
        %v1366 = vpack.c.b16 %v1210, %v1204
        %v1367 = vpack.c.b16 %v1211, %v1205
        %v1368 = vpack.c.b16 %v1212, %v1206
        %v1369 = vpack.c.b16 %v1213, %v1207
        %v1370 = vpack.c.b16 %v1214, %v1208
        %v1371 = vpack.c.b16 %v1221, %v1215
        %v1372 = vpack.c.b16 %v1222, %v1216
        %v1373 = vpack.c.b16 %v1223, %v1217
        %v1374 = vpack.c.b16 %v1224, %v1218
        %v1375 = vpack.c.b16 %v1225, %v1219
        %v1376 = vpack.c.b16 %v1226, %v1220
        %v1377 = vpack.c.b16 %v1233, %v1227
        %v1378 = vpack.c.b16 %v1234, %v1228
        %v1379 = vpack.c.b16 %v1235, %v1229
        %v1380 = vpack.c.b16 %v1236, %v1230
        %v1381 = vpack.c.b16 %v1237, %v1231
        %v1382 = vpack.c.b16 %v1238, %v1232
        %v1383 = vpack.c.b16 %v1245, %v1239
        %v1384 = vpack.c.b16 %v1246, %v1240
        %v1385 = vpack.c.b16 %v1247, %v1241
        %v1386 = vpack.c.b16 %v1248, %v1242
        %v1387 = vpack.c.b16 %v1249, %v1243
        %v1388 = vpack.c.b16 %v1250, %v1244
        %v1389 = vpack.c.b16 %v1257, %v1251
        %v1390 = vpack.c.b16 %v1258, %v1252
        %v1391 = vpack.c.b16 %v1259, %v1253
        %v1392 = vpack.c.b16 %v1260, %v1254
        %v1393 = vpack.c.b16 %v1261, %v1255
        %v1394 = vpack.c.b16 %v1262, %v1256
        %v1395 = vpack.c.b16 %v1269, %v1263
        %v1396 = vpack.c.b16 %v1270, %v1264
        %v1397 = vpack.c.b16 %v1271, %v1265
        %v1398 = vpack.c.b16 %v1272, %v1266
        %v1399 = vpack.c.b16 %v1273, %v1267
        %v1400 = vpack.c.b16 %v1274, %v1268
        %v1401 = vpack.c.b16 %v1281, %v1275
        %v1402 = vpack.c.b16 %v1282, %v1276
        %v1403 = vpack.c.b16 %v1283, %v1277
        %v1404 = vpack.c.b16 %v1284, %v1278
        %v1405 = vpack.c.b16 %v1285, %v1279
        %v1406 = vpack.c.b16 %v1286, %v1280
        %v1407 = vpack.c.b16 %v1293, %v1287
        %v1408 = vpack.c.b16 %v1294, %v1288
        %v1409 = vpack.c.b16 %v1295, %v1289
        %v1410 = vpack.c.b16 %v1296, %v1290
        %v1411 = vpack.c.b16 %v1297, %v1291
        %v1412 = vpack.c.b16 %v1298, %v1292
        %v1413 = vpack.c.b16 %v1305, %v1299
        %v1414 = vpack.c.b16 %v1306, %v1300
        %v1415 = vpack.c.b16 %v1307, %v1301
        %v1416 = vpack.c.b16 %v1308, %v1302
        %v1417 = vpack.c.b16 %v1309, %v1303
        %v1418 = vpack.c.b16 %v1310, %v1304
        %v1419 = vpack.c.b16 %v1317, %v1311
        %v1420 = vpack.c.b16 %v1318, %v1312
        %v1421 = vpack.c.b16 %v1319, %v1313
        %v1422 = vpack.c.b16 %v1320, %v1314
        %v1423 = vpack.c.b16 %v1321, %v1315
        %v1424 = vpack.c.b16 %v1322, %v1316
        %v1425 = vpack.c.b16 %v1329, %v1323
        %v1426 = vpack.c.b16 %v1330, %v1324
        %v1427 = vpack.c.b16 %v1331, %v1325
        %v1428 = vpack.c.b16 %v1332, %v1326
        %v1429 = vpack.c.b16 %v1333, %v1327
        %v1430 = vpack.c.b16 %v1334, %v1328
        %1527 = vmatpush.bf16.msra.mxu0 %v1377
        %1528 = vmatpush.bf16.msra.mxu0 %v1371
        %1529 = vmatpush.bf16.msra.mxu0 %v1365
        %1530 = vmatpush.bf16.msra.mxu0 %v1359
        %1531 = vmatpush.bf16.msra.mxu0 %v1353
        %1532 = vmatpush.bf16.msra.mxu0 %v1347
        %1533 = vmatpush.bf16.msra.mxu0 %v1341
        %1534 = vmatpush.bf16.msra.mxu0 %v1335
        %1535 = vmatmul.bf16.gmra.mxu0 %v1015
        %v1536 = vpop.f32.mrf.mxu0
        %v1537 = vadd.f32 %v955, %v1536
        %v1538 = vpop.f32.mrf.mxu0
        %v1539 = vadd.f32 %v955, %v1538
        %1540 = vmatmul.bf16.gmra.mxu0 %v1017
        %v1541 = vpop.f32.mrf.mxu0
        %v1542 = vadd.f32 %v955, %v1541
        %v1543 = vpop.f32.mrf.mxu0
        %v1544 = vadd.f32 %v955, %v1543
        %1545 = vmatmul.bf16.gmra.mxu0 %v1019
        %v1546 = vpop.f32.mrf.mxu0
        %v1547 = vadd.f32 %v955, %v1546
        %v1548 = vpop.f32.mrf.mxu0
        %v1549 = vadd.f32 %v955, %v1548
        %1550 = vmatmul.bf16.gmra.mxu0 %v1021
        %v1551 = vpop.f32.mrf.mxu0
        %v1552 = vadd.f32 %v955, %v1551
        %v1553 = vpop.f32.mrf.mxu0
        %v1554 = vadd.f32 %v955, %v1553
        %1555 = vmatmul.bf16.gmra.mxu0 %v1023
        %v1556 = vpop.f32.mrf.mxu0
        %v1557 = vadd.f32 %v955, %v1556
        %v1558 = vpop.f32.mrf.mxu0
        %v1559 = vadd.f32 %v955, %v1558
        %1560 = vmatmul.bf16.gmra.mxu0 %v1025
        %v1561 = vpop.f32.mrf.mxu0
        %v1562 = vadd.f32 %v955, %v1561
        %v1563 = vpop.f32.mrf.mxu0
        %v1564 = vadd.f32 %v955, %v1563
        %1565 = vmatmul.bf16.gmra.mxu0 %v1027
        %v1566 = vpop.f32.mrf.mxu0
        %v1567 = vadd.f32 %v955, %v1566
        %v1568 = vpop.f32.mrf.mxu0
        %v1569 = vadd.f32 %v955, %v1568
        %1570 = vmatmul.bf16.gmra.mxu0 %v1029
        %v1571 = vpop.f32.mrf.mxu0
        %v1572 = vadd.f32 %v955, %v1571
        %v1573 = vpop.f32.mrf.mxu0
        %v1574 = vadd.f32 %v955, %v1573
        %1575 = vdwg.mxu0
        %1576 = vmatpush.bf16.msra.mxu0 %v1425
        %1577 = vmatpush.bf16.msra.mxu0 %v1419
        %1578 = vmatpush.bf16.msra.mxu0 %v1413
        %1579 = vmatpush.bf16.msra.mxu0 %v1407
        %1580 = vmatpush.bf16.msra.mxu0 %v1401
        %1581 = vmatpush.bf16.msra.mxu0 %v1395
        %1582 = vmatpush.bf16.msra.mxu0 %v1389
        %1583 = vmatpush.bf16.msra.mxu0 %v1383
        %1584 = vmatmul.bf16.gmra.mxu0 %v1016
        %v1585 = vpop.f32.mrf.mxu0
        %v1586 = vadd.f32 %v1537, %v1585
        %v1587 = vpop.f32.mrf.mxu0
        %v1588 = vadd.f32 %v1539, %v1587
        %1589 = vmatmul.bf16.gmra.mxu0 %v1018
        %v1590 = vpop.f32.mrf.mxu0
        %v1591 = vadd.f32 %v1542, %v1590
        %v1592 = vpop.f32.mrf.mxu0
        %v1593 = vadd.f32 %v1544, %v1592
        %1594 = vmatmul.bf16.gmra.mxu0 %v1020
        %v1595 = vpop.f32.mrf.mxu0
        %v1596 = vadd.f32 %v1547, %v1595
        %v1597 = vpop.f32.mrf.mxu0
        %v1598 = vadd.f32 %v1549, %v1597
        %1599 = vmatmul.bf16.gmra.mxu0 %v1022
        %v1600 = vpop.f32.mrf.mxu0
        %v1601 = vadd.f32 %v1552, %v1600
        %v1602 = vpop.f32.mrf.mxu0
        %v1603 = vadd.f32 %v1554, %v1602
        %1604 = vmatmul.bf16.gmra.mxu0 %v1024
        %v1605 = vpop.f32.mrf.mxu0
        %v1606 = vadd.f32 %v1557, %v1605
        %v1607 = vpop.f32.mrf.mxu0
        %v1608 = vadd.f32 %v1559, %v1607
        %1609 = vmatmul.bf16.gmra.mxu0 %v1026
        %v1610 = vpop.f32.mrf.mxu0
        %v1611 = vadd.f32 %v1562, %v1610
        %v1612 = vpop.f32.mrf.mxu0
        %v1613 = vadd.f32 %v1564, %v1612
        %1614 = vmatmul.bf16.gmra.mxu0 %v1028
        %v1615 = vpop.f32.mrf.mxu0
        %v1616 = vadd.f32 %v1567, %v1615
        %v1617 = vpop.f32.mrf.mxu0
        %v1618 = vadd.f32 %v1569, %v1617
        %1619 = vmatmul.bf16.gmra.mxu0 %v1030
        %v1620 = vpop.f32.mrf.mxu0
        %v1621 = vadd.f32 %v1572, %v1620
        %v1622 = vpop.f32.mrf.mxu0
        %v1623 = vadd.f32 %v1574, %v1622
        %1624 = vdwg.mxu0
        %1625 = vmatpush.bf16.msra.mxu0 %v1378
        %1626 = vmatpush.bf16.msra.mxu0 %v1372
        %1627 = vmatpush.bf16.msra.mxu0 %v1366
        %1628 = vmatpush.bf16.msra.mxu0 %v1360
        %1629 = vmatpush.bf16.msra.mxu0 %v1354
        %1630 = vmatpush.bf16.msra.mxu0 %v1348
        %1631 = vmatpush.bf16.msra.mxu0 %v1342
        %1632 = vmatpush.bf16.msra.mxu0 %v1336
        %1633 = vmatmul.bf16.gmra.mxu0 %v1015
        %v1634 = vpop.f32.mrf.mxu0
        %v1635 = vadd.f32 %v956, %v1634
        %v1636 = vpop.f32.mrf.mxu0
        %v1637 = vadd.f32 %v956, %v1636
        %1638 = vmatmul.bf16.gmra.mxu0 %v1017
        %v1639 = vpop.f32.mrf.mxu0
        %v1640 = vadd.f32 %v956, %v1639
        %v1641 = vpop.f32.mrf.mxu0
        %v1642 = vadd.f32 %v956, %v1641
        %1643 = vmatmul.bf16.gmra.mxu0 %v1019
        %v1644 = vpop.f32.mrf.mxu0
        %v1645 = vadd.f32 %v956, %v1644
        %v1646 = vpop.f32.mrf.mxu0
        %v1647 = vadd.f32 %v956, %v1646
        %1648 = vmatmul.bf16.gmra.mxu0 %v1021
        %v1649 = vpop.f32.mrf.mxu0
        %v1650 = vadd.f32 %v956, %v1649
        %v1651 = vpop.f32.mrf.mxu0
        %v1652 = vadd.f32 %v956, %v1651
        %1653 = vmatmul.bf16.gmra.mxu0 %v1023
        %v1654 = vpop.f32.mrf.mxu0
        %v1655 = vadd.f32 %v956, %v1654
        %v1656 = vpop.f32.mrf.mxu0
        %v1657 = vadd.f32 %v956, %v1656
        %1658 = vmatmul.bf16.gmra.mxu0 %v1025
        %v1659 = vpop.f32.mrf.mxu0
        %v1660 = vadd.f32 %v956, %v1659
        %v1661 = vpop.f32.mrf.mxu0
        %v1662 = vadd.f32 %v956, %v1661
        %1663 = vmatmul.bf16.gmra.mxu0 %v1027
        %v1664 = vpop.f32.mrf.mxu0
        %v1665 = vadd.f32 %v956, %v1664
        %v1666 = vpop.f32.mrf.mxu0
        %v1667 = vadd.f32 %v956, %v1666
        %1668 = vmatmul.bf16.gmra.mxu0 %v1029
        %v1669 = vpop.f32.mrf.mxu0
        %v1670 = vadd.f32 %v956, %v1669
        %v1671 = vpop.f32.mrf.mxu0
        %v1672 = vadd.f32 %v956, %v1671
        %1673 = vdwg.mxu0
        %1674 = vmatpush.bf16.msra.mxu0 %v1426
        %1675 = vmatpush.bf16.msra.mxu0 %v1420
        %1676 = vmatpush.bf16.msra.mxu0 %v1414
        %1677 = vmatpush.bf16.msra.mxu0 %v1408
        %1678 = vmatpush.bf16.msra.mxu0 %v1402
        %1679 = vmatpush.bf16.msra.mxu0 %v1396
        %1680 = vmatpush.bf16.msra.mxu0 %v1390
        %1681 = vmatpush.bf16.msra.mxu0 %v1384
        %1682 = vmatmul.bf16.gmra.mxu0 %v1016
        %v1683 = vpop.f32.mrf.mxu0
        %v1684 = vadd.f32 %v1635, %v1683
        %v1685 = vpop.f32.mrf.mxu0
        %v1686 = vadd.f32 %v1637, %v1685
        %1687 = vmatmul.bf16.gmra.mxu0 %v1018
        %v1688 = vpop.f32.mrf.mxu0
        %v1689 = vadd.f32 %v1640, %v1688
        %v1690 = vpop.f32.mrf.mxu0
        %v1691 = vadd.f32 %v1642, %v1690
        %1692 = vmatmul.bf16.gmra.mxu0 %v1020
        %v1693 = vpop.f32.mrf.mxu0
        %v1694 = vadd.f32 %v1645, %v1693
        %v1695 = vpop.f32.mrf.mxu0
        %v1696 = vadd.f32 %v1647, %v1695
        %1697 = vmatmul.bf16.gmra.mxu0 %v1022
        %v1698 = vpop.f32.mrf.mxu0
        %v1699 = vadd.f32 %v1650, %v1698
        %v1700 = vpop.f32.mrf.mxu0
        %v1701 = vadd.f32 %v1652, %v1700
        %1702 = vmatmul.bf16.gmra.mxu0 %v1024
        %v1703 = vpop.f32.mrf.mxu0
        %v1704 = vadd.f32 %v1655, %v1703
        %v1705 = vpop.f32.mrf.mxu0
        %v1706 = vadd.f32 %v1657, %v1705
        %1707 = vmatmul.bf16.gmra.mxu0 %v1026
        %v1708 = vpop.f32.mrf.mxu0
        %v1709 = vadd.f32 %v1660, %v1708
        %v1710 = vpop.f32.mrf.mxu0
        %v1711 = vadd.f32 %v1662, %v1710
        %1712 = vmatmul.bf16.gmra.mxu0 %v1028
        %v1713 = vpop.f32.mrf.mxu0
        %v1714 = vadd.f32 %v1665, %v1713
        %v1715 = vpop.f32.mrf.mxu0
        %v1716 = vadd.f32 %v1667, %v1715
        %1717 = vmatmul.bf16.gmra.mxu0 %v1030
        %v1718 = vpop.f32.mrf.mxu0
        %v1719 = vadd.f32 %v1670, %v1718
        %v1720 = vpop.f32.mrf.mxu0
        %v1721 = vadd.f32 %v1672, %v1720
        %1722 = vdwg.mxu0
        %1723 = vmatpush.bf16.msra.mxu0 %v1379
        %1724 = vmatpush.bf16.msra.mxu0 %v1373
        %1725 = vmatpush.bf16.msra.mxu0 %v1367
        %1726 = vmatpush.bf16.msra.mxu0 %v1361
        %1727 = vmatpush.bf16.msra.mxu0 %v1355
        %1728 = vmatpush.bf16.msra.mxu0 %v1349
        %1729 = vmatpush.bf16.msra.mxu0 %v1343
        %1730 = vmatpush.bf16.msra.mxu0 %v1337
        %1731 = vmatmul.bf16.gmra.mxu0 %v1015
        %v1732 = vpop.f32.mrf.mxu0
        %v1733 = vadd.f32 %v957, %v1732
        %v1734 = vpop.f32.mrf.mxu0
        %v1735 = vadd.f32 %v957, %v1734
        %1736 = vmatmul.bf16.gmra.mxu0 %v1017
        %v1737 = vpop.f32.mrf.mxu0
        %v1738 = vadd.f32 %v957, %v1737
        %v1739 = vpop.f32.mrf.mxu0
        %v1740 = vadd.f32 %v957, %v1739
        %1741 = vmatmul.bf16.gmra.mxu0 %v1019
        %v1742 = vpop.f32.mrf.mxu0
        %v1743 = vadd.f32 %v957, %v1742
        %v1744 = vpop.f32.mrf.mxu0
        %v1745 = vadd.f32 %v957, %v1744
        %1746 = vmatmul.bf16.gmra.mxu0 %v1021
        %v1747 = vpop.f32.mrf.mxu0
        %v1748 = vadd.f32 %v957, %v1747
        %v1749 = vpop.f32.mrf.mxu0
        %v1750 = vadd.f32 %v957, %v1749
        %1751 = vmatmul.bf16.gmra.mxu0 %v1023
        %v1752 = vpop.f32.mrf.mxu0
        %v1753 = vadd.f32 %v957, %v1752
        %v1754 = vpop.f32.mrf.mxu0
        %v1755 = vadd.f32 %v957, %v1754
        %1756 = vmatmul.bf16.gmra.mxu0 %v1025
        %v1757 = vpop.f32.mrf.mxu0
        %v1758 = vadd.f32 %v957, %v1757
        %v1759 = vpop.f32.mrf.mxu0
        %v1760 = vadd.f32 %v957, %v1759
        %1761 = vmatmul.bf16.gmra.mxu0 %v1027
        %v1762 = vpop.f32.mrf.mxu0
        %v1763 = vadd.f32 %v957, %v1762
        %v1764 = vpop.f32.mrf.mxu0
        %v1765 = vadd.f32 %v957, %v1764
        %1766 = vmatmul.bf16.gmra.mxu0 %v1029
        %v1767 = vpop.f32.mrf.mxu0
        %v1768 = vadd.f32 %v957, %v1767
        %v1769 = vpop.f32.mrf.mxu0
        %v1770 = vadd.f32 %v957, %v1769
        %1771 = vdwg.mxu0
        %1772 = vmatpush.bf16.msra.mxu0 %v1427
        %1773 = vmatpush.bf16.msra.mxu0 %v1421
        %1774 = vmatpush.bf16.msra.mxu0 %v1415
        %1775 = vmatpush.bf16.msra.mxu0 %v1409
        %1776 = vmatpush.bf16.msra.mxu0 %v1403
        %1777 = vmatpush.bf16.msra.mxu0 %v1397
        %1778 = vmatpush.bf16.msra.mxu0 %v1391
        %1779 = vmatpush.bf16.msra.mxu0 %v1385
        %1780 = vmatmul.bf16.gmra.mxu0 %v1016
        %v1781 = vpop.f32.mrf.mxu0
        %v1782 = vadd.f32 %v1733, %v1781
        %v1783 = vpop.f32.mrf.mxu0
        %v1784 = vadd.f32 %v1735, %v1783
        %1785 = vmatmul.bf16.gmra.mxu0 %v1018
        %v1786 = vpop.f32.mrf.mxu0
        %v1787 = vadd.f32 %v1738, %v1786
        %v1788 = vpop.f32.mrf.mxu0
        %v1789 = vadd.f32 %v1740, %v1788
        %1790 = vmatmul.bf16.gmra.mxu0 %v1020
        %v1791 = vpop.f32.mrf.mxu0
        %v1792 = vadd.f32 %v1743, %v1791
        %v1793 = vpop.f32.mrf.mxu0
        %v1794 = vadd.f32 %v1745, %v1793
        %1795 = vmatmul.bf16.gmra.mxu0 %v1022
        %v1796 = vpop.f32.mrf.mxu0
        %v1797 = vadd.f32 %v1748, %v1796
        %v1798 = vpop.f32.mrf.mxu0
        %v1799 = vadd.f32 %v1750, %v1798
        %1800 = vmatmul.bf16.gmra.mxu0 %v1024
        %v1801 = vpop.f32.mrf.mxu0
        %v1802 = vadd.f32 %v1753, %v1801
        %v1803 = vpop.f32.mrf.mxu0
        %v1804 = vadd.f32 %v1755, %v1803
        %1805 = vmatmul.bf16.gmra.mxu0 %v1026
        %v1806 = vpop.f32.mrf.mxu0
        %v1807 = vadd.f32 %v1758, %v1806
        %v1808 = vpop.f32.mrf.mxu0
        %v1809 = vadd.f32 %v1760, %v1808
        %1810 = vmatmul.bf16.gmra.mxu0 %v1028
        %v1811 = vpop.f32.mrf.mxu0
        %v1812 = vadd.f32 %v1763, %v1811
        %v1813 = vpop.f32.mrf.mxu0
        %v1814 = vadd.f32 %v1765, %v1813
        %1815 = vmatmul.bf16.gmra.mxu0 %v1030
        %v1816 = vpop.f32.mrf.mxu0
        %v1817 = vadd.f32 %v1768, %v1816
        %v1818 = vpop.f32.mrf.mxu0
        %v1819 = vadd.f32 %v1770, %v1818
        %1820 = vdwg.mxu0
        %1821 = vmatpush.bf16.msra.mxu0 %v1380
        %1822 = vmatpush.bf16.msra.mxu0 %v1374
        %1823 = vmatpush.bf16.msra.mxu0 %v1368
        %1824 = vmatpush.bf16.msra.mxu0 %v1362
        %1825 = vmatpush.bf16.msra.mxu0 %v1356
        %1826 = vmatpush.bf16.msra.mxu0 %v1350
        %1827 = vmatpush.bf16.msra.mxu0 %v1344
        %1828 = vmatpush.bf16.msra.mxu0 %v1338
        %1829 = vmatmul.bf16.gmra.mxu0 %v1015
        %v1830 = vpop.f32.mrf.mxu0
        %v1831 = vadd.f32 %v958, %v1830
        %v1832 = vpop.f32.mrf.mxu0
        %v1833 = vadd.f32 %v958, %v1832
        %1834 = vmatmul.bf16.gmra.mxu0 %v1017
        %v1835 = vpop.f32.mrf.mxu0
        %v1836 = vadd.f32 %v958, %v1835
        %v1837 = vpop.f32.mrf.mxu0
        %v1838 = vadd.f32 %v958, %v1837
        %1839 = vmatmul.bf16.gmra.mxu0 %v1019
        %v1840 = vpop.f32.mrf.mxu0
        %v1841 = vadd.f32 %v958, %v1840
        %v1842 = vpop.f32.mrf.mxu0
        %v1843 = vadd.f32 %v958, %v1842
        %1844 = vmatmul.bf16.gmra.mxu0 %v1021
        %v1845 = vpop.f32.mrf.mxu0
        %v1846 = vadd.f32 %v958, %v1845
        %v1847 = vpop.f32.mrf.mxu0
        %v1848 = vadd.f32 %v958, %v1847
        %1849 = vmatmul.bf16.gmra.mxu0 %v1023
        %v1850 = vpop.f32.mrf.mxu0
        %v1851 = vadd.f32 %v958, %v1850
        %v1852 = vpop.f32.mrf.mxu0
        %v1853 = vadd.f32 %v958, %v1852
        %1854 = vmatmul.bf16.gmra.mxu0 %v1025
        %v1855 = vpop.f32.mrf.mxu0
        %v1856 = vadd.f32 %v958, %v1855
        %v1857 = vpop.f32.mrf.mxu0
        %v1858 = vadd.f32 %v958, %v1857
        %1859 = vmatmul.bf16.gmra.mxu0 %v1027
        %v1860 = vpop.f32.mrf.mxu0
        %v1861 = vadd.f32 %v958, %v1860
        %v1862 = vpop.f32.mrf.mxu0
        %v1863 = vadd.f32 %v958, %v1862
        %1864 = vmatmul.bf16.gmra.mxu0 %v1029
        %v1865 = vpop.f32.mrf.mxu0
        %v1866 = vadd.f32 %v958, %v1865
        %v1867 = vpop.f32.mrf.mxu0
        %v1868 = vadd.f32 %v958, %v1867
        %1869 = vdwg.mxu0
        %1870 = vmatpush.bf16.msra.mxu0 %v1428
        %1871 = vmatpush.bf16.msra.mxu0 %v1422
        %1872 = vmatpush.bf16.msra.mxu0 %v1416
        %1873 = vmatpush.bf16.msra.mxu0 %v1410
        %1874 = vmatpush.bf16.msra.mxu0 %v1404
        %1875 = vmatpush.bf16.msra.mxu0 %v1398
        %1876 = vmatpush.bf16.msra.mxu0 %v1392
        %1877 = vmatpush.bf16.msra.mxu0 %v1386
        %1878 = vmatmul.bf16.gmra.mxu0 %v1016
        %v1879 = vpop.f32.mrf.mxu0
        %v1880 = vadd.f32 %v1831, %v1879
        %v1881 = vpop.f32.mrf.mxu0
        %v1882 = vadd.f32 %v1833, %v1881
        %1883 = vmatmul.bf16.gmra.mxu0 %v1018
        %v1884 = vpop.f32.mrf.mxu0
        %v1885 = vadd.f32 %v1836, %v1884
        %v1886 = vpop.f32.mrf.mxu0
        %v1887 = vadd.f32 %v1838, %v1886
        %1888 = vmatmul.bf16.gmra.mxu0 %v1020
        %v1889 = vpop.f32.mrf.mxu0
        %v1890 = vadd.f32 %v1841, %v1889
        %v1891 = vpop.f32.mrf.mxu0
        %v1892 = vadd.f32 %v1843, %v1891
        %1893 = vmatmul.bf16.gmra.mxu0 %v1022
        %v1894 = vpop.f32.mrf.mxu0
        %v1895 = vadd.f32 %v1846, %v1894
        %v1896 = vpop.f32.mrf.mxu0
        %v1897 = vadd.f32 %v1848, %v1896
        %1898 = vmatmul.bf16.gmra.mxu0 %v1024
        %v1899 = vpop.f32.mrf.mxu0
        %v1900 = vadd.f32 %v1851, %v1899
        %v1901 = vpop.f32.mrf.mxu0
        %v1902 = vadd.f32 %v1853, %v1901
        %1903 = vmatmul.bf16.gmra.mxu0 %v1026
        %v1904 = vpop.f32.mrf.mxu0
        %v1905 = vadd.f32 %v1856, %v1904
        %v1906 = vpop.f32.mrf.mxu0
        %v1907 = vadd.f32 %v1858, %v1906
        %1908 = vmatmul.bf16.gmra.mxu0 %v1028
        %v1909 = vpop.f32.mrf.mxu0
        %v1910 = vadd.f32 %v1861, %v1909
        %v1911 = vpop.f32.mrf.mxu0
        %v1912 = vadd.f32 %v1863, %v1911
        %1913 = vmatmul.bf16.gmra.mxu0 %v1030
        %v1914 = vpop.f32.mrf.mxu0
        %v1915 = vadd.f32 %v1866, %v1914
        %v1916 = vpop.f32.mrf.mxu0
        %v1917 = vadd.f32 %v1868, %v1916
        %1918 = vdwg.mxu0
        %1919 = vmatpush.bf16.msra.mxu0 %v1381
        %1920 = vmatpush.bf16.msra.mxu0 %v1375
        %1921 = vmatpush.bf16.msra.mxu0 %v1369
        %1922 = vmatpush.bf16.msra.mxu0 %v1363
        %1923 = vmatpush.bf16.msra.mxu0 %v1357
        %1924 = vmatpush.bf16.msra.mxu0 %v1351
        %1925 = vmatpush.bf16.msra.mxu0 %v1345
        %1926 = vmatpush.bf16.msra.mxu0 %v1339
        %1927 = vmatmul.bf16.gmra.mxu0 %v1015
        %v1928 = vpop.f32.mrf.mxu0
        %v1929 = vadd.f32 %v959, %v1928
        %v1930 = vpop.f32.mrf.mxu0
        %v1931 = vadd.f32 %v959, %v1930
        %1932 = vmatmul.bf16.gmra.mxu0 %v1017
        %v1933 = vpop.f32.mrf.mxu0
        %v1934 = vadd.f32 %v959, %v1933
        %v1935 = vpop.f32.mrf.mxu0
        %v1936 = vadd.f32 %v959, %v1935
        %1937 = vmatmul.bf16.gmra.mxu0 %v1019
        %v1938 = vpop.f32.mrf.mxu0
        %v1939 = vadd.f32 %v959, %v1938
        %v1940 = vpop.f32.mrf.mxu0
        %v1941 = vadd.f32 %v959, %v1940
        %1942 = vmatmul.bf16.gmra.mxu0 %v1021
        %v1943 = vpop.f32.mrf.mxu0
        %v1944 = vadd.f32 %v959, %v1943
        %v1945 = vpop.f32.mrf.mxu0
        %v1946 = vadd.f32 %v959, %v1945
        %1947 = vmatmul.bf16.gmra.mxu0 %v1023
        %v1948 = vpop.f32.mrf.mxu0
        %v1949 = vadd.f32 %v959, %v1948
        %v1950 = vpop.f32.mrf.mxu0
        %v1951 = vadd.f32 %v959, %v1950
        %1952 = vmatmul.bf16.gmra.mxu0 %v1025
        %v1953 = vpop.f32.mrf.mxu0
        %v1954 = vadd.f32 %v959, %v1953
        %v1955 = vpop.f32.mrf.mxu0
        %v1956 = vadd.f32 %v959, %v1955
        %1957 = vmatmul.bf16.gmra.mxu0 %v1027
        %v1958 = vpop.f32.mrf.mxu0
        %v1959 = vadd.f32 %v959, %v1958
        %v1960 = vpop.f32.mrf.mxu0
        %v1961 = vadd.f32 %v959, %v1960
        %1962 = vmatmul.bf16.gmra.mxu0 %v1029
        %v1963 = vpop.f32.mrf.mxu0
        %v1964 = vadd.f32 %v959, %v1963
        %v1965 = vpop.f32.mrf.mxu0
        %v1966 = vadd.f32 %v959, %v1965
        %1967 = vdwg.mxu0
        %1968 = vmatpush.bf16.msra.mxu0 %v1429
        %1969 = vmatpush.bf16.msra.mxu0 %v1423
        %1970 = vmatpush.bf16.msra.mxu0 %v1417
        %1971 = vmatpush.bf16.msra.mxu0 %v1411
        %1972 = vmatpush.bf16.msra.mxu0 %v1405
        %1973 = vmatpush.bf16.msra.mxu0 %v1399
        %1974 = vmatpush.bf16.msra.mxu0 %v1393
        %1975 = vmatpush.bf16.msra.mxu0 %v1387
        %1976 = vmatmul.bf16.gmra.mxu0 %v1016
        %v1977 = vpop.f32.mrf.mxu0
        %v1978 = vadd.f32 %v1929, %v1977
        %v1979 = vpop.f32.mrf.mxu0
        %v1980 = vadd.f32 %v1931, %v1979
        %1981 = vmatmul.bf16.gmra.mxu0 %v1018
        %v1982 = vpop.f32.mrf.mxu0
        %v1983 = vadd.f32 %v1934, %v1982
        %v1984 = vpop.f32.mrf.mxu0
        %v1985 = vadd.f32 %v1936, %v1984
        %1986 = vmatmul.bf16.gmra.mxu0 %v1020
        %v1987 = vpop.f32.mrf.mxu0
        %v1988 = vadd.f32 %v1939, %v1987
        %v1989 = vpop.f32.mrf.mxu0
        %v1990 = vadd.f32 %v1941, %v1989
        %1991 = vmatmul.bf16.gmra.mxu0 %v1022
        %v1992 = vpop.f32.mrf.mxu0
        %v1993 = vadd.f32 %v1944, %v1992
        %v1994 = vpop.f32.mrf.mxu0
        %v1995 = vadd.f32 %v1946, %v1994
        %1996 = vmatmul.bf16.gmra.mxu0 %v1024
        %v1997 = vpop.f32.mrf.mxu0
        %v1998 = vadd.f32 %v1949, %v1997
        %v1999 = vpop.f32.mrf.mxu0
        %v2000 = vadd.f32 %v1951, %v1999
        %2001 = vmatmul.bf16.gmra.mxu0 %v1026
        %v2002 = vpop.f32.mrf.mxu0
        %v2003 = vadd.f32 %v1954, %v2002
        %v2004 = vpop.f32.mrf.mxu0
        %v2005 = vadd.f32 %v1956, %v2004
        %2006 = vmatmul.bf16.gmra.mxu0 %v1028
        %v2007 = vpop.f32.mrf.mxu0
        %v2008 = vadd.f32 %v1959, %v2007
        %v2009 = vpop.f32.mrf.mxu0
        %v2010 = vadd.f32 %v1961, %v2009
        %2011 = vmatmul.bf16.gmra.mxu0 %v1030
        %v2012 = vpop.f32.mrf.mxu0
        %v2013 = vadd.f32 %v1964, %v2012
        %v2014 = vpop.f32.mrf.mxu0
        %v2015 = vadd.f32 %v1966, %v2014
        %2016 = vdwg.mxu0
        %2017 = vmatpush.bf16.msra.mxu0 %v1382
        %2018 = vmatpush.bf16.msra.mxu0 %v1376
        %2019 = vmatpush.bf16.msra.mxu0 %v1370
        %2020 = vmatpush.bf16.msra.mxu0 %v1364
        %2021 = vmatpush.bf16.msra.mxu0 %v1358
        %2022 = vmatpush.bf16.msra.mxu0 %v1352
        %2023 = vmatpush.bf16.msra.mxu0 %v1346
        %2024 = vmatpush.bf16.msra.mxu0 %v1340
        %2025 = vmatmul.bf16.gmra.mxu0 %v1015
        %v2026 = vpop.f32.mrf.mxu0
        %v2027 = vadd.f32 %v960, %v2026
        %v2028 = vpop.f32.mrf.mxu0
        %v2029 = vadd.f32 %v960, %v2028
        %2030 = vmatmul.bf16.gmra.mxu0 %v1017
        %v2031 = vpop.f32.mrf.mxu0
        %v2032 = vadd.f32 %v960, %v2031
        %v2033 = vpop.f32.mrf.mxu0
        %v2034 = vadd.f32 %v960, %v2033
        %2035 = vmatmul.bf16.gmra.mxu0 %v1019
        %v2036 = vpop.f32.mrf.mxu0
        %v2037 = vadd.f32 %v960, %v2036
        %v2038 = vpop.f32.mrf.mxu0
        %v2039 = vadd.f32 %v960, %v2038
        %2040 = vmatmul.bf16.gmra.mxu0 %v1021
        %v2041 = vpop.f32.mrf.mxu0
        %v2042 = vadd.f32 %v960, %v2041
        %v2043 = vpop.f32.mrf.mxu0
        %v2044 = vadd.f32 %v960, %v2043
        %2045 = vmatmul.bf16.gmra.mxu0 %v1023
        %v2046 = vpop.f32.mrf.mxu0
        %v2047 = vadd.f32 %v960, %v2046
        %v2048 = vpop.f32.mrf.mxu0
        %v2049 = vadd.f32 %v960, %v2048
        %2050 = vmatmul.bf16.gmra.mxu0 %v1025
        %v2051 = vpop.f32.mrf.mxu0
        %v2052 = vadd.f32 %v960, %v2051
        %v2053 = vpop.f32.mrf.mxu0
        %v2054 = vadd.f32 %v960, %v2053
        %2055 = vmatmul.bf16.gmra.mxu0 %v1027
        %v2056 = vpop.f32.mrf.mxu0
        %v2057 = vadd.f32 %v960, %v2056
        %v2058 = vpop.f32.mrf.mxu0
        %v2059 = vadd.f32 %v960, %v2058
        %2060 = vmatmul.bf16.gmra.mxu0 %v1029
        %v2061 = vpop.f32.mrf.mxu0
        %v2062 = vadd.f32 %v960, %v2061
        %v2063 = vpop.f32.mrf.mxu0
        %v2064 = vadd.f32 %v960, %v2063
        %2065 = vdwg.mxu0
        %2066 = vmatpush.bf16.msra.mxu0 %v1430
        %2067 = vmatpush.bf16.msra.mxu0 %v1424
        %2068 = vmatpush.bf16.msra.mxu0 %v1418
        %2069 = vmatpush.bf16.msra.mxu0 %v1412
        %2070 = vmatpush.bf16.msra.mxu0 %v1406
        %2071 = vmatpush.bf16.msra.mxu0 %v1400
        %2072 = vmatpush.bf16.msra.mxu0 %v1394
        %2073 = vmatpush.bf16.msra.mxu0 %v1388
        %2074 = vmatmul.bf16.gmra.mxu0 %v1016
        %v2075 = vpop.f32.mrf.mxu0
        %v2076 = vadd.f32 %v2027, %v2075
        %v2077 = vpop.f32.mrf.mxu0
        %v2078 = vadd.f32 %v2029, %v2077
        %2079 = vmatmul.bf16.gmra.mxu0 %v1018
        %v2080 = vpop.f32.mrf.mxu0
        %v2081 = vadd.f32 %v2032, %v2080
        %v2082 = vpop.f32.mrf.mxu0
        %v2083 = vadd.f32 %v2034, %v2082
        %2084 = vmatmul.bf16.gmra.mxu0 %v1020
        %v2085 = vpop.f32.mrf.mxu0
        %v2086 = vadd.f32 %v2037, %v2085
        %v2087 = vpop.f32.mrf.mxu0
        %v2088 = vadd.f32 %v2039, %v2087
        %2089 = vmatmul.bf16.gmra.mxu0 %v1022
        %v2090 = vpop.f32.mrf.mxu0
        %v2091 = vadd.f32 %v2042, %v2090
        %v2092 = vpop.f32.mrf.mxu0
        %v2093 = vadd.f32 %v2044, %v2092
        %2094 = vmatmul.bf16.gmra.mxu0 %v1024
        %v2095 = vpop.f32.mrf.mxu0
        %v2096 = vadd.f32 %v2047, %v2095
        %v2097 = vpop.f32.mrf.mxu0
        %v2098 = vadd.f32 %v2049, %v2097
        %2099 = vmatmul.bf16.gmra.mxu0 %v1026
        %v2100 = vpop.f32.mrf.mxu0
        %v2101 = vadd.f32 %v2052, %v2100
        %v2102 = vpop.f32.mrf.mxu0
        %v2103 = vadd.f32 %v2054, %v2102
        %2104 = vmatmul.bf16.gmra.mxu0 %v1028
        %v2105 = vpop.f32.mrf.mxu0
        %v2106 = vadd.f32 %v2057, %v2105
        %v2107 = vpop.f32.mrf.mxu0
        %v2108 = vadd.f32 %v2059, %v2107
        %2109 = vmatmul.bf16.gmra.mxu0 %v1030
        %v2110 = vpop.f32.mrf.mxu0
        %v2111 = vadd.f32 %v2062, %v2110
        %v2112 = vpop.f32.mrf.mxu0
        %v2113 = vadd.f32 %v2064, %v2112
        %2114 = vdwg.mxu0
        %v2115 = vpack.c.bf16 %v1586, %v1586
        %v2116 = vpack.c.bf16 %v1588, %v1588
        %v2117 = vpack.c.bf16 %v1591, %v1591
        %v2118 = vpack.c.bf16 %v1593, %v1593
        %v2119 = vpack.c.bf16 %v1596, %v1596
        %v2120 = vpack.c.bf16 %v1598, %v1598
        %v2121 = vpack.c.bf16 %v1601, %v1601
        %v2122 = vpack.c.bf16 %v1603, %v1603
        %v2123 = vpack.c.bf16 %v1606, %v1606
        %v2124 = vpack.c.bf16 %v1608, %v1608
        %v2125 = vpack.c.bf16 %v1611, %v1611
        %v2126 = vpack.c.bf16 %v1613, %v1613
        %v2127 = vpack.c.bf16 %v1616, %v1616
        %v2128 = vpack.c.bf16 %v1618, %v1618
        %v2129 = vpack.c.bf16 %v1621, %v1621
        %v2130 = vpack.c.bf16 %v1623, %v1623
        %v2131 = vpack.c.bf16 %v1684, %v1684
        %v2132 = vpack.c.bf16 %v1686, %v1686
        %v2133 = vpack.c.bf16 %v1689, %v1689
        %v2134 = vpack.c.bf16 %v1691, %v1691
        %v2135 = vpack.c.bf16 %v1694, %v1694
        %v2136 = vpack.c.bf16 %v1696, %v1696
        %v2137 = vpack.c.bf16 %v1699, %v1699
        %v2138 = vpack.c.bf16 %v1701, %v1701
        %v2139 = vpack.c.bf16 %v1704, %v1704
        %v2140 = vpack.c.bf16 %v1706, %v1706
        %v2141 = vpack.c.bf16 %v1709, %v1709
        %v2142 = vpack.c.bf16 %v1711, %v1711
        %v2143 = vpack.c.bf16 %v1714, %v1714
        %v2144 = vpack.c.bf16 %v1716, %v1716
        %v2145 = vpack.c.bf16 %v1719, %v1719
        %v2146 = vpack.c.bf16 %v1721, %v1721
        %v2147 = vpack.c.bf16 %v1782, %v1782
        %v2148 = vpack.c.bf16 %v1784, %v1784
        %v2149 = vpack.c.bf16 %v1787, %v1787
        %v2150 = vpack.c.bf16 %v1789, %v1789
        %v2151 = vpack.c.bf16 %v1792, %v1792
        %v2152 = vpack.c.bf16 %v1794, %v1794
        %v2153 = vpack.c.bf16 %v1797, %v1797
        %v2154 = vpack.c.bf16 %v1799, %v1799
        %v2155 = vpack.c.bf16 %v1802, %v1802
        %v2156 = vpack.c.bf16 %v1804, %v1804
        %v2157 = vpack.c.bf16 %v1807, %v1807
        %v2158 = vpack.c.bf16 %v1809, %v1809
        %v2159 = vpack.c.bf16 %v1812, %v1812
        %v2160 = vpack.c.bf16 %v1814, %v1814
        %v2161 = vpack.c.bf16 %v1817, %v1817
        %v2162 = vpack.c.bf16 %v1819, %v1819
        %v2163 = vpack.c.bf16 %v1880, %v1880
        %v2164 = vpack.c.bf16 %v1882, %v1882
        %v2165 = vpack.c.bf16 %v1885, %v1885
        %v2166 = vpack.c.bf16 %v1887, %v1887
        %v2167 = vpack.c.bf16 %v1890, %v1890
        %v2168 = vpack.c.bf16 %v1892, %v1892
        %v2169 = vpack.c.bf16 %v1895, %v1895
        %v2170 = vpack.c.bf16 %v1897, %v1897
        %v2171 = vpack.c.bf16 %v1900, %v1900
        %v2172 = vpack.c.bf16 %v1902, %v1902
        %v2173 = vpack.c.bf16 %v1905, %v1905
        %v2174 = vpack.c.bf16 %v1907, %v1907
        %v2175 = vpack.c.bf16 %v1910, %v1910
        %v2176 = vpack.c.bf16 %v1912, %v1912
        %v2177 = vpack.c.bf16 %v1915, %v1915
        %v2178 = vpack.c.bf16 %v1917, %v1917
        %v2179 = vpack.c.bf16 %v1978, %v1978
        %v2180 = vpack.c.bf16 %v1980, %v1980
        %v2181 = vpack.c.bf16 %v1983, %v1983
        %v2182 = vpack.c.bf16 %v1985, %v1985
        %v2183 = vpack.c.bf16 %v1988, %v1988
        %v2184 = vpack.c.bf16 %v1990, %v1990
        %v2185 = vpack.c.bf16 %v1993, %v1993
        %v2186 = vpack.c.bf16 %v1995, %v1995
        %v2187 = vpack.c.bf16 %v1998, %v1998
        %v2188 = vpack.c.bf16 %v2000, %v2000
        %v2189 = vpack.c.bf16 %v2003, %v2003
        %v2190 = vpack.c.bf16 %v2005, %v2005
        %v2191 = vpack.c.bf16 %v2008, %v2008
        %v2192 = vpack.c.bf16 %v2010, %v2010
        %v2193 = vpack.c.bf16 %v2013, %v2013
        %v2194 = vpack.c.bf16 %v2015, %v2015
        %v2195 = vpack.c.bf16 %v2076, %v2076
        %v2196 = vpack.c.bf16 %v2078, %v2078
        %v2197 = vpack.c.bf16 %v2081, %v2081
        %v2198 = vpack.c.bf16 %v2083, %v2083
        %v2199 = vpack.c.bf16 %v2086, %v2086
        %v2200 = vpack.c.bf16 %v2088, %v2088
        %v2201 = vpack.c.bf16 %v2091, %v2091
        %v2202 = vpack.c.bf16 %v2093, %v2093
        %v2203 = vpack.c.bf16 %v2096, %v2096
        %v2204 = vpack.c.bf16 %v2098, %v2098
        %v2205 = vpack.c.bf16 %v2101, %v2101
        %v2206 = vpack.c.bf16 %v2103, %v2103
        %v2207 = vpack.c.bf16 %v2106, %v2106
        %v2208 = vpack.c.bf16 %v2108, %v2108
        %v2209 = vpack.c.bf16 %v2111, %v2111
        %v2210 = vpack.c.bf16 %v2113, %v2113
        %v2227 = vunpack.c.l.b16 %v2115
        %v2228 = vunpack.c.l.b16 %v2116
        %v2229 = vunpack.c.l.b16 %v2117
        %v2230 = vunpack.c.l.b16 %v2118
        %v2231 = vunpack.c.l.b16 %v2119
        %v2232 = vunpack.c.l.b16 %v2120
        %v2233 = vunpack.c.l.b16 %v2121
        %v2234 = vunpack.c.l.b16 %v2122
        %v2235 = vunpack.c.l.b16 %v2123
        %v2236 = vunpack.c.l.b16 %v2124
        %v2237 = vunpack.c.l.b16 %v2125
        %v2238 = vunpack.c.l.b16 %v2126
        %v2239 = vunpack.c.l.b16 %v2127
        %v2240 = vunpack.c.l.b16 %v2128
        %v2241 = vunpack.c.l.b16 %v2129
        %v2242 = vunpack.c.l.b16 %v2130
        %v2243 = vpack.c.b16 %v2228, %v2227
        %v2244 = vpack.c.b16 %v2230, %v2229
        %v2245 = vpack.c.b16 %v2232, %v2231
        %v2246 = vpack.c.b16 %v2234, %v2233
        %v2247 = vpack.c.b16 %v2236, %v2235
        %v2248 = vpack.c.b16 %v2238, %v2237
        %v2249 = vpack.c.b16 %v2240, %v2239
        %v2250 = vpack.c.b16 %v2242, %v2241
        %v2275 = vunpack.c.l.b16 %v2147
        %v2276 = vunpack.c.l.b16 %v2148
        %v2277 = vunpack.c.l.b16 %v2149
        %v2278 = vunpack.c.l.b16 %v2150
        %v2279 = vunpack.c.l.b16 %v2151
        %v2280 = vunpack.c.l.b16 %v2152
        %v2281 = vunpack.c.l.b16 %v2153
        %v2282 = vunpack.c.l.b16 %v2154
        %v2283 = vunpack.c.l.b16 %v2155
        %v2284 = vunpack.c.l.b16 %v2156
        %v2285 = vunpack.c.l.b16 %v2157
        %v2286 = vunpack.c.l.b16 %v2158
        %v2287 = vunpack.c.l.b16 %v2159
        %v2288 = vunpack.c.l.b16 %v2160
        %v2289 = vunpack.c.l.b16 %v2161
        %v2290 = vunpack.c.l.b16 %v2162
        %v2291 = vpack.c.b16 %v2276, %v2275
        %v2292 = vpack.c.b16 %v2278, %v2277
        %v2293 = vpack.c.b16 %v2280, %v2279
        %v2294 = vpack.c.b16 %v2282, %v2281
        %v2295 = vpack.c.b16 %v2284, %v2283
        %v2296 = vpack.c.b16 %v2286, %v2285
        %v2297 = vpack.c.b16 %v2288, %v2287
        %v2298 = vpack.c.b16 %v2290, %v2289
        %2307 = vmatpush.bf16.xpose.msra.mxu0 %v2298
        %2308 = vmatpush.bf16.xpose.msra.mxu0 %v2297
        %2309 = vmatpush.bf16.xpose.msra.mxu0 %v2296
        %2310 = vmatpush.bf16.xpose.msra.mxu0 %v2295
        %2311 = vmatpush.bf16.xpose.msra.mxu0 %v2294
        %2312 = vmatpush.bf16.xpose.msra.mxu0 %v2293
        %2313 = vmatpush.bf16.xpose.msra.mxu0 %v2292
        %2314 = vmatpush.bf16.xpose.msra.mxu0 %v2291
        %2315 = vmatmul.bf16.gmra.mxu0 %v2243
        %v2316 = vpop.f32.mrf.mxu0
        %v2317 = vadd.f32 %v837, %v2316
        %v2318 = vpop.f32.mrf.mxu0
        %v2319 = vadd.f32 %v838, %v2318
        %2320 = vmatmul.bf16.gmra.mxu0 %v2244
        %v2321 = vpop.f32.mrf.mxu0
        %v2322 = vadd.f32 %v839, %v2321
        %v2323 = vpop.f32.mrf.mxu0
        %v2324 = vadd.f32 %v840, %v2323
        %2325 = vmatmul.bf16.gmra.mxu0 %v2245
        %v2326 = vpop.f32.mrf.mxu0
        %v2327 = vadd.f32 %v841, %v2326
        %v2328 = vpop.f32.mrf.mxu0
        %v2329 = vadd.f32 %v842, %v2328
        %2330 = vmatmul.bf16.gmra.mxu0 %v2246
        %v2331 = vpop.f32.mrf.mxu0
        %v2332 = vadd.f32 %v843, %v2331
        %v2333 = vpop.f32.mrf.mxu0
        %v2334 = vadd.f32 %v844, %v2333
        %2335 = vmatmul.bf16.gmra.mxu0 %v2247
        %v2336 = vpop.f32.mrf.mxu0
        %v2337 = vadd.f32 %v845, %v2336
        %v2338 = vpop.f32.mrf.mxu0
        %v2339 = vadd.f32 %v846, %v2338
        %2340 = vmatmul.bf16.gmra.mxu0 %v2248
        %v2341 = vpop.f32.mrf.mxu0
        %v2342 = vadd.f32 %v847, %v2341
        %v2343 = vpop.f32.mrf.mxu0
        %v2344 = vadd.f32 %v848, %v2343
        %2345 = vmatmul.bf16.gmra.mxu0 %v2249
        %v2346 = vpop.f32.mrf.mxu0
        %v2347 = vadd.f32 %v849, %v2346
        %v2348 = vpop.f32.mrf.mxu0
        %v2349 = vadd.f32 %v850, %v2348
        %2350 = vmatmul.bf16.gmra.mxu0 %v2250
        %v2351 = vpop.f32.mrf.mxu0
        %v2352 = vadd.f32 %v851, %v2351
        %v2353 = vpop.f32.mrf.mxu0
        %v2354 = vadd.f32 %v852, %v2353
        %2355 = vdwg.mxu0
        %v2372 = vunpack.c.l.b16 %v2131
        %v2373 = vunpack.c.l.b16 %v2132
        %v2374 = vunpack.c.l.b16 %v2133
        %v2375 = vunpack.c.l.b16 %v2134
        %v2376 = vunpack.c.l.b16 %v2135
        %v2377 = vunpack.c.l.b16 %v2136
        %v2378 = vunpack.c.l.b16 %v2137
        %v2379 = vunpack.c.l.b16 %v2138
        %v2380 = vunpack.c.l.b16 %v2139
        %v2381 = vunpack.c.l.b16 %v2140
        %v2382 = vunpack.c.l.b16 %v2141
        %v2383 = vunpack.c.l.b16 %v2142
        %v2384 = vunpack.c.l.b16 %v2143
        %v2385 = vunpack.c.l.b16 %v2144
        %v2386 = vunpack.c.l.b16 %v2145
        %v2387 = vunpack.c.l.b16 %v2146
        %v2388 = vpack.c.b16 %v2373, %v2372
        %v2389 = vpack.c.b16 %v2375, %v2374
        %v2390 = vpack.c.b16 %v2377, %v2376
        %v2391 = vpack.c.b16 %v2379, %v2378
        %v2392 = vpack.c.b16 %v2381, %v2380
        %v2393 = vpack.c.b16 %v2383, %v2382
        %v2394 = vpack.c.b16 %v2385, %v2384
        %v2395 = vpack.c.b16 %v2387, %v2386
        %v2420 = vunpack.c.l.b16 %v2163
        %v2421 = vunpack.c.l.b16 %v2164
        %v2422 = vunpack.c.l.b16 %v2165
        %v2423 = vunpack.c.l.b16 %v2166
        %v2424 = vunpack.c.l.b16 %v2167
        %v2425 = vunpack.c.l.b16 %v2168
        %v2426 = vunpack.c.l.b16 %v2169
        %v2427 = vunpack.c.l.b16 %v2170
        %v2428 = vunpack.c.l.b16 %v2171
        %v2429 = vunpack.c.l.b16 %v2172
        %v2430 = vunpack.c.l.b16 %v2173
        %v2431 = vunpack.c.l.b16 %v2174
        %v2432 = vunpack.c.l.b16 %v2175
        %v2433 = vunpack.c.l.b16 %v2176
        %v2434 = vunpack.c.l.b16 %v2177
        %v2435 = vunpack.c.l.b16 %v2178
        %v2436 = vpack.c.b16 %v2421, %v2420
        %v2437 = vpack.c.b16 %v2423, %v2422
        %v2438 = vpack.c.b16 %v2425, %v2424
        %v2439 = vpack.c.b16 %v2427, %v2426
        %v2440 = vpack.c.b16 %v2429, %v2428
        %v2441 = vpack.c.b16 %v2431, %v2430
        %v2442 = vpack.c.b16 %v2433, %v2432
        %v2443 = vpack.c.b16 %v2435, %v2434
        %2452 = vmatpush.bf16.xpose.msra.mxu0 %v2443
        %2453 = vmatpush.bf16.xpose.msra.mxu0 %v2442
        %2454 = vmatpush.bf16.xpose.msra.mxu0 %v2441
        %2455 = vmatpush.bf16.xpose.msra.mxu0 %v2440
        %2456 = vmatpush.bf16.xpose.msra.mxu0 %v2439
        %2457 = vmatpush.bf16.xpose.msra.mxu0 %v2438
        %2458 = vmatpush.bf16.xpose.msra.mxu0 %v2437
        %2459 = vmatpush.bf16.xpose.msra.mxu0 %v2436
        %2460 = vmatmul.bf16.gmra.mxu0 %v2388
        %v2461 = vpop.f32.mrf.mxu0
        %v2462 = vadd.f32 %v837, %v2461
        %v2463 = vpop.f32.mrf.mxu0
        %v2464 = vadd.f32 %v838, %v2463
        %2465 = vmatmul.bf16.gmra.mxu0 %v2389
        %v2466 = vpop.f32.mrf.mxu0
        %v2467 = vadd.f32 %v839, %v2466
        %v2468 = vpop.f32.mrf.mxu0
        %v2469 = vadd.f32 %v840, %v2468
        %2470 = vmatmul.bf16.gmra.mxu0 %v2390
        %v2471 = vpop.f32.mrf.mxu0
        %v2472 = vadd.f32 %v841, %v2471
        %v2473 = vpop.f32.mrf.mxu0
        %v2474 = vadd.f32 %v842, %v2473
        %2475 = vmatmul.bf16.gmra.mxu0 %v2391
        %v2476 = vpop.f32.mrf.mxu0
        %v2477 = vadd.f32 %v843, %v2476
        %v2478 = vpop.f32.mrf.mxu0
        %v2479 = vadd.f32 %v844, %v2478
        %2480 = vmatmul.bf16.gmra.mxu0 %v2392
        %v2481 = vpop.f32.mrf.mxu0
        %v2482 = vadd.f32 %v845, %v2481
        %v2483 = vpop.f32.mrf.mxu0
        %v2484 = vadd.f32 %v846, %v2483
        %2485 = vmatmul.bf16.gmra.mxu0 %v2393
        %v2486 = vpop.f32.mrf.mxu0
        %v2487 = vadd.f32 %v847, %v2486
        %v2488 = vpop.f32.mrf.mxu0
        %v2489 = vadd.f32 %v848, %v2488
        %2490 = vmatmul.bf16.gmra.mxu0 %v2394
        %v2491 = vpop.f32.mrf.mxu0
        %v2492 = vadd.f32 %v849, %v2491
        %v2493 = vpop.f32.mrf.mxu0
        %v2494 = vadd.f32 %v850, %v2493
        %2495 = vmatmul.bf16.gmra.mxu0 %v2395
        %v2496 = vpop.f32.mrf.mxu0
        %v2497 = vadd.f32 %v851, %v2496
        %v2498 = vpop.f32.mrf.mxu0
        %v2499 = vadd.f32 %v852, %v2498
        %2500 = vdwg.mxu0
        %2501 = vmax.xlane.f32.xlu0 %v2317
        %v2502 = vpop.xlane.xlu0 %2501
        %2503 = vmax.xlane.f32.xlu0 %v2319
        %v2504 = vpop.xlane.xlu0 %2503
        %2505 = vmax.xlane.f32.xlu0 %v2322
        %v2506 = vpop.xlane.xlu0 %2505
        %2507 = vmax.xlane.f32.xlu0 %v2324
        %v2508 = vpop.xlane.xlu0 %2507
        %2509 = vmax.xlane.f32.xlu0 %v2327
        %v2510 = vpop.xlane.xlu0 %2509
        %2511 = vmax.xlane.f32.xlu0 %v2329
        %v2512 = vpop.xlane.xlu0 %2511
        %2513 = vmax.xlane.f32.xlu0 %v2332
        %v2514 = vpop.xlane.xlu0 %2513
        %2515 = vmax.xlane.f32.xlu0 %v2334
        %v2516 = vpop.xlane.xlu0 %2515
        %2517 = vmax.xlane.f32.xlu0 %v2337
        %v2518 = vpop.xlane.xlu0 %2517
        %2519 = vmax.xlane.f32.xlu0 %v2339
        %v2520 = vpop.xlane.xlu0 %2519
        %2521 = vmax.xlane.f32.xlu0 %v2342
        %v2522 = vpop.xlane.xlu0 %2521
        %2523 = vmax.xlane.f32.xlu0 %v2344
        %v2524 = vpop.xlane.xlu0 %2523
        %2525 = vmax.xlane.f32.xlu0 %v2347
        %v2526 = vpop.xlane.xlu0 %2525
        %2527 = vmax.xlane.f32.xlu0 %v2349
        %v2528 = vpop.xlane.xlu0 %2527
        %2529 = vmax.xlane.f32.xlu0 %v2352
        %v2530 = vpop.xlane.xlu0 %2529
        %2531 = vmax.xlane.f32.xlu0 %v2354
        %v2532 = vpop.xlane.xlu0 %2531
        %2533 = vmax.xlane.f32.xlu0 %v2462
        %v2534 = vpop.xlane.xlu0 %2533
        %2535 = vmax.xlane.f32.xlu0 %v2464
        %v2536 = vpop.xlane.xlu0 %2535
        %2537 = vmax.xlane.f32.xlu0 %v2467
        %v2538 = vpop.xlane.xlu0 %2537
        %2539 = vmax.xlane.f32.xlu0 %v2469
        %v2540 = vpop.xlane.xlu0 %2539
        %2541 = vmax.xlane.f32.xlu0 %v2472
        %v2542 = vpop.xlane.xlu0 %2541
        %2543 = vmax.xlane.f32.xlu0 %v2474
        %v2544 = vpop.xlane.xlu0 %2543
        %2545 = vmax.xlane.f32.xlu0 %v2477
        %v2546 = vpop.xlane.xlu0 %2545
        %2547 = vmax.xlane.f32.xlu0 %v2479
        %v2548 = vpop.xlane.xlu0 %2547
        %2549 = vmax.xlane.f32.xlu0 %v2482
        %v2550 = vpop.xlane.xlu0 %2549
        %2551 = vmax.xlane.f32.xlu0 %v2484
        %v2552 = vpop.xlane.xlu0 %2551
        %2553 = vmax.xlane.f32.xlu0 %v2487
        %v2554 = vpop.xlane.xlu0 %2553
        %2555 = vmax.xlane.f32.xlu0 %v2489
        %v2556 = vpop.xlane.xlu0 %2555
        %2557 = vmax.xlane.f32.xlu0 %v2492
        %v2558 = vpop.xlane.xlu0 %2557
        %2559 = vmax.xlane.f32.xlu0 %v2494
        %v2560 = vpop.xlane.xlu0 %2559
        %2561 = vmax.xlane.f32.xlu0 %v2497
        %v2562 = vpop.xlane.xlu0 %2561
        %2563 = vmax.xlane.f32.xlu0 %v2499
        %v2564 = vpop.xlane.xlu0 %2563
        %v2565 = vmax.f32 %v2502, -1e+30
        %v2566 = vmax.f32 %v2504, -1e+30
        %v2567 = vmax.f32 %v2506, -1e+30
        %v2568 = vmax.f32 %v2508, -1e+30
        %v2569 = vmax.f32 %v2510, -1e+30
        %v2570 = vmax.f32 %v2512, -1e+30
        %v2571 = vmax.f32 %v2514, -1e+30
        %v2572 = vmax.f32 %v2516, -1e+30
        %v2573 = vmax.f32 %v2518, -1e+30
        %v2574 = vmax.f32 %v2520, -1e+30
        %v2575 = vmax.f32 %v2522, -1e+30
        %v2576 = vmax.f32 %v2524, -1e+30
        %v2577 = vmax.f32 %v2526, -1e+30
        %v2578 = vmax.f32 %v2528, -1e+30
        %v2579 = vmax.f32 %v2530, -1e+30
        %v2580 = vmax.f32 %v2532, -1e+30
        %v2581 = vmax.f32 %v2534, -1e+30
        %v2582 = vmax.f32 %v2536, -1e+30
        %v2583 = vmax.f32 %v2538, -1e+30
        %v2584 = vmax.f32 %v2540, -1e+30
        %v2585 = vmax.f32 %v2542, -1e+30
        %v2586 = vmax.f32 %v2544, -1e+30
        %v2587 = vmax.f32 %v2546, -1e+30
        %v2588 = vmax.f32 %v2548, -1e+30
        %v2589 = vmax.f32 %v2550, -1e+30
        %v2590 = vmax.f32 %v2552, -1e+30
        %v2591 = vmax.f32 %v2554, -1e+30
        %v2592 = vmax.f32 %v2556, -1e+30
        %v2593 = vmax.f32 %v2558, -1e+30
        %v2594 = vmax.f32 %v2560, -1e+30
        %v2595 = vmax.f32 %v2562, -1e+30
        %v2596 = vmax.f32 %v2564, -1e+30
        %v2597 = vsub.f32 -1e+30, %v2565
        %v2598 = vsub.f32 -1e+30, %v2566
        %v2599 = vsub.f32 -1e+30, %v2567
        %v2600 = vsub.f32 -1e+30, %v2568
        %v2601 = vsub.f32 -1e+30, %v2569
        %v2602 = vsub.f32 -1e+30, %v2570
        %v2603 = vsub.f32 -1e+30, %v2571
        %v2604 = vsub.f32 -1e+30, %v2572
        %v2605 = vsub.f32 -1e+30, %v2573
        %v2606 = vsub.f32 -1e+30, %v2574
        %v2607 = vsub.f32 -1e+30, %v2575
        %v2608 = vsub.f32 -1e+30, %v2576
        %v2609 = vsub.f32 -1e+30, %v2577
        %v2610 = vsub.f32 -1e+30, %v2578
        %v2611 = vsub.f32 -1e+30, %v2579
        %v2612 = vsub.f32 -1e+30, %v2580
        %v2613 = vsub.f32 -1e+30, %v2581
        %v2614 = vsub.f32 -1e+30, %v2582
        %v2615 = vsub.f32 -1e+30, %v2583
        %v2616 = vsub.f32 -1e+30, %v2584
        %v2617 = vsub.f32 -1e+30, %v2585
        %v2618 = vsub.f32 -1e+30, %v2586
        %v2619 = vsub.f32 -1e+30, %v2587
        %v2620 = vsub.f32 -1e+30, %v2588
        %v2621 = vsub.f32 -1e+30, %v2589
        %v2622 = vsub.f32 -1e+30, %v2590
        %v2623 = vsub.f32 -1e+30, %v2591
        %v2624 = vsub.f32 -1e+30, %v2592
        %v2625 = vsub.f32 -1e+30, %v2593
        %v2626 = vsub.f32 -1e+30, %v2594
        %v2627 = vsub.f32 -1e+30, %v2595
        %v2628 = vsub.f32 -1e+30, %v2596
        %v2629 = vmul.f32 %v2597, 1.442695
        %v2630 = vpow.pop %v2629
        %v2631 = vmul.f32 %v2598, 1.442695
        %v2632 = vpow.pop %v2631
        %v2633 = vmul.f32 %v2599, 1.442695
        %v2634 = vpow.pop %v2633
        %v2635 = vmul.f32 %v2600, 1.442695
        %v2636 = vpow.pop %v2635
        %v2637 = vmul.f32 %v2601, 1.442695
        %v2638 = vpow.pop %v2637
        %v2639 = vmul.f32 %v2602, 1.442695
        %v2640 = vpow.pop %v2639
        %v2641 = vmul.f32 %v2603, 1.442695
        %v2642 = vpow.pop %v2641
        %v2643 = vmul.f32 %v2604, 1.442695
        %v2644 = vpow.pop %v2643
        %v2645 = vmul.f32 %v2605, 1.442695
        %v2646 = vpow.pop %v2645
        %v2647 = vmul.f32 %v2606, 1.442695
        %v2648 = vpow.pop %v2647
        %v2649 = vmul.f32 %v2607, 1.442695
        %v2650 = vpow.pop %v2649
        %v2651 = vmul.f32 %v2608, 1.442695
        %v2652 = vpow.pop %v2651
        %v2653 = vmul.f32 %v2609, 1.442695
        %v2654 = vpow.pop %v2653
        %v2655 = vmul.f32 %v2610, 1.442695
        %v2656 = vpow.pop %v2655
        %v2657 = vmul.f32 %v2611, 1.442695
        %v2658 = vpow.pop %v2657
        %v2659 = vmul.f32 %v2612, 1.442695
        %v2660 = vpow.pop %v2659
        %v2661 = vmul.f32 %v2613, 1.442695
        %v2662 = vpow.pop %v2661
        %v2663 = vmul.f32 %v2614, 1.442695
        %v2664 = vpow.pop %v2663
        %v2665 = vmul.f32 %v2615, 1.442695
        %v2666 = vpow.pop %v2665
        %v2667 = vmul.f32 %v2616, 1.442695
        %v2668 = vpow.pop %v2667
        %v2669 = vmul.f32 %v2617, 1.442695
        %v2670 = vpow.pop %v2669
        %v2671 = vmul.f32 %v2618, 1.442695
        %v2672 = vpow.pop %v2671
        %v2673 = vmul.f32 %v2619, 1.442695
        %v2674 = vpow.pop %v2673
        %v2675 = vmul.f32 %v2620, 1.442695
        %v2676 = vpow.pop %v2675
        %v2677 = vmul.f32 %v2621, 1.442695
        %v2678 = vpow.pop %v2677
        %v2679 = vmul.f32 %v2622, 1.442695
        %v2680 = vpow.pop %v2679
        %v2681 = vmul.f32 %v2623, 1.442695
        %v2682 = vpow.pop %v2681
        %v2683 = vmul.f32 %v2624, 1.442695
        %v2684 = vpow.pop %v2683
        %v2685 = vmul.f32 %v2625, 1.442695
        %v2686 = vpow.pop %v2685
        %v2687 = vmul.f32 %v2626, 1.442695
        %v2688 = vpow.pop %v2687
        %v2689 = vmul.f32 %v2627, 1.442695
        %v2690 = vpow.pop %v2689
        %v2691 = vmul.f32 %v2628, 1.442695
        %v2692 = vpow.pop %v2691
        %v2693 = vsub.f32 %v2317, %v2565
        %v2694 = vsub.f32 %v2319, %v2566
        %v2695 = vsub.f32 %v2322, %v2567
        %v2696 = vsub.f32 %v2324, %v2568
        %v2697 = vsub.f32 %v2327, %v2569
        %v2698 = vsub.f32 %v2329, %v2570
        %v2699 = vsub.f32 %v2332, %v2571
        %v2700 = vsub.f32 %v2334, %v2572
        %v2701 = vsub.f32 %v2337, %v2573
        %v2702 = vsub.f32 %v2339, %v2574
        %v2703 = vsub.f32 %v2342, %v2575
        %v2704 = vsub.f32 %v2344, %v2576
        %v2705 = vsub.f32 %v2347, %v2577
        %v2706 = vsub.f32 %v2349, %v2578
        %v2707 = vsub.f32 %v2352, %v2579
        %v2708 = vsub.f32 %v2354, %v2580
        %v2709 = vsub.f32 %v2462, %v2581
        %v2710 = vsub.f32 %v2464, %v2582
        %v2711 = vsub.f32 %v2467, %v2583
        %v2712 = vsub.f32 %v2469, %v2584
        %v2713 = vsub.f32 %v2472, %v2585
        %v2714 = vsub.f32 %v2474, %v2586
        %v2715 = vsub.f32 %v2477, %v2587
        %v2716 = vsub.f32 %v2479, %v2588
        %v2717 = vsub.f32 %v2482, %v2589
        %v2718 = vsub.f32 %v2484, %v2590
        %v2719 = vsub.f32 %v2487, %v2591
        %v2720 = vsub.f32 %v2489, %v2592
        %v2721 = vsub.f32 %v2492, %v2593
        %v2722 = vsub.f32 %v2494, %v2594
        %v2723 = vsub.f32 %v2497, %v2595
        %v2724 = vsub.f32 %v2499, %v2596
        %v2725 = vmul.f32 %v2693, 1.442695
        %v2726 = vpow.pop %v2725
        %v2727 = vmul.f32 %v2694, 1.442695
        %v2728 = vpow.pop %v2727
        %v2729 = vmul.f32 %v2695, 1.442695
        %v2730 = vpow.pop %v2729
        %v2731 = vmul.f32 %v2696, 1.442695
        %v2732 = vpow.pop %v2731
        %v2733 = vmul.f32 %v2697, 1.442695
        %v2734 = vpow.pop %v2733
        %v2735 = vmul.f32 %v2698, 1.442695
        %v2736 = vpow.pop %v2735
        %v2737 = vmul.f32 %v2699, 1.442695
        %v2738 = vpow.pop %v2737
        %v2739 = vmul.f32 %v2700, 1.442695
        %v2740 = vpow.pop %v2739
        %v2741 = vmul.f32 %v2701, 1.442695
        %v2742 = vpow.pop %v2741
        %v2743 = vmul.f32 %v2702, 1.442695
        %v2744 = vpow.pop %v2743
        %v2745 = vmul.f32 %v2703, 1.442695
        %v2746 = vpow.pop %v2745
        %v2747 = vmul.f32 %v2704, 1.442695
        %v2748 = vpow.pop %v2747
        %v2749 = vmul.f32 %v2705, 1.442695
        %v2750 = vpow.pop %v2749
        %v2751 = vmul.f32 %v2706, 1.442695
        %v2752 = vpow.pop %v2751
        %v2753 = vmul.f32 %v2707, 1.442695
        %v2754 = vpow.pop %v2753
        %v2755 = vmul.f32 %v2708, 1.442695
        %v2756 = vpow.pop %v2755
        %v2757 = vmul.f32 %v2709, 1.442695
        %v2758 = vpow.pop %v2757
        %v2759 = vmul.f32 %v2710, 1.442695
        %v2760 = vpow.pop %v2759
        %v2761 = vmul.f32 %v2711, 1.442695
        %v2762 = vpow.pop %v2761
        %v2763 = vmul.f32 %v2712, 1.442695
        %v2764 = vpow.pop %v2763
        %v2765 = vmul.f32 %v2713, 1.442695
        %v2766 = vpow.pop %v2765
        %v2767 = vmul.f32 %v2714, 1.442695
        %v2768 = vpow.pop %v2767
        %v2769 = vmul.f32 %v2715, 1.442695
        %v2770 = vpow.pop %v2769
        %v2771 = vmul.f32 %v2716, 1.442695
        %v2772 = vpow.pop %v2771
        %v2773 = vmul.f32 %v2717, 1.442695
        %v2774 = vpow.pop %v2773
        %v2775 = vmul.f32 %v2718, 1.442695
        %v2776 = vpow.pop %v2775
        %v2777 = vmul.f32 %v2719, 1.442695
        %v2778 = vpow.pop %v2777
        %v2779 = vmul.f32 %v2720, 1.442695
        %v2780 = vpow.pop %v2779
        %v2781 = vmul.f32 %v2721, 1.442695
        %v2782 = vpow.pop %v2781
        %v2783 = vmul.f32 %v2722, 1.442695
        %v2784 = vpow.pop %v2783
        %v2785 = vmul.f32 %v2723, 1.442695
        %v2786 = vpow.pop %v2785
        %v2787 = vmul.f32 %v2724, 1.442695
        %v2788 = vpow.pop %v2787
        %v2789 = vmul.f32 %v2630, 0.0
        %v2790 = vmul.f32 %v2632, 0.0
        %v2791 = vmul.f32 %v2634, 0.0
        %v2792 = vmul.f32 %v2636, 0.0
        %v2793 = vmul.f32 %v2638, 0.0
        %v2794 = vmul.f32 %v2640, 0.0
        %v2795 = vmul.f32 %v2642, 0.0
        %v2796 = vmul.f32 %v2644, 0.0
        %v2797 = vmul.f32 %v2646, 0.0
        %v2798 = vmul.f32 %v2648, 0.0
        %v2799 = vmul.f32 %v2650, 0.0
        %v2800 = vmul.f32 %v2652, 0.0
        %v2801 = vmul.f32 %v2654, 0.0
        %v2802 = vmul.f32 %v2656, 0.0
        %v2803 = vmul.f32 %v2658, 0.0
        %v2804 = vmul.f32 %v2660, 0.0
        %v2805 = vmul.f32 %v2662, 0.0
        %v2806 = vmul.f32 %v2664, 0.0
        %v2807 = vmul.f32 %v2666, 0.0
        %v2808 = vmul.f32 %v2668, 0.0
        %v2809 = vmul.f32 %v2670, 0.0
        %v2810 = vmul.f32 %v2672, 0.0
        %v2811 = vmul.f32 %v2674, 0.0
        %v2812 = vmul.f32 %v2676, 0.0
        %v2813 = vmul.f32 %v2678, 0.0
        %v2814 = vmul.f32 %v2680, 0.0
        %v2815 = vmul.f32 %v2682, 0.0
        %v2816 = vmul.f32 %v2684, 0.0
        %v2817 = vmul.f32 %v2686, 0.0
        %v2818 = vmul.f32 %v2688, 0.0
        %v2819 = vmul.f32 %v2690, 0.0
        %v2820 = vmul.f32 %v2692, 0.0
        %2821 = vadd.xlane.f32.xlu0 %v2726
        %v2822 = vpop.xlane.xlu0 %2821
        %2823 = vadd.xlane.f32.xlu0 %v2728
        %v2824 = vpop.xlane.xlu0 %2823
        %2825 = vadd.xlane.f32.xlu0 %v2730
        %v2826 = vpop.xlane.xlu0 %2825
        %2827 = vadd.xlane.f32.xlu0 %v2732
        %v2828 = vpop.xlane.xlu0 %2827
        %2829 = vadd.xlane.f32.xlu0 %v2734
        %v2830 = vpop.xlane.xlu0 %2829
        %2831 = vadd.xlane.f32.xlu0 %v2736
        %v2832 = vpop.xlane.xlu0 %2831
        %2833 = vadd.xlane.f32.xlu0 %v2738
        %v2834 = vpop.xlane.xlu0 %2833
        %2835 = vadd.xlane.f32.xlu0 %v2740
        %v2836 = vpop.xlane.xlu0 %2835
        %2837 = vadd.xlane.f32.xlu0 %v2742
        %v2838 = vpop.xlane.xlu0 %2837
        %2839 = vadd.xlane.f32.xlu0 %v2744
        %v2840 = vpop.xlane.xlu0 %2839
        %2841 = vadd.xlane.f32.xlu0 %v2746
        %v2842 = vpop.xlane.xlu0 %2841
        %2843 = vadd.xlane.f32.xlu0 %v2748
        %v2844 = vpop.xlane.xlu0 %2843
        %2845 = vadd.xlane.f32.xlu0 %v2750
        %v2846 = vpop.xlane.xlu0 %2845
        %2847 = vadd.xlane.f32.xlu0 %v2752
        %v2848 = vpop.xlane.xlu0 %2847
        %2849 = vadd.xlane.f32.xlu0 %v2754
        %v2850 = vpop.xlane.xlu0 %2849
        %2851 = vadd.xlane.f32.xlu0 %v2756
        %v2852 = vpop.xlane.xlu0 %2851
        %2853 = vadd.xlane.f32.xlu0 %v2758
        %v2854 = vpop.xlane.xlu0 %2853
        %2855 = vadd.xlane.f32.xlu0 %v2760
        %v2856 = vpop.xlane.xlu0 %2855
        %2857 = vadd.xlane.f32.xlu0 %v2762
        %v2858 = vpop.xlane.xlu0 %2857
        %2859 = vadd.xlane.f32.xlu0 %v2764
        %v2860 = vpop.xlane.xlu0 %2859
        %2861 = vadd.xlane.f32.xlu0 %v2766
        %v2862 = vpop.xlane.xlu0 %2861
        %2863 = vadd.xlane.f32.xlu0 %v2768
        %v2864 = vpop.xlane.xlu0 %2863
        %2865 = vadd.xlane.f32.xlu0 %v2770
        %v2866 = vpop.xlane.xlu0 %2865
        %2867 = vadd.xlane.f32.xlu0 %v2772
        %v2868 = vpop.xlane.xlu0 %2867
        %2869 = vadd.xlane.f32.xlu0 %v2774
        %v2870 = vpop.xlane.xlu0 %2869
        %2871 = vadd.xlane.f32.xlu0 %v2776
        %v2872 = vpop.xlane.xlu0 %2871
        %2873 = vadd.xlane.f32.xlu0 %v2778
        %v2874 = vpop.xlane.xlu0 %2873
        %2875 = vadd.xlane.f32.xlu0 %v2780
        %v2876 = vpop.xlane.xlu0 %2875
        %2877 = vadd.xlane.f32.xlu0 %v2782
        %v2878 = vpop.xlane.xlu0 %2877
        %2879 = vadd.xlane.f32.xlu0 %v2784
        %v2880 = vpop.xlane.xlu0 %2879
        %2881 = vadd.xlane.f32.xlu0 %v2786
        %v2882 = vpop.xlane.xlu0 %2881
        %2883 = vadd.xlane.f32.xlu0 %v2788
        %v2884 = vpop.xlane.xlu0 %2883
        %v2885 = vadd.f32 %v2789, %v2822
        %v2886 = vadd.f32 %v2790, %v2824
        %v2887 = vadd.f32 %v2791, %v2826
        %v2888 = vadd.f32 %v2792, %v2828
        %v2889 = vadd.f32 %v2793, %v2830
        %v2890 = vadd.f32 %v2794, %v2832
        %v2891 = vadd.f32 %v2795, %v2834
        %v2892 = vadd.f32 %v2796, %v2836
        %v2893 = vadd.f32 %v2797, %v2838
        %v2894 = vadd.f32 %v2798, %v2840
        %v2895 = vadd.f32 %v2799, %v2842
        %v2896 = vadd.f32 %v2800, %v2844
        %v2897 = vadd.f32 %v2801, %v2846
        %v2898 = vadd.f32 %v2802, %v2848
        %v2899 = vadd.f32 %v2803, %v2850
        %v2900 = vadd.f32 %v2804, %v2852
        %v2901 = vadd.f32 %v2805, %v2854
        %v2902 = vadd.f32 %v2806, %v2856
        %v2903 = vadd.f32 %v2807, %v2858
        %v2904 = vadd.f32 %v2808, %v2860
        %v2905 = vadd.f32 %v2809, %v2862
        %v2906 = vadd.f32 %v2810, %v2864
        %v2907 = vadd.f32 %v2811, %v2866
        %v2908 = vadd.f32 %v2812, %v2868
        %v2909 = vadd.f32 %v2813, %v2870
        %v2910 = vadd.f32 %v2814, %v2872
        %v2911 = vadd.f32 %v2815, %v2874
        %v2912 = vadd.f32 %v2816, %v2876
        %v2913 = vadd.f32 %v2817, %v2878
        %v2914 = vadd.f32 %v2818, %v2880
        %v2915 = vadd.f32 %v2819, %v2882
        %v2916 = vadd.f32 %v2820, %v2884
        %v2917 = vpack.c.bf16 %v2726, %v2726
        %v2918 = vpack.c.bf16 %v2728, %v2728
        %v2919 = vpack.c.bf16 %v2730, %v2730
        %v2920 = vpack.c.bf16 %v2732, %v2732
        %v2921 = vpack.c.bf16 %v2734, %v2734
        %v2922 = vpack.c.bf16 %v2736, %v2736
        %v2923 = vpack.c.bf16 %v2738, %v2738
        %v2924 = vpack.c.bf16 %v2740, %v2740
        %v2925 = vpack.c.bf16 %v2742, %v2742
        %v2926 = vpack.c.bf16 %v2744, %v2744
        %v2927 = vpack.c.bf16 %v2746, %v2746
        %v2928 = vpack.c.bf16 %v2748, %v2748
        %v2929 = vpack.c.bf16 %v2750, %v2750
        %v2930 = vpack.c.bf16 %v2752, %v2752
        %v2931 = vpack.c.bf16 %v2754, %v2754
        %v2932 = vpack.c.bf16 %v2756, %v2756
        %v2933 = vpack.c.bf16 %v2758, %v2758
        %v2934 = vpack.c.bf16 %v2760, %v2760
        %v2935 = vpack.c.bf16 %v2762, %v2762
        %v2936 = vpack.c.bf16 %v2764, %v2764
        %v2937 = vpack.c.bf16 %v2766, %v2766
        %v2938 = vpack.c.bf16 %v2768, %v2768
        %v2939 = vpack.c.bf16 %v2770, %v2770
        %v2940 = vpack.c.bf16 %v2772, %v2772
        %v2941 = vpack.c.bf16 %v2774, %v2774
        %v2942 = vpack.c.bf16 %v2776, %v2776
        %v2943 = vpack.c.bf16 %v2778, %v2778
        %v2944 = vpack.c.bf16 %v2780, %v2780
        %v2945 = vpack.c.bf16 %v2782, %v2782
        %v2946 = vpack.c.bf16 %v2784, %v2784
        %v2947 = vpack.c.bf16 %v2786, %v2786
        %v2948 = vpack.c.bf16 %v2788, %v2788
        %v2965 = vunpack.c.l.b16 %v2917
        %v2966 = vunpack.c.l.b16 %v2918
        %v2967 = vunpack.c.l.b16 %v2919
        %v2968 = vunpack.c.l.b16 %v2920
        %v2969 = vunpack.c.l.b16 %v2921
        %v2970 = vunpack.c.l.b16 %v2922
        %v2971 = vunpack.c.l.b16 %v2923
        %v2972 = vunpack.c.l.b16 %v2924
        %v2973 = vunpack.c.l.b16 %v2925
        %v2974 = vunpack.c.l.b16 %v2926
        %v2975 = vunpack.c.l.b16 %v2927
        %v2976 = vunpack.c.l.b16 %v2928
        %v2977 = vunpack.c.l.b16 %v2929
        %v2978 = vunpack.c.l.b16 %v2930
        %v2979 = vunpack.c.l.b16 %v2931
        %v2980 = vunpack.c.l.b16 %v2932
        %v2981 = vpack.c.b16 %v2966, %v2965
        %v2982 = vpack.c.b16 %v2968, %v2967
        %v2983 = vpack.c.b16 %v2970, %v2969
        %v2984 = vpack.c.b16 %v2972, %v2971
        %v2985 = vpack.c.b16 %v2974, %v2973
        %v2986 = vpack.c.b16 %v2976, %v2975
        %v2987 = vpack.c.b16 %v2978, %v2977
        %v2988 = vpack.c.b16 %v2980, %v2979
        %v3013 = vunpack.c.l.b16 %v2179
        %v3014 = vunpack.c.l.b16 %v2180
        %v3015 = vunpack.c.l.b16 %v2181
        %v3016 = vunpack.c.l.b16 %v2182
        %v3017 = vunpack.c.l.b16 %v2183
        %v3018 = vunpack.c.l.b16 %v2184
        %v3019 = vunpack.c.l.b16 %v2185
        %v3020 = vunpack.c.l.b16 %v2186
        %v3021 = vunpack.c.l.b16 %v2187
        %v3022 = vunpack.c.l.b16 %v2188
        %v3023 = vunpack.c.l.b16 %v2189
        %v3024 = vunpack.c.l.b16 %v2190
        %v3025 = vunpack.c.l.b16 %v2191
        %v3026 = vunpack.c.l.b16 %v2192
        %v3027 = vunpack.c.l.b16 %v2193
        %v3028 = vunpack.c.l.b16 %v2194
        %v3029 = vpack.c.b16 %v3014, %v3013
        %v3030 = vpack.c.b16 %v3016, %v3015
        %v3031 = vpack.c.b16 %v3018, %v3017
        %v3032 = vpack.c.b16 %v3020, %v3019
        %v3033 = vpack.c.b16 %v3022, %v3021
        %v3034 = vpack.c.b16 %v3024, %v3023
        %v3035 = vpack.c.b16 %v3026, %v3025
        %v3036 = vpack.c.b16 %v3028, %v3027
        %3045 = vmatpush.bf16.msra.mxu0 %v3036
        %3046 = vmatpush.bf16.msra.mxu0 %v3035
        %3047 = vmatpush.bf16.msra.mxu0 %v3034
        %3048 = vmatpush.bf16.msra.mxu0 %v3033
        %3049 = vmatpush.bf16.msra.mxu0 %v3032
        %3050 = vmatpush.bf16.msra.mxu0 %v3031
        %3051 = vmatpush.bf16.msra.mxu0 %v3030
        %3052 = vmatpush.bf16.msra.mxu0 %v3029
        %3053 = vmatmul.bf16.gmra.mxu0 %v2981
        %v3054 = vpop.f32.mrf.mxu0
        %v3055 = vadd.f32 0.0, %v3054
        %v3056 = vpop.f32.mrf.mxu0
        %v3057 = vadd.f32 0.0, %v3056
        %3058 = vmatmul.bf16.gmra.mxu0 %v2982
        %v3059 = vpop.f32.mrf.mxu0
        %v3060 = vadd.f32 0.0, %v3059
        %v3061 = vpop.f32.mrf.mxu0
        %v3062 = vadd.f32 0.0, %v3061
        %3063 = vmatmul.bf16.gmra.mxu0 %v2983
        %v3064 = vpop.f32.mrf.mxu0
        %v3065 = vadd.f32 0.0, %v3064
        %v3066 = vpop.f32.mrf.mxu0
        %v3067 = vadd.f32 0.0, %v3066
        %3068 = vmatmul.bf16.gmra.mxu0 %v2984
        %v3069 = vpop.f32.mrf.mxu0
        %v3070 = vadd.f32 0.0, %v3069
        %v3071 = vpop.f32.mrf.mxu0
        %v3072 = vadd.f32 0.0, %v3071
        %3073 = vmatmul.bf16.gmra.mxu0 %v2985
        %v3074 = vpop.f32.mrf.mxu0
        %v3075 = vadd.f32 0.0, %v3074
        %v3076 = vpop.f32.mrf.mxu0
        %v3077 = vadd.f32 0.0, %v3076
        %3078 = vmatmul.bf16.gmra.mxu0 %v2986
        %v3079 = vpop.f32.mrf.mxu0
        %v3080 = vadd.f32 0.0, %v3079
        %v3081 = vpop.f32.mrf.mxu0
        %v3082 = vadd.f32 0.0, %v3081
        %3083 = vmatmul.bf16.gmra.mxu0 %v2987
        %v3084 = vpop.f32.mrf.mxu0
        %v3085 = vadd.f32 0.0, %v3084
        %v3086 = vpop.f32.mrf.mxu0
        %v3087 = vadd.f32 0.0, %v3086
        %3088 = vmatmul.bf16.gmra.mxu0 %v2988
        %v3089 = vpop.f32.mrf.mxu0
        %v3090 = vadd.f32 0.0, %v3089
        %v3091 = vpop.f32.mrf.mxu0
        %v3092 = vadd.f32 0.0, %v3091
        %3093 = vdwg.mxu0
        %v3110 = vunpack.c.l.b16 %v2933
        %v3111 = vunpack.c.l.b16 %v2934
        %v3112 = vunpack.c.l.b16 %v2935
        %v3113 = vunpack.c.l.b16 %v2936
        %v3114 = vunpack.c.l.b16 %v2937
        %v3115 = vunpack.c.l.b16 %v2938
        %v3116 = vunpack.c.l.b16 %v2939
        %v3117 = vunpack.c.l.b16 %v2940
        %v3118 = vunpack.c.l.b16 %v2941
        %v3119 = vunpack.c.l.b16 %v2942
        %v3120 = vunpack.c.l.b16 %v2943
        %v3121 = vunpack.c.l.b16 %v2944
        %v3122 = vunpack.c.l.b16 %v2945
        %v3123 = vunpack.c.l.b16 %v2946
        %v3124 = vunpack.c.l.b16 %v2947
        %v3125 = vunpack.c.l.b16 %v2948
        %v3126 = vpack.c.b16 %v3111, %v3110
        %v3127 = vpack.c.b16 %v3113, %v3112
        %v3128 = vpack.c.b16 %v3115, %v3114
        %v3129 = vpack.c.b16 %v3117, %v3116
        %v3130 = vpack.c.b16 %v3119, %v3118
        %v3131 = vpack.c.b16 %v3121, %v3120
        %v3132 = vpack.c.b16 %v3123, %v3122
        %v3133 = vpack.c.b16 %v3125, %v3124
        %v3158 = vunpack.c.l.b16 %v2195
        %v3159 = vunpack.c.l.b16 %v2196
        %v3160 = vunpack.c.l.b16 %v2197
        %v3161 = vunpack.c.l.b16 %v2198
        %v3162 = vunpack.c.l.b16 %v2199
        %v3163 = vunpack.c.l.b16 %v2200
        %v3164 = vunpack.c.l.b16 %v2201
        %v3165 = vunpack.c.l.b16 %v2202
        %v3166 = vunpack.c.l.b16 %v2203
        %v3167 = vunpack.c.l.b16 %v2204
        %v3168 = vunpack.c.l.b16 %v2205
        %v3169 = vunpack.c.l.b16 %v2206
        %v3170 = vunpack.c.l.b16 %v2207
        %v3171 = vunpack.c.l.b16 %v2208
        %v3172 = vunpack.c.l.b16 %v2209
        %v3173 = vunpack.c.l.b16 %v2210
        %v3174 = vpack.c.b16 %v3159, %v3158
        %v3175 = vpack.c.b16 %v3161, %v3160
        %v3176 = vpack.c.b16 %v3163, %v3162
        %v3177 = vpack.c.b16 %v3165, %v3164
        %v3178 = vpack.c.b16 %v3167, %v3166
        %v3179 = vpack.c.b16 %v3169, %v3168
        %v3180 = vpack.c.b16 %v3171, %v3170
        %v3181 = vpack.c.b16 %v3173, %v3172
        %3190 = vmatpush.bf16.msra.mxu0 %v3181
        %3191 = vmatpush.bf16.msra.mxu0 %v3180
        %3192 = vmatpush.bf16.msra.mxu0 %v3179
        %3193 = vmatpush.bf16.msra.mxu0 %v3178
        %3194 = vmatpush.bf16.msra.mxu0 %v3177
        %3195 = vmatpush.bf16.msra.mxu0 %v3176
        %3196 = vmatpush.bf16.msra.mxu0 %v3175
        %3197 = vmatpush.bf16.msra.mxu0 %v3174
        %3198 = vmatmul.bf16.gmra.mxu0 %v3126
        %v3199 = vpop.f32.mrf.mxu0
        %v3200 = vadd.f32 0.0, %v3199
        %v3201 = vpop.f32.mrf.mxu0
        %v3202 = vadd.f32 0.0, %v3201
        %3203 = vmatmul.bf16.gmra.mxu0 %v3127
        %v3204 = vpop.f32.mrf.mxu0
        %v3205 = vadd.f32 0.0, %v3204
        %v3206 = vpop.f32.mrf.mxu0
        %v3207 = vadd.f32 0.0, %v3206
        %3208 = vmatmul.bf16.gmra.mxu0 %v3128
        %v3209 = vpop.f32.mrf.mxu0
        %v3210 = vadd.f32 0.0, %v3209
        %v3211 = vpop.f32.mrf.mxu0
        %v3212 = vadd.f32 0.0, %v3211
        %3213 = vmatmul.bf16.gmra.mxu0 %v3129
        %v3214 = vpop.f32.mrf.mxu0
        %v3215 = vadd.f32 0.0, %v3214
        %v3216 = vpop.f32.mrf.mxu0
        %v3217 = vadd.f32 0.0, %v3216
        %3218 = vmatmul.bf16.gmra.mxu0 %v3130
        %v3219 = vpop.f32.mrf.mxu0
        %v3220 = vadd.f32 0.0, %v3219
        %v3221 = vpop.f32.mrf.mxu0
        %v3222 = vadd.f32 0.0, %v3221
        %3223 = vmatmul.bf16.gmra.mxu0 %v3131
        %v3224 = vpop.f32.mrf.mxu0
        %v3225 = vadd.f32 0.0, %v3224
        %v3226 = vpop.f32.mrf.mxu0
        %v3227 = vadd.f32 0.0, %v3226
        %3228 = vmatmul.bf16.gmra.mxu0 %v3132
        %v3229 = vpop.f32.mrf.mxu0
        %v3230 = vadd.f32 0.0, %v3229
        %v3231 = vpop.f32.mrf.mxu0
        %v3232 = vadd.f32 0.0, %v3231
        %3233 = vmatmul.bf16.gmra.mxu0 %v3133
        %v3234 = vpop.f32.mrf.mxu0
        %v3235 = vadd.f32 0.0, %v3234
        %v3236 = vpop.f32.mrf.mxu0
        %v3237 = vadd.f32 0.0, %v3236
        %3238 = vdwg.mxu0
        %v3239 = vadd.f32 %v2789, %v3055
        %v3240 = vadd.f32 %v2790, %v3057
        %v3241 = vadd.f32 %v2791, %v3060
        %v3242 = vadd.f32 %v2792, %v3062
        %v3243 = vadd.f32 %v2793, %v3065
        %v3244 = vadd.f32 %v2794, %v3067
        %v3245 = vadd.f32 %v2795, %v3070
        %v3246 = vadd.f32 %v2796, %v3072
        %v3247 = vadd.f32 %v2797, %v3075
        %v3248 = vadd.f32 %v2798, %v3077
        %v3249 = vadd.f32 %v2799, %v3080
        %v3250 = vadd.f32 %v2800, %v3082
        %v3251 = vadd.f32 %v2801, %v3085
        %v3252 = vadd.f32 %v2802, %v3087
        %v3253 = vadd.f32 %v2803, %v3090
        %v3254 = vadd.f32 %v2804, %v3092
        %v3255 = vadd.f32 %v2805, %v3200
        %v3256 = vadd.f32 %v2806, %v3202
        %v3257 = vadd.f32 %v2807, %v3205
        %v3258 = vadd.f32 %v2808, %v3207
        %v3259 = vadd.f32 %v2809, %v3210
        %v3260 = vadd.f32 %v2810, %v3212
        %v3261 = vadd.f32 %v2811, %v3215
        %v3262 = vadd.f32 %v2812, %v3217
        %v3263 = vadd.f32 %v2813, %v3220
        %v3264 = vadd.f32 %v2814, %v3222
        %v3265 = vadd.f32 %v2815, %v3225
        %v3266 = vadd.f32 %v2816, %v3227
        %v3267 = vadd.f32 %v2817, %v3230
        %v3268 = vadd.f32 %v2818, %v3232
        %v3269 = vadd.f32 %v2819, %v3235
        %v3270 = vadd.f32 %v2820, %v3237
        %v3271 = vrcp.pop %v2885
        %v3272 = vrcp.pop %v2886
        %v3273 = vrcp.pop %v2887
        %v3274 = vrcp.pop %v2888
        %v3275 = vrcp.pop %v2889
        %v3276 = vrcp.pop %v2890
        %v3277 = vrcp.pop %v2891
        %v3278 = vrcp.pop %v2892
        %v3279 = vrcp.pop %v2893
        %v3280 = vrcp.pop %v2894
        %v3281 = vrcp.pop %v2895
        %v3282 = vrcp.pop %v2896
        %v3283 = vrcp.pop %v2897
        %v3284 = vrcp.pop %v2898
        %v3285 = vrcp.pop %v2899
        %v3286 = vrcp.pop %v2900
        %v3287 = vrcp.pop %v2901
        %v3288 = vrcp.pop %v2902
        %v3289 = vrcp.pop %v2903
        %v3290 = vrcp.pop %v2904
        %v3291 = vrcp.pop %v2905
        %v3292 = vrcp.pop %v2906
        %v3293 = vrcp.pop %v2907
        %v3294 = vrcp.pop %v2908
        %v3295 = vrcp.pop %v2909
        %v3296 = vrcp.pop %v2910
        %v3297 = vrcp.pop %v2911
        %v3298 = vrcp.pop %v2912
        %v3299 = vrcp.pop %v2913
        %v3300 = vrcp.pop %v2914
        %v3301 = vrcp.pop %v2915
        %v3302 = vrcp.pop %v2916
        %v3303 = vmul.f32 %v3239, %v3271
        %v3304 = vmul.f32 %v3240, %v3272
        %v3305 = vmul.f32 %v3241, %v3273
        %v3306 = vmul.f32 %v3242, %v3274
        %v3307 = vmul.f32 %v3243, %v3275
        %v3308 = vmul.f32 %v3244, %v3276
        %v3309 = vmul.f32 %v3245, %v3277
        %v3310 = vmul.f32 %v3246, %v3278
        %v3311 = vmul.f32 %v3247, %v3279
        %v3312 = vmul.f32 %v3248, %v3280
        %v3313 = vmul.f32 %v3249, %v3281
        %v3314 = vmul.f32 %v3250, %v3282
        %v3315 = vmul.f32 %v3251, %v3283
        %v3316 = vmul.f32 %v3252, %v3284
        %v3317 = vmul.f32 %v3253, %v3285
        %v3318 = vmul.f32 %v3254, %v3286
        %v3319 = vmul.f32 %v3255, %v3287
        %v3320 = vmul.f32 %v3256, %v3288
        %v3321 = vmul.f32 %v3257, %v3289
        %v3322 = vmul.f32 %v3258, %v3290
        %v3323 = vmul.f32 %v3259, %v3291
        %v3324 = vmul.f32 %v3260, %v3292
        %v3325 = vmul.f32 %v3261, %v3293
        %v3326 = vmul.f32 %v3262, %v3294
        %v3327 = vmul.f32 %v3263, %v3295
        %v3328 = vmul.f32 %v3264, %v3296
        %v3329 = vmul.f32 %v3265, %v3297
        %v3330 = vmul.f32 %v3266, %v3298
        %v3331 = vmul.f32 %v3267, %v3299
        %v3332 = vmul.f32 %v3268, %v3300
        %v3333 = vmul.f32 %v3269, %v3301
        %v3334 = vmul.f32 %v3270, %v3302
        %v3335 = vadd.f32 %v751, %v3303
        %v3336 = vadd.f32 %v752, %v3319
        %v3337 = vadd.f32 %v753, %v3304
        %v3338 = vadd.f32 %v754, %v3320
        %v3339 = vadd.f32 %v755, %v3305
        %v3340 = vadd.f32 %v756, %v3321
        %v3341 = vadd.f32 %v757, %v3306
        %v3342 = vadd.f32 %v758, %v3322
        %v3343 = vadd.f32 %v759, %v3307
        %v3344 = vadd.f32 %v760, %v3323
        %v3345 = vadd.f32 %v761, %v3308
        %v3346 = vadd.f32 %v762, %v3324
        %v3347 = vadd.f32 %v763, %v3309
        %v3348 = vadd.f32 %v764, %v3325
        %v3349 = vadd.f32 %v765, %v3310
        %v3350 = vadd.f32 %v766, %v3326
        %v3351 = vadd.f32 %v767, %v3311
        %v3352 = vadd.f32 %v768, %v3327
        %v3353 = vadd.f32 %v769, %v3312
        %v3354 = vadd.f32 %v770, %v3328
        %v3355 = vadd.f32 %v771, %v3313
        %v3356 = vadd.f32 %v772, %v3329
        %v3357 = vadd.f32 %v773, %v3314
        %v3358 = vadd.f32 %v774, %v3330
        %v3359 = vadd.f32 %v775, %v3315
        %v3360 = vadd.f32 %v776, %v3331
        %v3361 = vadd.f32 %v777, %v3316
        %v3362 = vadd.f32 %v778, %v3332
        %v3363 = vadd.f32 %v779, %v3317
        %v3364 = vadd.f32 %v780, %v3333
        %v3365 = vadd.f32 %v781, %v3318
        %v3366 = vadd.f32 %v782, %v3334
        %v3367 = vld [vmem:[%s12] ss:$4 sm:$0x3]
        %v3368 = vld [vmem:[#allocation20] ss:$4 sm:$0x3]
        %v3369 = vadd.f32 %v3335, %v3336
        %3370 = vadd.xlane.f32.xlu0 %v3369
        %v3371 = vpop.xlane.xlu0 %3370
        %v3372 = vadd.f32 %v3337, %v3338
        %3373 = vadd.xlane.f32.xlu0 %v3372
        %v3374 = vpop.xlane.xlu0 %3373
        %v3375 = vadd.f32 %v3339, %v3340
        %3376 = vadd.xlane.f32.xlu0 %v3375
        %v3377 = vpop.xlane.xlu0 %3376
        %v3378 = vadd.f32 %v3341, %v3342
        %3379 = vadd.xlane.f32.xlu0 %v3378
        %v3380 = vpop.xlane.xlu0 %3379
        %v3381 = vadd.f32 %v3343, %v3344
        %3382 = vadd.xlane.f32.xlu0 %v3381
        %v3383 = vpop.xlane.xlu0 %3382
        %v3384 = vadd.f32 %v3345, %v3346
        %3385 = vadd.xlane.f32.xlu0 %v3384
        %v3386 = vpop.xlane.xlu0 %3385
        %v3387 = vadd.f32 %v3347, %v3348
        %3388 = vadd.xlane.f32.xlu0 %v3387
        %v3389 = vpop.xlane.xlu0 %3388
        %v3390 = vadd.f32 %v3349, %v3350
        %3391 = vadd.xlane.f32.xlu0 %v3390
        %v3392 = vpop.xlane.xlu0 %3391
        %v3393 = vadd.f32 %v3351, %v3352
        %3394 = vadd.xlane.f32.xlu0 %v3393
        %v3395 = vpop.xlane.xlu0 %3394
        %v3396 = vadd.f32 %v3353, %v3354
        %3397 = vadd.xlane.f32.xlu0 %v3396
        %v3398 = vpop.xlane.xlu0 %3397
        %v3399 = vadd.f32 %v3355, %v3356
        %3400 = vadd.xlane.f32.xlu0 %v3399
        %v3401 = vpop.xlane.xlu0 %3400
        %v3402 = vadd.f32 %v3357, %v3358
        %3403 = vadd.xlane.f32.xlu0 %v3402
        %v3404 = vpop.xlane.xlu0 %3403
        %v3405 = vadd.f32 %v3359, %v3360
        %3406 = vadd.xlane.f32.xlu0 %v3405
        %v3407 = vpop.xlane.xlu0 %3406
        %v3408 = vadd.f32 %v3361, %v3362
        %3409 = vadd.xlane.f32.xlu0 %v3408
        %v3410 = vpop.xlane.xlu0 %3409
        %v3411 = vadd.f32 %v3363, %v3364
        %3412 = vadd.xlane.f32.xlu0 %v3411
        %v3413 = vpop.xlane.xlu0 %3412
        %v3414 = vadd.f32 %v3365, %v3366
        %3415 = vadd.xlane.f32.xlu0 %v3414
        %v3416 = vpop.xlane.xlu0 %3415
        %v3417 = vrcp.pop 256.0
        %v3418 = vmul.f32 256.0, %v3417
        %v3419 = vsub.f32 1.0, %v3418
        %v3420 = vmul.f32 %v3417, %v3419
        %v3421 = vadd.f32 %v3417, %v3420
        %vm3422 = vweird.f32 %v3417
        %v3423 = vsel %vm3422, %v3417, %v3421
        %v3424 = vmul.f32 %v3371, %v3423
        %v3425 = vmul.f32 %v3374, %v3423
        %v3426 = vmul.f32 %v3377, %v3423
        %v3427 = vmul.f32 %v3380, %v3423
        %v3428 = vmul.f32 %v3383, %v3423
        %v3429 = vmul.f32 %v3386, %v3423
        %v3430 = vmul.f32 %v3389, %v3423
        %v3431 = vmul.f32 %v3392, %v3423
        %v3432 = vmul.f32 %v3395, %v3423
        %v3433 = vmul.f32 %v3398, %v3423
        %v3434 = vmul.f32 %v3401, %v3423
        %v3435 = vmul.f32 %v3404, %v3423
        %v3436 = vmul.f32 %v3407, %v3423
        %v3437 = vmul.f32 %v3410, %v3423
        %v3438 = vmul.f32 %v3413, %v3423
        %v3439 = vmul.f32 %v3416, %v3423
        %v3440 = vsub.f32 %v3335, %v3424
        %v3441 = vsub.f32 %v3336, %v3424
        %v3442 = vsub.f32 %v3337, %v3425
        %v3443 = vsub.f32 %v3338, %v3425
        %v3444 = vsub.f32 %v3339, %v3426
        %v3445 = vsub.f32 %v3340, %v3426
        %v3446 = vsub.f32 %v3341, %v3427
        %v3447 = vsub.f32 %v3342, %v3427
        %v3448 = vsub.f32 %v3343, %v3428
        %v3449 = vsub.f32 %v3344, %v3428
        %v3450 = vsub.f32 %v3345, %v3429
        %v3451 = vsub.f32 %v3346, %v3429
        %v3452 = vsub.f32 %v3347, %v3430
        %v3453 = vsub.f32 %v3348, %v3430
        %v3454 = vsub.f32 %v3349, %v3431
        %v3455 = vsub.f32 %v3350, %v3431
        %v3456 = vsub.f32 %v3351, %v3432
        %v3457 = vsub.f32 %v3352, %v3432
        %v3458 = vsub.f32 %v3353, %v3433
        %v3459 = vsub.f32 %v3354, %v3433
        %v3460 = vsub.f32 %v3355, %v3434
        %v3461 = vsub.f32 %v3356, %v3434
        %v3462 = vsub.f32 %v3357, %v3435
        %v3463 = vsub.f32 %v3358, %v3435
        %v3464 = vsub.f32 %v3359, %v3436
        %v3465 = vsub.f32 %v3360, %v3436
        %v3466 = vsub.f32 %v3361, %v3437
        %v3467 = vsub.f32 %v3362, %v3437
        %v3468 = vsub.f32 %v3363, %v3438
        %v3469 = vsub.f32 %v3364, %v3438
        %v3470 = vsub.f32 %v3365, %v3439
        %v3471 = vsub.f32 %v3366, %v3439
        %v3472 = vmul.f32 %v3440, %v3440
        %v3473 = vmul.f32 %v3441, %v3441
        %v3474 = vmul.f32 %v3442, %v3442
        %v3475 = vmul.f32 %v3443, %v3443
        %v3476 = vmul.f32 %v3444, %v3444
        %v3477 = vmul.f32 %v3445, %v3445
        %v3478 = vmul.f32 %v3446, %v3446
        %v3479 = vmul.f32 %v3447, %v3447
        %v3480 = vmul.f32 %v3448, %v3448
        %v3481 = vmul.f32 %v3449, %v3449
        %v3482 = vmul.f32 %v3450, %v3450
        %v3483 = vmul.f32 %v3451, %v3451
        %v3484 = vmul.f32 %v3452, %v3452
        %v3485 = vmul.f32 %v3453, %v3453
        %v3486 = vmul.f32 %v3454, %v3454
        %v3487 = vmul.f32 %v3455, %v3455
        %v3488 = vmul.f32 %v3456, %v3456
        %v3489 = vmul.f32 %v3457, %v3457
        %v3490 = vmul.f32 %v3458, %v3458
        %v3491 = vmul.f32 %v3459, %v3459
        %v3492 = vmul.f32 %v3460, %v3460
        %v3493 = vmul.f32 %v3461, %v3461
        %v3494 = vmul.f32 %v3462, %v3462
        %v3495 = vmul.f32 %v3463, %v3463
        %v3496 = vmul.f32 %v3464, %v3464
        %v3497 = vmul.f32 %v3465, %v3465
        %v3498 = vmul.f32 %v3466, %v3466
        %v3499 = vmul.f32 %v3467, %v3467
        %v3500 = vmul.f32 %v3468, %v3468
        %v3501 = vmul.f32 %v3469, %v3469
        %v3502 = vmul.f32 %v3470, %v3470
        %v3503 = vmul.f32 %v3471, %v3471
        %v3504 = vadd.f32 %v3472, %v3473
        %3505 = vadd.xlane.f32.xlu0 %v3504
        %v3506 = vpop.xlane.xlu0 %3505
        %v3507 = vadd.f32 %v3474, %v3475
        %3508 = vadd.xlane.f32.xlu0 %v3507
        %v3509 = vpop.xlane.xlu0 %3508
        %v3510 = vadd.f32 %v3476, %v3477
        %3511 = vadd.xlane.f32.xlu0 %v3510
        %v3512 = vpop.xlane.xlu0 %3511
        %v3513 = vadd.f32 %v3478, %v3479
        %3514 = vadd.xlane.f32.xlu0 %v3513
        %v3515 = vpop.xlane.xlu0 %3514
        %v3516 = vadd.f32 %v3480, %v3481
        %3517 = vadd.xlane.f32.xlu0 %v3516
        %v3518 = vpop.xlane.xlu0 %3517
        %v3519 = vadd.f32 %v3482, %v3483
        %3520 = vadd.xlane.f32.xlu0 %v3519
        %v3521 = vpop.xlane.xlu0 %3520
        %v3522 = vadd.f32 %v3484, %v3485
        %3523 = vadd.xlane.f32.xlu0 %v3522
        %v3524 = vpop.xlane.xlu0 %3523
        %v3525 = vadd.f32 %v3486, %v3487
        %3526 = vadd.xlane.f32.xlu0 %v3525
        %v3527 = vpop.xlane.xlu0 %3526
        %v3528 = vadd.f32 %v3488, %v3489
        %3529 = vadd.xlane.f32.xlu0 %v3528
        %v3530 = vpop.xlane.xlu0 %3529
        %v3531 = vadd.f32 %v3490, %v3491
        %3532 = vadd.xlane.f32.xlu0 %v3531
        %v3533 = vpop.xlane.xlu0 %3532
        %v3534 = vadd.f32 %v3492, %v3493
        %3535 = vadd.xlane.f32.xlu0 %v3534
        %v3536 = vpop.xlane.xlu0 %3535
        %v3537 = vadd.f32 %v3494, %v3495
        %3538 = vadd.xlane.f32.xlu0 %v3537
        %v3539 = vpop.xlane.xlu0 %3538
        %v3540 = vadd.f32 %v3496, %v3497
        %3541 = vadd.xlane.f32.xlu0 %v3540
        %v3542 = vpop.xlane.xlu0 %3541
        %v3543 = vadd.f32 %v3498, %v3499
        %3544 = vadd.xlane.f32.xlu0 %v3543
        %v3545 = vpop.xlane.xlu0 %3544
        %v3546 = vadd.f32 %v3500, %v3501
        %3547 = vadd.xlane.f32.xlu0 %v3546
        %v3548 = vpop.xlane.xlu0 %3547
        %v3549 = vadd.f32 %v3502, %v3503
        %3550 = vadd.xlane.f32.xlu0 %v3549
        %v3551 = vpop.xlane.xlu0 %3550
        %v3552 = vmul.f32 %v3506, %v3423
        %v3553 = vmul.f32 %v3509, %v3423
        %v3554 = vmul.f32 %v3512, %v3423
        %v3555 = vmul.f32 %v3515, %v3423
        %v3556 = vmul.f32 %v3518, %v3423
        %v3557 = vmul.f32 %v3521, %v3423
        %v3558 = vmul.f32 %v3524, %v3423
        %v3559 = vmul.f32 %v3527, %v3423
        %v3560 = vmul.f32 %v3530, %v3423
        %v3561 = vmul.f32 %v3533, %v3423
        %v3562 = vmul.f32 %v3536, %v3423
        %v3563 = vmul.f32 %v3539, %v3423
        %v3564 = vmul.f32 %v3542, %v3423
        %v3565 = vmul.f32 %v3545, %v3423
        %v3566 = vmul.f32 %v3548, %v3423
        %v3567 = vmul.f32 %v3551, %v3423
        %v3568 = vadd.f32 %v3552, 1e-05
        %v3569 = vadd.f32 %v3553, 1e-05
        %v3570 = vadd.f32 %v3554, 1e-05
        %v3571 = vadd.f32 %v3555, 1e-05
        %v3572 = vadd.f32 %v3556, 1e-05
        %v3573 = vadd.f32 %v3557, 1e-05
        %v3574 = vadd.f32 %v3558, 1e-05
        %v3575 = vadd.f32 %v3559, 1e-05
        %v3576 = vadd.f32 %v3560, 1e-05
        %v3577 = vadd.f32 %v3561, 1e-05
        %v3578 = vadd.f32 %v3562, 1e-05
        %v3579 = vadd.f32 %v3563, 1e-05
        %v3580 = vadd.f32 %v3564, 1e-05
        %v3581 = vadd.f32 %v3565, 1e-05
        %v3582 = vadd.f32 %v3566, 1e-05
        %v3583 = vadd.f32 %v3567, 1e-05
        %v3584 = vrsqrt.pop %v3568
        %v3585 = vmul.f32 %v3584, %v3568
        %v3586 = vmul.f32 %v3585, %v3584
        %v3587 = vmul.f32 0.5, %v3586
        %v3588 = vsub.f32 1.5, %v3587
        %v3589 = vmul.f32 %v3584, %v3588
        %vm3590 = vweird.f32 %v3568
        %vm3591 = vweird.f32 %v3584
        %vm3592 = vmor %vm3590, %vm3591
        %v3593 = vsel %vm3592, %v3584, %v3589
        %v3594 = vrsqrt.pop %v3569
        %v3595 = vmul.f32 %v3594, %v3569
        %v3596 = vmul.f32 %v3595, %v3594
        %v3597 = vmul.f32 0.5, %v3596
        %v3598 = vsub.f32 1.5, %v3597
        %v3599 = vmul.f32 %v3594, %v3598
        %vm3600 = vweird.f32 %v3569
        %vm3601 = vweird.f32 %v3594
        %vm3602 = vmor %vm3600, %vm3601
        %v3603 = vsel %vm3602, %v3594, %v3599
        %v3604 = vrsqrt.pop %v3570
        %v3605 = vmul.f32 %v3604, %v3570
        %v3606 = vmul.f32 %v3605, %v3604
        %v3607 = vmul.f32 0.5, %v3606
        %v3608 = vsub.f32 1.5, %v3607
        %v3609 = vmul.f32 %v3604, %v3608
        %vm3610 = vweird.f32 %v3570
        %vm3611 = vweird.f32 %v3604
        %vm3612 = vmor %vm3610, %vm3611
        %v3613 = vsel %vm3612, %v3604, %v3609
        %v3614 = vrsqrt.pop %v3571
        %v3615 = vmul.f32 %v3614, %v3571
        %v3616 = vmul.f32 %v3615, %v3614
        %v3617 = vmul.f32 0.5, %v3616
        %v3618 = vsub.f32 1.5, %v3617
        %v3619 = vmul.f32 %v3614, %v3618
        %vm3620 = vweird.f32 %v3571
        %vm3621 = vweird.f32 %v3614
        %vm3622 = vmor %vm3620, %vm3621
        %v3623 = vsel %vm3622, %v3614, %v3619
        %v3624 = vrsqrt.pop %v3572
        %v3625 = vmul.f32 %v3624, %v3572
        %v3626 = vmul.f32 %v3625, %v3624
        %v3627 = vmul.f32 0.5, %v3626
        %v3628 = vsub.f32 1.5, %v3627
        %v3629 = vmul.f32 %v3624, %v3628
        %vm3630 = vweird.f32 %v3572
        %vm3631 = vweird.f32 %v3624
        %vm3632 = vmor %vm3630, %vm3631
        %v3633 = vsel %vm3632, %v3624, %v3629
        %v3634 = vrsqrt.pop %v3573
        %v3635 = vmul.f32 %v3634, %v3573
        %v3636 = vmul.f32 %v3635, %v3634
        %v3637 = vmul.f32 0.5, %v3636
        %v3638 = vsub.f32 1.5, %v3637
        %v3639 = vmul.f32 %v3634, %v3638
        %vm3640 = vweird.f32 %v3573
        %vm3641 = vweird.f32 %v3634
        %vm3642 = vmor %vm3640, %vm3641
        %v3643 = vsel %vm3642, %v3634, %v3639
        %v3644 = vrsqrt.pop %v3574
        %v3645 = vmul.f32 %v3644, %v3574
        %v3646 = vmul.f32 %v3645, %v3644
        %v3647 = vmul.f32 0.5, %v3646
        %v3648 = vsub.f32 1.5, %v3647
        %v3649 = vmul.f32 %v3644, %v3648
        %vm3650 = vweird.f32 %v3574
        %vm3651 = vweird.f32 %v3644
        %vm3652 = vmor %vm3650, %vm3651
        %v3653 = vsel %vm3652, %v3644, %v3649
        %v3654 = vrsqrt.pop %v3575
        %v3655 = vmul.f32 %v3654, %v3575
        %v3656 = vmul.f32 %v3655, %v3654
        %v3657 = vmul.f32 0.5, %v3656
        %v3658 = vsub.f32 1.5, %v3657
        %v3659 = vmul.f32 %v3654, %v3658
        %vm3660 = vweird.f32 %v3575
        %vm3661 = vweird.f32 %v3654
        %vm3662 = vmor %vm3660, %vm3661
        %v3663 = vsel %vm3662, %v3654, %v3659
        %v3664 = vrsqrt.pop %v3576
        %v3665 = vmul.f32 %v3664, %v3576
        %v3666 = vmul.f32 %v3665, %v3664
        %v3667 = vmul.f32 0.5, %v3666
        %v3668 = vsub.f32 1.5, %v3667
        %v3669 = vmul.f32 %v3664, %v3668
        %vm3670 = vweird.f32 %v3576
        %vm3671 = vweird.f32 %v3664
        %vm3672 = vmor %vm3670, %vm3671
        %v3673 = vsel %vm3672, %v3664, %v3669
        %v3674 = vrsqrt.pop %v3577
        %v3675 = vmul.f32 %v3674, %v3577
        %v3676 = vmul.f32 %v3675, %v3674
        %v3677 = vmul.f32 0.5, %v3676
        %v3678 = vsub.f32 1.5, %v3677
        %v3679 = vmul.f32 %v3674, %v3678
        %vm3680 = vweird.f32 %v3577
        %vm3681 = vweird.f32 %v3674
        %vm3682 = vmor %vm3680, %vm3681
        %v3683 = vsel %vm3682, %v3674, %v3679
        %v3684 = vrsqrt.pop %v3578
        %v3685 = vmul.f32 %v3684, %v3578
        %v3686 = vmul.f32 %v3685, %v3684
        %v3687 = vmul.f32 0.5, %v3686
        %v3688 = vsub.f32 1.5, %v3687
        %v3689 = vmul.f32 %v3684, %v3688
        %vm3690 = vweird.f32 %v3578
        %vm3691 = vweird.f32 %v3684
        %vm3692 = vmor %vm3690, %vm3691
        %v3693 = vsel %vm3692, %v3684, %v3689
        %v3694 = vrsqrt.pop %v3579
        %v3695 = vmul.f32 %v3694, %v3579
        %v3696 = vmul.f32 %v3695, %v3694
        %v3697 = vmul.f32 0.5, %v3696
        %v3698 = vsub.f32 1.5, %v3697
        %v3699 = vmul.f32 %v3694, %v3698
        %vm3700 = vweird.f32 %v3579
        %vm3701 = vweird.f32 %v3694
        %vm3702 = vmor %vm3700, %vm3701
        %v3703 = vsel %vm3702, %v3694, %v3699
        %v3704 = vrsqrt.pop %v3580
        %v3705 = vmul.f32 %v3704, %v3580
        %v3706 = vmul.f32 %v3705, %v3704
        %v3707 = vmul.f32 0.5, %v3706
        %v3708 = vsub.f32 1.5, %v3707
        %v3709 = vmul.f32 %v3704, %v3708
        %vm3710 = vweird.f32 %v3580
        %vm3711 = vweird.f32 %v3704
        %vm3712 = vmor %vm3710, %vm3711
        %v3713 = vsel %vm3712, %v3704, %v3709
        %v3714 = vrsqrt.pop %v3581
        %v3715 = vmul.f32 %v3714, %v3581
        %v3716 = vmul.f32 %v3715, %v3714
        %v3717 = vmul.f32 0.5, %v3716
        %v3718 = vsub.f32 1.5, %v3717
        %v3719 = vmul.f32 %v3714, %v3718
        %vm3720 = vweird.f32 %v3581
        %vm3721 = vweird.f32 %v3714
        %vm3722 = vmor %vm3720, %vm3721
        %v3723 = vsel %vm3722, %v3714, %v3719
        %v3724 = vrsqrt.pop %v3582
        %v3725 = vmul.f32 %v3724, %v3582
        %v3726 = vmul.f32 %v3725, %v3724
        %v3727 = vmul.f32 0.5, %v3726
        %v3728 = vsub.f32 1.5, %v3727
        %v3729 = vmul.f32 %v3724, %v3728
        %vm3730 = vweird.f32 %v3582
        %vm3731 = vweird.f32 %v3724
        %vm3732 = vmor %vm3730, %vm3731
        %v3733 = vsel %vm3732, %v3724, %v3729
        %v3734 = vrsqrt.pop %v3583
        %v3735 = vmul.f32 %v3734, %v3583
        %v3736 = vmul.f32 %v3735, %v3734
        %v3737 = vmul.f32 0.5, %v3736
        %v3738 = vsub.f32 1.5, %v3737
        %v3739 = vmul.f32 %v3734, %v3738
        %vm3740 = vweird.f32 %v3583
        %vm3741 = vweird.f32 %v3734
        %vm3742 = vmor %vm3740, %vm3741
        %v3743 = vsel %vm3742, %v3734, %v3739
        %v3744 = vmul.f32 %v3440, %v3593
        %v3745 = vmul.f32 %v3441, %v3593
        %v3746 = vmul.f32 %v3442, %v3603
        %v3747 = vmul.f32 %v3443, %v3603
        %v3748 = vmul.f32 %v3444, %v3613
        %v3749 = vmul.f32 %v3445, %v3613
        %v3750 = vmul.f32 %v3446, %v3623
        %v3751 = vmul.f32 %v3447, %v3623
        %v3752 = vmul.f32 %v3448, %v3633
        %v3753 = vmul.f32 %v3449, %v3633
        %v3754 = vmul.f32 %v3450, %v3643
        %v3755 = vmul.f32 %v3451, %v3643
        %v3756 = vmul.f32 %v3452, %v3653
        %v3757 = vmul.f32 %v3453, %v3653
        %v3758 = vmul.f32 %v3454, %v3663
        %v3759 = vmul.f32 %v3455, %v3663
        %v3760 = vmul.f32 %v3456, %v3673
        %v3761 = vmul.f32 %v3457, %v3673
        %v3762 = vmul.f32 %v3458, %v3683
        %v3763 = vmul.f32 %v3459, %v3683
        %v3764 = vmul.f32 %v3460, %v3693
        %v3765 = vmul.f32 %v3461, %v3693
        %v3766 = vmul.f32 %v3462, %v3703
        %v3767 = vmul.f32 %v3463, %v3703
        %v3768 = vmul.f32 %v3464, %v3713
        %v3769 = vmul.f32 %v3465, %v3713
        %v3770 = vmul.f32 %v3466, %v3723
        %v3771 = vmul.f32 %v3467, %v3723
        %v3772 = vmul.f32 %v3468, %v3733
        %v3773 = vmul.f32 %v3469, %v3733
        %v3774 = vmul.f32 %v3470, %v3743
        %v3775 = vmul.f32 %v3471, %v3743
        %v3777 = vperm.slane %v3367, 0
        %v3778 = vperm.slane %v3367, 1
        %v3781 = vmul.f32 %v3744, %v3777
        %v3782 = vmul.f32 %v3745, %v3778
        %v3783 = vmul.f32 %v3746, %v3777
        %v3784 = vmul.f32 %v3747, %v3778
        %v3785 = vmul.f32 %v3748, %v3777
        %v3786 = vmul.f32 %v3749, %v3778
        %v3787 = vmul.f32 %v3750, %v3777
        %v3788 = vmul.f32 %v3751, %v3778
        %v3789 = vmul.f32 %v3752, %v3777
        %v3790 = vmul.f32 %v3753, %v3778
        %v3791 = vmul.f32 %v3754, %v3777
        %v3792 = vmul.f32 %v3755, %v3778
        %v3793 = vmul.f32 %v3756, %v3777
        %v3794 = vmul.f32 %v3757, %v3778
        %v3795 = vmul.f32 %v3758, %v3777
        %v3796 = vmul.f32 %v3759, %v3778
        %v3797 = vmul.f32 %v3760, %v3777
        %v3798 = vmul.f32 %v3761, %v3778
        %v3799 = vmul.f32 %v3762, %v3777
        %v3800 = vmul.f32 %v3763, %v3778
        %v3801 = vmul.f32 %v3764, %v3777
        %v3802 = vmul.f32 %v3765, %v3778
        %v3803 = vmul.f32 %v3766, %v3777
        %v3804 = vmul.f32 %v3767, %v3778
        %v3805 = vmul.f32 %v3768, %v3777
        %v3806 = vmul.f32 %v3769, %v3778
        %v3807 = vmul.f32 %v3770, %v3777
        %v3808 = vmul.f32 %v3771, %v3778
        %v3809 = vmul.f32 %v3772, %v3777
        %v3810 = vmul.f32 %v3773, %v3778
        %v3811 = vmul.f32 %v3774, %v3777
        %v3812 = vmul.f32 %v3775, %v3778
        %v3814 = vperm.slane %v3368, 0
        %v3815 = vperm.slane %v3368, 1
        %v3818 = vadd.f32 %v3781, %v3814
        %v3819 = vadd.f32 %v3782, %v3815
        %v3820 = vadd.f32 %v3783, %v3814
        %v3821 = vadd.f32 %v3784, %v3815
        %v3822 = vadd.f32 %v3785, %v3814
        %v3823 = vadd.f32 %v3786, %v3815
        %v3824 = vadd.f32 %v3787, %v3814
        %v3825 = vadd.f32 %v3788, %v3815
        %v3826 = vadd.f32 %v3789, %v3814
        %v3827 = vadd.f32 %v3790, %v3815
        %v3828 = vadd.f32 %v3791, %v3814
        %v3829 = vadd.f32 %v3792, %v3815
        %v3830 = vadd.f32 %v3793, %v3814
        %v3831 = vadd.f32 %v3794, %v3815
        %v3832 = vadd.f32 %v3795, %v3814
        %v3833 = vadd.f32 %v3796, %v3815
        %v3834 = vadd.f32 %v3797, %v3814
        %v3835 = vadd.f32 %v3798, %v3815
        %v3836 = vadd.f32 %v3799, %v3814
        %v3837 = vadd.f32 %v3800, %v3815
        %v3838 = vadd.f32 %v3801, %v3814
        %v3839 = vadd.f32 %v3802, %v3815
        %v3840 = vadd.f32 %v3803, %v3814
        %v3841 = vadd.f32 %v3804, %v3815
        %v3842 = vadd.f32 %v3805, %v3814
        %v3843 = vadd.f32 %v3806, %v3815
        %v3844 = vadd.f32 %v3807, %v3814
        %v3845 = vadd.f32 %v3808, %v3815
        %v3846 = vadd.f32 %v3809, %v3814
        %v3847 = vadd.f32 %v3810, %v3815
        %v3848 = vadd.f32 %v3811, %v3814
        %v3849 = vadd.f32 %v3812, %v3815
        %v3850 = vld [vmem:[#allocation11] sm:$0xff]
        %v3851 = vld [vmem:[#allocation11 + $0x8] sm:$0xff]
        %v3852 = vld [vmem:[#allocation11 + $0x10] sm:$0xff]
        %v3853 = vld [vmem:[#allocation11 + $0x18] sm:$0xff]
        %v3854 = vld [vmem:[#allocation11 + $0x20] sm:$0xff]
        %v3855 = vld [vmem:[#allocation11 + $0x28] sm:$0xff]
        %v3856 = vld [vmem:[#allocation11 + $0x30] sm:$0xff]
        %v3857 = vld [vmem:[#allocation11 + $0x38] sm:$0xff]
        %v3858 = vld [vmem:[#allocation11 + $0x40] sm:$0xff]
        %v3859 = vld [vmem:[#allocation11 + $0x48] sm:$0xff]
        %v3860 = vld [vmem:[#allocation11 + $0x50] sm:$0xff]
        %v3861 = vld [vmem:[#allocation11 + $0x58] sm:$0xff]
        %v3862 = vld [vmem:[#allocation11 + $0x60] sm:$0xff]
        %v3863 = vld [vmem:[#allocation11 + $0x68] sm:$0xff]
        %v3864 = vld [vmem:[#allocation11 + $0x70] sm:$0xff]
        %v3865 = vld [vmem:[#allocation11 + $0x78] sm:$0xff]
        %v3866 = vld [vmem:[#allocation11 + $0x80] sm:$0xff]
        %v3867 = vld [vmem:[#allocation11 + $0x88] sm:$0xff]
        %v3868 = vld [vmem:[#allocation11 + $0x90] sm:$0xff]
        %v3869 = vld [vmem:[#allocation11 + $0x98] sm:$0xff]
        %v3870 = vld [vmem:[#allocation11 + $0xa0] sm:$0xff]
        %v3871 = vld [vmem:[#allocation11 + $0xa8] sm:$0xff]
        %v3872 = vld [vmem:[#allocation11 + $0xb0] sm:$0xff]
        %v3873 = vld [vmem:[#allocation11 + $0xb8] sm:$0xff]
        %v3874 = vld [vmem:[#allocation11 + $0xc0] sm:$0xff]
        %v3875 = vld [vmem:[#allocation11 + $0xc8] sm:$0xff]
        %v3876 = vld [vmem:[#allocation11 + $0xd0] sm:$0xff]
        %v3877 = vld [vmem:[#allocation11 + $0xd8] sm:$0xff]
        %v3878 = vld [vmem:[#allocation11 + $0xe0] sm:$0xff]
        %v3879 = vld [vmem:[#allocation11 + $0xe8] sm:$0xff]
        %v3880 = vld [vmem:[#allocation11 + $0xf0] sm:$0xff]
        %v3881 = vld [vmem:[#allocation11 + $0xf8] sm:$0xff]
        %v3882 = vld [vmem:[#allocation11 + $0x100] sm:$0xff]
        %v3883 = vld [vmem:[#allocation11 + $0x108] sm:$0xff]
        %v3884 = vld [vmem:[#allocation11 + $0x110] sm:$0xff]
        %v3885 = vld [vmem:[#allocation11 + $0x118] sm:$0xff]
        %v3886 = vld [vmem:[#allocation11 + $0x120] sm:$0xff]
        %v3887 = vld [vmem:[#allocation11 + $0x128] sm:$0xff]
        %v3888 = vld [vmem:[#allocation11 + $0x130] sm:$0xff]
        %v3889 = vld [vmem:[#allocation11 + $0x138] sm:$0xff]
        %v3890 = vld [vmem:[#allocation11 + $0x140] sm:$0xff]
        %v3891 = vld [vmem:[#allocation11 + $0x148] sm:$0xff]
        %v3892 = vld [vmem:[#allocation11 + $0x150] sm:$0xff]
        %v3893 = vld [vmem:[#allocation11 + $0x158] sm:$0xff]
        %v3894 = vld [vmem:[#allocation11 + $0x160] sm:$0xff]
        %v3895 = vld [vmem:[#allocation11 + $0x168] sm:$0xff]
        %v3896 = vld [vmem:[#allocation11 + $0x170] sm:$0xff]
        %v3897 = vld [vmem:[#allocation11 + $0x178] sm:$0xff]
        %v3898 = vld [vmem:[#allocation11 + $0x180] sm:$0xff]
        %v3899 = vld [vmem:[#allocation11 + $0x188] sm:$0xff]
        %v3900 = vld [vmem:[#allocation11 + $0x190] sm:$0xff]
        %v3901 = vld [vmem:[#allocation11 + $0x198] sm:$0xff]
        %v3902 = vld [vmem:[#allocation11 + $0x1a0] sm:$0xff]
        %v3903 = vld [vmem:[#allocation11 + $0x1a8] sm:$0xff]
        %v3904 = vld [vmem:[#allocation11 + $0x1b0] sm:$0xff]
        %v3905 = vld [vmem:[#allocation11 + $0x1b8] sm:$0xff]
        %v3906 = vld [vmem:[#allocation11 + $0x1c0] sm:$0xff]
        %v3907 = vld [vmem:[#allocation11 + $0x1c8] sm:$0xff]
        %v3908 = vld [vmem:[#allocation11 + $0x1d0] sm:$0xff]
        %v3909 = vld [vmem:[#allocation11 + $0x1d8] sm:$0xff]
        %v3910 = vld [vmem:[#allocation11 + $0x1e0] sm:$0xff]
        %v3911 = vld [vmem:[#allocation11 + $0x1e8] sm:$0xff]
        %v3912 = vld [vmem:[#allocation11 + $0x1f0] sm:$0xff]
        %v3913 = vld [vmem:[#allocation11 + $0x1f8] sm:$0xff]
        %v3914 = vld [vmem:[#allocation13] sm:$0xf]
        %v3916 = vperm.slane %v3914, 0
        %v3917 = vperm.slane %v3914, 1
        %v3918 = vperm.slane %v3914, 2
        %v3919 = vperm.slane %v3914, 3
        %v3940 = vunpack.c.l.b16 %v731
        %v3941 = vunpack.c.h.b16 %v731
        %v3942 = vunpack.c.l.b16 %v732
        %v3943 = vunpack.c.h.b16 %v732
        %v3944 = vunpack.c.l.b16 %v733
        %v3945 = vunpack.c.h.b16 %v733
        %v3946 = vunpack.c.l.b16 %v734
        %v3947 = vunpack.c.h.b16 %v734
        %v3948 = vunpack.c.l.b16 %v735
        %v3949 = vunpack.c.h.b16 %v735
        %v3950 = vunpack.c.l.b16 %v736
        %v3951 = vunpack.c.h.b16 %v736
        %v3952 = vunpack.c.l.b16 %v737
        %v3953 = vunpack.c.h.b16 %v737
        %v3954 = vunpack.c.l.b16 %v738
        %v3955 = vunpack.c.h.b16 %v738
        %v3956 = vunpack.c.l.b16 %v739
        %v3957 = vunpack.c.h.b16 %v739
        %v3958 = vunpack.c.l.b16 %v740
        %v3959 = vunpack.c.h.b16 %v740
        %v3960 = vunpack.c.l.b16 %v741
        %v3961 = vunpack.c.h.b16 %v741
        %v3962 = vunpack.c.l.b16 %v742
        %v3963 = vunpack.c.h.b16 %v742
        %v3964 = vunpack.c.l.b16 %v743
        %v3965 = vunpack.c.h.b16 %v743
        %v3966 = vunpack.c.l.b16 %v744
        %v3967 = vunpack.c.h.b16 %v744
        %v3968 = vunpack.c.l.b16 %v745
        %v3969 = vunpack.c.h.b16 %v745
        %v3970 = vunpack.c.l.b16 %v746
        %v3971 = vunpack.c.h.b16 %v746
        %v3972 = vpack.c.b16 %v3942, %v3940
        %v3973 = vpack.c.b16 %v3943, %v3941
        %v3974 = vpack.c.b16 %v3946, %v3944
        %v3975 = vpack.c.b16 %v3947, %v3945
        %v3976 = vpack.c.b16 %v3950, %v3948
        %v3977 = vpack.c.b16 %v3951, %v3949
        %v3978 = vpack.c.b16 %v3954, %v3952
        %v3979 = vpack.c.b16 %v3955, %v3953
        %v3980 = vpack.c.b16 %v3958, %v3956
        %v3981 = vpack.c.b16 %v3959, %v3957
        %v3982 = vpack.c.b16 %v3962, %v3960
        %v3983 = vpack.c.b16 %v3963, %v3961
        %v3984 = vpack.c.b16 %v3966, %v3964
        %v3985 = vpack.c.b16 %v3967, %v3965
        %v3986 = vpack.c.b16 %v3970, %v3968
        %v3987 = vpack.c.b16 %v3971, %v3969
        %v4068 = vunpack.c.l.b16 %v3850
        %v4069 = vunpack.c.h.b16 %v3850
        %v4070 = vunpack.c.l.b16 %v3851
        %v4071 = vunpack.c.h.b16 %v3851
        %v4072 = vunpack.c.l.b16 %v3852
        %v4073 = vunpack.c.h.b16 %v3852
        %v4074 = vunpack.c.l.b16 %v3853
        %v4075 = vunpack.c.h.b16 %v3853
        %v4076 = vunpack.c.l.b16 %v3854
        %v4077 = vunpack.c.h.b16 %v3854
        %v4078 = vunpack.c.l.b16 %v3855
        %v4079 = vunpack.c.h.b16 %v3855
        %v4080 = vunpack.c.l.b16 %v3856
        %v4081 = vunpack.c.h.b16 %v3856
        %v4082 = vunpack.c.l.b16 %v3857
        %v4083 = vunpack.c.h.b16 %v3857
        %v4084 = vunpack.c.l.b16 %v3858
        %v4085 = vunpack.c.h.b16 %v3858
        %v4086 = vunpack.c.l.b16 %v3859
        %v4087 = vunpack.c.h.b16 %v3859
        %v4088 = vunpack.c.l.b16 %v3860
        %v4089 = vunpack.c.h.b16 %v3860
        %v4090 = vunpack.c.l.b16 %v3861
        %v4091 = vunpack.c.h.b16 %v3861
        %v4092 = vunpack.c.l.b16 %v3862
        %v4093 = vunpack.c.h.b16 %v3862
        %v4094 = vunpack.c.l.b16 %v3863
        %v4095 = vunpack.c.h.b16 %v3863
        %v4096 = vunpack.c.l.b16 %v3864
        %v4097 = vunpack.c.h.b16 %v3864
        %v4098 = vunpack.c.l.b16 %v3865
        %v4099 = vunpack.c.h.b16 %v3865
        %v4100 = vunpack.c.l.b16 %v3866
        %v4101 = vunpack.c.h.b16 %v3866
        %v4102 = vunpack.c.l.b16 %v3867
        %v4103 = vunpack.c.h.b16 %v3867
        %v4104 = vunpack.c.l.b16 %v3868
        %v4105 = vunpack.c.h.b16 %v3868
        %v4106 = vunpack.c.l.b16 %v3869
        %v4107 = vunpack.c.h.b16 %v3869
        %v4108 = vunpack.c.l.b16 %v3870
        %v4109 = vunpack.c.h.b16 %v3870
        %v4110 = vunpack.c.l.b16 %v3871
        %v4111 = vunpack.c.h.b16 %v3871
        %v4112 = vunpack.c.l.b16 %v3872
        %v4113 = vunpack.c.h.b16 %v3872
        %v4114 = vunpack.c.l.b16 %v3873
        %v4115 = vunpack.c.h.b16 %v3873
        %v4116 = vunpack.c.l.b16 %v3874
        %v4117 = vunpack.c.h.b16 %v3874
        %v4118 = vunpack.c.l.b16 %v3875
        %v4119 = vunpack.c.h.b16 %v3875
        %v4120 = vunpack.c.l.b16 %v3876
        %v4121 = vunpack.c.h.b16 %v3876
        %v4122 = vunpack.c.l.b16 %v3877
        %v4123 = vunpack.c.h.b16 %v3877
        %v4124 = vunpack.c.l.b16 %v3878
        %v4125 = vunpack.c.h.b16 %v3878
        %v4126 = vunpack.c.l.b16 %v3879
        %v4127 = vunpack.c.h.b16 %v3879
        %v4128 = vunpack.c.l.b16 %v3880
        %v4129 = vunpack.c.h.b16 %v3880
        %v4130 = vunpack.c.l.b16 %v3881
        %v4131 = vunpack.c.h.b16 %v3881
        %v4132 = vunpack.c.l.b16 %v3882
        %v4133 = vunpack.c.h.b16 %v3882
        %v4134 = vunpack.c.l.b16 %v3883
        %v4135 = vunpack.c.h.b16 %v3883
        %v4136 = vunpack.c.l.b16 %v3884
        %v4137 = vunpack.c.h.b16 %v3884
        %v4138 = vunpack.c.l.b16 %v3885
        %v4139 = vunpack.c.h.b16 %v3885
        %v4140 = vunpack.c.l.b16 %v3886
        %v4141 = vunpack.c.h.b16 %v3886
        %v4142 = vunpack.c.l.b16 %v3887
        %v4143 = vunpack.c.h.b16 %v3887
        %v4144 = vunpack.c.l.b16 %v3888
        %v4145 = vunpack.c.h.b16 %v3888
        %v4146 = vunpack.c.l.b16 %v3889
        %v4147 = vunpack.c.h.b16 %v3889
        %v4148 = vunpack.c.l.b16 %v3890
        %v4149 = vunpack.c.h.b16 %v3890
        %v4150 = vunpack.c.l.b16 %v3891
        %v4151 = vunpack.c.h.b16 %v3891
        %v4152 = vunpack.c.l.b16 %v3892
        %v4153 = vunpack.c.h.b16 %v3892
        %v4154 = vunpack.c.l.b16 %v3893
        %v4155 = vunpack.c.h.b16 %v3893
        %v4156 = vunpack.c.l.b16 %v3894
        %v4157 = vunpack.c.h.b16 %v3894
        %v4158 = vunpack.c.l.b16 %v3895
        %v4159 = vunpack.c.h.b16 %v3895
        %v4160 = vunpack.c.l.b16 %v3896
        %v4161 = vunpack.c.h.b16 %v3896
        %v4162 = vunpack.c.l.b16 %v3897
        %v4163 = vunpack.c.h.b16 %v3897
        %v4164 = vunpack.c.l.b16 %v3898
        %v4165 = vunpack.c.h.b16 %v3898
        %v4166 = vunpack.c.l.b16 %v3899
        %v4167 = vunpack.c.h.b16 %v3899
        %v4168 = vunpack.c.l.b16 %v3900
        %v4169 = vunpack.c.h.b16 %v3900
        %v4170 = vunpack.c.l.b16 %v3901
        %v4171 = vunpack.c.h.b16 %v3901
        %v4172 = vunpack.c.l.b16 %v3902
        %v4173 = vunpack.c.h.b16 %v3902
        %v4174 = vunpack.c.l.b16 %v3903
        %v4175 = vunpack.c.h.b16 %v3903
        %v4176 = vunpack.c.l.b16 %v3904
        %v4177 = vunpack.c.h.b16 %v3904
        %v4178 = vunpack.c.l.b16 %v3905
        %v4179 = vunpack.c.h.b16 %v3905
        %v4180 = vunpack.c.l.b16 %v3906
        %v4181 = vunpack.c.h.b16 %v3906
        %v4182 = vunpack.c.l.b16 %v3907
        %v4183 = vunpack.c.h.b16 %v3907
        %v4184 = vunpack.c.l.b16 %v3908
        %v4185 = vunpack.c.h.b16 %v3908
        %v4186 = vunpack.c.l.b16 %v3909
        %v4187 = vunpack.c.h.b16 %v3909
        %v4188 = vunpack.c.l.b16 %v3910
        %v4189 = vunpack.c.h.b16 %v3910
        %v4190 = vunpack.c.l.b16 %v3911
        %v4191 = vunpack.c.h.b16 %v3911
        %v4192 = vunpack.c.l.b16 %v3912
        %v4193 = vunpack.c.h.b16 %v3912
        %v4194 = vunpack.c.l.b16 %v3913
        %v4195 = vunpack.c.h.b16 %v3913
        %v4196 = vpack.c.b16 %v4072, %v4068
        %v4197 = vpack.c.b16 %v4073, %v4069
        %v4198 = vpack.c.b16 %v4074, %v4070
        %v4199 = vpack.c.b16 %v4075, %v4071
        %v4200 = vpack.c.b16 %v4080, %v4076
        %v4201 = vpack.c.b16 %v4081, %v4077
        %v4202 = vpack.c.b16 %v4082, %v4078
        %v4203 = vpack.c.b16 %v4083, %v4079
        %v4204 = vpack.c.b16 %v4088, %v4084
        %v4205 = vpack.c.b16 %v4089, %v4085
        %v4206 = vpack.c.b16 %v4090, %v4086
        %v4207 = vpack.c.b16 %v4091, %v4087
        %v4208 = vpack.c.b16 %v4096, %v4092
        %v4209 = vpack.c.b16 %v4097, %v4093
        %v4210 = vpack.c.b16 %v4098, %v4094
        %v4211 = vpack.c.b16 %v4099, %v4095
        %v4212 = vpack.c.b16 %v4104, %v4100
        %v4213 = vpack.c.b16 %v4105, %v4101
        %v4214 = vpack.c.b16 %v4106, %v4102
        %v4215 = vpack.c.b16 %v4107, %v4103
        %v4216 = vpack.c.b16 %v4112, %v4108
        %v4217 = vpack.c.b16 %v4113, %v4109
        %v4218 = vpack.c.b16 %v4114, %v4110
        %v4219 = vpack.c.b16 %v4115, %v4111
        %v4220 = vpack.c.b16 %v4120, %v4116
        %v4221 = vpack.c.b16 %v4121, %v4117
        %v4222 = vpack.c.b16 %v4122, %v4118
        %v4223 = vpack.c.b16 %v4123, %v4119
        %v4224 = vpack.c.b16 %v4128, %v4124
        %v4225 = vpack.c.b16 %v4129, %v4125
        %v4226 = vpack.c.b16 %v4130, %v4126
        %v4227 = vpack.c.b16 %v4131, %v4127
        %v4228 = vpack.c.b16 %v4136, %v4132
        %v4229 = vpack.c.b16 %v4137, %v4133
        %v4230 = vpack.c.b16 %v4138, %v4134
        %v4231 = vpack.c.b16 %v4139, %v4135
        %v4232 = vpack.c.b16 %v4144, %v4140
        %v4233 = vpack.c.b16 %v4145, %v4141
        %v4234 = vpack.c.b16 %v4146, %v4142
        %v4235 = vpack.c.b16 %v4147, %v4143
        %v4236 = vpack.c.b16 %v4152, %v4148
        %v4237 = vpack.c.b16 %v4153, %v4149
        %v4238 = vpack.c.b16 %v4154, %v4150
        %v4239 = vpack.c.b16 %v4155, %v4151
        %v4240 = vpack.c.b16 %v4160, %v4156
        %v4241 = vpack.c.b16 %v4161, %v4157
        %v4242 = vpack.c.b16 %v4162, %v4158
        %v4243 = vpack.c.b16 %v4163, %v4159
        %v4244 = vpack.c.b16 %v4168, %v4164
        %v4245 = vpack.c.b16 %v4169, %v4165
        %v4246 = vpack.c.b16 %v4170, %v4166
        %v4247 = vpack.c.b16 %v4171, %v4167
        %v4248 = vpack.c.b16 %v4176, %v4172
        %v4249 = vpack.c.b16 %v4177, %v4173
        %v4250 = vpack.c.b16 %v4178, %v4174
        %v4251 = vpack.c.b16 %v4179, %v4175
        %v4252 = vpack.c.b16 %v4184, %v4180
        %v4253 = vpack.c.b16 %v4185, %v4181
        %v4254 = vpack.c.b16 %v4186, %v4182
        %v4255 = vpack.c.b16 %v4187, %v4183
        %v4256 = vpack.c.b16 %v4192, %v4188
        %v4257 = vpack.c.b16 %v4193, %v4189
        %v4258 = vpack.c.b16 %v4194, %v4190
        %v4259 = vpack.c.b16 %v4195, %v4191
        %4324 = vmatpush.bf16.msra.mxu0 %v4224
        %4325 = vmatpush.bf16.msra.mxu0 %v4220
        %4326 = vmatpush.bf16.msra.mxu0 %v4216
        %4327 = vmatpush.bf16.msra.mxu0 %v4212
        %4328 = vmatpush.bf16.msra.mxu0 %v4208
        %4329 = vmatpush.bf16.msra.mxu0 %v4204
        %4330 = vmatpush.bf16.msra.mxu0 %v4200
        %4331 = vmatpush.bf16.msra.mxu0 %v4196
        %4332 = vmatmul.bf16.gmra.mxu0 %v3972
        %v4333 = vpop.f32.mrf.mxu0
        %v4334 = vadd.f32 %v3916, %v4333
        %v4335 = vpop.f32.mrf.mxu0
        %v4336 = vadd.f32 %v3916, %v4335
        %4337 = vmatmul.bf16.gmra.mxu0 %v3974
        %v4338 = vpop.f32.mrf.mxu0
        %v4339 = vadd.f32 %v3916, %v4338
        %v4340 = vpop.f32.mrf.mxu0
        %v4341 = vadd.f32 %v3916, %v4340
        %4342 = vmatmul.bf16.gmra.mxu0 %v3976
        %v4343 = vpop.f32.mrf.mxu0
        %v4344 = vadd.f32 %v3916, %v4343
        %v4345 = vpop.f32.mrf.mxu0
        %v4346 = vadd.f32 %v3916, %v4345
        %4347 = vmatmul.bf16.gmra.mxu0 %v3978
        %v4348 = vpop.f32.mrf.mxu0
        %v4349 = vadd.f32 %v3916, %v4348
        %v4350 = vpop.f32.mrf.mxu0
        %v4351 = vadd.f32 %v3916, %v4350
        %4352 = vmatmul.bf16.gmra.mxu0 %v3980
        %v4353 = vpop.f32.mrf.mxu0
        %v4354 = vadd.f32 %v3916, %v4353
        %v4355 = vpop.f32.mrf.mxu0
        %v4356 = vadd.f32 %v3916, %v4355
        %4357 = vmatmul.bf16.gmra.mxu0 %v3982
        %v4358 = vpop.f32.mrf.mxu0
        %v4359 = vadd.f32 %v3916, %v4358
        %v4360 = vpop.f32.mrf.mxu0
        %v4361 = vadd.f32 %v3916, %v4360
        %4362 = vmatmul.bf16.gmra.mxu0 %v3984
        %v4363 = vpop.f32.mrf.mxu0
        %v4364 = vadd.f32 %v3916, %v4363
        %v4365 = vpop.f32.mrf.mxu0
        %v4366 = vadd.f32 %v3916, %v4365
        %4367 = vmatmul.bf16.gmra.mxu0 %v3986
        %v4368 = vpop.f32.mrf.mxu0
        %v4369 = vadd.f32 %v3916, %v4368
        %v4370 = vpop.f32.mrf.mxu0
        %v4371 = vadd.f32 %v3916, %v4370
        %4372 = vdwg.mxu0
        %4373 = vmatpush.bf16.msra.mxu0 %v4256
        %4374 = vmatpush.bf16.msra.mxu0 %v4252
        %4375 = vmatpush.bf16.msra.mxu0 %v4248
        %4376 = vmatpush.bf16.msra.mxu0 %v4244
        %4377 = vmatpush.bf16.msra.mxu0 %v4240
        %4378 = vmatpush.bf16.msra.mxu0 %v4236
        %4379 = vmatpush.bf16.msra.mxu0 %v4232
        %4380 = vmatpush.bf16.msra.mxu0 %v4228
        %4381 = vmatmul.bf16.gmra.mxu0 %v3973
        %v4382 = vpop.f32.mrf.mxu0
        %v4383 = vadd.f32 %v4334, %v4382
        %v4384 = vpop.f32.mrf.mxu0
        %v4385 = vadd.f32 %v4336, %v4384
        %4386 = vmatmul.bf16.gmra.mxu0 %v3975
        %v4387 = vpop.f32.mrf.mxu0
        %v4388 = vadd.f32 %v4339, %v4387
        %v4389 = vpop.f32.mrf.mxu0
        %v4390 = vadd.f32 %v4341, %v4389
        %4391 = vmatmul.bf16.gmra.mxu0 %v3977
        %v4392 = vpop.f32.mrf.mxu0
        %v4393 = vadd.f32 %v4344, %v4392
        %v4394 = vpop.f32.mrf.mxu0
        %v4395 = vadd.f32 %v4346, %v4394
        %4396 = vmatmul.bf16.gmra.mxu0 %v3979
        %v4397 = vpop.f32.mrf.mxu0
        %v4398 = vadd.f32 %v4349, %v4397
        %v4399 = vpop.f32.mrf.mxu0
        %v4400 = vadd.f32 %v4351, %v4399
        %4401 = vmatmul.bf16.gmra.mxu0 %v3981
        %v4402 = vpop.f32.mrf.mxu0
        %v4403 = vadd.f32 %v4354, %v4402
        %v4404 = vpop.f32.mrf.mxu0
        %v4405 = vadd.f32 %v4356, %v4404
        %4406 = vmatmul.bf16.gmra.mxu0 %v3983
        %v4407 = vpop.f32.mrf.mxu0
        %v4408 = vadd.f32 %v4359, %v4407
        %v4409 = vpop.f32.mrf.mxu0
        %v4410 = vadd.f32 %v4361, %v4409
        %4411 = vmatmul.bf16.gmra.mxu0 %v3985
        %v4412 = vpop.f32.mrf.mxu0
        %v4413 = vadd.f32 %v4364, %v4412
        %v4414 = vpop.f32.mrf.mxu0
        %v4415 = vadd.f32 %v4366, %v4414
        %4416 = vmatmul.bf16.gmra.mxu0 %v3987
        %v4417 = vpop.f32.mrf.mxu0
        %v4418 = vadd.f32 %v4369, %v4417
        %v4419 = vpop.f32.mrf.mxu0
        %v4420 = vadd.f32 %v4371, %v4419
        %4421 = vdwg.mxu0
        %4422 = vmatpush.bf16.msra.mxu0 %v4225
        %4423 = vmatpush.bf16.msra.mxu0 %v4221
        %4424 = vmatpush.bf16.msra.mxu0 %v4217
        %4425 = vmatpush.bf16.msra.mxu0 %v4213
        %4426 = vmatpush.bf16.msra.mxu0 %v4209
        %4427 = vmatpush.bf16.msra.mxu0 %v4205
        %4428 = vmatpush.bf16.msra.mxu0 %v4201
        %4429 = vmatpush.bf16.msra.mxu0 %v4197
        %4430 = vmatmul.bf16.gmra.mxu0 %v3972
        %v4431 = vpop.f32.mrf.mxu0
        %v4432 = vadd.f32 %v3917, %v4431
        %v4433 = vpop.f32.mrf.mxu0
        %v4434 = vadd.f32 %v3917, %v4433
        %4435 = vmatmul.bf16.gmra.mxu0 %v3974
        %v4436 = vpop.f32.mrf.mxu0
        %v4437 = vadd.f32 %v3917, %v4436
        %v4438 = vpop.f32.mrf.mxu0
        %v4439 = vadd.f32 %v3917, %v4438
        %4440 = vmatmul.bf16.gmra.mxu0 %v3976
        %v4441 = vpop.f32.mrf.mxu0
        %v4442 = vadd.f32 %v3917, %v4441
        %v4443 = vpop.f32.mrf.mxu0
        %v4444 = vadd.f32 %v3917, %v4443
        %4445 = vmatmul.bf16.gmra.mxu0 %v3978
        %v4446 = vpop.f32.mrf.mxu0
        %v4447 = vadd.f32 %v3917, %v4446
        %v4448 = vpop.f32.mrf.mxu0
        %v4449 = vadd.f32 %v3917, %v4448
        %4450 = vmatmul.bf16.gmra.mxu0 %v3980
        %v4451 = vpop.f32.mrf.mxu0
        %v4452 = vadd.f32 %v3917, %v4451
        %v4453 = vpop.f32.mrf.mxu0
        %v4454 = vadd.f32 %v3917, %v4453
        %4455 = vmatmul.bf16.gmra.mxu0 %v3982
        %v4456 = vpop.f32.mrf.mxu0
        %v4457 = vadd.f32 %v3917, %v4456
        %v4458 = vpop.f32.mrf.mxu0
        %v4459 = vadd.f32 %v3917, %v4458
        %4460 = vmatmul.bf16.gmra.mxu0 %v3984
        %v4461 = vpop.f32.mrf.mxu0
        %v4462 = vadd.f32 %v3917, %v4461
        %v4463 = vpop.f32.mrf.mxu0
        %v4464 = vadd.f32 %v3917, %v4463
        %4465 = vmatmul.bf16.gmra.mxu0 %v3986
        %v4466 = vpop.f32.mrf.mxu0
        %v4467 = vadd.f32 %v3917, %v4466
        %v4468 = vpop.f32.mrf.mxu0
        %v4469 = vadd.f32 %v3917, %v4468
        %4470 = vdwg.mxu0
        %4471 = vmatpush.bf16.msra.mxu0 %v4257
        %4472 = vmatpush.bf16.msra.mxu0 %v4253
        %4473 = vmatpush.bf16.msra.mxu0 %v4249
        %4474 = vmatpush.bf16.msra.mxu0 %v4245
        %4475 = vmatpush.bf16.msra.mxu0 %v4241
        %4476 = vmatpush.bf16.msra.mxu0 %v4237
        %4477 = vmatpush.bf16.msra.mxu0 %v4233
        %4478 = vmatpush.bf16.msra.mxu0 %v4229
        %4479 = vmatmul.bf16.gmra.mxu0 %v3973
        %v4480 = vpop.f32.mrf.mxu0
        %v4481 = vadd.f32 %v4432, %v4480
        %v4482 = vpop.f32.mrf.mxu0
        %v4483 = vadd.f32 %v4434, %v4482
        %4484 = vmatmul.bf16.gmra.mxu0 %v3975
        %v4485 = vpop.f32.mrf.mxu0
        %v4486 = vadd.f32 %v4437, %v4485
        %v4487 = vpop.f32.mrf.mxu0
        %v4488 = vadd.f32 %v4439, %v4487
        %4489 = vmatmul.bf16.gmra.mxu0 %v3977
        %v4490 = vpop.f32.mrf.mxu0
        %v4491 = vadd.f32 %v4442, %v4490
        %v4492 = vpop.f32.mrf.mxu0
        %v4493 = vadd.f32 %v4444, %v4492
        %4494 = vmatmul.bf16.gmra.mxu0 %v3979
        %v4495 = vpop.f32.mrf.mxu0
        %v4496 = vadd.f32 %v4447, %v4495
        %v4497 = vpop.f32.mrf.mxu0
        %v4498 = vadd.f32 %v4449, %v4497
        %4499 = vmatmul.bf16.gmra.mxu0 %v3981
        %v4500 = vpop.f32.mrf.mxu0
        %v4501 = vadd.f32 %v4452, %v4500
        %v4502 = vpop.f32.mrf.mxu0
        %v4503 = vadd.f32 %v4454, %v4502
        %4504 = vmatmul.bf16.gmra.mxu0 %v3983
        %v4505 = vpop.f32.mrf.mxu0
        %v4506 = vadd.f32 %v4457, %v4505
        %v4507 = vpop.f32.mrf.mxu0
        %v4508 = vadd.f32 %v4459, %v4507
        %4509 = vmatmul.bf16.gmra.mxu0 %v3985
        %v4510 = vpop.f32.mrf.mxu0
        %v4511 = vadd.f32 %v4462, %v4510
        %v4512 = vpop.f32.mrf.mxu0
        %v4513 = vadd.f32 %v4464, %v4512
        %4514 = vmatmul.bf16.gmra.mxu0 %v3987
        %v4515 = vpop.f32.mrf.mxu0
        %v4516 = vadd.f32 %v4467, %v4515
        %v4517 = vpop.f32.mrf.mxu0
        %v4518 = vadd.f32 %v4469, %v4517
        %4519 = vdwg.mxu0
        %4520 = vmatpush.bf16.msra.mxu0 %v4226
        %4521 = vmatpush.bf16.msra.mxu0 %v4222
        %4522 = vmatpush.bf16.msra.mxu0 %v4218
        %4523 = vmatpush.bf16.msra.mxu0 %v4214
        %4524 = vmatpush.bf16.msra.mxu0 %v4210
        %4525 = vmatpush.bf16.msra.mxu0 %v4206
        %4526 = vmatpush.bf16.msra.mxu0 %v4202
        %4527 = vmatpush.bf16.msra.mxu0 %v4198
        %4528 = vmatmul.bf16.gmra.mxu0 %v3972
        %v4529 = vpop.f32.mrf.mxu0
        %v4530 = vadd.f32 %v3918, %v4529
        %v4531 = vpop.f32.mrf.mxu0
        %v4532 = vadd.f32 %v3918, %v4531
        %4533 = vmatmul.bf16.gmra.mxu0 %v3974
        %v4534 = vpop.f32.mrf.mxu0
        %v4535 = vadd.f32 %v3918, %v4534
        %v4536 = vpop.f32.mrf.mxu0
        %v4537 = vadd.f32 %v3918, %v4536
        %4538 = vmatmul.bf16.gmra.mxu0 %v3976
        %v4539 = vpop.f32.mrf.mxu0
        %v4540 = vadd.f32 %v3918, %v4539
        %v4541 = vpop.f32.mrf.mxu0
        %v4542 = vadd.f32 %v3918, %v4541
        %4543 = vmatmul.bf16.gmra.mxu0 %v3978
        %v4544 = vpop.f32.mrf.mxu0
        %v4545 = vadd.f32 %v3918, %v4544
        %v4546 = vpop.f32.mrf.mxu0
        %v4547 = vadd.f32 %v3918, %v4546
        %4548 = vmatmul.bf16.gmra.mxu0 %v3980
        %v4549 = vpop.f32.mrf.mxu0
        %v4550 = vadd.f32 %v3918, %v4549
        %v4551 = vpop.f32.mrf.mxu0
        %v4552 = vadd.f32 %v3918, %v4551
        %4553 = vmatmul.bf16.gmra.mxu0 %v3982
        %v4554 = vpop.f32.mrf.mxu0
        %v4555 = vadd.f32 %v3918, %v4554
        %v4556 = vpop.f32.mrf.mxu0
        %v4557 = vadd.f32 %v3918, %v4556
        %4558 = vmatmul.bf16.gmra.mxu0 %v3984
        %v4559 = vpop.f32.mrf.mxu0
        %v4560 = vadd.f32 %v3918, %v4559
        %v4561 = vpop.f32.mrf.mxu0
        %v4562 = vadd.f32 %v3918, %v4561
        %4563 = vmatmul.bf16.gmra.mxu0 %v3986
        %v4564 = vpop.f32.mrf.mxu0
        %v4565 = vadd.f32 %v3918, %v4564
        %v4566 = vpop.f32.mrf.mxu0
        %v4567 = vadd.f32 %v3918, %v4566
        %4568 = vdwg.mxu0
        %4569 = vmatpush.bf16.msra.mxu0 %v4258
        %4570 = vmatpush.bf16.msra.mxu0 %v4254
        %4571 = vmatpush.bf16.msra.mxu0 %v4250
        %4572 = vmatpush.bf16.msra.mxu0 %v4246
        %4573 = vmatpush.bf16.msra.mxu0 %v4242
        %4574 = vmatpush.bf16.msra.mxu0 %v4238
        %4575 = vmatpush.bf16.msra.mxu0 %v4234
        %4576 = vmatpush.bf16.msra.mxu0 %v4230
        %4577 = vmatmul.bf16.gmra.mxu0 %v3973
        %v4578 = vpop.f32.mrf.mxu0
        %v4579 = vadd.f32 %v4530, %v4578
        %v4580 = vpop.f32.mrf.mxu0
        %v4581 = vadd.f32 %v4532, %v4580
        %4582 = vmatmul.bf16.gmra.mxu0 %v3975
        %v4583 = vpop.f32.mrf.mxu0
        %v4584 = vadd.f32 %v4535, %v4583
        %v4585 = vpop.f32.mrf.mxu0
        %v4586 = vadd.f32 %v4537, %v4585
        %4587 = vmatmul.bf16.gmra.mxu0 %v3977
        %v4588 = vpop.f32.mrf.mxu0
        %v4589 = vadd.f32 %v4540, %v4588
        %v4590 = vpop.f32.mrf.mxu0
        %v4591 = vadd.f32 %v4542, %v4590
        %4592 = vmatmul.bf16.gmra.mxu0 %v3979
        %v4593 = vpop.f32.mrf.mxu0
        %v4594 = vadd.f32 %v4545, %v4593
        %v4595 = vpop.f32.mrf.mxu0
        %v4596 = vadd.f32 %v4547, %v4595
        %4597 = vmatmul.bf16.gmra.mxu0 %v3981
        %v4598 = vpop.f32.mrf.mxu0
        %v4599 = vadd.f32 %v4550, %v4598
        %v4600 = vpop.f32.mrf.mxu0
        %v4601 = vadd.f32 %v4552, %v4600
        %4602 = vmatmul.bf16.gmra.mxu0 %v3983
        %v4603 = vpop.f32.mrf.mxu0
        %v4604 = vadd.f32 %v4555, %v4603
        %v4605 = vpop.f32.mrf.mxu0
        %v4606 = vadd.f32 %v4557, %v4605
        %4607 = vmatmul.bf16.gmra.mxu0 %v3985
        %v4608 = vpop.f32.mrf.mxu0
        %v4609 = vadd.f32 %v4560, %v4608
        %v4610 = vpop.f32.mrf.mxu0
        %v4611 = vadd.f32 %v4562, %v4610
        %4612 = vmatmul.bf16.gmra.mxu0 %v3987
        %v4613 = vpop.f32.mrf.mxu0
        %v4614 = vadd.f32 %v4565, %v4613
        %v4615 = vpop.f32.mrf.mxu0
        %v4616 = vadd.f32 %v4567, %v4615
        %4617 = vdwg.mxu0
        %4618 = vmatpush.bf16.msra.mxu0 %v4227
        %4619 = vmatpush.bf16.msra.mxu0 %v4223
        %4620 = vmatpush.bf16.msra.mxu0 %v4219
        %4621 = vmatpush.bf16.msra.mxu0 %v4215
        %4622 = vmatpush.bf16.msra.mxu0 %v4211
        %4623 = vmatpush.bf16.msra.mxu0 %v4207
        %4624 = vmatpush.bf16.msra.mxu0 %v4203
        %4625 = vmatpush.bf16.msra.mxu0 %v4199
        %4626 = vmatmul.bf16.gmra.mxu0 %v3972
        %v4627 = vpop.f32.mrf.mxu0
        %v4628 = vadd.f32 %v3919, %v4627
        %v4629 = vpop.f32.mrf.mxu0
        %v4630 = vadd.f32 %v3919, %v4629
        %4631 = vmatmul.bf16.gmra.mxu0 %v3974
        %v4632 = vpop.f32.mrf.mxu0
        %v4633 = vadd.f32 %v3919, %v4632
        %v4634 = vpop.f32.mrf.mxu0
        %v4635 = vadd.f32 %v3919, %v4634
        %4636 = vmatmul.bf16.gmra.mxu0 %v3976
        %v4637 = vpop.f32.mrf.mxu0
        %v4638 = vadd.f32 %v3919, %v4637
        %v4639 = vpop.f32.mrf.mxu0
        %v4640 = vadd.f32 %v3919, %v4639
        %4641 = vmatmul.bf16.gmra.mxu0 %v3978
        %v4642 = vpop.f32.mrf.mxu0
        %v4643 = vadd.f32 %v3919, %v4642
        %v4644 = vpop.f32.mrf.mxu0
        %v4645 = vadd.f32 %v3919, %v4644
        %4646 = vmatmul.bf16.gmra.mxu0 %v3980
        %v4647 = vpop.f32.mrf.mxu0
        %v4648 = vadd.f32 %v3919, %v4647
        %v4649 = vpop.f32.mrf.mxu0
        %v4650 = vadd.f32 %v3919, %v4649
        %4651 = vmatmul.bf16.gmra.mxu0 %v3982
        %v4652 = vpop.f32.mrf.mxu0
        %v4653 = vadd.f32 %v3919, %v4652
        %v4654 = vpop.f32.mrf.mxu0
        %v4655 = vadd.f32 %v3919, %v4654
        %4656 = vmatmul.bf16.gmra.mxu0 %v3984
        %v4657 = vpop.f32.mrf.mxu0
        %v4658 = vadd.f32 %v3919, %v4657
        %v4659 = vpop.f32.mrf.mxu0
        %v4660 = vadd.f32 %v3919, %v4659
        %4661 = vmatmul.bf16.gmra.mxu0 %v3986
        %v4662 = vpop.f32.mrf.mxu0
        %v4663 = vadd.f32 %v3919, %v4662
        %v4664 = vpop.f32.mrf.mxu0
        %v4665 = vadd.f32 %v3919, %v4664
        %4666 = vdwg.mxu0
        %4667 = vmatpush.bf16.msra.mxu0 %v4259
        %4668 = vmatpush.bf16.msra.mxu0 %v4255
        %4669 = vmatpush.bf16.msra.mxu0 %v4251
        %4670 = vmatpush.bf16.msra.mxu0 %v4247
        %4671 = vmatpush.bf16.msra.mxu0 %v4243
        %4672 = vmatpush.bf16.msra.mxu0 %v4239
        %4673 = vmatpush.bf16.msra.mxu0 %v4235
        %4674 = vmatpush.bf16.msra.mxu0 %v4231
        %4675 = vmatmul.bf16.gmra.mxu0 %v3973
        %v4676 = vpop.f32.mrf.mxu0
        %v4677 = vadd.f32 %v4628, %v4676
        %v4678 = vpop.f32.mrf.mxu0
        %v4679 = vadd.f32 %v4630, %v4678
        %4680 = vmatmul.bf16.gmra.mxu0 %v3975
        %v4681 = vpop.f32.mrf.mxu0
        %v4682 = vadd.f32 %v4633, %v4681
        %v4683 = vpop.f32.mrf.mxu0
        %v4684 = vadd.f32 %v4635, %v4683
        %4685 = vmatmul.bf16.gmra.mxu0 %v3977
        %v4686 = vpop.f32.mrf.mxu0
        %v4687 = vadd.f32 %v4638, %v4686
        %v4688 = vpop.f32.mrf.mxu0
        %v4689 = vadd.f32 %v4640, %v4688
        %4690 = vmatmul.bf16.gmra.mxu0 %v3979
        %v4691 = vpop.f32.mrf.mxu0
        %v4692 = vadd.f32 %v4643, %v4691
        %v4693 = vpop.f32.mrf.mxu0
        %v4694 = vadd.f32 %v4645, %v4693
        %4695 = vmatmul.bf16.gmra.mxu0 %v3981
        %v4696 = vpop.f32.mrf.mxu0
        %v4697 = vadd.f32 %v4648, %v4696
        %v4698 = vpop.f32.mrf.mxu0
        %v4699 = vadd.f32 %v4650, %v4698
        %4700 = vmatmul.bf16.gmra.mxu0 %v3983
        %v4701 = vpop.f32.mrf.mxu0
        %v4702 = vadd.f32 %v4653, %v4701
        %v4703 = vpop.f32.mrf.mxu0
        %v4704 = vadd.f32 %v4655, %v4703
        %4705 = vmatmul.bf16.gmra.mxu0 %v3985
        %v4706 = vpop.f32.mrf.mxu0
        %v4707 = vadd.f32 %v4658, %v4706
        %v4708 = vpop.f32.mrf.mxu0
        %v4709 = vadd.f32 %v4660, %v4708
        %4710 = vmatmul.bf16.gmra.mxu0 %v3987
        %v4711 = vpop.f32.mrf.mxu0
        %v4712 = vadd.f32 %v4663, %v4711
        %v4713 = vpop.f32.mrf.mxu0
        %v4714 = vadd.f32 %v4665, %v4713
        %4715 = vdwg.mxu0
        %v4716 = vpack.c.bf16 %v3818, %v3818
        %v4717 = vpack.c.bf16 %v3820, %v3820
        %v4718 = vpack.c.bf16 %v3822, %v3822
        %v4719 = vpack.c.bf16 %v3824, %v3824
        %v4720 = vpack.c.bf16 %v3826, %v3826
        %v4721 = vpack.c.bf16 %v3828, %v3828
        %v4722 = vpack.c.bf16 %v3830, %v3830
        %v4723 = vpack.c.bf16 %v3832, %v3832
        %v4724 = vpack.c.bf16 %v3834, %v3834
        %v4725 = vpack.c.bf16 %v3836, %v3836
        %v4726 = vpack.c.bf16 %v3838, %v3838
        %v4727 = vpack.c.bf16 %v3840, %v3840
        %v4728 = vpack.c.bf16 %v3842, %v3842
        %v4729 = vpack.c.bf16 %v3844, %v3844
        %v4730 = vpack.c.bf16 %v3846, %v3846
        %v4731 = vpack.c.bf16 %v3848, %v3848
        %v4732 = vpack.c.bf16 %v3819, %v3819
        %v4733 = vpack.c.bf16 %v3821, %v3821
        %v4734 = vpack.c.bf16 %v3823, %v3823
        %v4735 = vpack.c.bf16 %v3825, %v3825
        %v4736 = vpack.c.bf16 %v3827, %v3827
        %v4737 = vpack.c.bf16 %v3829, %v3829
        %v4738 = vpack.c.bf16 %v3831, %v3831
        %v4739 = vpack.c.bf16 %v3833, %v3833
        %v4740 = vpack.c.bf16 %v3835, %v3835
        %v4741 = vpack.c.bf16 %v3837, %v3837
        %v4742 = vpack.c.bf16 %v3839, %v3839
        %v4743 = vpack.c.bf16 %v3841, %v3841
        %v4744 = vpack.c.bf16 %v3843, %v3843
        %v4745 = vpack.c.bf16 %v3845, %v3845
        %v4746 = vpack.c.bf16 %v3847, %v3847
        %v4747 = vpack.c.bf16 %v3849, %v3849
        %v4748 = vpack.c.bf16 %v4383, %v4383
        %v4749 = vpack.c.bf16 %v4385, %v4385
        %v4750 = vpack.c.bf16 %v4388, %v4388
        %v4751 = vpack.c.bf16 %v4390, %v4390
        %v4752 = vpack.c.bf16 %v4393, %v4393
        %v4753 = vpack.c.bf16 %v4395, %v4395
        %v4754 = vpack.c.bf16 %v4398, %v4398
        %v4755 = vpack.c.bf16 %v4400, %v4400
        %v4756 = vpack.c.bf16 %v4403, %v4403
        %v4757 = vpack.c.bf16 %v4405, %v4405
        %v4758 = vpack.c.bf16 %v4408, %v4408
        %v4759 = vpack.c.bf16 %v4410, %v4410
        %v4760 = vpack.c.bf16 %v4413, %v4413
        %v4761 = vpack.c.bf16 %v4415, %v4415
        %v4762 = vpack.c.bf16 %v4418, %v4418
        %v4763 = vpack.c.bf16 %v4420, %v4420
        %v4764 = vpack.c.bf16 %v4481, %v4481
        %v4765 = vpack.c.bf16 %v4483, %v4483
        %v4766 = vpack.c.bf16 %v4486, %v4486
        %v4767 = vpack.c.bf16 %v4488, %v4488
        %v4768 = vpack.c.bf16 %v4491, %v4491
        %v4769 = vpack.c.bf16 %v4493, %v4493
        %v4770 = vpack.c.bf16 %v4496, %v4496
        %v4771 = vpack.c.bf16 %v4498, %v4498
        %v4772 = vpack.c.bf16 %v4501, %v4501
        %v4773 = vpack.c.bf16 %v4503, %v4503
        %v4774 = vpack.c.bf16 %v4506, %v4506
        %v4775 = vpack.c.bf16 %v4508, %v4508
        %v4776 = vpack.c.bf16 %v4511, %v4511
        %v4777 = vpack.c.bf16 %v4513, %v4513
        %v4778 = vpack.c.bf16 %v4516, %v4516
        %v4779 = vpack.c.bf16 %v4518, %v4518
        %v4780 = vpack.c.bf16 %v4579, %v4579
        %v4781 = vpack.c.bf16 %v4581, %v4581
        %v4782 = vpack.c.bf16 %v4584, %v4584
        %v4783 = vpack.c.bf16 %v4586, %v4586
        %v4784 = vpack.c.bf16 %v4589, %v4589
        %v4785 = vpack.c.bf16 %v4591, %v4591
        %v4786 = vpack.c.bf16 %v4594, %v4594
        %v4787 = vpack.c.bf16 %v4596, %v4596
        %v4788 = vpack.c.bf16 %v4599, %v4599
        %v4789 = vpack.c.bf16 %v4601, %v4601
        %v4790 = vpack.c.bf16 %v4604, %v4604
        %v4791 = vpack.c.bf16 %v4606, %v4606
        %v4792 = vpack.c.bf16 %v4609, %v4609
        %v4793 = vpack.c.bf16 %v4611, %v4611
        %v4794 = vpack.c.bf16 %v4614, %v4614
        %v4795 = vpack.c.bf16 %v4616, %v4616
        %v4796 = vpack.c.bf16 %v4677, %v4677
        %v4797 = vpack.c.bf16 %v4679, %v4679
        %v4798 = vpack.c.bf16 %v4682, %v4682
        %v4799 = vpack.c.bf16 %v4684, %v4684
        %v4800 = vpack.c.bf16 %v4687, %v4687
        %v4801 = vpack.c.bf16 %v4689, %v4689
        %v4802 = vpack.c.bf16 %v4692, %v4692
        %v4803 = vpack.c.bf16 %v4694, %v4694
        %v4804 = vpack.c.bf16 %v4697, %v4697
        %v4805 = vpack.c.bf16 %v4699, %v4699
        %v4806 = vpack.c.bf16 %v4702, %v4702
        %v4807 = vpack.c.bf16 %v4704, %v4704
        %v4808 = vpack.c.bf16 %v4707, %v4707
        %v4809 = vpack.c.bf16 %v4709, %v4709
        %v4810 = vpack.c.bf16 %v4712, %v4712
        %v4811 = vpack.c.bf16 %v4714, %v4714
        %v4828 = vunpack.c.l.b16 %v4716
        %v4829 = vunpack.c.l.b16 %v4717
        %v4830 = vunpack.c.l.b16 %v4718
        %v4831 = vunpack.c.l.b16 %v4719
        %v4832 = vunpack.c.l.b16 %v4720
        %v4833 = vunpack.c.l.b16 %v4721
        %v4834 = vunpack.c.l.b16 %v4722
        %v4835 = vunpack.c.l.b16 %v4723
        %v4836 = vunpack.c.l.b16 %v4724
        %v4837 = vunpack.c.l.b16 %v4725
        %v4838 = vunpack.c.l.b16 %v4726
        %v4839 = vunpack.c.l.b16 %v4727
        %v4840 = vunpack.c.l.b16 %v4728
        %v4841 = vunpack.c.l.b16 %v4729
        %v4842 = vunpack.c.l.b16 %v4730
        %v4843 = vunpack.c.l.b16 %v4731
        %v4844 = vpack.c.b16 %v4829, %v4828
        %v4845 = vpack.c.b16 %v4831, %v4830
        %v4846 = vpack.c.b16 %v4833, %v4832
        %v4847 = vpack.c.b16 %v4835, %v4834
        %v4848 = vpack.c.b16 %v4837, %v4836
        %v4849 = vpack.c.b16 %v4839, %v4838
        %v4850 = vpack.c.b16 %v4841, %v4840
        %v4851 = vpack.c.b16 %v4843, %v4842
        %v4876 = vunpack.c.l.b16 %v4748
        %v4877 = vunpack.c.l.b16 %v4749
        %v4878 = vunpack.c.l.b16 %v4750
        %v4879 = vunpack.c.l.b16 %v4751
        %v4880 = vunpack.c.l.b16 %v4752
        %v4881 = vunpack.c.l.b16 %v4753
        %v4882 = vunpack.c.l.b16 %v4754
        %v4883 = vunpack.c.l.b16 %v4755
        %v4884 = vunpack.c.l.b16 %v4756
        %v4885 = vunpack.c.l.b16 %v4757
        %v4886 = vunpack.c.l.b16 %v4758
        %v4887 = vunpack.c.l.b16 %v4759
        %v4888 = vunpack.c.l.b16 %v4760
        %v4889 = vunpack.c.l.b16 %v4761
        %v4890 = vunpack.c.l.b16 %v4762
        %v4891 = vunpack.c.l.b16 %v4763
        %v4892 = vpack.c.b16 %v4877, %v4876
        %v4893 = vpack.c.b16 %v4879, %v4878
        %v4894 = vpack.c.b16 %v4881, %v4880
        %v4895 = vpack.c.b16 %v4883, %v4882
        %v4896 = vpack.c.b16 %v4885, %v4884
        %v4897 = vpack.c.b16 %v4887, %v4886
        %v4898 = vpack.c.b16 %v4889, %v4888
        %v4899 = vpack.c.b16 %v4891, %v4890
        %4908 = vmatpush.bf16.xpose.msra.mxu0 %v4899
        %4909 = vmatpush.bf16.xpose.msra.mxu0 %v4898
        %4910 = vmatpush.bf16.xpose.msra.mxu0 %v4897
        %4911 = vmatpush.bf16.xpose.msra.mxu0 %v4896
        %4912 = vmatpush.bf16.xpose.msra.mxu0 %v4895
        %4913 = vmatpush.bf16.xpose.msra.mxu0 %v4894
        %4914 = vmatpush.bf16.xpose.msra.mxu0 %v4893
        %4915 = vmatpush.bf16.xpose.msra.mxu0 %v4892
        %4916 = vmatmul.bf16.gmra.mxu0 %v4844
        %v4917 = vpop.f32.mrf.mxu0
        %v4918 = vadd.f32 %v856, %v4917
        %v4919 = vpop.f32.mrf.mxu0
        %v4920 = vadd.f32 %v856, %v4919
        %4921 = vmatmul.bf16.gmra.mxu0 %v4845
        %v4922 = vpop.f32.mrf.mxu0
        %v4923 = vadd.f32 %v856, %v4922
        %v4924 = vpop.f32.mrf.mxu0
        %v4925 = vadd.f32 %v856, %v4924
        %4926 = vmatmul.bf16.gmra.mxu0 %v4846
        %v4927 = vpop.f32.mrf.mxu0
        %v4928 = vadd.f32 %v856, %v4927
        %v4929 = vpop.f32.mrf.mxu0
        %v4930 = vadd.f32 %v856, %v4929
        %4931 = vmatmul.bf16.gmra.mxu0 %v4847
        %v4932 = vpop.f32.mrf.mxu0
        %v4933 = vadd.f32 %v856, %v4932
        %v4934 = vpop.f32.mrf.mxu0
        %v4935 = vadd.f32 %v856, %v4934
        %4936 = vmatmul.bf16.gmra.mxu0 %v4848
        %v4937 = vpop.f32.mrf.mxu0
        %v4938 = vadd.f32 %v856, %v4937
        %v4939 = vpop.f32.mrf.mxu0
        %v4940 = vadd.f32 %v856, %v4939
        %4941 = vmatmul.bf16.gmra.mxu0 %v4849
        %v4942 = vpop.f32.mrf.mxu0
        %v4943 = vadd.f32 %v856, %v4942
        %v4944 = vpop.f32.mrf.mxu0
        %v4945 = vadd.f32 %v856, %v4944
        %4946 = vmatmul.bf16.gmra.mxu0 %v4850
        %v4947 = vpop.f32.mrf.mxu0
        %v4948 = vadd.f32 %v856, %v4947
        %v4949 = vpop.f32.mrf.mxu0
        %v4950 = vadd.f32 %v856, %v4949
        %4951 = vmatmul.bf16.gmra.mxu0 %v4851
        %v4952 = vpop.f32.mrf.mxu0
        %v4953 = vadd.f32 %v856, %v4952
        %v4954 = vpop.f32.mrf.mxu0
        %v4955 = vadd.f32 %v856, %v4954
        %4956 = vdwg.mxu0
        %v4973 = vunpack.c.l.b16 %v4732
        %v4974 = vunpack.c.l.b16 %v4733
        %v4975 = vunpack.c.l.b16 %v4734
        %v4976 = vunpack.c.l.b16 %v4735
        %v4977 = vunpack.c.l.b16 %v4736
        %v4978 = vunpack.c.l.b16 %v4737
        %v4979 = vunpack.c.l.b16 %v4738
        %v4980 = vunpack.c.l.b16 %v4739
        %v4981 = vunpack.c.l.b16 %v4740
        %v4982 = vunpack.c.l.b16 %v4741
        %v4983 = vunpack.c.l.b16 %v4742
        %v4984 = vunpack.c.l.b16 %v4743
        %v4985 = vunpack.c.l.b16 %v4744
        %v4986 = vunpack.c.l.b16 %v4745
        %v4987 = vunpack.c.l.b16 %v4746
        %v4988 = vunpack.c.l.b16 %v4747
        %v4989 = vpack.c.b16 %v4974, %v4973
        %v4990 = vpack.c.b16 %v4976, %v4975
        %v4991 = vpack.c.b16 %v4978, %v4977
        %v4992 = vpack.c.b16 %v4980, %v4979
        %v4993 = vpack.c.b16 %v4982, %v4981
        %v4994 = vpack.c.b16 %v4984, %v4983
        %v4995 = vpack.c.b16 %v4986, %v4985
        %v4996 = vpack.c.b16 %v4988, %v4987
        %v5021 = vunpack.c.l.b16 %v4764
        %v5022 = vunpack.c.l.b16 %v4765
        %v5023 = vunpack.c.l.b16 %v4766
        %v5024 = vunpack.c.l.b16 %v4767
        %v5025 = vunpack.c.l.b16 %v4768
        %v5026 = vunpack.c.l.b16 %v4769
        %v5027 = vunpack.c.l.b16 %v4770
        %v5028 = vunpack.c.l.b16 %v4771
        %v5029 = vunpack.c.l.b16 %v4772
        %v5030 = vunpack.c.l.b16 %v4773
        %v5031 = vunpack.c.l.b16 %v4774
        %v5032 = vunpack.c.l.b16 %v4775
        %v5033 = vunpack.c.l.b16 %v4776
        %v5034 = vunpack.c.l.b16 %v4777
        %v5035 = vunpack.c.l.b16 %v4778
        %v5036 = vunpack.c.l.b16 %v4779
        %v5037 = vpack.c.b16 %v5022, %v5021
        %v5038 = vpack.c.b16 %v5024, %v5023
        %v5039 = vpack.c.b16 %v5026, %v5025
        %v5040 = vpack.c.b16 %v5028, %v5027
        %v5041 = vpack.c.b16 %v5030, %v5029
        %v5042 = vpack.c.b16 %v5032, %v5031
        %v5043 = vpack.c.b16 %v5034, %v5033
        %v5044 = vpack.c.b16 %v5036, %v5035
        %5053 = vmatpush.bf16.xpose.msra.mxu0 %v5044
        %5054 = vmatpush.bf16.xpose.msra.mxu0 %v5043
        %5055 = vmatpush.bf16.xpose.msra.mxu0 %v5042
        %5056 = vmatpush.bf16.xpose.msra.mxu0 %v5041
        %5057 = vmatpush.bf16.xpose.msra.mxu0 %v5040
        %5058 = vmatpush.bf16.xpose.msra.mxu0 %v5039
        %5059 = vmatpush.bf16.xpose.msra.mxu0 %v5038
        %5060 = vmatpush.bf16.xpose.msra.mxu0 %v5037
        %5061 = vmatmul.bf16.gmra.mxu0 %v4989
        %v5062 = vpop.f32.mrf.mxu0
        %v5063 = vadd.f32 %v856, %v5062
        %v5064 = vpop.f32.mrf.mxu0
        %v5065 = vadd.f32 %v856, %v5064
        %5066 = vmatmul.bf16.gmra.mxu0 %v4990
        %v5067 = vpop.f32.mrf.mxu0
        %v5068 = vadd.f32 %v856, %v5067
        %v5069 = vpop.f32.mrf.mxu0
        %v5070 = vadd.f32 %v856, %v5069
        %5071 = vmatmul.bf16.gmra.mxu0 %v4991
        %v5072 = vpop.f32.mrf.mxu0
        %v5073 = vadd.f32 %v856, %v5072
        %v5074 = vpop.f32.mrf.mxu0
        %v5075 = vadd.f32 %v856, %v5074
        %5076 = vmatmul.bf16.gmra.mxu0 %v4992
        %v5077 = vpop.f32.mrf.mxu0
        %v5078 = vadd.f32 %v856, %v5077
        %v5079 = vpop.f32.mrf.mxu0
        %v5080 = vadd.f32 %v856, %v5079
        %5081 = vmatmul.bf16.gmra.mxu0 %v4993
        %v5082 = vpop.f32.mrf.mxu0
        %v5083 = vadd.f32 %v856, %v5082
        %v5084 = vpop.f32.mrf.mxu0
        %v5085 = vadd.f32 %v856, %v5084
        %5086 = vmatmul.bf16.gmra.mxu0 %v4994
        %v5087 = vpop.f32.mrf.mxu0
        %v5088 = vadd.f32 %v856, %v5087
        %v5089 = vpop.f32.mrf.mxu0
        %v5090 = vadd.f32 %v856, %v5089
        %5091 = vmatmul.bf16.gmra.mxu0 %v4995
        %v5092 = vpop.f32.mrf.mxu0
        %v5093 = vadd.f32 %v856, %v5092
        %v5094 = vpop.f32.mrf.mxu0
        %v5095 = vadd.f32 %v856, %v5094
        %5096 = vmatmul.bf16.gmra.mxu0 %v4996
        %v5097 = vpop.f32.mrf.mxu0
        %v5098 = vadd.f32 %v856, %v5097
        %v5099 = vpop.f32.mrf.mxu0
        %v5100 = vadd.f32 %v856, %v5099
        %5101 = vdwg.mxu0
        %5102 = vmax.xlane.f32.xlu0 %v4918
        %v5103 = vpop.xlane.xlu0 %5102
        %5104 = vmax.xlane.f32.xlu0 %v4920
        %v5105 = vpop.xlane.xlu0 %5104
        %5106 = vmax.xlane.f32.xlu0 %v4923
        %v5107 = vpop.xlane.xlu0 %5106
        %5108 = vmax.xlane.f32.xlu0 %v4925
        %v5109 = vpop.xlane.xlu0 %5108
        %5110 = vmax.xlane.f32.xlu0 %v4928
        %v5111 = vpop.xlane.xlu0 %5110
        %5112 = vmax.xlane.f32.xlu0 %v4930
        %v5113 = vpop.xlane.xlu0 %5112
        %5114 = vmax.xlane.f32.xlu0 %v4933
        %v5115 = vpop.xlane.xlu0 %5114
        %5116 = vmax.xlane.f32.xlu0 %v4935
        %v5117 = vpop.xlane.xlu0 %5116
        %5118 = vmax.xlane.f32.xlu0 %v4938
        %v5119 = vpop.xlane.xlu0 %5118
        %5120 = vmax.xlane.f32.xlu0 %v4940
        %v5121 = vpop.xlane.xlu0 %5120
        %5122 = vmax.xlane.f32.xlu0 %v4943
        %v5123 = vpop.xlane.xlu0 %5122
        %5124 = vmax.xlane.f32.xlu0 %v4945
        %v5125 = vpop.xlane.xlu0 %5124
        %5126 = vmax.xlane.f32.xlu0 %v4948
        %v5127 = vpop.xlane.xlu0 %5126
        %5128 = vmax.xlane.f32.xlu0 %v4950
        %v5129 = vpop.xlane.xlu0 %5128
        %5130 = vmax.xlane.f32.xlu0 %v4953
        %v5131 = vpop.xlane.xlu0 %5130
        %5132 = vmax.xlane.f32.xlu0 %v4955
        %v5133 = vpop.xlane.xlu0 %5132
        %5134 = vmax.xlane.f32.xlu0 %v5063
        %v5135 = vpop.xlane.xlu0 %5134
        %5136 = vmax.xlane.f32.xlu0 %v5065
        %v5137 = vpop.xlane.xlu0 %5136
        %5138 = vmax.xlane.f32.xlu0 %v5068
        %v5139 = vpop.xlane.xlu0 %5138
        %5140 = vmax.xlane.f32.xlu0 %v5070
        %v5141 = vpop.xlane.xlu0 %5140
        %5142 = vmax.xlane.f32.xlu0 %v5073
        %v5143 = vpop.xlane.xlu0 %5142
        %5144 = vmax.xlane.f32.xlu0 %v5075
        %v5145 = vpop.xlane.xlu0 %5144
        %5146 = vmax.xlane.f32.xlu0 %v5078
        %v5147 = vpop.xlane.xlu0 %5146
        %5148 = vmax.xlane.f32.xlu0 %v5080
        %v5149 = vpop.xlane.xlu0 %5148
        %5150 = vmax.xlane.f32.xlu0 %v5083
        %v5151 = vpop.xlane.xlu0 %5150
        %5152 = vmax.xlane.f32.xlu0 %v5085
        %v5153 = vpop.xlane.xlu0 %5152
        %5154 = vmax.xlane.f32.xlu0 %v5088
        %v5155 = vpop.xlane.xlu0 %5154
        %5156 = vmax.xlane.f32.xlu0 %v5090
        %v5157 = vpop.xlane.xlu0 %5156
        %5158 = vmax.xlane.f32.xlu0 %v5093
        %v5159 = vpop.xlane.xlu0 %5158
        %5160 = vmax.xlane.f32.xlu0 %v5095
        %v5161 = vpop.xlane.xlu0 %5160
        %5162 = vmax.xlane.f32.xlu0 %v5098
        %v5163 = vpop.xlane.xlu0 %5162
        %5164 = vmax.xlane.f32.xlu0 %v5100
        %v5165 = vpop.xlane.xlu0 %5164
        %v5166 = vmax.f32 %v5103, -1e+30
        %v5167 = vmax.f32 %v5105, -1e+30
        %v5168 = vmax.f32 %v5107, -1e+30
        %v5169 = vmax.f32 %v5109, -1e+30
        %v5170 = vmax.f32 %v5111, -1e+30
        %v5171 = vmax.f32 %v5113, -1e+30
        %v5172 = vmax.f32 %v5115, -1e+30
        %v5173 = vmax.f32 %v5117, -1e+30
        %v5174 = vmax.f32 %v5119, -1e+30
        %v5175 = vmax.f32 %v5121, -1e+30
        %v5176 = vmax.f32 %v5123, -1e+30
        %v5177 = vmax.f32 %v5125, -1e+30
        %v5178 = vmax.f32 %v5127, -1e+30
        %v5179 = vmax.f32 %v5129, -1e+30
        %v5180 = vmax.f32 %v5131, -1e+30
        %v5181 = vmax.f32 %v5133, -1e+30
        %v5182 = vmax.f32 %v5135, -1e+30
        %v5183 = vmax.f32 %v5137, -1e+30
        %v5184 = vmax.f32 %v5139, -1e+30
        %v5185 = vmax.f32 %v5141, -1e+30
        %v5186 = vmax.f32 %v5143, -1e+30
        %v5187 = vmax.f32 %v5145, -1e+30
        %v5188 = vmax.f32 %v5147, -1e+30
        %v5189 = vmax.f32 %v5149, -1e+30
        %v5190 = vmax.f32 %v5151, -1e+30
        %v5191 = vmax.f32 %v5153, -1e+30
        %v5192 = vmax.f32 %v5155, -1e+30
        %v5193 = vmax.f32 %v5157, -1e+30
        %v5194 = vmax.f32 %v5159, -1e+30
        %v5195 = vmax.f32 %v5161, -1e+30
        %v5196 = vmax.f32 %v5163, -1e+30
        %v5197 = vmax.f32 %v5165, -1e+30
        %v5198 = vsub.f32 -1e+30, %v5166
        %v5199 = vsub.f32 -1e+30, %v5167
        %v5200 = vsub.f32 -1e+30, %v5168
        %v5201 = vsub.f32 -1e+30, %v5169
        %v5202 = vsub.f32 -1e+30, %v5170
        %v5203 = vsub.f32 -1e+30, %v5171
        %v5204 = vsub.f32 -1e+30, %v5172
        %v5205 = vsub.f32 -1e+30, %v5173
        %v5206 = vsub.f32 -1e+30, %v5174
        %v5207 = vsub.f32 -1e+30, %v5175
        %v5208 = vsub.f32 -1e+30, %v5176
        %v5209 = vsub.f32 -1e+30, %v5177
        %v5210 = vsub.f32 -1e+30, %v5178
        %v5211 = vsub.f32 -1e+30, %v5179
        %v5212 = vsub.f32 -1e+30, %v5180
        %v5213 = vsub.f32 -1e+30, %v5181
        %v5214 = vsub.f32 -1e+30, %v5182
        %v5215 = vsub.f32 -1e+30, %v5183
        %v5216 = vsub.f32 -1e+30, %v5184
        %v5217 = vsub.f32 -1e+30, %v5185
        %v5218 = vsub.f32 -1e+30, %v5186
        %v5219 = vsub.f32 -1e+30, %v5187
        %v5220 = vsub.f32 -1e+30, %v5188
        %v5221 = vsub.f32 -1e+30, %v5189
        %v5222 = vsub.f32 -1e+30, %v5190
        %v5223 = vsub.f32 -1e+30, %v5191
        %v5224 = vsub.f32 -1e+30, %v5192
        %v5225 = vsub.f32 -1e+30, %v5193
        %v5226 = vsub.f32 -1e+30, %v5194
        %v5227 = vsub.f32 -1e+30, %v5195
        %v5228 = vsub.f32 -1e+30, %v5196
        %v5229 = vsub.f32 -1e+30, %v5197
        %v5230 = vmul.f32 %v5198, 1.442695
        %v5231 = vpow.pop %v5230
        %v5232 = vmul.f32 %v5199, 1.442695
        %v5233 = vpow.pop %v5232
        %v5234 = vmul.f32 %v5200, 1.442695
        %v5235 = vpow.pop %v5234
        %v5236 = vmul.f32 %v5201, 1.442695
        %v5237 = vpow.pop %v5236
        %v5238 = vmul.f32 %v5202, 1.442695
        %v5239 = vpow.pop %v5238
        %v5240 = vmul.f32 %v5203, 1.442695
        %v5241 = vpow.pop %v5240
        %v5242 = vmul.f32 %v5204, 1.442695
        %v5243 = vpow.pop %v5242
        %v5244 = vmul.f32 %v5205, 1.442695
        %v5245 = vpow.pop %v5244
        %v5246 = vmul.f32 %v5206, 1.442695
        %v5247 = vpow.pop %v5246
        %v5248 = vmul.f32 %v5207, 1.442695
        %v5249 = vpow.pop %v5248
        %v5250 = vmul.f32 %v5208, 1.442695
        %v5251 = vpow.pop %v5250
        %v5252 = vmul.f32 %v5209, 1.442695
        %v5253 = vpow.pop %v5252
        %v5254 = vmul.f32 %v5210, 1.442695
        %v5255 = vpow.pop %v5254
        %v5256 = vmul.f32 %v5211, 1.442695
        %v5257 = vpow.pop %v5256
        %v5258 = vmul.f32 %v5212, 1.442695
        %v5259 = vpow.pop %v5258
        %v5260 = vmul.f32 %v5213, 1.442695
        %v5261 = vpow.pop %v5260
        %v5262 = vmul.f32 %v5214, 1.442695
        %v5263 = vpow.pop %v5262
        %v5264 = vmul.f32 %v5215, 1.442695
        %v5265 = vpow.pop %v5264
        %v5266 = vmul.f32 %v5216, 1.442695
        %v5267 = vpow.pop %v5266
        %v5268 = vmul.f32 %v5217, 1.442695
        %v5269 = vpow.pop %v5268
        %v5270 = vmul.f32 %v5218, 1.442695
        %v5271 = vpow.pop %v5270
        %v5272 = vmul.f32 %v5219, 1.442695
        %v5273 = vpow.pop %v5272
        %v5274 = vmul.f32 %v5220, 1.442695
        %v5275 = vpow.pop %v5274
        %v5276 = vmul.f32 %v5221, 1.442695
        %v5277 = vpow.pop %v5276
        %v5278 = vmul.f32 %v5222, 1.442695
        %v5279 = vpow.pop %v5278
        %v5280 = vmul.f32 %v5223, 1.442695
        %v5281 = vpow.pop %v5280
        %v5282 = vmul.f32 %v5224, 1.442695
        %v5283 = vpow.pop %v5282
        %v5284 = vmul.f32 %v5225, 1.442695
        %v5285 = vpow.pop %v5284
        %v5286 = vmul.f32 %v5226, 1.442695
        %v5287 = vpow.pop %v5286
        %v5288 = vmul.f32 %v5227, 1.442695
        %v5289 = vpow.pop %v5288
        %v5290 = vmul.f32 %v5228, 1.442695
        %v5291 = vpow.pop %v5290
        %v5292 = vmul.f32 %v5229, 1.442695
        %v5293 = vpow.pop %v5292
        %v5294 = vsub.f32 %v4918, %v5166
        %v5295 = vsub.f32 %v4920, %v5167
        %v5296 = vsub.f32 %v4923, %v5168
        %v5297 = vsub.f32 %v4925, %v5169
        %v5298 = vsub.f32 %v4928, %v5170
        %v5299 = vsub.f32 %v4930, %v5171
        %v5300 = vsub.f32 %v4933, %v5172
        %v5301 = vsub.f32 %v4935, %v5173
        %v5302 = vsub.f32 %v4938, %v5174
        %v5303 = vsub.f32 %v4940, %v5175
        %v5304 = vsub.f32 %v4943, %v5176
        %v5305 = vsub.f32 %v4945, %v5177
        %v5306 = vsub.f32 %v4948, %v5178
        %v5307 = vsub.f32 %v4950, %v5179
        %v5308 = vsub.f32 %v4953, %v5180
        %v5309 = vsub.f32 %v4955, %v5181
        %v5310 = vsub.f32 %v5063, %v5182
        %v5311 = vsub.f32 %v5065, %v5183
        %v5312 = vsub.f32 %v5068, %v5184
        %v5313 = vsub.f32 %v5070, %v5185
        %v5314 = vsub.f32 %v5073, %v5186
        %v5315 = vsub.f32 %v5075, %v5187
        %v5316 = vsub.f32 %v5078, %v5188
        %v5317 = vsub.f32 %v5080, %v5189
        %v5318 = vsub.f32 %v5083, %v5190
        %v5319 = vsub.f32 %v5085, %v5191
        %v5320 = vsub.f32 %v5088, %v5192
        %v5321 = vsub.f32 %v5090, %v5193
        %v5322 = vsub.f32 %v5093, %v5194
        %v5323 = vsub.f32 %v5095, %v5195
        %v5324 = vsub.f32 %v5098, %v5196
        %v5325 = vsub.f32 %v5100, %v5197
        %v5326 = vmul.f32 %v5294, 1.442695
        %v5327 = vpow.pop %v5326
        %v5328 = vmul.f32 %v5295, 1.442695
        %v5329 = vpow.pop %v5328
        %v5330 = vmul.f32 %v5296, 1.442695
        %v5331 = vpow.pop %v5330
        %v5332 = vmul.f32 %v5297, 1.442695
        %v5333 = vpow.pop %v5332
        %v5334 = vmul.f32 %v5298, 1.442695
        %v5335 = vpow.pop %v5334
        %v5336 = vmul.f32 %v5299, 1.442695
        %v5337 = vpow.pop %v5336
        %v5338 = vmul.f32 %v5300, 1.442695
        %v5339 = vpow.pop %v5338
        %v5340 = vmul.f32 %v5301, 1.442695
        %v5341 = vpow.pop %v5340
        %v5342 = vmul.f32 %v5302, 1.442695
        %v5343 = vpow.pop %v5342
        %v5344 = vmul.f32 %v5303, 1.442695
        %v5345 = vpow.pop %v5344
        %v5346 = vmul.f32 %v5304, 1.442695
        %v5347 = vpow.pop %v5346
        %v5348 = vmul.f32 %v5305, 1.442695
        %v5349 = vpow.pop %v5348
        %v5350 = vmul.f32 %v5306, 1.442695
        %v5351 = vpow.pop %v5350
        %v5352 = vmul.f32 %v5307, 1.442695
        %v5353 = vpow.pop %v5352
        %v5354 = vmul.f32 %v5308, 1.442695
        %v5355 = vpow.pop %v5354
        %v5356 = vmul.f32 %v5309, 1.442695
        %v5357 = vpow.pop %v5356
        %v5358 = vmul.f32 %v5310, 1.442695
        %v5359 = vpow.pop %v5358
        %v5360 = vmul.f32 %v5311, 1.442695
        %v5361 = vpow.pop %v5360
        %v5362 = vmul.f32 %v5312, 1.442695
        %v5363 = vpow.pop %v5362
        %v5364 = vmul.f32 %v5313, 1.442695
        %v5365 = vpow.pop %v5364
        %v5366 = vmul.f32 %v5314, 1.442695
        %v5367 = vpow.pop %v5366
        %v5368 = vmul.f32 %v5315, 1.442695
        %v5369 = vpow.pop %v5368
        %v5370 = vmul.f32 %v5316, 1.442695
        %v5371 = vpow.pop %v5370
        %v5372 = vmul.f32 %v5317, 1.442695
        %v5373 = vpow.pop %v5372
        %v5374 = vmul.f32 %v5318, 1.442695
        %v5375 = vpow.pop %v5374
        %v5376 = vmul.f32 %v5319, 1.442695
        %v5377 = vpow.pop %v5376
        %v5378 = vmul.f32 %v5320, 1.442695
        %v5379 = vpow.pop %v5378
        %v5380 = vmul.f32 %v5321, 1.442695
        %v5381 = vpow.pop %v5380
        %v5382 = vmul.f32 %v5322, 1.442695
        %v5383 = vpow.pop %v5382
        %v5384 = vmul.f32 %v5323, 1.442695
        %v5385 = vpow.pop %v5384
        %v5386 = vmul.f32 %v5324, 1.442695
        %v5387 = vpow.pop %v5386
        %v5388 = vmul.f32 %v5325, 1.442695
        %v5389 = vpow.pop %v5388
        %v5390 = vmul.f32 %v5231, 0.0
        %v5391 = vmul.f32 %v5233, 0.0
        %v5392 = vmul.f32 %v5235, 0.0
        %v5393 = vmul.f32 %v5237, 0.0
        %v5394 = vmul.f32 %v5239, 0.0
        %v5395 = vmul.f32 %v5241, 0.0
        %v5396 = vmul.f32 %v5243, 0.0
        %v5397 = vmul.f32 %v5245, 0.0
        %v5398 = vmul.f32 %v5247, 0.0
        %v5399 = vmul.f32 %v5249, 0.0
        %v5400 = vmul.f32 %v5251, 0.0
        %v5401 = vmul.f32 %v5253, 0.0
        %v5402 = vmul.f32 %v5255, 0.0
        %v5403 = vmul.f32 %v5257, 0.0
        %v5404 = vmul.f32 %v5259, 0.0
        %v5405 = vmul.f32 %v5261, 0.0
        %v5406 = vmul.f32 %v5263, 0.0
        %v5407 = vmul.f32 %v5265, 0.0
        %v5408 = vmul.f32 %v5267, 0.0
        %v5409 = vmul.f32 %v5269, 0.0
        %v5410 = vmul.f32 %v5271, 0.0
        %v5411 = vmul.f32 %v5273, 0.0
        %v5412 = vmul.f32 %v5275, 0.0
        %v5413 = vmul.f32 %v5277, 0.0
        %v5414 = vmul.f32 %v5279, 0.0
        %v5415 = vmul.f32 %v5281, 0.0
        %v5416 = vmul.f32 %v5283, 0.0
        %v5417 = vmul.f32 %v5285, 0.0
        %v5418 = vmul.f32 %v5287, 0.0
        %v5419 = vmul.f32 %v5289, 0.0
        %v5420 = vmul.f32 %v5291, 0.0
        %v5421 = vmul.f32 %v5293, 0.0
        %5422 = vadd.xlane.f32.xlu0 %v5327
        %v5423 = vpop.xlane.xlu0 %5422
        %5424 = vadd.xlane.f32.xlu0 %v5329
        %v5425 = vpop.xlane.xlu0 %5424
        %5426 = vadd.xlane.f32.xlu0 %v5331
        %v5427 = vpop.xlane.xlu0 %5426
        %5428 = vadd.xlane.f32.xlu0 %v5333
        %v5429 = vpop.xlane.xlu0 %5428
        %5430 = vadd.xlane.f32.xlu0 %v5335
        %v5431 = vpop.xlane.xlu0 %5430
        %5432 = vadd.xlane.f32.xlu0 %v5337
        %v5433 = vpop.xlane.xlu0 %5432
        %5434 = vadd.xlane.f32.xlu0 %v5339
        %v5435 = vpop.xlane.xlu0 %5434
        %5436 = vadd.xlane.f32.xlu0 %v5341
        %v5437 = vpop.xlane.xlu0 %5436
        %5438 = vadd.xlane.f32.xlu0 %v5343
        %v5439 = vpop.xlane.xlu0 %5438
        %5440 = vadd.xlane.f32.xlu0 %v5345
        %v5441 = vpop.xlane.xlu0 %5440
        %5442 = vadd.xlane.f32.xlu0 %v5347
        %v5443 = vpop.xlane.xlu0 %5442
        %5444 = vadd.xlane.f32.xlu0 %v5349
        %v5445 = vpop.xlane.xlu0 %5444
        %5446 = vadd.xlane.f32.xlu0 %v5351
        %v5447 = vpop.xlane.xlu0 %5446
        %5448 = vadd.xlane.f32.xlu0 %v5353
        %v5449 = vpop.xlane.xlu0 %5448
        %5450 = vadd.xlane.f32.xlu0 %v5355
        %v5451 = vpop.xlane.xlu0 %5450
        %5452 = vadd.xlane.f32.xlu0 %v5357
        %v5453 = vpop.xlane.xlu0 %5452
        %5454 = vadd.xlane.f32.xlu0 %v5359
        %v5455 = vpop.xlane.xlu0 %5454
        %5456 = vadd.xlane.f32.xlu0 %v5361
        %v5457 = vpop.xlane.xlu0 %5456
        %5458 = vadd.xlane.f32.xlu0 %v5363
        %v5459 = vpop.xlane.xlu0 %5458
        %5460 = vadd.xlane.f32.xlu0 %v5365
        %v5461 = vpop.xlane.xlu0 %5460
        %5462 = vadd.xlane.f32.xlu0 %v5367
        %v5463 = vpop.xlane.xlu0 %5462
        %5464 = vadd.xlane.f32.xlu0 %v5369
        %v5465 = vpop.xlane.xlu0 %5464
        %5466 = vadd.xlane.f32.xlu0 %v5371
        %v5467 = vpop.xlane.xlu0 %5466
        %5468 = vadd.xlane.f32.xlu0 %v5373
        %v5469 = vpop.xlane.xlu0 %5468
        %5470 = vadd.xlane.f32.xlu0 %v5375
        %v5471 = vpop.xlane.xlu0 %5470
        %5472 = vadd.xlane.f32.xlu0 %v5377
        %v5473 = vpop.xlane.xlu0 %5472
        %5474 = vadd.xlane.f32.xlu0 %v5379
        %v5475 = vpop.xlane.xlu0 %5474
        %5476 = vadd.xlane.f32.xlu0 %v5381
        %v5477 = vpop.xlane.xlu0 %5476
        %5478 = vadd.xlane.f32.xlu0 %v5383
        %v5479 = vpop.xlane.xlu0 %5478
        %5480 = vadd.xlane.f32.xlu0 %v5385
        %v5481 = vpop.xlane.xlu0 %5480
        %5482 = vadd.xlane.f32.xlu0 %v5387
        %v5483 = vpop.xlane.xlu0 %5482
        %5484 = vadd.xlane.f32.xlu0 %v5389
        %v5485 = vpop.xlane.xlu0 %5484
        %v5486 = vadd.f32 %v5390, %v5423
        %v5487 = vadd.f32 %v5391, %v5425
        %v5488 = vadd.f32 %v5392, %v5427
        %v5489 = vadd.f32 %v5393, %v5429
        %v5490 = vadd.f32 %v5394, %v5431
        %v5491 = vadd.f32 %v5395, %v5433
        %v5492 = vadd.f32 %v5396, %v5435
        %v5493 = vadd.f32 %v5397, %v5437
        %v5494 = vadd.f32 %v5398, %v5439
        %v5495 = vadd.f32 %v5399, %v5441
        %v5496 = vadd.f32 %v5400, %v5443
        %v5497 = vadd.f32 %v5401, %v5445
        %v5498 = vadd.f32 %v5402, %v5447
        %v5499 = vadd.f32 %v5403, %v5449
        %v5500 = vadd.f32 %v5404, %v5451
        %v5501 = vadd.f32 %v5405, %v5453
        %v5502 = vadd.f32 %v5406, %v5455
        %v5503 = vadd.f32 %v5407, %v5457
        %v5504 = vadd.f32 %v5408, %v5459
        %v5505 = vadd.f32 %v5409, %v5461
        %v5506 = vadd.f32 %v5410, %v5463
        %v5507 = vadd.f32 %v5411, %v5465
        %v5508 = vadd.f32 %v5412, %v5467
        %v5509 = vadd.f32 %v5413, %v5469
        %v5510 = vadd.f32 %v5414, %v5471
        %v5511 = vadd.f32 %v5415, %v5473
        %v5512 = vadd.f32 %v5416, %v5475
        %v5513 = vadd.f32 %v5417, %v5477
        %v5514 = vadd.f32 %v5418, %v5479
        %v5515 = vadd.f32 %v5419, %v5481
        %v5516 = vadd.f32 %v5420, %v5483
        %v5517 = vadd.f32 %v5421, %v5485
        %v5518 = vpack.c.bf16 %v5327, %v5327
        %v5519 = vpack.c.bf16 %v5329, %v5329
        %v5520 = vpack.c.bf16 %v5331, %v5331
        %v5521 = vpack.c.bf16 %v5333, %v5333
        %v5522 = vpack.c.bf16 %v5335, %v5335
        %v5523 = vpack.c.bf16 %v5337, %v5337
        %v5524 = vpack.c.bf16 %v5339, %v5339
        %v5525 = vpack.c.bf16 %v5341, %v5341
        %v5526 = vpack.c.bf16 %v5343, %v5343
        %v5527 = vpack.c.bf16 %v5345, %v5345
        %v5528 = vpack.c.bf16 %v5347, %v5347
        %v5529 = vpack.c.bf16 %v5349, %v5349
        %v5530 = vpack.c.bf16 %v5351, %v5351
        %v5531 = vpack.c.bf16 %v5353, %v5353
        %v5532 = vpack.c.bf16 %v5355, %v5355
        %v5533 = vpack.c.bf16 %v5357, %v5357
        %v5534 = vpack.c.bf16 %v5359, %v5359
        %v5535 = vpack.c.bf16 %v5361, %v5361
        %v5536 = vpack.c.bf16 %v5363, %v5363
        %v5537 = vpack.c.bf16 %v5365, %v5365
        %v5538 = vpack.c.bf16 %v5367, %v5367
        %v5539 = vpack.c.bf16 %v5369, %v5369
        %v5540 = vpack.c.bf16 %v5371, %v5371
        %v5541 = vpack.c.bf16 %v5373, %v5373
        %v5542 = vpack.c.bf16 %v5375, %v5375
        %v5543 = vpack.c.bf16 %v5377, %v5377
        %v5544 = vpack.c.bf16 %v5379, %v5379
        %v5545 = vpack.c.bf16 %v5381, %v5381
        %v5546 = vpack.c.bf16 %v5383, %v5383
        %v5547 = vpack.c.bf16 %v5385, %v5385
        %v5548 = vpack.c.bf16 %v5387, %v5387
        %v5549 = vpack.c.bf16 %v5389, %v5389
        %v5566 = vunpack.c.l.b16 %v5518
        %v5567 = vunpack.c.l.b16 %v5519
        %v5568 = vunpack.c.l.b16 %v5520
        %v5569 = vunpack.c.l.b16 %v5521
        %v5570 = vunpack.c.l.b16 %v5522
        %v5571 = vunpack.c.l.b16 %v5523
        %v5572 = vunpack.c.l.b16 %v5524
        %v5573 = vunpack.c.l.b16 %v5525
        %v5574 = vunpack.c.l.b16 %v5526
        %v5575 = vunpack.c.l.b16 %v5527
        %v5576 = vunpack.c.l.b16 %v5528
        %v5577 = vunpack.c.l.b16 %v5529
        %v5578 = vunpack.c.l.b16 %v5530
        %v5579 = vunpack.c.l.b16 %v5531
        %v5580 = vunpack.c.l.b16 %v5532
        %v5581 = vunpack.c.l.b16 %v5533
        %v5582 = vpack.c.b16 %v5567, %v5566
        %v5583 = vpack.c.b16 %v5569, %v5568
        %v5584 = vpack.c.b16 %v5571, %v5570
        %v5585 = vpack.c.b16 %v5573, %v5572
        %v5586 = vpack.c.b16 %v5575, %v5574
        %v5587 = vpack.c.b16 %v5577, %v5576
        %v5588 = vpack.c.b16 %v5579, %v5578
        %v5589 = vpack.c.b16 %v5581, %v5580
        %v5614 = vunpack.c.l.b16 %v4780
        %v5615 = vunpack.c.l.b16 %v4781
        %v5616 = vunpack.c.l.b16 %v4782
        %v5617 = vunpack.c.l.b16 %v4783
        %v5618 = vunpack.c.l.b16 %v4784
        %v5619 = vunpack.c.l.b16 %v4785
        %v5620 = vunpack.c.l.b16 %v4786
        %v5621 = vunpack.c.l.b16 %v4787
        %v5622 = vunpack.c.l.b16 %v4788
        %v5623 = vunpack.c.l.b16 %v4789
        %v5624 = vunpack.c.l.b16 %v4790
        %v5625 = vunpack.c.l.b16 %v4791
        %v5626 = vunpack.c.l.b16 %v4792
        %v5627 = vunpack.c.l.b16 %v4793
        %v5628 = vunpack.c.l.b16 %v4794
        %v5629 = vunpack.c.l.b16 %v4795
        %v5630 = vpack.c.b16 %v5615, %v5614
        %v5631 = vpack.c.b16 %v5617, %v5616
        %v5632 = vpack.c.b16 %v5619, %v5618
        %v5633 = vpack.c.b16 %v5621, %v5620
        %v5634 = vpack.c.b16 %v5623, %v5622
        %v5635 = vpack.c.b16 %v5625, %v5624
        %v5636 = vpack.c.b16 %v5627, %v5626
        %v5637 = vpack.c.b16 %v5629, %v5628
        %5646 = vmatpush.bf16.msra.mxu0 %v5637
        %5647 = vmatpush.bf16.msra.mxu0 %v5636
        %5648 = vmatpush.bf16.msra.mxu0 %v5635
        %5649 = vmatpush.bf16.msra.mxu0 %v5634
        %5650 = vmatpush.bf16.msra.mxu0 %v5633
        %5651 = vmatpush.bf16.msra.mxu0 %v5632
        %5652 = vmatpush.bf16.msra.mxu0 %v5631
        %5653 = vmatpush.bf16.msra.mxu0 %v5630
        %5654 = vmatmul.bf16.gmra.mxu0 %v5582
        %v5655 = vpop.f32.mrf.mxu0
        %v5656 = vadd.f32 0.0, %v5655
        %v5657 = vpop.f32.mrf.mxu0
        %v5658 = vadd.f32 0.0, %v5657
        %5659 = vmatmul.bf16.gmra.mxu0 %v5583
        %v5660 = vpop.f32.mrf.mxu0
        %v5661 = vadd.f32 0.0, %v5660
        %v5662 = vpop.f32.mrf.mxu0
        %v5663 = vadd.f32 0.0, %v5662
        %5664 = vmatmul.bf16.gmra.mxu0 %v5584
        %v5665 = vpop.f32.mrf.mxu0
        %v5666 = vadd.f32 0.0, %v5665
        %v5667 = vpop.f32.mrf.mxu0
        %v5668 = vadd.f32 0.0, %v5667
        %5669 = vmatmul.bf16.gmra.mxu0 %v5585
        %v5670 = vpop.f32.mrf.mxu0
        %v5671 = vadd.f32 0.0, %v5670
        %v5672 = vpop.f32.mrf.mxu0
        %v5673 = vadd.f32 0.0, %v5672
        %5674 = vmatmul.bf16.gmra.mxu0 %v5586
        %v5675 = vpop.f32.mrf.mxu0
        %v5676 = vadd.f32 0.0, %v5675
        %v5677 = vpop.f32.mrf.mxu0
        %v5678 = vadd.f32 0.0, %v5677
        %5679 = vmatmul.bf16.gmra.mxu0 %v5587
        %v5680 = vpop.f32.mrf.mxu0
        %v5681 = vadd.f32 0.0, %v5680
        %v5682 = vpop.f32.mrf.mxu0
        %v5683 = vadd.f32 0.0, %v5682
        %5684 = vmatmul.bf16.gmra.mxu0 %v5588
        %v5685 = vpop.f32.mrf.mxu0
        %v5686 = vadd.f32 0.0, %v5685
        %v5687 = vpop.f32.mrf.mxu0
        %v5688 = vadd.f32 0.0, %v5687
        %5689 = vmatmul.bf16.gmra.mxu0 %v5589
        %v5690 = vpop.f32.mrf.mxu0
        %v5691 = vadd.f32 0.0, %v5690
        %v5692 = vpop.f32.mrf.mxu0
        %v5693 = vadd.f32 0.0, %v5692
        %5694 = vdwg.mxu0
        %v5711 = vunpack.c.l.b16 %v5534
        %v5712 = vunpack.c.l.b16 %v5535
        %v5713 = vunpack.c.l.b16 %v5536
        %v5714 = vunpack.c.l.b16 %v5537
        %v5715 = vunpack.c.l.b16 %v5538
        %v5716 = vunpack.c.l.b16 %v5539
        %v5717 = vunpack.c.l.b16 %v5540
        %v5718 = vunpack.c.l.b16 %v5541
        %v5719 = vunpack.c.l.b16 %v5542
        %v5720 = vunpack.c.l.b16 %v5543
        %v5721 = vunpack.c.l.b16 %v5544
        %v5722 = vunpack.c.l.b16 %v5545
        %v5723 = vunpack.c.l.b16 %v5546
        %v5724 = vunpack.c.l.b16 %v5547
        %v5725 = vunpack.c.l.b16 %v5548
        %v5726 = vunpack.c.l.b16 %v5549
        %v5727 = vpack.c.b16 %v5712, %v5711
        %v5728 = vpack.c.b16 %v5714, %v5713
        %v5729 = vpack.c.b16 %v5716, %v5715
        %v5730 = vpack.c.b16 %v5718, %v5717
        %v5731 = vpack.c.b16 %v5720, %v5719
        %v5732 = vpack.c.b16 %v5722, %v5721
        %v5733 = vpack.c.b16 %v5724, %v5723
        %v5734 = vpack.c.b16 %v5726, %v5725
        %v5759 = vunpack.c.l.b16 %v4796
        %v5760 = vunpack.c.l.b16 %v4797
        %v5761 = vunpack.c.l.b16 %v4798
        %v5762 = vunpack.c.l.b16 %v4799
        %v5763 = vunpack.c.l.b16 %v4800
        %v5764 = vunpack.c.l.b16 %v4801
        %v5765 = vunpack.c.l.b16 %v4802
        %v5766 = vunpack.c.l.b16 %v4803
        %v5767 = vunpack.c.l.b16 %v4804
        %v5768 = vunpack.c.l.b16 %v4805
        %v5769 = vunpack.c.l.b16 %v4806
        %v5770 = vunpack.c.l.b16 %v4807
        %v5771 = vunpack.c.l.b16 %v4808
        %v5772 = vunpack.c.l.b16 %v4809
        %v5773 = vunpack.c.l.b16 %v4810
        %v5774 = vunpack.c.l.b16 %v4811
        %v5775 = vpack.c.b16 %v5760, %v5759
        %v5776 = vpack.c.b16 %v5762, %v5761
        %v5777 = vpack.c.b16 %v5764, %v5763
        %v5778 = vpack.c.b16 %v5766, %v5765
        %v5779 = vpack.c.b16 %v5768, %v5767
        %v5780 = vpack.c.b16 %v5770, %v5769
        %v5781 = vpack.c.b16 %v5772, %v5771
        %v5782 = vpack.c.b16 %v5774, %v5773
        %5791 = vmatpush.bf16.msra.mxu0 %v5782
        %5792 = vmatpush.bf16.msra.mxu0 %v5781
        %5793 = vmatpush.bf16.msra.mxu0 %v5780
        %5794 = vmatpush.bf16.msra.mxu0 %v5779
        %5795 = vmatpush.bf16.msra.mxu0 %v5778
        %5796 = vmatpush.bf16.msra.mxu0 %v5777
        %5797 = vmatpush.bf16.msra.mxu0 %v5776
        %5798 = vmatpush.bf16.msra.mxu0 %v5775
        %5799 = vmatmul.bf16.gmra.mxu0 %v5727
        %v5800 = vpop.f32.mrf.mxu0
        %v5801 = vadd.f32 0.0, %v5800
        %v5802 = vpop.f32.mrf.mxu0
        %v5803 = vadd.f32 0.0, %v5802
        %5804 = vmatmul.bf16.gmra.mxu0 %v5728
        %v5805 = vpop.f32.mrf.mxu0
        %v5806 = vadd.f32 0.0, %v5805
        %v5807 = vpop.f32.mrf.mxu0
        %v5808 = vadd.f32 0.0, %v5807
        %5809 = vmatmul.bf16.gmra.mxu0 %v5729
        %v5810 = vpop.f32.mrf.mxu0
        %v5811 = vadd.f32 0.0, %v5810
        %v5812 = vpop.f32.mrf.mxu0
        %v5813 = vadd.f32 0.0, %v5812
        %5814 = vmatmul.bf16.gmra.mxu0 %v5730
        %v5815 = vpop.f32.mrf.mxu0
        %v5816 = vadd.f32 0.0, %v5815
        %v5817 = vpop.f32.mrf.mxu0
        %v5818 = vadd.f32 0.0, %v5817
        %5819 = vmatmul.bf16.gmra.mxu0 %v5731
        %v5820 = vpop.f32.mrf.mxu0
        %v5821 = vadd.f32 0.0, %v5820
        %v5822 = vpop.f32.mrf.mxu0
        %v5823 = vadd.f32 0.0, %v5822
        %5824 = vmatmul.bf16.gmra.mxu0 %v5732
        %v5825 = vpop.f32.mrf.mxu0
        %v5826 = vadd.f32 0.0, %v5825
        %v5827 = vpop.f32.mrf.mxu0
        %v5828 = vadd.f32 0.0, %v5827
        %5829 = vmatmul.bf16.gmra.mxu0 %v5733
        %v5830 = vpop.f32.mrf.mxu0
        %v5831 = vadd.f32 0.0, %v5830
        %v5832 = vpop.f32.mrf.mxu0
        %v5833 = vadd.f32 0.0, %v5832
        %5834 = vmatmul.bf16.gmra.mxu0 %v5734
        %v5835 = vpop.f32.mrf.mxu0
        %v5836 = vadd.f32 0.0, %v5835
        %v5837 = vpop.f32.mrf.mxu0
        %v5838 = vadd.f32 0.0, %v5837
        %5839 = vdwg.mxu0
        %v5840 = vadd.f32 %v5390, %v5656
        %v5841 = vadd.f32 %v5391, %v5658
        %v5842 = vadd.f32 %v5392, %v5661
        %v5843 = vadd.f32 %v5393, %v5663
        %v5844 = vadd.f32 %v5394, %v5666
        %v5845 = vadd.f32 %v5395, %v5668
        %v5846 = vadd.f32 %v5396, %v5671
        %v5847 = vadd.f32 %v5397, %v5673
        %v5848 = vadd.f32 %v5398, %v5676
        %v5849 = vadd.f32 %v5399, %v5678
        %v5850 = vadd.f32 %v5400, %v5681
        %v5851 = vadd.f32 %v5401, %v5683
        %v5852 = vadd.f32 %v5402, %v5686
        %v5853 = vadd.f32 %v5403, %v5688
        %v5854 = vadd.f32 %v5404, %v5691
        %v5855 = vadd.f32 %v5405, %v5693
        %v5856 = vadd.f32 %v5406, %v5801
        %v5857 = vadd.f32 %v5407, %v5803
        %v5858 = vadd.f32 %v5408, %v5806
        %v5859 = vadd.f32 %v5409, %v5808
        %v5860 = vadd.f32 %v5410, %v5811
        %v5861 = vadd.f32 %v5411, %v5813
        %v5862 = vadd.f32 %v5412, %v5816
        %v5863 = vadd.f32 %v5413, %v5818
        %v5864 = vadd.f32 %v5414, %v5821
        %v5865 = vadd.f32 %v5415, %v5823
        %v5866 = vadd.f32 %v5416, %v5826
        %v5867 = vadd.f32 %v5417, %v5828
        %v5868 = vadd.f32 %v5418, %v5831
        %v5869 = vadd.f32 %v5419, %v5833
        %v5870 = vadd.f32 %v5420, %v5836
        %v5871 = vadd.f32 %v5421, %v5838
        %v5872 = vrcp.pop %v5486
        %v5873 = vrcp.pop %v5487
        %v5874 = vrcp.pop %v5488
        %v5875 = vrcp.pop %v5489
        %v5876 = vrcp.pop %v5490
        %v5877 = vrcp.pop %v5491
        %v5878 = vrcp.pop %v5492
        %v5879 = vrcp.pop %v5493
        %v5880 = vrcp.pop %v5494
        %v5881 = vrcp.pop %v5495
        %v5882 = vrcp.pop %v5496
        %v5883 = vrcp.pop %v5497
        %v5884 = vrcp.pop %v5498
        %v5885 = vrcp.pop %v5499
        %v5886 = vrcp.pop %v5500
        %v5887 = vrcp.pop %v5501
        %v5888 = vrcp.pop %v5502
        %v5889 = vrcp.pop %v5503
        %v5890 = vrcp.pop %v5504
        %v5891 = vrcp.pop %v5505
        %v5892 = vrcp.pop %v5506
        %v5893 = vrcp.pop %v5507
        %v5894 = vrcp.pop %v5508
        %v5895 = vrcp.pop %v5509
        %v5896 = vrcp.pop %v5510
        %v5897 = vrcp.pop %v5511
        %v5898 = vrcp.pop %v5512
        %v5899 = vrcp.pop %v5513
        %v5900 = vrcp.pop %v5514
        %v5901 = vrcp.pop %v5515
        %v5902 = vrcp.pop %v5516
        %v5903 = vrcp.pop %v5517
        %v5904 = vmul.f32 %v5840, %v5872
        %v5905 = vmul.f32 %v5841, %v5873
        %v5906 = vmul.f32 %v5842, %v5874
        %v5907 = vmul.f32 %v5843, %v5875
        %v5908 = vmul.f32 %v5844, %v5876
        %v5909 = vmul.f32 %v5845, %v5877
        %v5910 = vmul.f32 %v5846, %v5878
        %v5911 = vmul.f32 %v5847, %v5879
        %v5912 = vmul.f32 %v5848, %v5880
        %v5913 = vmul.f32 %v5849, %v5881
        %v5914 = vmul.f32 %v5850, %v5882
        %v5915 = vmul.f32 %v5851, %v5883
        %v5916 = vmul.f32 %v5852, %v5884
        %v5917 = vmul.f32 %v5853, %v5885
        %v5918 = vmul.f32 %v5854, %v5886
        %v5919 = vmul.f32 %v5855, %v5887
        %v5920 = vmul.f32 %v5856, %v5888
        %v5921 = vmul.f32 %v5857, %v5889
        %v5922 = vmul.f32 %v5858, %v5890
        %v5923 = vmul.f32 %v5859, %v5891
        %v5924 = vmul.f32 %v5860, %v5892
        %v5925 = vmul.f32 %v5861, %v5893
        %v5926 = vmul.f32 %v5862, %v5894
        %v5927 = vmul.f32 %v5863, %v5895
        %v5928 = vmul.f32 %v5864, %v5896
        %v5929 = vmul.f32 %v5865, %v5897
        %v5930 = vmul.f32 %v5866, %v5898
        %v5931 = vmul.f32 %v5867, %v5899
        %v5932 = vmul.f32 %v5868, %v5900
        %v5933 = vmul.f32 %v5869, %v5901
        %v5934 = vmul.f32 %v5870, %v5902
        %v5935 = vmul.f32 %v5871, %v5903
        %v5936 = vadd.f32 %v3818, %v5904
        %v5937 = vadd.f32 %v3819, %v5920
        %v5938 = vadd.f32 %v3820, %v5905
        %v5939 = vadd.f32 %v3821, %v5921
        %v5940 = vadd.f32 %v3822, %v5906
        %v5941 = vadd.f32 %v3823, %v5922
        %v5942 = vadd.f32 %v3824, %v5907
        %v5943 = vadd.f32 %v3825, %v5923
        %v5944 = vadd.f32 %v3826, %v5908
        %v5945 = vadd.f32 %v3827, %v5924
        %v5946 = vadd.f32 %v3828, %v5909
        %v5947 = vadd.f32 %v3829, %v5925
        %v5948 = vadd.f32 %v3830, %v5910
        %v5949 = vadd.f32 %v3831, %v5926
        %v5950 = vadd.f32 %v3832, %v5911
        %v5951 = vadd.f32 %v3833, %v5927
        %v5952 = vadd.f32 %v3834, %v5912
        %v5953 = vadd.f32 %v3835, %v5928
        %v5954 = vadd.f32 %v3836, %v5913
        %v5955 = vadd.f32 %v3837, %v5929
        %v5956 = vadd.f32 %v3838, %v5914
        %v5957 = vadd.f32 %v3839, %v5930
        %v5958 = vadd.f32 %v3840, %v5915
        %v5959 = vadd.f32 %v3841, %v5931
        %v5960 = vadd.f32 %v3842, %v5916
        %v5961 = vadd.f32 %v3843, %v5932
        %v5962 = vadd.f32 %v3844, %v5917
        %v5963 = vadd.f32 %v3845, %v5933
        %v5964 = vadd.f32 %v3846, %v5918
        %v5965 = vadd.f32 %v3847, %v5934
        %v5966 = vadd.f32 %v3848, %v5919
        %v5967 = vadd.f32 %v3849, %v5935
        %s5968 = scalar_lea.vmem %s12, 1
        %v5969 = vld [vmem:[%s5968] ss:$4 sm:$0x3]
        %s5970 = scalar_lea.vmem [#allocation20], 1
        %v5971 = vld [vmem:[%s5970] ss:$4 sm:$0x3]
        %v5972 = vadd.f32 %v5936, %v5937
        %5973 = vadd.xlane.f32.xlu0 %v5972
        %v5974 = vpop.xlane.xlu0 %5973
        %v5975 = vadd.f32 %v5938, %v5939
        %5976 = vadd.xlane.f32.xlu0 %v5975
        %v5977 = vpop.xlane.xlu0 %5976
        %v5978 = vadd.f32 %v5940, %v5941
        %5979 = vadd.xlane.f32.xlu0 %v5978
        %v5980 = vpop.xlane.xlu0 %5979
        %v5981 = vadd.f32 %v5942, %v5943
        %5982 = vadd.xlane.f32.xlu0 %v5981
        %v5983 = vpop.xlane.xlu0 %5982
        %v5984 = vadd.f32 %v5944, %v5945
        %5985 = vadd.xlane.f32.xlu0 %v5984
        %v5986 = vpop.xlane.xlu0 %5985
        %v5987 = vadd.f32 %v5946, %v5947
        %5988 = vadd.xlane.f32.xlu0 %v5987
        %v5989 = vpop.xlane.xlu0 %5988
        %v5990 = vadd.f32 %v5948, %v5949
        %5991 = vadd.xlane.f32.xlu0 %v5990
        %v5992 = vpop.xlane.xlu0 %5991
        %v5993 = vadd.f32 %v5950, %v5951
        %5994 = vadd.xlane.f32.xlu0 %v5993
        %v5995 = vpop.xlane.xlu0 %5994
        %v5996 = vadd.f32 %v5952, %v5953
        %5997 = vadd.xlane.f32.xlu0 %v5996
        %v5998 = vpop.xlane.xlu0 %5997
        %v5999 = vadd.f32 %v5954, %v5955
        %6000 = vadd.xlane.f32.xlu0 %v5999
        %v6001 = vpop.xlane.xlu0 %6000
        %v6002 = vadd.f32 %v5956, %v5957
        %6003 = vadd.xlane.f32.xlu0 %v6002
        %v6004 = vpop.xlane.xlu0 %6003
        %v6005 = vadd.f32 %v5958, %v5959
        %6006 = vadd.xlane.f32.xlu0 %v6005
        %v6007 = vpop.xlane.xlu0 %6006
        %v6008 = vadd.f32 %v5960, %v5961
        %6009 = vadd.xlane.f32.xlu0 %v6008
        %v6010 = vpop.xlane.xlu0 %6009
        %v6011 = vadd.f32 %v5962, %v5963
        %6012 = vadd.xlane.f32.xlu0 %v6011
        %v6013 = vpop.xlane.xlu0 %6012
        %v6014 = vadd.f32 %v5964, %v5965
        %6015 = vadd.xlane.f32.xlu0 %v6014
        %v6016 = vpop.xlane.xlu0 %6015
        %v6017 = vadd.f32 %v5966, %v5967
        %6018 = vadd.xlane.f32.xlu0 %v6017
        %v6019 = vpop.xlane.xlu0 %6018
        %v6020 = vmul.f32 %v5974, %v3423
        %v6021 = vmul.f32 %v5977, %v3423
        %v6022 = vmul.f32 %v5980, %v3423
        %v6023 = vmul.f32 %v5983, %v3423
        %v6024 = vmul.f32 %v5986, %v3423
        %v6025 = vmul.f32 %v5989, %v3423
        %v6026 = vmul.f32 %v5992, %v3423
        %v6027 = vmul.f32 %v5995, %v3423
        %v6028 = vmul.f32 %v5998, %v3423
        %v6029 = vmul.f32 %v6001, %v3423
        %v6030 = vmul.f32 %v6004, %v3423
        %v6031 = vmul.f32 %v6007, %v3423
        %v6032 = vmul.f32 %v6010, %v3423
        %v6033 = vmul.f32 %v6013, %v3423
        %v6034 = vmul.f32 %v6016, %v3423
        %v6035 = vmul.f32 %v6019, %v3423
        %v6036 = vsub.f32 %v5936, %v6020
        %v6037 = vsub.f32 %v5937, %v6020
        %v6038 = vsub.f32 %v5938, %v6021
        %v6039 = vsub.f32 %v5939, %v6021
        %v6040 = vsub.f32 %v5940, %v6022
        %v6041 = vsub.f32 %v5941, %v6022
        %v6042 = vsub.f32 %v5942, %v6023
        %v6043 = vsub.f32 %v5943, %v6023
        %v6044 = vsub.f32 %v5944, %v6024
        %v6045 = vsub.f32 %v5945, %v6024
        %v6046 = vsub.f32 %v5946, %v6025
        %v6047 = vsub.f32 %v5947, %v6025
        %v6048 = vsub.f32 %v5948, %v6026
        %v6049 = vsub.f32 %v5949, %v6026
        %v6050 = vsub.f32 %v5950, %v6027
        %v6051 = vsub.f32 %v5951, %v6027
        %v6052 = vsub.f32 %v5952, %v6028
        %v6053 = vsub.f32 %v5953, %v6028
        %v6054 = vsub.f32 %v5954, %v6029
        %v6055 = vsub.f32 %v5955, %v6029
        %v6056 = vsub.f32 %v5956, %v6030
        %v6057 = vsub.f32 %v5957, %v6030
        %v6058 = vsub.f32 %v5958, %v6031
        %v6059 = vsub.f32 %v5959, %v6031
        %v6060 = vsub.f32 %v5960, %v6032
        %v6061 = vsub.f32 %v5961, %v6032
        %v6062 = vsub.f32 %v5962, %v6033
        %v6063 = vsub.f32 %v5963, %v6033
        %v6064 = vsub.f32 %v5964, %v6034
        %v6065 = vsub.f32 %v5965, %v6034
        %v6066 = vsub.f32 %v5966, %v6035
        %v6067 = vsub.f32 %v5967, %v6035
        %v6068 = vmul.f32 %v6036, %v6036
        %v6069 = vmul.f32 %v6037, %v6037
        %v6070 = vmul.f32 %v6038, %v6038
        %v6071 = vmul.f32 %v6039, %v6039
        %v6072 = vmul.f32 %v6040, %v6040
        %v6073 = vmul.f32 %v6041, %v6041
        %v6074 = vmul.f32 %v6042, %v6042
        %v6075 = vmul.f32 %v6043, %v6043
        %v6076 = vmul.f32 %v6044, %v6044
        %v6077 = vmul.f32 %v6045, %v6045
        %v6078 = vmul.f32 %v6046, %v6046
        %v6079 = vmul.f32 %v6047, %v6047
        %v6080 = vmul.f32 %v6048, %v6048
        %v6081 = vmul.f32 %v6049, %v6049
        %v6082 = vmul.f32 %v6050, %v6050
        %v6083 = vmul.f32 %v6051, %v6051
        %v6084 = vmul.f32 %v6052, %v6052
        %v6085 = vmul.f32 %v6053, %v6053
        %v6086 = vmul.f32 %v6054, %v6054
        %v6087 = vmul.f32 %v6055, %v6055
        %v6088 = vmul.f32 %v6056, %v6056
        %v6089 = vmul.f32 %v6057, %v6057
        %v6090 = vmul.f32 %v6058, %v6058
        %v6091 = vmul.f32 %v6059, %v6059
        %v6092 = vmul.f32 %v6060, %v6060
        %v6093 = vmul.f32 %v6061, %v6061
        %v6094 = vmul.f32 %v6062, %v6062
        %v6095 = vmul.f32 %v6063, %v6063
        %v6096 = vmul.f32 %v6064, %v6064
        %v6097 = vmul.f32 %v6065, %v6065
        %v6098 = vmul.f32 %v6066, %v6066
        %v6099 = vmul.f32 %v6067, %v6067
        %v6100 = vadd.f32 %v6068, %v6069
        %6101 = vadd.xlane.f32.xlu0 %v6100
        %v6102 = vpop.xlane.xlu0 %6101
        %v6103 = vadd.f32 %v6070, %v6071
        %6104 = vadd.xlane.f32.xlu0 %v6103
        %v6105 = vpop.xlane.xlu0 %6104
        %v6106 = vadd.f32 %v6072, %v6073
        %6107 = vadd.xlane.f32.xlu0 %v6106
        %v6108 = vpop.xlane.xlu0 %6107
        %v6109 = vadd.f32 %v6074, %v6075
        %6110 = vadd.xlane.f32.xlu0 %v6109
        %v6111 = vpop.xlane.xlu0 %6110
        %v6112 = vadd.f32 %v6076, %v6077
        %6113 = vadd.xlane.f32.xlu0 %v6112
        %v6114 = vpop.xlane.xlu0 %6113
        %v6115 = vadd.f32 %v6078, %v6079
        %6116 = vadd.xlane.f32.xlu0 %v6115
        %v6117 = vpop.xlane.xlu0 %6116
        %v6118 = vadd.f32 %v6080, %v6081
        %6119 = vadd.xlane.f32.xlu0 %v6118
        %v6120 = vpop.xlane.xlu0 %6119
        %v6121 = vadd.f32 %v6082, %v6083
        %6122 = vadd.xlane.f32.xlu0 %v6121
        %v6123 = vpop.xlane.xlu0 %6122
        %v6124 = vadd.f32 %v6084, %v6085
        %6125 = vadd.xlane.f32.xlu0 %v6124
        %v6126 = vpop.xlane.xlu0 %6125
        %v6127 = vadd.f32 %v6086, %v6087
        %6128 = vadd.xlane.f32.xlu0 %v6127
        %v6129 = vpop.xlane.xlu0 %6128
        %v6130 = vadd.f32 %v6088, %v6089
        %6131 = vadd.xlane.f32.xlu0 %v6130
        %v6132 = vpop.xlane.xlu0 %6131
        %v6133 = vadd.f32 %v6090, %v6091
        %6134 = vadd.xlane.f32.xlu0 %v6133
        %v6135 = vpop.xlane.xlu0 %6134
        %v6136 = vadd.f32 %v6092, %v6093
        %6137 = vadd.xlane.f32.xlu0 %v6136
        %v6138 = vpop.xlane.xlu0 %6137
        %v6139 = vadd.f32 %v6094, %v6095
        %6140 = vadd.xlane.f32.xlu0 %v6139
        %v6141 = vpop.xlane.xlu0 %6140
        %v6142 = vadd.f32 %v6096, %v6097
        %6143 = vadd.xlane.f32.xlu0 %v6142
        %v6144 = vpop.xlane.xlu0 %6143
        %v6145 = vadd.f32 %v6098, %v6099
        %6146 = vadd.xlane.f32.xlu0 %v6145
        %v6147 = vpop.xlane.xlu0 %6146
        %v6148 = vmul.f32 %v6102, %v3423
        %v6149 = vmul.f32 %v6105, %v3423
        %v6150 = vmul.f32 %v6108, %v3423
        %v6151 = vmul.f32 %v6111, %v3423
        %v6152 = vmul.f32 %v6114, %v3423
        %v6153 = vmul.f32 %v6117, %v3423
        %v6154 = vmul.f32 %v6120, %v3423
        %v6155 = vmul.f32 %v6123, %v3423
        %v6156 = vmul.f32 %v6126, %v3423
        %v6157 = vmul.f32 %v6129, %v3423
        %v6158 = vmul.f32 %v6132, %v3423
        %v6159 = vmul.f32 %v6135, %v3423
        %v6160 = vmul.f32 %v6138, %v3423
        %v6161 = vmul.f32 %v6141, %v3423
        %v6162 = vmul.f32 %v6144, %v3423
        %v6163 = vmul.f32 %v6147, %v3423
        %v6164 = vadd.f32 %v6148, 1e-05
        %v6165 = vadd.f32 %v6149, 1e-05
        %v6166 = vadd.f32 %v6150, 1e-05
        %v6167 = vadd.f32 %v6151, 1e-05
        %v6168 = vadd.f32 %v6152, 1e-05
        %v6169 = vadd.f32 %v6153, 1e-05
        %v6170 = vadd.f32 %v6154, 1e-05
        %v6171 = vadd.f32 %v6155, 1e-05
        %v6172 = vadd.f32 %v6156, 1e-05
        %v6173 = vadd.f32 %v6157, 1e-05
        %v6174 = vadd.f32 %v6158, 1e-05
        %v6175 = vadd.f32 %v6159, 1e-05
        %v6176 = vadd.f32 %v6160, 1e-05
        %v6177 = vadd.f32 %v6161, 1e-05
        %v6178 = vadd.f32 %v6162, 1e-05
        %v6179 = vadd.f32 %v6163, 1e-05
        %v6180 = vrsqrt.pop %v6164
        %v6181 = vmul.f32 %v6180, %v6164
        %v6182 = vmul.f32 %v6181, %v6180
        %v6183 = vmul.f32 0.5, %v6182
        %v6184 = vsub.f32 1.5, %v6183
        %v6185 = vmul.f32 %v6180, %v6184
        %vm6186 = vweird.f32 %v6164
        %vm6187 = vweird.f32 %v6180
        %vm6188 = vmor %vm6186, %vm6187
        %v6189 = vsel %vm6188, %v6180, %v6185
        %v6190 = vrsqrt.pop %v6165
        %v6191 = vmul.f32 %v6190, %v6165
        %v6192 = vmul.f32 %v6191, %v6190
        %v6193 = vmul.f32 0.5, %v6192
        %v6194 = vsub.f32 1.5, %v6193
        %v6195 = vmul.f32 %v6190, %v6194
        %vm6196 = vweird.f32 %v6165
        %vm6197 = vweird.f32 %v6190
        %vm6198 = vmor %vm6196, %vm6197
        %v6199 = vsel %vm6198, %v6190, %v6195
        %v6200 = vrsqrt.pop %v6166
        %v6201 = vmul.f32 %v6200, %v6166
        %v6202 = vmul.f32 %v6201, %v6200
        %v6203 = vmul.f32 0.5, %v6202
        %v6204 = vsub.f32 1.5, %v6203
        %v6205 = vmul.f32 %v6200, %v6204
        %vm6206 = vweird.f32 %v6166
        %vm6207 = vweird.f32 %v6200
        %vm6208 = vmor %vm6206, %vm6207
        %v6209 = vsel %vm6208, %v6200, %v6205
        %v6210 = vrsqrt.pop %v6167
        %v6211 = vmul.f32 %v6210, %v6167
        %v6212 = vmul.f32 %v6211, %v6210
        %v6213 = vmul.f32 0.5, %v6212
        %v6214 = vsub.f32 1.5, %v6213
        %v6215 = vmul.f32 %v6210, %v6214
        %vm6216 = vweird.f32 %v6167
        %vm6217 = vweird.f32 %v6210
        %vm6218 = vmor %vm6216, %vm6217
        %v6219 = vsel %vm6218, %v6210, %v6215
        %v6220 = vrsqrt.pop %v6168
        %v6221 = vmul.f32 %v6220, %v6168
        %v6222 = vmul.f32 %v6221, %v6220
        %v6223 = vmul.f32 0.5, %v6222
        %v6224 = vsub.f32 1.5, %v6223
        %v6225 = vmul.f32 %v6220, %v6224
        %vm6226 = vweird.f32 %v6168
        %vm6227 = vweird.f32 %v6220
        %vm6228 = vmor %vm6226, %vm6227
        %v6229 = vsel %vm6228, %v6220, %v6225
        %v6230 = vrsqrt.pop %v6169
        %v6231 = vmul.f32 %v6230, %v6169
        %v6232 = vmul.f32 %v6231, %v6230
        %v6233 = vmul.f32 0.5, %v6232
        %v6234 = vsub.f32 1.5, %v6233
        %v6235 = vmul.f32 %v6230, %v6234
        %vm6236 = vweird.f32 %v6169
        %vm6237 = vweird.f32 %v6230
        %vm6238 = vmor %vm6236, %vm6237
        %v6239 = vsel %vm6238, %v6230, %v6235
        %v6240 = vrsqrt.pop %v6170
        %v6241 = vmul.f32 %v6240, %v6170
        %v6242 = vmul.f32 %v6241, %v6240
        %v6243 = vmul.f32 0.5, %v6242
        %v6244 = vsub.f32 1.5, %v6243
        %v6245 = vmul.f32 %v6240, %v6244
        %vm6246 = vweird.f32 %v6170
        %vm6247 = vweird.f32 %v6240
        %vm6248 = vmor %vm6246, %vm6247
        %v6249 = vsel %vm6248, %v6240, %v6245
        %v6250 = vrsqrt.pop %v6171
        %v6251 = vmul.f32 %v6250, %v6171
        %v6252 = vmul.f32 %v6251, %v6250
        %v6253 = vmul.f32 0.5, %v6252
        %v6254 = vsub.f32 1.5, %v6253
        %v6255 = vmul.f32 %v6250, %v6254
        %vm6256 = vweird.f32 %v6171
        %vm6257 = vweird.f32 %v6250
        %vm6258 = vmor %vm6256, %vm6257
        %v6259 = vsel %vm6258, %v6250, %v6255
        %v6260 = vrsqrt.pop %v6172
        %v6261 = vmul.f32 %v6260, %v6172
        %v6262 = vmul.f32 %v6261, %v6260
        %v6263 = vmul.f32 0.5, %v6262
        %v6264 = vsub.f32 1.5, %v6263
        %v6265 = vmul.f32 %v6260, %v6264
        %vm6266 = vweird.f32 %v6172
        %vm6267 = vweird.f32 %v6260
        %vm6268 = vmor %vm6266, %vm6267
        %v6269 = vsel %vm6268, %v6260, %v6265
        %v6270 = vrsqrt.pop %v6173
        %v6271 = vmul.f32 %v6270, %v6173
        %v6272 = vmul.f32 %v6271, %v6270
        %v6273 = vmul.f32 0.5, %v6272
        %v6274 = vsub.f32 1.5, %v6273
        %v6275 = vmul.f32 %v6270, %v6274
        %vm6276 = vweird.f32 %v6173
        %vm6277 = vweird.f32 %v6270
        %vm6278 = vmor %vm6276, %vm6277
        %v6279 = vsel %vm6278, %v6270, %v6275
        %v6280 = vrsqrt.pop %v6174
        %v6281 = vmul.f32 %v6280, %v6174
        %v6282 = vmul.f32 %v6281, %v6280
        %v6283 = vmul.f32 0.5, %v6282
        %v6284 = vsub.f32 1.5, %v6283
        %v6285 = vmul.f32 %v6280, %v6284
        %vm6286 = vweird.f32 %v6174
        %vm6287 = vweird.f32 %v6280
        %vm6288 = vmor %vm6286, %vm6287
        %v6289 = vsel %vm6288, %v6280, %v6285
        %v6290 = vrsqrt.pop %v6175
        %v6291 = vmul.f32 %v6290, %v6175
        %v6292 = vmul.f32 %v6291, %v6290
        %v6293 = vmul.f32 0.5, %v6292
        %v6294 = vsub.f32 1.5, %v6293
        %v6295 = vmul.f32 %v6290, %v6294
        %vm6296 = vweird.f32 %v6175
        %vm6297 = vweird.f32 %v6290
        %vm6298 = vmor %vm6296, %vm6297
        %v6299 = vsel %vm6298, %v6290, %v6295
        %v6300 = vrsqrt.pop %v6176
        %v6301 = vmul.f32 %v6300, %v6176
        %v6302 = vmul.f32 %v6301, %v6300
        %v6303 = vmul.f32 0.5, %v6302
        %v6304 = vsub.f32 1.5, %v6303
        %v6305 = vmul.f32 %v6300, %v6304
        %vm6306 = vweird.f32 %v6176
        %vm6307 = vweird.f32 %v6300
        %vm6308 = vmor %vm6306, %vm6307
        %v6309 = vsel %vm6308, %v6300, %v6305
        %v6310 = vrsqrt.pop %v6177
        %v6311 = vmul.f32 %v6310, %v6177
        %v6312 = vmul.f32 %v6311, %v6310
        %v6313 = vmul.f32 0.5, %v6312
        %v6314 = vsub.f32 1.5, %v6313
        %v6315 = vmul.f32 %v6310, %v6314
        %vm6316 = vweird.f32 %v6177
        %vm6317 = vweird.f32 %v6310
        %vm6318 = vmor %vm6316, %vm6317
        %v6319 = vsel %vm6318, %v6310, %v6315
        %v6320 = vrsqrt.pop %v6178
        %v6321 = vmul.f32 %v6320, %v6178
        %v6322 = vmul.f32 %v6321, %v6320
        %v6323 = vmul.f32 0.5, %v6322
        %v6324 = vsub.f32 1.5, %v6323
        %v6325 = vmul.f32 %v6320, %v6324
        %vm6326 = vweird.f32 %v6178
        %vm6327 = vweird.f32 %v6320
        %vm6328 = vmor %vm6326, %vm6327
        %v6329 = vsel %vm6328, %v6320, %v6325
        %v6330 = vrsqrt.pop %v6179
        %v6331 = vmul.f32 %v6330, %v6179
        %v6332 = vmul.f32 %v6331, %v6330
        %v6333 = vmul.f32 0.5, %v6332
        %v6334 = vsub.f32 1.5, %v6333
        %v6335 = vmul.f32 %v6330, %v6334
        %vm6336 = vweird.f32 %v6179
        %vm6337 = vweird.f32 %v6330
        %vm6338 = vmor %vm6336, %vm6337
        %v6339 = vsel %vm6338, %v6330, %v6335
        %v6340 = vmul.f32 %v6036, %v6189
        %v6341 = vmul.f32 %v6037, %v6189
        %v6342 = vmul.f32 %v6038, %v6199
        %v6343 = vmul.f32 %v6039, %v6199
        %v6344 = vmul.f32 %v6040, %v6209
        %v6345 = vmul.f32 %v6041, %v6209
        %v6346 = vmul.f32 %v6042, %v6219
        %v6347 = vmul.f32 %v6043, %v6219
        %v6348 = vmul.f32 %v6044, %v6229
        %v6349 = vmul.f32 %v6045, %v6229
        %v6350 = vmul.f32 %v6046, %v6239
        %v6351 = vmul.f32 %v6047, %v6239
        %v6352 = vmul.f32 %v6048, %v6249
        %v6353 = vmul.f32 %v6049, %v6249
        %v6354 = vmul.f32 %v6050, %v6259
        %v6355 = vmul.f32 %v6051, %v6259
        %v6356 = vmul.f32 %v6052, %v6269
        %v6357 = vmul.f32 %v6053, %v6269
        %v6358 = vmul.f32 %v6054, %v6279
        %v6359 = vmul.f32 %v6055, %v6279
        %v6360 = vmul.f32 %v6056, %v6289
        %v6361 = vmul.f32 %v6057, %v6289
        %v6362 = vmul.f32 %v6058, %v6299
        %v6363 = vmul.f32 %v6059, %v6299
        %v6364 = vmul.f32 %v6060, %v6309
        %v6365 = vmul.f32 %v6061, %v6309
        %v6366 = vmul.f32 %v6062, %v6319
        %v6367 = vmul.f32 %v6063, %v6319
        %v6368 = vmul.f32 %v6064, %v6329
        %v6369 = vmul.f32 %v6065, %v6329
        %v6370 = vmul.f32 %v6066, %v6339
        %v6371 = vmul.f32 %v6067, %v6339
        %v6373 = vperm.slane %v5969, 0
        %v6374 = vperm.slane %v5969, 1
        %v6377 = vmul.f32 %v6340, %v6373
        %v6378 = vmul.f32 %v6341, %v6374
        %v6379 = vmul.f32 %v6342, %v6373
        %v6380 = vmul.f32 %v6343, %v6374
        %v6381 = vmul.f32 %v6344, %v6373
        %v6382 = vmul.f32 %v6345, %v6374
        %v6383 = vmul.f32 %v6346, %v6373
        %v6384 = vmul.f32 %v6347, %v6374
        %v6385 = vmul.f32 %v6348, %v6373
        %v6386 = vmul.f32 %v6349, %v6374
        %v6387 = vmul.f32 %v6350, %v6373
        %v6388 = vmul.f32 %v6351, %v6374
        %v6389 = vmul.f32 %v6352, %v6373
        %v6390 = vmul.f32 %v6353, %v6374
        %v6391 = vmul.f32 %v6354, %v6373
        %v6392 = vmul.f32 %v6355, %v6374
        %v6393 = vmul.f32 %v6356, %v6373
        %v6394 = vmul.f32 %v6357, %v6374
        %v6395 = vmul.f32 %v6358, %v6373
        %v6396 = vmul.f32 %v6359, %v6374
        %v6397 = vmul.f32 %v6360, %v6373
        %v6398 = vmul.f32 %v6361, %v6374
        %v6399 = vmul.f32 %v6362, %v6373
        %v6400 = vmul.f32 %v6363, %v6374
        %v6401 = vmul.f32 %v6364, %v6373
        %v6402 = vmul.f32 %v6365, %v6374
        %v6403 = vmul.f32 %v6366, %v6373
        %v6404 = vmul.f32 %v6367, %v6374
        %v6405 = vmul.f32 %v6368, %v6373
        %v6406 = vmul.f32 %v6369, %v6374
        %v6407 = vmul.f32 %v6370, %v6373
        %v6408 = vmul.f32 %v6371, %v6374
        %v6410 = vperm.slane %v5971, 0
        %v6411 = vperm.slane %v5971, 1
        %v6414 = vadd.f32 %v6377, %v6410
        %v6415 = vadd.f32 %v6378, %v6411
        %v6416 = vadd.f32 %v6379, %v6410
        %v6417 = vadd.f32 %v6380, %v6411
        %v6418 = vadd.f32 %v6381, %v6410
        %v6419 = vadd.f32 %v6382, %v6411
        %v6420 = vadd.f32 %v6383, %v6410
        %v6421 = vadd.f32 %v6384, %v6411
        %v6422 = vadd.f32 %v6385, %v6410
        %v6423 = vadd.f32 %v6386, %v6411
        %v6424 = vadd.f32 %v6387, %v6410
        %v6425 = vadd.f32 %v6388, %v6411
        %v6426 = vadd.f32 %v6389, %v6410
        %v6427 = vadd.f32 %v6390, %v6411
        %v6428 = vadd.f32 %v6391, %v6410
        %v6429 = vadd.f32 %v6392, %v6411
        %v6430 = vadd.f32 %v6393, %v6410
        %v6431 = vadd.f32 %v6394, %v6411
        %v6432 = vadd.f32 %v6395, %v6410
        %v6433 = vadd.f32 %v6396, %v6411
        %v6434 = vadd.f32 %v6397, %v6410
        %v6435 = vadd.f32 %v6398, %v6411
        %v6436 = vadd.f32 %v6399, %v6410
        %v6437 = vadd.f32 %v6400, %v6411
        %v6438 = vadd.f32 %v6401, %v6410
        %v6439 = vadd.f32 %v6402, %v6411
        %v6440 = vadd.f32 %v6403, %v6410
        %v6441 = vadd.f32 %v6404, %v6411
        %v6442 = vadd.f32 %v6405, %v6410
        %v6443 = vadd.f32 %v6406, %v6411
        %v6444 = vadd.f32 %v6407, %v6410
        %v6445 = vadd.f32 %v6408, %v6411
        %v6446 = vpack.c.bf16 %v6416, %v6414
        %v6447 = vpack.c.bf16 %v6417, %v6415
        %v6448 = vpack.c.bf16 %v6420, %v6418
        %v6449 = vpack.c.bf16 %v6421, %v6419
        %v6450 = vpack.c.bf16 %v6424, %v6422
        %v6451 = vpack.c.bf16 %v6425, %v6423
        %v6452 = vpack.c.bf16 %v6428, %v6426
        %v6453 = vpack.c.bf16 %v6429, %v6427
        %v6454 = vpack.c.bf16 %v6432, %v6430
        %v6455 = vpack.c.bf16 %v6433, %v6431
        %v6456 = vpack.c.bf16 %v6436, %v6434
        %v6457 = vpack.c.bf16 %v6437, %v6435
        %v6458 = vpack.c.bf16 %v6440, %v6438
        %v6459 = vpack.c.bf16 %v6441, %v6439
        %v6460 = vpack.c.bf16 %v6444, %v6442
        %v6461 = vpack.c.bf16 %v6445, %v6443
        %v6462 = vld [vmem:[#allocation14] sm:$0xff]
        %v6463 = vld [vmem:[#allocation14 + $0x8] sm:$0xff]
        %v6464 = vld [vmem:[#allocation14 + $0x10] sm:$0xff]
        %v6465 = vld [vmem:[#allocation14 + $0x18] sm:$0xff]
        %v6466 = vld [vmem:[#allocation14 + $0x20] sm:$0xff]
        %v6467 = vld [vmem:[#allocation14 + $0x28] sm:$0xff]
        %v6468 = vld [vmem:[#allocation14 + $0x30] sm:$0xff]
        %v6469 = vld [vmem:[#allocation14 + $0x38] sm:$0xff]
        %v6470 = vld [vmem:[#allocation14 + $0x40] sm:$0xff]
        %v6471 = vld [vmem:[#allocation14 + $0x48] sm:$0xff]
        %v6472 = vld [vmem:[#allocation14 + $0x50] sm:$0xff]
        %v6473 = vld [vmem:[#allocation14 + $0x58] sm:$0xff]
        %v6474 = vld [vmem:[#allocation14 + $0x60] sm:$0xff]
        %v6475 = vld [vmem:[#allocation14 + $0x68] sm:$0xff]
        %v6476 = vld [vmem:[#allocation14 + $0x70] sm:$0xff]
        %v6477 = vld [vmem:[#allocation14 + $0x78] sm:$0xff]
        %v6478 = vld [vmem:[#allocation14 + $0x80] sm:$0xff]
        %v6479 = vld [vmem:[#allocation14 + $0x88] sm:$0xff]
        %v6480 = vld [vmem:[#allocation14 + $0x90] sm:$0xff]
        %v6481 = vld [vmem:[#allocation14 + $0x98] sm:$0xff]
        %v6482 = vld [vmem:[#allocation14 + $0xa0] sm:$0xff]
        %v6483 = vld [vmem:[#allocation14 + $0xa8] sm:$0xff]
        %v6484 = vld [vmem:[#allocation14 + $0xb0] sm:$0xff]
        %v6485 = vld [vmem:[#allocation14 + $0xb8] sm:$0xff]
        %v6486 = vld [vmem:[#allocation14 + $0xc0] sm:$0xff]
        %v6487 = vld [vmem:[#allocation14 + $0xc8] sm:$0xff]
        %v6488 = vld [vmem:[#allocation14 + $0xd0] sm:$0xff]
        %v6489 = vld [vmem:[#allocation14 + $0xd8] sm:$0xff]
        %v6490 = vld [vmem:[#allocation14 + $0xe0] sm:$0xff]
        %v6491 = vld [vmem:[#allocation14 + $0xe8] sm:$0xff]
        %v6492 = vld [vmem:[#allocation14 + $0xf0] sm:$0xff]
        %v6493 = vld [vmem:[#allocation14 + $0xf8] sm:$0xff]
        %v6494 = vld [vmem:[#allocation14 + $0x100] sm:$0xff]
        %v6495 = vld [vmem:[#allocation14 + $0x108] sm:$0xff]
        %v6496 = vld [vmem:[#allocation14 + $0x110] sm:$0xff]
        %v6497 = vld [vmem:[#allocation14 + $0x118] sm:$0xff]
        %v6498 = vld [vmem:[#allocation14 + $0x120] sm:$0xff]
        %v6499 = vld [vmem:[#allocation14 + $0x128] sm:$0xff]
        %v6500 = vld [vmem:[#allocation14 + $0x130] sm:$0xff]
        %v6501 = vld [vmem:[#allocation14 + $0x138] sm:$0xff]
        %v6502 = vld [vmem:[#allocation14 + $0x140] sm:$0xff]
        %v6503 = vld [vmem:[#allocation14 + $0x148] sm:$0xff]
        %v6504 = vld [vmem:[#allocation14 + $0x150] sm:$0xff]
        %v6505 = vld [vmem:[#allocation14 + $0x158] sm:$0xff]
        %v6506 = vld [vmem:[#allocation14 + $0x160] sm:$0xff]
        %v6507 = vld [vmem:[#allocation14 + $0x168] sm:$0xff]
        %v6508 = vld [vmem:[#allocation14 + $0x170] sm:$0xff]
        %v6509 = vld [vmem:[#allocation14 + $0x178] sm:$0xff]
        %v6510 = vld [vmem:[#allocation14 + $0x180] sm:$0xff]
        %v6511 = vld [vmem:[#allocation14 + $0x188] sm:$0xff]
        %v6512 = vld [vmem:[#allocation14 + $0x190] sm:$0xff]
        %v6513 = vld [vmem:[#allocation14 + $0x198] sm:$0xff]
        %v6514 = vld [vmem:[#allocation14 + $0x1a0] sm:$0xff]
        %v6515 = vld [vmem:[#allocation14 + $0x1a8] sm:$0xff]
        %v6516 = vld [vmem:[#allocation14 + $0x1b0] sm:$0xff]
        %v6517 = vld [vmem:[#allocation14 + $0x1b8] sm:$0xff]
        %v6518 = vld [vmem:[#allocation14 + $0x1c0] sm:$0xff]
        %v6519 = vld [vmem:[#allocation14 + $0x1c8] sm:$0xff]
        %v6520 = vld [vmem:[#allocation14 + $0x1d0] sm:$0xff]
        %v6521 = vld [vmem:[#allocation14 + $0x1d8] sm:$0xff]
        %v6522 = vld [vmem:[#allocation14 + $0x1e0] sm:$0xff]
        %v6523 = vld [vmem:[#allocation14 + $0x1e8] sm:$0xff]
        %v6524 = vld [vmem:[#allocation14 + $0x1f0] sm:$0xff]
        %v6525 = vld [vmem:[#allocation14 + $0x1f8] sm:$0xff]
        %v6526 = vld [vmem:[#allocation16] sm:$0xf]
        %v6528 = vperm.slane %v6526, 0
        %v6529 = vperm.slane %v6526, 1
        %v6530 = vperm.slane %v6526, 2
        %v6531 = vperm.slane %v6526, 3
        %v6600 = vunpack.c.l.b16 %v6462
        %v6601 = vunpack.c.h.b16 %v6462
        %v6602 = vunpack.c.l.b16 %v6463
        %v6603 = vunpack.c.h.b16 %v6463
        %v6604 = vunpack.c.l.b16 %v6464
        %v6605 = vunpack.c.h.b16 %v6464
        %v6606 = vunpack.c.l.b16 %v6465
        %v6607 = vunpack.c.h.b16 %v6465
        %v6608 = vunpack.c.l.b16 %v6466
        %v6609 = vunpack.c.h.b16 %v6466
        %v6610 = vunpack.c.l.b16 %v6467
        %v6611 = vunpack.c.h.b16 %v6467
        %v6612 = vunpack.c.l.b16 %v6468
        %v6613 = vunpack.c.h.b16 %v6468
        %v6614 = vunpack.c.l.b16 %v6469
        %v6615 = vunpack.c.h.b16 %v6469
        %v6616 = vunpack.c.l.b16 %v6470
        %v6617 = vunpack.c.h.b16 %v6470
        %v6618 = vunpack.c.l.b16 %v6471
        %v6619 = vunpack.c.h.b16 %v6471
        %v6620 = vunpack.c.l.b16 %v6472
        %v6621 = vunpack.c.h.b16 %v6472
        %v6622 = vunpack.c.l.b16 %v6473
        %v6623 = vunpack.c.h.b16 %v6473
        %v6624 = vunpack.c.l.b16 %v6474
        %v6625 = vunpack.c.h.b16 %v6474
        %v6626 = vunpack.c.l.b16 %v6475
        %v6627 = vunpack.c.h.b16 %v6475
        %v6628 = vunpack.c.l.b16 %v6476
        %v6629 = vunpack.c.h.b16 %v6476
        %v6630 = vunpack.c.l.b16 %v6477
        %v6631 = vunpack.c.h.b16 %v6477
        %v6632 = vunpack.c.l.b16 %v6478
        %v6633 = vunpack.c.h.b16 %v6478
        %v6634 = vunpack.c.l.b16 %v6479
        %v6635 = vunpack.c.h.b16 %v6479
        %v6636 = vunpack.c.l.b16 %v6480
        %v6637 = vunpack.c.h.b16 %v6480
        %v6638 = vunpack.c.l.b16 %v6481
        %v6639 = vunpack.c.h.b16 %v6481
        %v6640 = vunpack.c.l.b16 %v6482
        %v6641 = vunpack.c.h.b16 %v6482
        %v6642 = vunpack.c.l.b16 %v6483
        %v6643 = vunpack.c.h.b16 %v6483
        %v6644 = vunpack.c.l.b16 %v6484
        %v6645 = vunpack.c.h.b16 %v6484
        %v6646 = vunpack.c.l.b16 %v6485
        %v6647 = vunpack.c.h.b16 %v6485
        %v6648 = vunpack.c.l.b16 %v6486
        %v6649 = vunpack.c.h.b16 %v6486
        %v6650 = vunpack.c.l.b16 %v6487
        %v6651 = vunpack.c.h.b16 %v6487
        %v6652 = vunpack.c.l.b16 %v6488
        %v6653 = vunpack.c.h.b16 %v6488
        %v6654 = vunpack.c.l.b16 %v6489
        %v6655 = vunpack.c.h.b16 %v6489
        %v6656 = vunpack.c.l.b16 %v6490
        %v6657 = vunpack.c.h.b16 %v6490
        %v6658 = vunpack.c.l.b16 %v6491
        %v6659 = vunpack.c.h.b16 %v6491
        %v6660 = vunpack.c.l.b16 %v6492
        %v6661 = vunpack.c.h.b16 %v6492
        %v6662 = vunpack.c.l.b16 %v6493
        %v6663 = vunpack.c.h.b16 %v6493
        %v6664 = vunpack.c.l.b16 %v6494
        %v6665 = vunpack.c.h.b16 %v6494
        %v6666 = vunpack.c.l.b16 %v6495
        %v6667 = vunpack.c.h.b16 %v6495
        %v6668 = vunpack.c.l.b16 %v6496
        %v6669 = vunpack.c.h.b16 %v6496
        %v6670 = vunpack.c.l.b16 %v6497
        %v6671 = vunpack.c.h.b16 %v6497
        %v6672 = vunpack.c.l.b16 %v6498
        %v6673 = vunpack.c.h.b16 %v6498
        %v6674 = vunpack.c.l.b16 %v6499
        %v6675 = vunpack.c.h.b16 %v6499
        %v6676 = vunpack.c.l.b16 %v6500
        %v6677 = vunpack.c.h.b16 %v6500
        %v6678 = vunpack.c.l.b16 %v6501
        %v6679 = vunpack.c.h.b16 %v6501
        %v6680 = vunpack.c.l.b16 %v6502
        %v6681 = vunpack.c.h.b16 %v6502
        %v6682 = vunpack.c.l.b16 %v6503
        %v6683 = vunpack.c.h.b16 %v6503
        %v6684 = vunpack.c.l.b16 %v6504
        %v6685 = vunpack.c.h.b16 %v6504
        %v6686 = vunpack.c.l.b16 %v6505
        %v6687 = vunpack.c.h.b16 %v6505
        %v6688 = vunpack.c.l.b16 %v6506
        %v6689 = vunpack.c.h.b16 %v6506
        %v6690 = vunpack.c.l.b16 %v6507
        %v6691 = vunpack.c.h.b16 %v6507
        %v6692 = vunpack.c.l.b16 %v6508
        %v6693 = vunpack.c.h.b16 %v6508
        %v6694 = vunpack.c.l.b16 %v6509
        %v6695 = vunpack.c.h.b16 %v6509
        %v6696 = vunpack.c.l.b16 %v6510
        %v6697 = vunpack.c.h.b16 %v6510
        %v6698 = vunpack.c.l.b16 %v6511
        %v6699 = vunpack.c.h.b16 %v6511
        %v6700 = vunpack.c.l.b16 %v6512
        %v6701 = vunpack.c.h.b16 %v6512
        %v6702 = vunpack.c.l.b16 %v6513
        %v6703 = vunpack.c.h.b16 %v6513
        %v6704 = vunpack.c.l.b16 %v6514
        %v6705 = vunpack.c.h.b16 %v6514
        %v6706 = vunpack.c.l.b16 %v6515
        %v6707 = vunpack.c.h.b16 %v6515
        %v6708 = vunpack.c.l.b16 %v6516
        %v6709 = vunpack.c.h.b16 %v6516
        %v6710 = vunpack.c.l.b16 %v6517
        %v6711 = vunpack.c.h.b16 %v6517
        %v6712 = vunpack.c.l.b16 %v6518
        %v6713 = vunpack.c.h.b16 %v6518
        %v6714 = vunpack.c.l.b16 %v6519
        %v6715 = vunpack.c.h.b16 %v6519
        %v6716 = vunpack.c.l.b16 %v6520
        %v6717 = vunpack.c.h.b16 %v6520
        %v6718 = vunpack.c.l.b16 %v6521
        %v6719 = vunpack.c.h.b16 %v6521
        %v6720 = vunpack.c.l.b16 %v6522
        %v6721 = vunpack.c.h.b16 %v6522
        %v6722 = vunpack.c.l.b16 %v6523
        %v6723 = vunpack.c.h.b16 %v6523
        %v6724 = vunpack.c.l.b16 %v6524
        %v6725 = vunpack.c.h.b16 %v6524
        %v6726 = vunpack.c.l.b16 %v6525
        %v6727 = vunpack.c.h.b16 %v6525
        %v6728 = vpack.c.b16 %v6604, %v6600
        %v6729 = vpack.c.b16 %v6605, %v6601
        %v6730 = vpack.c.b16 %v6606, %v6602
        %v6731 = vpack.c.b16 %v6607, %v6603
        %v6732 = vpack.c.b16 %v6612, %v6608
        %v6733 = vpack.c.b16 %v6613, %v6609
        %v6734 = vpack.c.b16 %v6614, %v6610
        %v6735 = vpack.c.b16 %v6615, %v6611
        %v6736 = vpack.c.b16 %v6620, %v6616
        %v6737 = vpack.c.b16 %v6621, %v6617
        %v6738 = vpack.c.b16 %v6622, %v6618
        %v6739 = vpack.c.b16 %v6623, %v6619
        %v6740 = vpack.c.b16 %v6628, %v6624
        %v6741 = vpack.c.b16 %v6629, %v6625
        %v6742 = vpack.c.b16 %v6630, %v6626
        %v6743 = vpack.c.b16 %v6631, %v6627
        %v6744 = vpack.c.b16 %v6636, %v6632
        %v6745 = vpack.c.b16 %v6637, %v6633
        %v6746 = vpack.c.b16 %v6638, %v6634
        %v6747 = vpack.c.b16 %v6639, %v6635
        %v6748 = vpack.c.b16 %v6644, %v6640
        %v6749 = vpack.c.b16 %v6645, %v6641
        %v6750 = vpack.c.b16 %v6646, %v6642
        %v6751 = vpack.c.b16 %v6647, %v6643
        %v6752 = vpack.c.b16 %v6652, %v6648
        %v6753 = vpack.c.b16 %v6653, %v6649
        %v6754 = vpack.c.b16 %v6654, %v6650
        %v6755 = vpack.c.b16 %v6655, %v6651
        %v6756 = vpack.c.b16 %v6660, %v6656
        %v6757 = vpack.c.b16 %v6661, %v6657
        %v6758 = vpack.c.b16 %v6662, %v6658
        %v6759 = vpack.c.b16 %v6663, %v6659
        %v6760 = vpack.c.b16 %v6668, %v6664
        %v6761 = vpack.c.b16 %v6669, %v6665
        %v6762 = vpack.c.b16 %v6670, %v6666
        %v6763 = vpack.c.b16 %v6671, %v6667
        %v6764 = vpack.c.b16 %v6676, %v6672
        %v6765 = vpack.c.b16 %v6677, %v6673
        %v6766 = vpack.c.b16 %v6678, %v6674
        %v6767 = vpack.c.b16 %v6679, %v6675
        %v6768 = vpack.c.b16 %v6684, %v6680
        %v6769 = vpack.c.b16 %v6685, %v6681
        %v6770 = vpack.c.b16 %v6686, %v6682
        %v6771 = vpack.c.b16 %v6687, %v6683
        %v6772 = vpack.c.b16 %v6692, %v6688
        %v6773 = vpack.c.b16 %v6693, %v6689
        %v6774 = vpack.c.b16 %v6694, %v6690
        %v6775 = vpack.c.b16 %v6695, %v6691
        %v6776 = vpack.c.b16 %v6700, %v6696
        %v6777 = vpack.c.b16 %v6701, %v6697
        %v6778 = vpack.c.b16 %v6702, %v6698
        %v6779 = vpack.c.b16 %v6703, %v6699
        %v6780 = vpack.c.b16 %v6708, %v6704
        %v6781 = vpack.c.b16 %v6709, %v6705
        %v6782 = vpack.c.b16 %v6710, %v6706
        %v6783 = vpack.c.b16 %v6711, %v6707
        %v6784 = vpack.c.b16 %v6716, %v6712
        %v6785 = vpack.c.b16 %v6717, %v6713
        %v6786 = vpack.c.b16 %v6718, %v6714
        %v6787 = vpack.c.b16 %v6719, %v6715
        %v6788 = vpack.c.b16 %v6724, %v6720
        %v6789 = vpack.c.b16 %v6725, %v6721
        %v6790 = vpack.c.b16 %v6726, %v6722
        %v6791 = vpack.c.b16 %v6727, %v6723
        %6856 = vmatpush.bf16.msra.mxu0 %v6756
        %6857 = vmatpush.bf16.msra.mxu0 %v6752
        %6858 = vmatpush.bf16.msra.mxu0 %v6748
        %6859 = vmatpush.bf16.msra.mxu0 %v6744
        %6860 = vmatpush.bf16.msra.mxu0 %v6740
        %6861 = vmatpush.bf16.msra.mxu0 %v6736
        %6862 = vmatpush.bf16.msra.mxu0 %v6732
        %6863 = vmatpush.bf16.msra.mxu0 %v6728
        %6864 = vmatmul.bf16.gmra.mxu0 %v6446
        %v6865 = vpop.f32.mrf.mxu0
        %v6866 = vadd.f32 %v6528, %v6865
        %v6867 = vpop.f32.mrf.mxu0
        %v6868 = vadd.f32 %v6528, %v6867
        %6869 = vmatmul.bf16.gmra.mxu0 %v6448
        %v6870 = vpop.f32.mrf.mxu0
        %v6871 = vadd.f32 %v6528, %v6870
        %v6872 = vpop.f32.mrf.mxu0
        %v6873 = vadd.f32 %v6528, %v6872
        %6874 = vmatmul.bf16.gmra.mxu0 %v6450
        %v6875 = vpop.f32.mrf.mxu0
        %v6876 = vadd.f32 %v6528, %v6875
        %v6877 = vpop.f32.mrf.mxu0
        %v6878 = vadd.f32 %v6528, %v6877
        %6879 = vmatmul.bf16.gmra.mxu0 %v6452
        %v6880 = vpop.f32.mrf.mxu0
        %v6881 = vadd.f32 %v6528, %v6880
        %v6882 = vpop.f32.mrf.mxu0
        %v6883 = vadd.f32 %v6528, %v6882
        %6884 = vmatmul.bf16.gmra.mxu0 %v6454
        %v6885 = vpop.f32.mrf.mxu0
        %v6886 = vadd.f32 %v6528, %v6885
        %v6887 = vpop.f32.mrf.mxu0
        %v6888 = vadd.f32 %v6528, %v6887
        %6889 = vmatmul.bf16.gmra.mxu0 %v6456
        %v6890 = vpop.f32.mrf.mxu0
        %v6891 = vadd.f32 %v6528, %v6890
        %v6892 = vpop.f32.mrf.mxu0
        %v6893 = vadd.f32 %v6528, %v6892
        %6894 = vmatmul.bf16.gmra.mxu0 %v6458
        %v6895 = vpop.f32.mrf.mxu0
        %v6896 = vadd.f32 %v6528, %v6895
        %v6897 = vpop.f32.mrf.mxu0
        %v6898 = vadd.f32 %v6528, %v6897
        %6899 = vmatmul.bf16.gmra.mxu0 %v6460
        %v6900 = vpop.f32.mrf.mxu0
        %v6901 = vadd.f32 %v6528, %v6900
        %v6902 = vpop.f32.mrf.mxu0
        %v6903 = vadd.f32 %v6528, %v6902
        %6904 = vdwg.mxu0
        %6905 = vmatpush.bf16.msra.mxu0 %v6788
        %6906 = vmatpush.bf16.msra.mxu0 %v6784
        %6907 = vmatpush.bf16.msra.mxu0 %v6780
        %6908 = vmatpush.bf16.msra.mxu0 %v6776
        %6909 = vmatpush.bf16.msra.mxu0 %v6772
        %6910 = vmatpush.bf16.msra.mxu0 %v6768
        %6911 = vmatpush.bf16.msra.mxu0 %v6764
        %6912 = vmatpush.bf16.msra.mxu0 %v6760
        %6913 = vmatmul.bf16.gmra.mxu0 %v6447
        %v6914 = vpop.f32.mrf.mxu0
        %v6915 = vadd.f32 %v6866, %v6914
        %v6916 = vpop.f32.mrf.mxu0
        %v6917 = vadd.f32 %v6868, %v6916
        %6918 = vmatmul.bf16.gmra.mxu0 %v6449
        %v6919 = vpop.f32.mrf.mxu0
        %v6920 = vadd.f32 %v6871, %v6919
        %v6921 = vpop.f32.mrf.mxu0
        %v6922 = vadd.f32 %v6873, %v6921
        %6923 = vmatmul.bf16.gmra.mxu0 %v6451
        %v6924 = vpop.f32.mrf.mxu0
        %v6925 = vadd.f32 %v6876, %v6924
        %v6926 = vpop.f32.mrf.mxu0
        %v6927 = vadd.f32 %v6878, %v6926
        %6928 = vmatmul.bf16.gmra.mxu0 %v6453
        %v6929 = vpop.f32.mrf.mxu0
        %v6930 = vadd.f32 %v6881, %v6929
        %v6931 = vpop.f32.mrf.mxu0
        %v6932 = vadd.f32 %v6883, %v6931
        %6933 = vmatmul.bf16.gmra.mxu0 %v6455
        %v6934 = vpop.f32.mrf.mxu0
        %v6935 = vadd.f32 %v6886, %v6934
        %v6936 = vpop.f32.mrf.mxu0
        %v6937 = vadd.f32 %v6888, %v6936
        %6938 = vmatmul.bf16.gmra.mxu0 %v6457
        %v6939 = vpop.f32.mrf.mxu0
        %v6940 = vadd.f32 %v6891, %v6939
        %v6941 = vpop.f32.mrf.mxu0
        %v6942 = vadd.f32 %v6893, %v6941
        %6943 = vmatmul.bf16.gmra.mxu0 %v6459
        %v6944 = vpop.f32.mrf.mxu0
        %v6945 = vadd.f32 %v6896, %v6944
        %v6946 = vpop.f32.mrf.mxu0
        %v6947 = vadd.f32 %v6898, %v6946
        %6948 = vmatmul.bf16.gmra.mxu0 %v6461
        %v6949 = vpop.f32.mrf.mxu0
        %v6950 = vadd.f32 %v6901, %v6949
        %v6951 = vpop.f32.mrf.mxu0
        %v6952 = vadd.f32 %v6903, %v6951
        %6953 = vdwg.mxu0
        %6954 = vmatpush.bf16.msra.mxu0 %v6757
        %6955 = vmatpush.bf16.msra.mxu0 %v6753
        %6956 = vmatpush.bf16.msra.mxu0 %v6749
        %6957 = vmatpush.bf16.msra.mxu0 %v6745
        %6958 = vmatpush.bf16.msra.mxu0 %v6741
        %6959 = vmatpush.bf16.msra.mxu0 %v6737
        %6960 = vmatpush.bf16.msra.mxu0 %v6733
        %6961 = vmatpush.bf16.msra.mxu0 %v6729
        %6962 = vmatmul.bf16.gmra.mxu0 %v6446
        %v6963 = vpop.f32.mrf.mxu0
        %v6964 = vadd.f32 %v6529, %v6963
        %v6965 = vpop.f32.mrf.mxu0
        %v6966 = vadd.f32 %v6529, %v6965
        %6967 = vmatmul.bf16.gmra.mxu0 %v6448
        %v6968 = vpop.f32.mrf.mxu0
        %v6969 = vadd.f32 %v6529, %v6968
        %v6970 = vpop.f32.mrf.mxu0
        %v6971 = vadd.f32 %v6529, %v6970
        %6972 = vmatmul.bf16.gmra.mxu0 %v6450
        %v6973 = vpop.f32.mrf.mxu0
        %v6974 = vadd.f32 %v6529, %v6973
        %v6975 = vpop.f32.mrf.mxu0
        %v6976 = vadd.f32 %v6529, %v6975
        %6977 = vmatmul.bf16.gmra.mxu0 %v6452
        %v6978 = vpop.f32.mrf.mxu0
        %v6979 = vadd.f32 %v6529, %v6978
        %v6980 = vpop.f32.mrf.mxu0
        %v6981 = vadd.f32 %v6529, %v6980
        %6982 = vmatmul.bf16.gmra.mxu0 %v6454
        %v6983 = vpop.f32.mrf.mxu0
        %v6984 = vadd.f32 %v6529, %v6983
        %v6985 = vpop.f32.mrf.mxu0
        %v6986 = vadd.f32 %v6529, %v6985
        %6987 = vmatmul.bf16.gmra.mxu0 %v6456
        %v6988 = vpop.f32.mrf.mxu0
        %v6989 = vadd.f32 %v6529, %v6988
        %v6990 = vpop.f32.mrf.mxu0
        %v6991 = vadd.f32 %v6529, %v6990
        %6992 = vmatmul.bf16.gmra.mxu0 %v6458
        %v6993 = vpop.f32.mrf.mxu0
        %v6994 = vadd.f32 %v6529, %v6993
        %v6995 = vpop.f32.mrf.mxu0
        %v6996 = vadd.f32 %v6529, %v6995
        %6997 = vmatmul.bf16.gmra.mxu0 %v6460
        %v6998 = vpop.f32.mrf.mxu0
        %v6999 = vadd.f32 %v6529, %v6998
        %v7000 = vpop.f32.mrf.mxu0
        %v7001 = vadd.f32 %v6529, %v7000
        %7002 = vdwg.mxu0
        %7003 = vmatpush.bf16.msra.mxu0 %v6789
        %7004 = vmatpush.bf16.msra.mxu0 %v6785
        %7005 = vmatpush.bf16.msra.mxu0 %v6781
        %7006 = vmatpush.bf16.msra.mxu0 %v6777
        %7007 = vmatpush.bf16.msra.mxu0 %v6773
        %7008 = vmatpush.bf16.msra.mxu0 %v6769
        %7009 = vmatpush.bf16.msra.mxu0 %v6765
        %7010 = vmatpush.bf16.msra.mxu0 %v6761
        %7011 = vmatmul.bf16.gmra.mxu0 %v6447
        %v7012 = vpop.f32.mrf.mxu0
        %v7013 = vadd.f32 %v6964, %v7012
        %v7014 = vpop.f32.mrf.mxu0
        %v7015 = vadd.f32 %v6966, %v7014
        %7016 = vmatmul.bf16.gmra.mxu0 %v6449
        %v7017 = vpop.f32.mrf.mxu0
        %v7018 = vadd.f32 %v6969, %v7017
        %v7019 = vpop.f32.mrf.mxu0
        %v7020 = vadd.f32 %v6971, %v7019
        %7021 = vmatmul.bf16.gmra.mxu0 %v6451
        %v7022 = vpop.f32.mrf.mxu0
        %v7023 = vadd.f32 %v6974, %v7022
        %v7024 = vpop.f32.mrf.mxu0
        %v7025 = vadd.f32 %v6976, %v7024
        %7026 = vmatmul.bf16.gmra.mxu0 %v6453
        %v7027 = vpop.f32.mrf.mxu0
        %v7028 = vadd.f32 %v6979, %v7027
        %v7029 = vpop.f32.mrf.mxu0
        %v7030 = vadd.f32 %v6981, %v7029
        %7031 = vmatmul.bf16.gmra.mxu0 %v6455
        %v7032 = vpop.f32.mrf.mxu0
        %v7033 = vadd.f32 %v6984, %v7032
        %v7034 = vpop.f32.mrf.mxu0
        %v7035 = vadd.f32 %v6986, %v7034
        %7036 = vmatmul.bf16.gmra.mxu0 %v6457
        %v7037 = vpop.f32.mrf.mxu0
        %v7038 = vadd.f32 %v6989, %v7037
        %v7039 = vpop.f32.mrf.mxu0
        %v7040 = vadd.f32 %v6991, %v7039
        %7041 = vmatmul.bf16.gmra.mxu0 %v6459
        %v7042 = vpop.f32.mrf.mxu0
        %v7043 = vadd.f32 %v6994, %v7042
        %v7044 = vpop.f32.mrf.mxu0
        %v7045 = vadd.f32 %v6996, %v7044
        %7046 = vmatmul.bf16.gmra.mxu0 %v6461
        %v7047 = vpop.f32.mrf.mxu0
        %v7048 = vadd.f32 %v6999, %v7047
        %v7049 = vpop.f32.mrf.mxu0
        %v7050 = vadd.f32 %v7001, %v7049
        %7051 = vdwg.mxu0
        %7052 = vmatpush.bf16.msra.mxu0 %v6758
        %7053 = vmatpush.bf16.msra.mxu0 %v6754
        %7054 = vmatpush.bf16.msra.mxu0 %v6750
        %7055 = vmatpush.bf16.msra.mxu0 %v6746
        %7056 = vmatpush.bf16.msra.mxu0 %v6742
        %7057 = vmatpush.bf16.msra.mxu0 %v6738
        %7058 = vmatpush.bf16.msra.mxu0 %v6734
        %7059 = vmatpush.bf16.msra.mxu0 %v6730
        %7060 = vmatmul.bf16.gmra.mxu0 %v6446
        %v7061 = vpop.f32.mrf.mxu0
        %v7062 = vadd.f32 %v6530, %v7061
        %v7063 = vpop.f32.mrf.mxu0
        %v7064 = vadd.f32 %v6530, %v7063
        %7065 = vmatmul.bf16.gmra.mxu0 %v6448
        %v7066 = vpop.f32.mrf.mxu0
        %v7067 = vadd.f32 %v6530, %v7066
        %v7068 = vpop.f32.mrf.mxu0
        %v7069 = vadd.f32 %v6530, %v7068
        %7070 = vmatmul.bf16.gmra.mxu0 %v6450
        %v7071 = vpop.f32.mrf.mxu0
        %v7072 = vadd.f32 %v6530, %v7071
        %v7073 = vpop.f32.mrf.mxu0
        %v7074 = vadd.f32 %v6530, %v7073
        %7075 = vmatmul.bf16.gmra.mxu0 %v6452
        %v7076 = vpop.f32.mrf.mxu0
        %v7077 = vadd.f32 %v6530, %v7076
        %v7078 = vpop.f32.mrf.mxu0
        %v7079 = vadd.f32 %v6530, %v7078
        %7080 = vmatmul.bf16.gmra.mxu0 %v6454
        %v7081 = vpop.f32.mrf.mxu0
        %v7082 = vadd.f32 %v6530, %v7081
        %v7083 = vpop.f32.mrf.mxu0
        %v7084 = vadd.f32 %v6530, %v7083
        %7085 = vmatmul.bf16.gmra.mxu0 %v6456
        %v7086 = vpop.f32.mrf.mxu0
        %v7087 = vadd.f32 %v6530, %v7086
        %v7088 = vpop.f32.mrf.mxu0
        %v7089 = vadd.f32 %v6530, %v7088
        %7090 = vmatmul.bf16.gmra.mxu0 %v6458
        %v7091 = vpop.f32.mrf.mxu0
        %v7092 = vadd.f32 %v6530, %v7091
        %v7093 = vpop.f32.mrf.mxu0
        %v7094 = vadd.f32 %v6530, %v7093
        %7095 = vmatmul.bf16.gmra.mxu0 %v6460
        %v7096 = vpop.f32.mrf.mxu0
        %v7097 = vadd.f32 %v6530, %v7096
        %v7098 = vpop.f32.mrf.mxu0
        %v7099 = vadd.f32 %v6530, %v7098
        %7100 = vdwg.mxu0
        %7101 = vmatpush.bf16.msra.mxu0 %v6790
        %7102 = vmatpush.bf16.msra.mxu0 %v6786
        %7103 = vmatpush.bf16.msra.mxu0 %v6782
        %7104 = vmatpush.bf16.msra.mxu0 %v6778
        %7105 = vmatpush.bf16.msra.mxu0 %v6774
        %7106 = vmatpush.bf16.msra.mxu0 %v6770
        %7107 = vmatpush.bf16.msra.mxu0 %v6766
        %7108 = vmatpush.bf16.msra.mxu0 %v6762
        %7109 = vmatmul.bf16.gmra.mxu0 %v6447
        %v7110 = vpop.f32.mrf.mxu0
        %v7111 = vadd.f32 %v7062, %v7110
        %v7112 = vpop.f32.mrf.mxu0
        %v7113 = vadd.f32 %v7064, %v7112
        %7114 = vmatmul.bf16.gmra.mxu0 %v6449
        %v7115 = vpop.f32.mrf.mxu0
        %v7116 = vadd.f32 %v7067, %v7115
        %v7117 = vpop.f32.mrf.mxu0
        %v7118 = vadd.f32 %v7069, %v7117
        %7119 = vmatmul.bf16.gmra.mxu0 %v6451
        %v7120 = vpop.f32.mrf.mxu0
        %v7121 = vadd.f32 %v7072, %v7120
        %v7122 = vpop.f32.mrf.mxu0
        %v7123 = vadd.f32 %v7074, %v7122
        %7124 = vmatmul.bf16.gmra.mxu0 %v6453
        %v7125 = vpop.f32.mrf.mxu0
        %v7126 = vadd.f32 %v7077, %v7125
        %v7127 = vpop.f32.mrf.mxu0
        %v7128 = vadd.f32 %v7079, %v7127
        %7129 = vmatmul.bf16.gmra.mxu0 %v6455
        %v7130 = vpop.f32.mrf.mxu0
        %v7131 = vadd.f32 %v7082, %v7130
        %v7132 = vpop.f32.mrf.mxu0
        %v7133 = vadd.f32 %v7084, %v7132
        %7134 = vmatmul.bf16.gmra.mxu0 %v6457
        %v7135 = vpop.f32.mrf.mxu0
        %v7136 = vadd.f32 %v7087, %v7135
        %v7137 = vpop.f32.mrf.mxu0
        %v7138 = vadd.f32 %v7089, %v7137
        %7139 = vmatmul.bf16.gmra.mxu0 %v6459
        %v7140 = vpop.f32.mrf.mxu0
        %v7141 = vadd.f32 %v7092, %v7140
        %v7142 = vpop.f32.mrf.mxu0
        %v7143 = vadd.f32 %v7094, %v7142
        %7144 = vmatmul.bf16.gmra.mxu0 %v6461
        %v7145 = vpop.f32.mrf.mxu0
        %v7146 = vadd.f32 %v7097, %v7145
        %v7147 = vpop.f32.mrf.mxu0
        %v7148 = vadd.f32 %v7099, %v7147
        %7149 = vdwg.mxu0
        %7150 = vmatpush.bf16.msra.mxu0 %v6759
        %7151 = vmatpush.bf16.msra.mxu0 %v6755
        %7152 = vmatpush.bf16.msra.mxu0 %v6751
        %7153 = vmatpush.bf16.msra.mxu0 %v6747
        %7154 = vmatpush.bf16.msra.mxu0 %v6743
        %7155 = vmatpush.bf16.msra.mxu0 %v6739
        %7156 = vmatpush.bf16.msra.mxu0 %v6735
        %7157 = vmatpush.bf16.msra.mxu0 %v6731
        %7158 = vmatmul.bf16.gmra.mxu0 %v6446
        %v7159 = vpop.f32.mrf.mxu0
        %v7160 = vadd.f32 %v6531, %v7159
        %v7161 = vpop.f32.mrf.mxu0
        %v7162 = vadd.f32 %v6531, %v7161
        %7163 = vmatmul.bf16.gmra.mxu0 %v6448
        %v7164 = vpop.f32.mrf.mxu0
        %v7165 = vadd.f32 %v6531, %v7164
        %v7166 = vpop.f32.mrf.mxu0
        %v7167 = vadd.f32 %v6531, %v7166
        %7168 = vmatmul.bf16.gmra.mxu0 %v6450
        %v7169 = vpop.f32.mrf.mxu0
        %v7170 = vadd.f32 %v6531, %v7169
        %v7171 = vpop.f32.mrf.mxu0
        %v7172 = vadd.f32 %v6531, %v7171
        %7173 = vmatmul.bf16.gmra.mxu0 %v6452
        %v7174 = vpop.f32.mrf.mxu0
        %v7175 = vadd.f32 %v6531, %v7174
        %v7176 = vpop.f32.mrf.mxu0
        %v7177 = vadd.f32 %v6531, %v7176
        %7178 = vmatmul.bf16.gmra.mxu0 %v6454
        %v7179 = vpop.f32.mrf.mxu0
        %v7180 = vadd.f32 %v6531, %v7179
        %v7181 = vpop.f32.mrf.mxu0
        %v7182 = vadd.f32 %v6531, %v7181
        %7183 = vmatmul.bf16.gmra.mxu0 %v6456
        %v7184 = vpop.f32.mrf.mxu0
        %v7185 = vadd.f32 %v6531, %v7184
        %v7186 = vpop.f32.mrf.mxu0
        %v7187 = vadd.f32 %v6531, %v7186
        %7188 = vmatmul.bf16.gmra.mxu0 %v6458
        %v7189 = vpop.f32.mrf.mxu0
        %v7190 = vadd.f32 %v6531, %v7189
        %v7191 = vpop.f32.mrf.mxu0
        %v7192 = vadd.f32 %v6531, %v7191
        %7193 = vmatmul.bf16.gmra.mxu0 %v6460
        %v7194 = vpop.f32.mrf.mxu0
        %v7195 = vadd.f32 %v6531, %v7194
        %v7196 = vpop.f32.mrf.mxu0
        %v7197 = vadd.f32 %v6531, %v7196
        %7198 = vdwg.mxu0
        %7199 = vmatpush.bf16.msra.mxu0 %v6791
        %7200 = vmatpush.bf16.msra.mxu0 %v6787
        %7201 = vmatpush.bf16.msra.mxu0 %v6783
        %7202 = vmatpush.bf16.msra.mxu0 %v6779
        %7203 = vmatpush.bf16.msra.mxu0 %v6775
        %7204 = vmatpush.bf16.msra.mxu0 %v6771
        %7205 = vmatpush.bf16.msra.mxu0 %v6767
        %7206 = vmatpush.bf16.msra.mxu0 %v6763
        %7207 = vmatmul.bf16.gmra.mxu0 %v6447
        %v7208 = vpop.f32.mrf.mxu0
        %v7209 = vadd.f32 %v7160, %v7208
        %v7210 = vpop.f32.mrf.mxu0
        %v7211 = vadd.f32 %v7162, %v7210
        %7212 = vmatmul.bf16.gmra.mxu0 %v6449
        %v7213 = vpop.f32.mrf.mxu0
        %v7214 = vadd.f32 %v7165, %v7213
        %v7215 = vpop.f32.mrf.mxu0
        %v7216 = vadd.f32 %v7167, %v7215
        %7217 = vmatmul.bf16.gmra.mxu0 %v6451
        %v7218 = vpop.f32.mrf.mxu0
        %v7219 = vadd.f32 %v7170, %v7218
        %v7220 = vpop.f32.mrf.mxu0
        %v7221 = vadd.f32 %v7172, %v7220
        %7222 = vmatmul.bf16.gmra.mxu0 %v6453
        %v7223 = vpop.f32.mrf.mxu0
        %v7224 = vadd.f32 %v7175, %v7223
        %v7225 = vpop.f32.mrf.mxu0
        %v7226 = vadd.f32 %v7177, %v7225
        %7227 = vmatmul.bf16.gmra.mxu0 %v6455
        %v7228 = vpop.f32.mrf.mxu0
        %v7229 = vadd.f32 %v7180, %v7228
        %v7230 = vpop.f32.mrf.mxu0
        %v7231 = vadd.f32 %v7182, %v7230
        %7232 = vmatmul.bf16.gmra.mxu0 %v6457
        %v7233 = vpop.f32.mrf.mxu0
        %v7234 = vadd.f32 %v7185, %v7233
        %v7235 = vpop.f32.mrf.mxu0
        %v7236 = vadd.f32 %v7187, %v7235
        %7237 = vmatmul.bf16.gmra.mxu0 %v6459
        %v7238 = vpop.f32.mrf.mxu0
        %v7239 = vadd.f32 %v7190, %v7238
        %v7240 = vpop.f32.mrf.mxu0
        %v7241 = vadd.f32 %v7192, %v7240
        %7242 = vmatmul.bf16.gmra.mxu0 %v6461
        %v7243 = vpop.f32.mrf.mxu0
        %v7244 = vadd.f32 %v7195, %v7243
        %v7245 = vpop.f32.mrf.mxu0
        %v7246 = vadd.f32 %v7197, %v7245
        %7247 = vdwg.mxu0
        %v7248 = vmax.f32 %v6915, 0.0
        %v7249 = vmax.f32 %v7013, 0.0
        %v7250 = vmax.f32 %v7111, 0.0
        %v7251 = vmax.f32 %v7209, 0.0
        %v7252 = vmax.f32 %v6917, 0.0
        %v7253 = vmax.f32 %v7015, 0.0
        %v7254 = vmax.f32 %v7113, 0.0
        %v7255 = vmax.f32 %v7211, 0.0
        %v7256 = vmax.f32 %v6920, 0.0
        %v7257 = vmax.f32 %v7018, 0.0
        %v7258 = vmax.f32 %v7116, 0.0
        %v7259 = vmax.f32 %v7214, 0.0
        %v7260 = vmax.f32 %v6922, 0.0
        %v7261 = vmax.f32 %v7020, 0.0
        %v7262 = vmax.f32 %v7118, 0.0
        %v7263 = vmax.f32 %v7216, 0.0
        %v7264 = vmax.f32 %v6925, 0.0
        %v7265 = vmax.f32 %v7023, 0.0
        %v7266 = vmax.f32 %v7121, 0.0
        %v7267 = vmax.f32 %v7219, 0.0
        %v7268 = vmax.f32 %v6927, 0.0
        %v7269 = vmax.f32 %v7025, 0.0
        %v7270 = vmax.f32 %v7123, 0.0
        %v7271 = vmax.f32 %v7221, 0.0
        %v7272 = vmax.f32 %v6930, 0.0
        %v7273 = vmax.f32 %v7028, 0.0
        %v7274 = vmax.f32 %v7126, 0.0
        %v7275 = vmax.f32 %v7224, 0.0
        %v7276 = vmax.f32 %v6932, 0.0
        %v7277 = vmax.f32 %v7030, 0.0
        %v7278 = vmax.f32 %v7128, 0.0
        %v7279 = vmax.f32 %v7226, 0.0
        %v7280 = vmax.f32 %v6935, 0.0
        %v7281 = vmax.f32 %v7033, 0.0
        %v7282 = vmax.f32 %v7131, 0.0
        %v7283 = vmax.f32 %v7229, 0.0
        %v7284 = vmax.f32 %v6937, 0.0
        %v7285 = vmax.f32 %v7035, 0.0
        %v7286 = vmax.f32 %v7133, 0.0
        %v7287 = vmax.f32 %v7231, 0.0
        %v7288 = vmax.f32 %v6940, 0.0
        %v7289 = vmax.f32 %v7038, 0.0
        %v7290 = vmax.f32 %v7136, 0.0
        %v7291 = vmax.f32 %v7234, 0.0
        %v7292 = vmax.f32 %v6942, 0.0
        %v7293 = vmax.f32 %v7040, 0.0
        %v7294 = vmax.f32 %v7138, 0.0
        %v7295 = vmax.f32 %v7236, 0.0
        %v7296 = vmax.f32 %v6945, 0.0
        %v7297 = vmax.f32 %v7043, 0.0
        %v7298 = vmax.f32 %v7141, 0.0
        %v7299 = vmax.f32 %v7239, 0.0
        %v7300 = vmax.f32 %v6947, 0.0
        %v7301 = vmax.f32 %v7045, 0.0
        %v7302 = vmax.f32 %v7143, 0.0
        %v7303 = vmax.f32 %v7241, 0.0
        %v7304 = vmax.f32 %v6950, 0.0
        %v7305 = vmax.f32 %v7048, 0.0
        %v7306 = vmax.f32 %v7146, 0.0
        %v7307 = vmax.f32 %v7244, 0.0
        %v7308 = vmax.f32 %v6952, 0.0
        %v7309 = vmax.f32 %v7050, 0.0
        %v7310 = vmax.f32 %v7148, 0.0
        %v7311 = vmax.f32 %v7246, 0.0
        %v7312 = vpack.c.bf16 %v7252, %v7248
        %v7313 = vpack.c.bf16 %v7253, %v7249
        %v7314 = vpack.c.bf16 %v7254, %v7250
        %v7315 = vpack.c.bf16 %v7255, %v7251
        %v7316 = vpack.c.bf16 %v7260, %v7256
        %v7317 = vpack.c.bf16 %v7261, %v7257
        %v7318 = vpack.c.bf16 %v7262, %v7258
        %v7319 = vpack.c.bf16 %v7263, %v7259
        %v7320 = vpack.c.bf16 %v7268, %v7264
        %v7321 = vpack.c.bf16 %v7269, %v7265
        %v7322 = vpack.c.bf16 %v7270, %v7266
        %v7323 = vpack.c.bf16 %v7271, %v7267
        %v7324 = vpack.c.bf16 %v7276, %v7272
        %v7325 = vpack.c.bf16 %v7277, %v7273
        %v7326 = vpack.c.bf16 %v7278, %v7274
        %v7327 = vpack.c.bf16 %v7279, %v7275
        %v7328 = vpack.c.bf16 %v7284, %v7280
        %v7329 = vpack.c.bf16 %v7285, %v7281
        %v7330 = vpack.c.bf16 %v7286, %v7282
        %v7331 = vpack.c.bf16 %v7287, %v7283
        %v7332 = vpack.c.bf16 %v7292, %v7288
        %v7333 = vpack.c.bf16 %v7293, %v7289
        %v7334 = vpack.c.bf16 %v7294, %v7290
        %v7335 = vpack.c.bf16 %v7295, %v7291
        %v7336 = vpack.c.bf16 %v7300, %v7296
        %v7337 = vpack.c.bf16 %v7301, %v7297
        %v7338 = vpack.c.bf16 %v7302, %v7298
        %v7339 = vpack.c.bf16 %v7303, %v7299
        %v7340 = vpack.c.bf16 %v7308, %v7304
        %v7341 = vpack.c.bf16 %v7309, %v7305
        %v7342 = vpack.c.bf16 %v7310, %v7306
        %v7343 = vpack.c.bf16 %v7311, %v7307
        %v7344 = vld [vmem:[#allocation17] sm:$0xff]
        %v7345 = vld [vmem:[#allocation17 + $0x8] sm:$0xff]
        %v7346 = vld [vmem:[#allocation17 + $0x10] sm:$0xff]
        %v7347 = vld [vmem:[#allocation17 + $0x18] sm:$0xff]
        %v7348 = vld [vmem:[#allocation17 + $0x20] sm:$0xff]
        %v7349 = vld [vmem:[#allocation17 + $0x28] sm:$0xff]
        %v7350 = vld [vmem:[#allocation17 + $0x30] sm:$0xff]
        %v7351 = vld [vmem:[#allocation17 + $0x38] sm:$0xff]
        %v7352 = vld [vmem:[#allocation17 + $0x40] sm:$0xff]
        %v7353 = vld [vmem:[#allocation17 + $0x48] sm:$0xff]
        %v7354 = vld [vmem:[#allocation17 + $0x50] sm:$0xff]
        %v7355 = vld [vmem:[#allocation17 + $0x58] sm:$0xff]
        %v7356 = vld [vmem:[#allocation17 + $0x60] sm:$0xff]
        %v7357 = vld [vmem:[#allocation17 + $0x68] sm:$0xff]
        %v7358 = vld [vmem:[#allocation17 + $0x70] sm:$0xff]
        %v7359 = vld [vmem:[#allocation17 + $0x78] sm:$0xff]
        %v7360 = vld [vmem:[#allocation17 + $0x80] sm:$0xff]
        %v7361 = vld [vmem:[#allocation17 + $0x88] sm:$0xff]
        %v7362 = vld [vmem:[#allocation17 + $0x90] sm:$0xff]
        %v7363 = vld [vmem:[#allocation17 + $0x98] sm:$0xff]
        %v7364 = vld [vmem:[#allocation17 + $0xa0] sm:$0xff]
        %v7365 = vld [vmem:[#allocation17 + $0xa8] sm:$0xff]
        %v7366 = vld [vmem:[#allocation17 + $0xb0] sm:$0xff]
        %v7367 = vld [vmem:[#allocation17 + $0xb8] sm:$0xff]
        %v7368 = vld [vmem:[#allocation17 + $0xc0] sm:$0xff]
        %v7369 = vld [vmem:[#allocation17 + $0xc8] sm:$0xff]
        %v7370 = vld [vmem:[#allocation17 + $0xd0] sm:$0xff]
        %v7371 = vld [vmem:[#allocation17 + $0xd8] sm:$0xff]
        %v7372 = vld [vmem:[#allocation17 + $0xe0] sm:$0xff]
        %v7373 = vld [vmem:[#allocation17 + $0xe8] sm:$0xff]
        %v7374 = vld [vmem:[#allocation17 + $0xf0] sm:$0xff]
        %v7375 = vld [vmem:[#allocation17 + $0xf8] sm:$0xff]
        %v7376 = vld [vmem:[#allocation17 + $0x100] sm:$0xff]
        %v7377 = vld [vmem:[#allocation17 + $0x108] sm:$0xff]
        %v7378 = vld [vmem:[#allocation17 + $0x110] sm:$0xff]
        %v7379 = vld [vmem:[#allocation17 + $0x118] sm:$0xff]
        %v7380 = vld [vmem:[#allocation17 + $0x120] sm:$0xff]
        %v7381 = vld [vmem:[#allocation17 + $0x128] sm:$0xff]
        %v7382 = vld [vmem:[#allocation17 + $0x130] sm:$0xff]
        %v7383 = vld [vmem:[#allocation17 + $0x138] sm:$0xff]
        %v7384 = vld [vmem:[#allocation17 + $0x140] sm:$0xff]
        %v7385 = vld [vmem:[#allocation17 + $0x148] sm:$0xff]
        %v7386 = vld [vmem:[#allocation17 + $0x150] sm:$0xff]
        %v7387 = vld [vmem:[#allocation17 + $0x158] sm:$0xff]
        %v7388 = vld [vmem:[#allocation17 + $0x160] sm:$0xff]
        %v7389 = vld [vmem:[#allocation17 + $0x168] sm:$0xff]
        %v7390 = vld [vmem:[#allocation17 + $0x170] sm:$0xff]
        %v7391 = vld [vmem:[#allocation17 + $0x178] sm:$0xff]
        %v7392 = vld [vmem:[#allocation17 + $0x180] sm:$0xff]
        %v7393 = vld [vmem:[#allocation17 + $0x188] sm:$0xff]
        %v7394 = vld [vmem:[#allocation17 + $0x190] sm:$0xff]
        %v7395 = vld [vmem:[#allocation17 + $0x198] sm:$0xff]
        %v7396 = vld [vmem:[#allocation17 + $0x1a0] sm:$0xff]
        %v7397 = vld [vmem:[#allocation17 + $0x1a8] sm:$0xff]
        %v7398 = vld [vmem:[#allocation17 + $0x1b0] sm:$0xff]
        %v7399 = vld [vmem:[#allocation17 + $0x1b8] sm:$0xff]
        %v7400 = vld [vmem:[#allocation17 + $0x1c0] sm:$0xff]
        %v7401 = vld [vmem:[#allocation17 + $0x1c8] sm:$0xff]
        %v7402 = vld [vmem:[#allocation17 + $0x1d0] sm:$0xff]
        %v7403 = vld [vmem:[#allocation17 + $0x1d8] sm:$0xff]
        %v7404 = vld [vmem:[#allocation17 + $0x1e0] sm:$0xff]
        %v7405 = vld [vmem:[#allocation17 + $0x1e8] sm:$0xff]
        %v7406 = vld [vmem:[#allocation17 + $0x1f0] sm:$0xff]
        %v7407 = vld [vmem:[#allocation17 + $0x1f8] sm:$0xff]
        %v7408 = vld [vmem:[#allocation19] sm:$0x3]
        %v7410 = vperm.slane %v7408, 0
        %v7411 = vperm.slane %v7408, 1
        %v7478 = vunpack.c.l.b16 %v7344
        %v7479 = vunpack.c.h.b16 %v7344
        %v7480 = vunpack.c.l.b16 %v7345
        %v7481 = vunpack.c.h.b16 %v7345
        %v7482 = vunpack.c.l.b16 %v7346
        %v7483 = vunpack.c.h.b16 %v7346
        %v7484 = vunpack.c.l.b16 %v7347
        %v7485 = vunpack.c.h.b16 %v7347
        %v7486 = vunpack.c.l.b16 %v7348
        %v7487 = vunpack.c.h.b16 %v7348
        %v7488 = vunpack.c.l.b16 %v7349
        %v7489 = vunpack.c.h.b16 %v7349
        %v7490 = vunpack.c.l.b16 %v7350
        %v7491 = vunpack.c.h.b16 %v7350
        %v7492 = vunpack.c.l.b16 %v7351
        %v7493 = vunpack.c.h.b16 %v7351
        %v7494 = vunpack.c.l.b16 %v7352
        %v7495 = vunpack.c.h.b16 %v7352
        %v7496 = vunpack.c.l.b16 %v7353
        %v7497 = vunpack.c.h.b16 %v7353
        %v7498 = vunpack.c.l.b16 %v7354
        %v7499 = vunpack.c.h.b16 %v7354
        %v7500 = vunpack.c.l.b16 %v7355
        %v7501 = vunpack.c.h.b16 %v7355
        %v7502 = vunpack.c.l.b16 %v7356
        %v7503 = vunpack.c.h.b16 %v7356
        %v7504 = vunpack.c.l.b16 %v7357
        %v7505 = vunpack.c.h.b16 %v7357
        %v7506 = vunpack.c.l.b16 %v7358
        %v7507 = vunpack.c.h.b16 %v7358
        %v7508 = vunpack.c.l.b16 %v7359
        %v7509 = vunpack.c.h.b16 %v7359
        %v7510 = vunpack.c.l.b16 %v7360
        %v7511 = vunpack.c.h.b16 %v7360
        %v7512 = vunpack.c.l.b16 %v7361
        %v7513 = vunpack.c.h.b16 %v7361
        %v7514 = vunpack.c.l.b16 %v7362
        %v7515 = vunpack.c.h.b16 %v7362
        %v7516 = vunpack.c.l.b16 %v7363
        %v7517 = vunpack.c.h.b16 %v7363
        %v7518 = vunpack.c.l.b16 %v7364
        %v7519 = vunpack.c.h.b16 %v7364
        %v7520 = vunpack.c.l.b16 %v7365
        %v7521 = vunpack.c.h.b16 %v7365
        %v7522 = vunpack.c.l.b16 %v7366
        %v7523 = vunpack.c.h.b16 %v7366
        %v7524 = vunpack.c.l.b16 %v7367
        %v7525 = vunpack.c.h.b16 %v7367
        %v7526 = vunpack.c.l.b16 %v7368
        %v7527 = vunpack.c.h.b16 %v7368
        %v7528 = vunpack.c.l.b16 %v7369
        %v7529 = vunpack.c.h.b16 %v7369
        %v7530 = vunpack.c.l.b16 %v7370
        %v7531 = vunpack.c.h.b16 %v7370
        %v7532 = vunpack.c.l.b16 %v7371
        %v7533 = vunpack.c.h.b16 %v7371
        %v7534 = vunpack.c.l.b16 %v7372
        %v7535 = vunpack.c.h.b16 %v7372
        %v7536 = vunpack.c.l.b16 %v7373
        %v7537 = vunpack.c.h.b16 %v7373
        %v7538 = vunpack.c.l.b16 %v7374
        %v7539 = vunpack.c.h.b16 %v7374
        %v7540 = vunpack.c.l.b16 %v7375
        %v7541 = vunpack.c.h.b16 %v7375
        %v7542 = vunpack.c.l.b16 %v7376
        %v7543 = vunpack.c.h.b16 %v7376
        %v7544 = vunpack.c.l.b16 %v7377
        %v7545 = vunpack.c.h.b16 %v7377
        %v7546 = vunpack.c.l.b16 %v7378
        %v7547 = vunpack.c.h.b16 %v7378
        %v7548 = vunpack.c.l.b16 %v7379
        %v7549 = vunpack.c.h.b16 %v7379
        %v7550 = vunpack.c.l.b16 %v7380
        %v7551 = vunpack.c.h.b16 %v7380
        %v7552 = vunpack.c.l.b16 %v7381
        %v7553 = vunpack.c.h.b16 %v7381
        %v7554 = vunpack.c.l.b16 %v7382
        %v7555 = vunpack.c.h.b16 %v7382
        %v7556 = vunpack.c.l.b16 %v7383
        %v7557 = vunpack.c.h.b16 %v7383
        %v7558 = vunpack.c.l.b16 %v7384
        %v7559 = vunpack.c.h.b16 %v7384
        %v7560 = vunpack.c.l.b16 %v7385
        %v7561 = vunpack.c.h.b16 %v7385
        %v7562 = vunpack.c.l.b16 %v7386
        %v7563 = vunpack.c.h.b16 %v7386
        %v7564 = vunpack.c.l.b16 %v7387
        %v7565 = vunpack.c.h.b16 %v7387
        %v7566 = vunpack.c.l.b16 %v7388
        %v7567 = vunpack.c.h.b16 %v7388
        %v7568 = vunpack.c.l.b16 %v7389
        %v7569 = vunpack.c.h.b16 %v7389
        %v7570 = vunpack.c.l.b16 %v7390
        %v7571 = vunpack.c.h.b16 %v7390
        %v7572 = vunpack.c.l.b16 %v7391
        %v7573 = vunpack.c.h.b16 %v7391
        %v7574 = vunpack.c.l.b16 %v7392
        %v7575 = vunpack.c.h.b16 %v7392
        %v7576 = vunpack.c.l.b16 %v7393
        %v7577 = vunpack.c.h.b16 %v7393
        %v7578 = vunpack.c.l.b16 %v7394
        %v7579 = vunpack.c.h.b16 %v7394
        %v7580 = vunpack.c.l.b16 %v7395
        %v7581 = vunpack.c.h.b16 %v7395
        %v7582 = vunpack.c.l.b16 %v7396
        %v7583 = vunpack.c.h.b16 %v7396
        %v7584 = vunpack.c.l.b16 %v7397
        %v7585 = vunpack.c.h.b16 %v7397
        %v7586 = vunpack.c.l.b16 %v7398
        %v7587 = vunpack.c.h.b16 %v7398
        %v7588 = vunpack.c.l.b16 %v7399
        %v7589 = vunpack.c.h.b16 %v7399
        %v7590 = vunpack.c.l.b16 %v7400
        %v7591 = vunpack.c.h.b16 %v7400
        %v7592 = vunpack.c.l.b16 %v7401
        %v7593 = vunpack.c.h.b16 %v7401
        %v7594 = vunpack.c.l.b16 %v7402
        %v7595 = vunpack.c.h.b16 %v7402
        %v7596 = vunpack.c.l.b16 %v7403
        %v7597 = vunpack.c.h.b16 %v7403
        %v7598 = vunpack.c.l.b16 %v7404
        %v7599 = vunpack.c.h.b16 %v7404
        %v7600 = vunpack.c.l.b16 %v7405
        %v7601 = vunpack.c.h.b16 %v7405
        %v7602 = vunpack.c.l.b16 %v7406
        %v7603 = vunpack.c.h.b16 %v7406
        %v7604 = vunpack.c.l.b16 %v7407
        %v7605 = vunpack.c.h.b16 %v7407
        %v7606 = vpack.c.b16 %v7480, %v7478
        %v7607 = vpack.c.b16 %v7481, %v7479
        %v7608 = vpack.c.b16 %v7484, %v7482
        %v7609 = vpack.c.b16 %v7485, %v7483
        %v7610 = vpack.c.b16 %v7488, %v7486
        %v7611 = vpack.c.b16 %v7489, %v7487
        %v7612 = vpack.c.b16 %v7492, %v7490
        %v7613 = vpack.c.b16 %v7493, %v7491
        %v7614 = vpack.c.b16 %v7496, %v7494
        %v7615 = vpack.c.b16 %v7497, %v7495
        %v7616 = vpack.c.b16 %v7500, %v7498
        %v7617 = vpack.c.b16 %v7501, %v7499
        %v7618 = vpack.c.b16 %v7504, %v7502
        %v7619 = vpack.c.b16 %v7505, %v7503
        %v7620 = vpack.c.b16 %v7508, %v7506
        %v7621 = vpack.c.b16 %v7509, %v7507
        %v7622 = vpack.c.b16 %v7512, %v7510
        %v7623 = vpack.c.b16 %v7513, %v7511
        %v7624 = vpack.c.b16 %v7516, %v7514
        %v7625 = vpack.c.b16 %v7517, %v7515
        %v7626 = vpack.c.b16 %v7520, %v7518
        %v7627 = vpack.c.b16 %v7521, %v7519
        %v7628 = vpack.c.b16 %v7524, %v7522
        %v7629 = vpack.c.b16 %v7525, %v7523
        %v7630 = vpack.c.b16 %v7528, %v7526
        %v7631 = vpack.c.b16 %v7529, %v7527
        %v7632 = vpack.c.b16 %v7532, %v7530
        %v7633 = vpack.c.b16 %v7533, %v7531
        %v7634 = vpack.c.b16 %v7536, %v7534
        %v7635 = vpack.c.b16 %v7537, %v7535
        %v7636 = vpack.c.b16 %v7540, %v7538
        %v7637 = vpack.c.b16 %v7541, %v7539
        %v7638 = vpack.c.b16 %v7544, %v7542
        %v7639 = vpack.c.b16 %v7545, %v7543
        %v7640 = vpack.c.b16 %v7548, %v7546
        %v7641 = vpack.c.b16 %v7549, %v7547
        %v7642 = vpack.c.b16 %v7552, %v7550
        %v7643 = vpack.c.b16 %v7553, %v7551
        %v7644 = vpack.c.b16 %v7556, %v7554
        %v7645 = vpack.c.b16 %v7557, %v7555
        %v7646 = vpack.c.b16 %v7560, %v7558
        %v7647 = vpack.c.b16 %v7561, %v7559
        %v7648 = vpack.c.b16 %v7564, %v7562
        %v7649 = vpack.c.b16 %v7565, %v7563
        %v7650 = vpack.c.b16 %v7568, %v7566
        %v7651 = vpack.c.b16 %v7569, %v7567
        %v7652 = vpack.c.b16 %v7572, %v7570
        %v7653 = vpack.c.b16 %v7573, %v7571
        %v7654 = vpack.c.b16 %v7576, %v7574
        %v7655 = vpack.c.b16 %v7577, %v7575
        %v7656 = vpack.c.b16 %v7580, %v7578
        %v7657 = vpack.c.b16 %v7581, %v7579
        %v7658 = vpack.c.b16 %v7584, %v7582
        %v7659 = vpack.c.b16 %v7585, %v7583
        %v7660 = vpack.c.b16 %v7588, %v7586
        %v7661 = vpack.c.b16 %v7589, %v7587
        %v7662 = vpack.c.b16 %v7592, %v7590
        %v7663 = vpack.c.b16 %v7593, %v7591
        %v7664 = vpack.c.b16 %v7596, %v7594
        %v7665 = vpack.c.b16 %v7597, %v7595
        %v7666 = vpack.c.b16 %v7600, %v7598
        %v7667 = vpack.c.b16 %v7601, %v7599
        %v7668 = vpack.c.b16 %v7604, %v7602
        %v7669 = vpack.c.b16 %v7605, %v7603
        %7734 = vmatpush.bf16.msra.mxu0 %v7620
        %7735 = vmatpush.bf16.msra.mxu0 %v7618
        %7736 = vmatpush.bf16.msra.mxu0 %v7616
        %7737 = vmatpush.bf16.msra.mxu0 %v7614
        %7738 = vmatpush.bf16.msra.mxu0 %v7612
        %7739 = vmatpush.bf16.msra.mxu0 %v7610
        %7740 = vmatpush.bf16.msra.mxu0 %v7608
        %7741 = vmatpush.bf16.msra.mxu0 %v7606
        %7742 = vmatmul.bf16.gmra.mxu0 %v7312
        %v7743 = vpop.f32.mrf.mxu0
        %v7744 = vadd.f32 %v7410, %v7743
        %v7745 = vpop.f32.mrf.mxu0
        %v7746 = vadd.f32 %v7410, %v7745
        %7747 = vmatmul.bf16.gmra.mxu0 %v7316
        %v7748 = vpop.f32.mrf.mxu0
        %v7749 = vadd.f32 %v7410, %v7748
        %v7750 = vpop.f32.mrf.mxu0
        %v7751 = vadd.f32 %v7410, %v7750
        %7752 = vmatmul.bf16.gmra.mxu0 %v7320
        %v7753 = vpop.f32.mrf.mxu0
        %v7754 = vadd.f32 %v7410, %v7753
        %v7755 = vpop.f32.mrf.mxu0
        %v7756 = vadd.f32 %v7410, %v7755
        %7757 = vmatmul.bf16.gmra.mxu0 %v7324
        %v7758 = vpop.f32.mrf.mxu0
        %v7759 = vadd.f32 %v7410, %v7758
        %v7760 = vpop.f32.mrf.mxu0
        %v7761 = vadd.f32 %v7410, %v7760
        %7762 = vmatmul.bf16.gmra.mxu0 %v7328
        %v7763 = vpop.f32.mrf.mxu0
        %v7764 = vadd.f32 %v7410, %v7763
        %v7765 = vpop.f32.mrf.mxu0
        %v7766 = vadd.f32 %v7410, %v7765
        %7767 = vmatmul.bf16.gmra.mxu0 %v7332
        %v7768 = vpop.f32.mrf.mxu0
        %v7769 = vadd.f32 %v7410, %v7768
        %v7770 = vpop.f32.mrf.mxu0
        %v7771 = vadd.f32 %v7410, %v7770
        %7772 = vmatmul.bf16.gmra.mxu0 %v7336
        %v7773 = vpop.f32.mrf.mxu0
        %v7774 = vadd.f32 %v7410, %v7773
        %v7775 = vpop.f32.mrf.mxu0
        %v7776 = vadd.f32 %v7410, %v7775
        %7777 = vmatmul.bf16.gmra.mxu0 %v7340
        %v7778 = vpop.f32.mrf.mxu0
        %v7779 = vadd.f32 %v7410, %v7778
        %v7780 = vpop.f32.mrf.mxu0
        %v7781 = vadd.f32 %v7410, %v7780
        %7782 = vdwg.mxu0
        %7783 = vmatpush.bf16.msra.mxu0 %v7636
        %7784 = vmatpush.bf16.msra.mxu0 %v7634
        %7785 = vmatpush.bf16.msra.mxu0 %v7632
        %7786 = vmatpush.bf16.msra.mxu0 %v7630
        %7787 = vmatpush.bf16.msra.mxu0 %v7628
        %7788 = vmatpush.bf16.msra.mxu0 %v7626
        %7789 = vmatpush.bf16.msra.mxu0 %v7624
        %7790 = vmatpush.bf16.msra.mxu0 %v7622
        %7791 = vmatmul.bf16.gmra.mxu0 %v7313
        %v7792 = vpop.f32.mrf.mxu0
        %v7793 = vadd.f32 %v7744, %v7792
        %v7794 = vpop.f32.mrf.mxu0
        %v7795 = vadd.f32 %v7746, %v7794
        %7796 = vmatmul.bf16.gmra.mxu0 %v7317
        %v7797 = vpop.f32.mrf.mxu0
        %v7798 = vadd.f32 %v7749, %v7797
        %v7799 = vpop.f32.mrf.mxu0
        %v7800 = vadd.f32 %v7751, %v7799
        %7801 = vmatmul.bf16.gmra.mxu0 %v7321
        %v7802 = vpop.f32.mrf.mxu0
        %v7803 = vadd.f32 %v7754, %v7802
        %v7804 = vpop.f32.mrf.mxu0
        %v7805 = vadd.f32 %v7756, %v7804
        %7806 = vmatmul.bf16.gmra.mxu0 %v7325
        %v7807 = vpop.f32.mrf.mxu0
        %v7808 = vadd.f32 %v7759, %v7807
        %v7809 = vpop.f32.mrf.mxu0
        %v7810 = vadd.f32 %v7761, %v7809
        %7811 = vmatmul.bf16.gmra.mxu0 %v7329
        %v7812 = vpop.f32.mrf.mxu0
        %v7813 = vadd.f32 %v7764, %v7812
        %v7814 = vpop.f32.mrf.mxu0
        %v7815 = vadd.f32 %v7766, %v7814
        %7816 = vmatmul.bf16.gmra.mxu0 %v7333
        %v7817 = vpop.f32.mrf.mxu0
        %v7818 = vadd.f32 %v7769, %v7817
        %v7819 = vpop.f32.mrf.mxu0
        %v7820 = vadd.f32 %v7771, %v7819
        %7821 = vmatmul.bf16.gmra.mxu0 %v7337
        %v7822 = vpop.f32.mrf.mxu0
        %v7823 = vadd.f32 %v7774, %v7822
        %v7824 = vpop.f32.mrf.mxu0
        %v7825 = vadd.f32 %v7776, %v7824
        %7826 = vmatmul.bf16.gmra.mxu0 %v7341
        %v7827 = vpop.f32.mrf.mxu0
        %v7828 = vadd.f32 %v7779, %v7827
        %v7829 = vpop.f32.mrf.mxu0
        %v7830 = vadd.f32 %v7781, %v7829
        %7831 = vdwg.mxu0
        %7832 = vmatpush.bf16.msra.mxu0 %v7652
        %7833 = vmatpush.bf16.msra.mxu0 %v7650
        %7834 = vmatpush.bf16.msra.mxu0 %v7648
        %7835 = vmatpush.bf16.msra.mxu0 %v7646
        %7836 = vmatpush.bf16.msra.mxu0 %v7644
        %7837 = vmatpush.bf16.msra.mxu0 %v7642
        %7838 = vmatpush.bf16.msra.mxu0 %v7640
        %7839 = vmatpush.bf16.msra.mxu0 %v7638
        %7840 = vmatmul.bf16.gmra.mxu0 %v7314
        %v7841 = vpop.f32.mrf.mxu0
        %v7842 = vadd.f32 %v7793, %v7841
        %v7843 = vpop.f32.mrf.mxu0
        %v7844 = vadd.f32 %v7795, %v7843
        %7845 = vmatmul.bf16.gmra.mxu0 %v7318
        %v7846 = vpop.f32.mrf.mxu0
        %v7847 = vadd.f32 %v7798, %v7846
        %v7848 = vpop.f32.mrf.mxu0
        %v7849 = vadd.f32 %v7800, %v7848
        %7850 = vmatmul.bf16.gmra.mxu0 %v7322
        %v7851 = vpop.f32.mrf.mxu0
        %v7852 = vadd.f32 %v7803, %v7851
        %v7853 = vpop.f32.mrf.mxu0
        %v7854 = vadd.f32 %v7805, %v7853
        %7855 = vmatmul.bf16.gmra.mxu0 %v7326
        %v7856 = vpop.f32.mrf.mxu0
        %v7857 = vadd.f32 %v7808, %v7856
        %v7858 = vpop.f32.mrf.mxu0
        %v7859 = vadd.f32 %v7810, %v7858
        %7860 = vmatmul.bf16.gmra.mxu0 %v7330
        %v7861 = vpop.f32.mrf.mxu0
        %v7862 = vadd.f32 %v7813, %v7861
        %v7863 = vpop.f32.mrf.mxu0
        %v7864 = vadd.f32 %v7815, %v7863
        %7865 = vmatmul.bf16.gmra.mxu0 %v7334
        %v7866 = vpop.f32.mrf.mxu0
        %v7867 = vadd.f32 %v7818, %v7866
        %v7868 = vpop.f32.mrf.mxu0
        %v7869 = vadd.f32 %v7820, %v7868
        %7870 = vmatmul.bf16.gmra.mxu0 %v7338
        %v7871 = vpop.f32.mrf.mxu0
        %v7872 = vadd.f32 %v7823, %v7871
        %v7873 = vpop.f32.mrf.mxu0
        %v7874 = vadd.f32 %v7825, %v7873
        %7875 = vmatmul.bf16.gmra.mxu0 %v7342
        %v7876 = vpop.f32.mrf.mxu0
        %v7877 = vadd.f32 %v7828, %v7876
        %v7878 = vpop.f32.mrf.mxu0
        %v7879 = vadd.f32 %v7830, %v7878
        %7880 = vdwg.mxu0
        %7881 = vmatpush.bf16.msra.mxu0 %v7668
        %7882 = vmatpush.bf16.msra.mxu0 %v7666
        %7883 = vmatpush.bf16.msra.mxu0 %v7664
        %7884 = vmatpush.bf16.msra.mxu0 %v7662
        %7885 = vmatpush.bf16.msra.mxu0 %v7660
        %7886 = vmatpush.bf16.msra.mxu0 %v7658
        %7887 = vmatpush.bf16.msra.mxu0 %v7656
        %7888 = vmatpush.bf16.msra.mxu0 %v7654
        %7889 = vmatmul.bf16.gmra.mxu0 %v7315
        %v7890 = vpop.f32.mrf.mxu0
        %v7891 = vadd.f32 %v7842, %v7890
        %v7892 = vpop.f32.mrf.mxu0
        %v7893 = vadd.f32 %v7844, %v7892
        %7894 = vmatmul.bf16.gmra.mxu0 %v7319
        %v7895 = vpop.f32.mrf.mxu0
        %v7896 = vadd.f32 %v7847, %v7895
        %v7897 = vpop.f32.mrf.mxu0
        %v7898 = vadd.f32 %v7849, %v7897
        %7899 = vmatmul.bf16.gmra.mxu0 %v7323
        %v7900 = vpop.f32.mrf.mxu0
        %v7901 = vadd.f32 %v7852, %v7900
        %v7902 = vpop.f32.mrf.mxu0
        %v7903 = vadd.f32 %v7854, %v7902
        %7904 = vmatmul.bf16.gmra.mxu0 %v7327
        %v7905 = vpop.f32.mrf.mxu0
        %v7906 = vadd.f32 %v7857, %v7905
        %v7907 = vpop.f32.mrf.mxu0
        %v7908 = vadd.f32 %v7859, %v7907
        %7909 = vmatmul.bf16.gmra.mxu0 %v7331
        %v7910 = vpop.f32.mrf.mxu0
        %v7911 = vadd.f32 %v7862, %v7910
        %v7912 = vpop.f32.mrf.mxu0
        %v7913 = vadd.f32 %v7864, %v7912
        %7914 = vmatmul.bf16.gmra.mxu0 %v7335
        %v7915 = vpop.f32.mrf.mxu0
        %v7916 = vadd.f32 %v7867, %v7915
        %v7917 = vpop.f32.mrf.mxu0
        %v7918 = vadd.f32 %v7869, %v7917
        %7919 = vmatmul.bf16.gmra.mxu0 %v7339
        %v7920 = vpop.f32.mrf.mxu0
        %v7921 = vadd.f32 %v7872, %v7920
        %v7922 = vpop.f32.mrf.mxu0
        %v7923 = vadd.f32 %v7874, %v7922
        %7924 = vmatmul.bf16.gmra.mxu0 %v7343
        %v7925 = vpop.f32.mrf.mxu0
        %v7926 = vadd.f32 %v7877, %v7925
        %v7927 = vpop.f32.mrf.mxu0
        %v7928 = vadd.f32 %v7879, %v7927
        %7929 = vdwg.mxu0
        %7930 = vmatpush.bf16.msra.mxu0 %v7621
        %7931 = vmatpush.bf16.msra.mxu0 %v7619
        %7932 = vmatpush.bf16.msra.mxu0 %v7617
        %7933 = vmatpush.bf16.msra.mxu0 %v7615
        %7934 = vmatpush.bf16.msra.mxu0 %v7613
        %7935 = vmatpush.bf16.msra.mxu0 %v7611
        %7936 = vmatpush.bf16.msra.mxu0 %v7609
        %7937 = vmatpush.bf16.msra.mxu0 %v7607
        %7938 = vmatmul.bf16.gmra.mxu0 %v7312
        %v7939 = vpop.f32.mrf.mxu0
        %v7940 = vadd.f32 %v7411, %v7939
        %v7941 = vpop.f32.mrf.mxu0
        %v7942 = vadd.f32 %v7411, %v7941
        %7943 = vmatmul.bf16.gmra.mxu0 %v7316
        %v7944 = vpop.f32.mrf.mxu0
        %v7945 = vadd.f32 %v7411, %v7944
        %v7946 = vpop.f32.mrf.mxu0
        %v7947 = vadd.f32 %v7411, %v7946
        %7948 = vmatmul.bf16.gmra.mxu0 %v7320
        %v7949 = vpop.f32.mrf.mxu0
        %v7950 = vadd.f32 %v7411, %v7949
        %v7951 = vpop.f32.mrf.mxu0
        %v7952 = vadd.f32 %v7411, %v7951
        %7953 = vmatmul.bf16.gmra.mxu0 %v7324
        %v7954 = vpop.f32.mrf.mxu0
        %v7955 = vadd.f32 %v7411, %v7954
        %v7956 = vpop.f32.mrf.mxu0
        %v7957 = vadd.f32 %v7411, %v7956
        %7958 = vmatmul.bf16.gmra.mxu0 %v7328
        %v7959 = vpop.f32.mrf.mxu0
        %v7960 = vadd.f32 %v7411, %v7959
        %v7961 = vpop.f32.mrf.mxu0
        %v7962 = vadd.f32 %v7411, %v7961
        %7963 = vmatmul.bf16.gmra.mxu0 %v7332
        %v7964 = vpop.f32.mrf.mxu0
        %v7965 = vadd.f32 %v7411, %v7964
        %v7966 = vpop.f32.mrf.mxu0
        %v7967 = vadd.f32 %v7411, %v7966
        %7968 = vmatmul.bf16.gmra.mxu0 %v7336
        %v7969 = vpop.f32.mrf.mxu0
        %v7970 = vadd.f32 %v7411, %v7969
        %v7971 = vpop.f32.mrf.mxu0
        %v7972 = vadd.f32 %v7411, %v7971
        %7973 = vmatmul.bf16.gmra.mxu0 %v7340
        %v7974 = vpop.f32.mrf.mxu0
        %v7975 = vadd.f32 %v7411, %v7974
        %v7976 = vpop.f32.mrf.mxu0
        %v7977 = vadd.f32 %v7411, %v7976
        %7978 = vdwg.mxu0
        %7979 = vmatpush.bf16.msra.mxu0 %v7637
        %7980 = vmatpush.bf16.msra.mxu0 %v7635
        %7981 = vmatpush.bf16.msra.mxu0 %v7633
        %7982 = vmatpush.bf16.msra.mxu0 %v7631
        %7983 = vmatpush.bf16.msra.mxu0 %v7629
        %7984 = vmatpush.bf16.msra.mxu0 %v7627
        %7985 = vmatpush.bf16.msra.mxu0 %v7625
        %7986 = vmatpush.bf16.msra.mxu0 %v7623
        %7987 = vmatmul.bf16.gmra.mxu0 %v7313
        %v7988 = vpop.f32.mrf.mxu0
        %v7989 = vadd.f32 %v7940, %v7988
        %v7990 = vpop.f32.mrf.mxu0
        %v7991 = vadd.f32 %v7942, %v7990
        %7992 = vmatmul.bf16.gmra.mxu0 %v7317
        %v7993 = vpop.f32.mrf.mxu0
        %v7994 = vadd.f32 %v7945, %v7993
        %v7995 = vpop.f32.mrf.mxu0
        %v7996 = vadd.f32 %v7947, %v7995
        %7997 = vmatmul.bf16.gmra.mxu0 %v7321
        %v7998 = vpop.f32.mrf.mxu0
        %v7999 = vadd.f32 %v7950, %v7998
        %v8000 = vpop.f32.mrf.mxu0
        %v8001 = vadd.f32 %v7952, %v8000
        %8002 = vmatmul.bf16.gmra.mxu0 %v7325
        %v8003 = vpop.f32.mrf.mxu0
        %v8004 = vadd.f32 %v7955, %v8003
        %v8005 = vpop.f32.mrf.mxu0
        %v8006 = vadd.f32 %v7957, %v8005
        %8007 = vmatmul.bf16.gmra.mxu0 %v7329
        %v8008 = vpop.f32.mrf.mxu0
        %v8009 = vadd.f32 %v7960, %v8008
        %v8010 = vpop.f32.mrf.mxu0
        %v8011 = vadd.f32 %v7962, %v8010
        %8012 = vmatmul.bf16.gmra.mxu0 %v7333
        %v8013 = vpop.f32.mrf.mxu0
        %v8014 = vadd.f32 %v7965, %v8013
        %v8015 = vpop.f32.mrf.mxu0
        %v8016 = vadd.f32 %v7967, %v8015
        %8017 = vmatmul.bf16.gmra.mxu0 %v7337
        %v8018 = vpop.f32.mrf.mxu0
        %v8019 = vadd.f32 %v7970, %v8018
        %v8020 = vpop.f32.mrf.mxu0
        %v8021 = vadd.f32 %v7972, %v8020
        %8022 = vmatmul.bf16.gmra.mxu0 %v7341
        %v8023 = vpop.f32.mrf.mxu0
        %v8024 = vadd.f32 %v7975, %v8023
        %v8025 = vpop.f32.mrf.mxu0
        %v8026 = vadd.f32 %v7977, %v8025
        %8027 = vdwg.mxu0
        %8028 = vmatpush.bf16.msra.mxu0 %v7653
        %8029 = vmatpush.bf16.msra.mxu0 %v7651
        %8030 = vmatpush.bf16.msra.mxu0 %v7649
        %8031 = vmatpush.bf16.msra.mxu0 %v7647
        %8032 = vmatpush.bf16.msra.mxu0 %v7645
        %8033 = vmatpush.bf16.msra.mxu0 %v7643
        %8034 = vmatpush.bf16.msra.mxu0 %v7641
        %8035 = vmatpush.bf16.msra.mxu0 %v7639
        %8036 = vmatmul.bf16.gmra.mxu0 %v7314
        %v8037 = vpop.f32.mrf.mxu0
        %v8038 = vadd.f32 %v7989, %v8037
        %v8039 = vpop.f32.mrf.mxu0
        %v8040 = vadd.f32 %v7991, %v8039
        %8041 = vmatmul.bf16.gmra.mxu0 %v7318
        %v8042 = vpop.f32.mrf.mxu0
        %v8043 = vadd.f32 %v7994, %v8042
        %v8044 = vpop.f32.mrf.mxu0
        %v8045 = vadd.f32 %v7996, %v8044
        %8046 = vmatmul.bf16.gmra.mxu0 %v7322
        %v8047 = vpop.f32.mrf.mxu0
        %v8048 = vadd.f32 %v7999, %v8047
        %v8049 = vpop.f32.mrf.mxu0
        %v8050 = vadd.f32 %v8001, %v8049
        %8051 = vmatmul.bf16.gmra.mxu0 %v7326
        %v8052 = vpop.f32.mrf.mxu0
        %v8053 = vadd.f32 %v8004, %v8052
        %v8054 = vpop.f32.mrf.mxu0
        %v8055 = vadd.f32 %v8006, %v8054
        %8056 = vmatmul.bf16.gmra.mxu0 %v7330
        %v8057 = vpop.f32.mrf.mxu0
        %v8058 = vadd.f32 %v8009, %v8057
        %v8059 = vpop.f32.mrf.mxu0
        %v8060 = vadd.f32 %v8011, %v8059
        %8061 = vmatmul.bf16.gmra.mxu0 %v7334
        %v8062 = vpop.f32.mrf.mxu0
        %v8063 = vadd.f32 %v8014, %v8062
        %v8064 = vpop.f32.mrf.mxu0
        %v8065 = vadd.f32 %v8016, %v8064
        %8066 = vmatmul.bf16.gmra.mxu0 %v7338
        %v8067 = vpop.f32.mrf.mxu0
        %v8068 = vadd.f32 %v8019, %v8067
        %v8069 = vpop.f32.mrf.mxu0
        %v8070 = vadd.f32 %v8021, %v8069
        %8071 = vmatmul.bf16.gmra.mxu0 %v7342
        %v8072 = vpop.f32.mrf.mxu0
        %v8073 = vadd.f32 %v8024, %v8072
        %v8074 = vpop.f32.mrf.mxu0
        %v8075 = vadd.f32 %v8026, %v8074
        %8076 = vdwg.mxu0
        %8077 = vmatpush.bf16.msra.mxu0 %v7669
        %8078 = vmatpush.bf16.msra.mxu0 %v7667
        %8079 = vmatpush.bf16.msra.mxu0 %v7665
        %8080 = vmatpush.bf16.msra.mxu0 %v7663
        %8081 = vmatpush.bf16.msra.mxu0 %v7661
        %8082 = vmatpush.bf16.msra.mxu0 %v7659
        %8083 = vmatpush.bf16.msra.mxu0 %v7657
        %8084 = vmatpush.bf16.msra.mxu0 %v7655
        %8085 = vmatmul.bf16.gmra.mxu0 %v7315
        %v8086 = vpop.f32.mrf.mxu0
        %v8087 = vadd.f32 %v8038, %v8086
        %v8088 = vpop.f32.mrf.mxu0
        %v8089 = vadd.f32 %v8040, %v8088
        %8090 = vmatmul.bf16.gmra.mxu0 %v7319
        %v8091 = vpop.f32.mrf.mxu0
        %v8092 = vadd.f32 %v8043, %v8091
        %v8093 = vpop.f32.mrf.mxu0
        %v8094 = vadd.f32 %v8045, %v8093
        %8095 = vmatmul.bf16.gmra.mxu0 %v7323
        %v8096 = vpop.f32.mrf.mxu0
        %v8097 = vadd.f32 %v8048, %v8096
        %v8098 = vpop.f32.mrf.mxu0
        %v8099 = vadd.f32 %v8050, %v8098
        %8100 = vmatmul.bf16.gmra.mxu0 %v7327
        %v8101 = vpop.f32.mrf.mxu0
        %v8102 = vadd.f32 %v8053, %v8101
        %v8103 = vpop.f32.mrf.mxu0
        %v8104 = vadd.f32 %v8055, %v8103
        %8105 = vmatmul.bf16.gmra.mxu0 %v7331
        %v8106 = vpop.f32.mrf.mxu0
        %v8107 = vadd.f32 %v8058, %v8106
        %v8108 = vpop.f32.mrf.mxu0
        %v8109 = vadd.f32 %v8060, %v8108
        %8110 = vmatmul.bf16.gmra.mxu0 %v7335
        %v8111 = vpop.f32.mrf.mxu0
        %v8112 = vadd.f32 %v8063, %v8111
        %v8113 = vpop.f32.mrf.mxu0
        %v8114 = vadd.f32 %v8065, %v8113
        %8115 = vmatmul.bf16.gmra.mxu0 %v7339
        %v8116 = vpop.f32.mrf.mxu0
        %v8117 = vadd.f32 %v8068, %v8116
        %v8118 = vpop.f32.mrf.mxu0
        %v8119 = vadd.f32 %v8070, %v8118
        %8120 = vmatmul.bf16.gmra.mxu0 %v7343
        %v8121 = vpop.f32.mrf.mxu0
        %v8122 = vadd.f32 %v8073, %v8121
        %v8123 = vpop.f32.mrf.mxu0
        %v8124 = vadd.f32 %v8075, %v8123
        %8125 = vdwg.mxu0
        %v8126 = vadd.f32 %v6414, %v7891
        %v8127 = vadd.f32 %v6415, %v8087
        %v8128 = vadd.f32 %v6416, %v7893
        %v8129 = vadd.f32 %v6417, %v8089
        %v8130 = vadd.f32 %v6418, %v7896
        %v8131 = vadd.f32 %v6419, %v8092
        %v8132 = vadd.f32 %v6420, %v7898
        %v8133 = vadd.f32 %v6421, %v8094
        %v8134 = vadd.f32 %v6422, %v7901
        %v8135 = vadd.f32 %v6423, %v8097
        %v8136 = vadd.f32 %v6424, %v7903
        %v8137 = vadd.f32 %v6425, %v8099
        %v8138 = vadd.f32 %v6426, %v7906
        %v8139 = vadd.f32 %v6427, %v8102
        %v8140 = vadd.f32 %v6428, %v7908
        %v8141 = vadd.f32 %v6429, %v8104
        %v8142 = vadd.f32 %v6430, %v7911
        %v8143 = vadd.f32 %v6431, %v8107
        %v8144 = vadd.f32 %v6432, %v7913
        %v8145 = vadd.f32 %v6433, %v8109
        %v8146 = vadd.f32 %v6434, %v7916
        %v8147 = vadd.f32 %v6435, %v8112
        %v8148 = vadd.f32 %v6436, %v7918
        %v8149 = vadd.f32 %v6437, %v8114
        %v8150 = vadd.f32 %v6438, %v7921
        %v8151 = vadd.f32 %v6439, %v8117
        %v8152 = vadd.f32 %v6440, %v7923
        %v8153 = vadd.f32 %v6441, %v8119
        %v8154 = vadd.f32 %v6442, %v7926
        %v8155 = vadd.f32 %v6443, %v8122
        %v8156 = vadd.f32 %v6444, %v7928
        %v8157 = vadd.f32 %v6445, %v8124
        %s8158 = scalar_lea.vmem %s12, 2
        %v8159 = vld [vmem:[%s8158] ss:$4 sm:$0x3]
        %s8160 = scalar_lea.vmem [#allocation20], 2
        %v8161 = vld [vmem:[%s8160] ss:$4 sm:$0x3]
        %v8162 = vadd.f32 %v8126, %v8127
        %8163 = vadd.xlane.f32.xlu0 %v8162
        %v8164 = vpop.xlane.xlu0 %8163
        %v8165 = vadd.f32 %v8128, %v8129
        %8166 = vadd.xlane.f32.xlu0 %v8165
        %v8167 = vpop.xlane.xlu0 %8166
        %v8168 = vadd.f32 %v8130, %v8131
        %8169 = vadd.xlane.f32.xlu0 %v8168
        %v8170 = vpop.xlane.xlu0 %8169
        %v8171 = vadd.f32 %v8132, %v8133
        %8172 = vadd.xlane.f32.xlu0 %v8171
        %v8173 = vpop.xlane.xlu0 %8172
        %v8174 = vadd.f32 %v8134, %v8135
        %8175 = vadd.xlane.f32.xlu0 %v8174
        %v8176 = vpop.xlane.xlu0 %8175
        %v8177 = vadd.f32 %v8136, %v8137
        %8178 = vadd.xlane.f32.xlu0 %v8177
        %v8179 = vpop.xlane.xlu0 %8178
        %v8180 = vadd.f32 %v8138, %v8139
        %8181 = vadd.xlane.f32.xlu0 %v8180
        %v8182 = vpop.xlane.xlu0 %8181
        %v8183 = vadd.f32 %v8140, %v8141
        %8184 = vadd.xlane.f32.xlu0 %v8183
        %v8185 = vpop.xlane.xlu0 %8184
        %v8186 = vadd.f32 %v8142, %v8143
        %8187 = vadd.xlane.f32.xlu0 %v8186
        %v8188 = vpop.xlane.xlu0 %8187
        %v8189 = vadd.f32 %v8144, %v8145
        %8190 = vadd.xlane.f32.xlu0 %v8189
        %v8191 = vpop.xlane.xlu0 %8190
        %v8192 = vadd.f32 %v8146, %v8147
        %8193 = vadd.xlane.f32.xlu0 %v8192
        %v8194 = vpop.xlane.xlu0 %8193
        %v8195 = vadd.f32 %v8148, %v8149
        %8196 = vadd.xlane.f32.xlu0 %v8195
        %v8197 = vpop.xlane.xlu0 %8196
        %v8198 = vadd.f32 %v8150, %v8151
        %8199 = vadd.xlane.f32.xlu0 %v8198
        %v8200 = vpop.xlane.xlu0 %8199
        %v8201 = vadd.f32 %v8152, %v8153
        %8202 = vadd.xlane.f32.xlu0 %v8201
        %v8203 = vpop.xlane.xlu0 %8202
        %v8204 = vadd.f32 %v8154, %v8155
        %8205 = vadd.xlane.f32.xlu0 %v8204
        %v8206 = vpop.xlane.xlu0 %8205
        %v8207 = vadd.f32 %v8156, %v8157
        %8208 = vadd.xlane.f32.xlu0 %v8207
        %v8209 = vpop.xlane.xlu0 %8208
        %v8210 = vmul.f32 %v8164, %v3423
        %v8211 = vmul.f32 %v8167, %v3423
        %v8212 = vmul.f32 %v8170, %v3423
        %v8213 = vmul.f32 %v8173, %v3423
        %v8214 = vmul.f32 %v8176, %v3423
        %v8215 = vmul.f32 %v8179, %v3423
        %v8216 = vmul.f32 %v8182, %v3423
        %v8217 = vmul.f32 %v8185, %v3423
        %v8218 = vmul.f32 %v8188, %v3423
        %v8219 = vmul.f32 %v8191, %v3423
        %v8220 = vmul.f32 %v8194, %v3423
        %v8221 = vmul.f32 %v8197, %v3423
        %v8222 = vmul.f32 %v8200, %v3423
        %v8223 = vmul.f32 %v8203, %v3423
        %v8224 = vmul.f32 %v8206, %v3423
        %v8225 = vmul.f32 %v8209, %v3423
        %v8226 = vsub.f32 %v8126, %v8210
        %v8227 = vsub.f32 %v8127, %v8210
        %v8228 = vsub.f32 %v8128, %v8211
        %v8229 = vsub.f32 %v8129, %v8211
        %v8230 = vsub.f32 %v8130, %v8212
        %v8231 = vsub.f32 %v8131, %v8212
        %v8232 = vsub.f32 %v8132, %v8213
        %v8233 = vsub.f32 %v8133, %v8213
        %v8234 = vsub.f32 %v8134, %v8214
        %v8235 = vsub.f32 %v8135, %v8214
        %v8236 = vsub.f32 %v8136, %v8215
        %v8237 = vsub.f32 %v8137, %v8215
        %v8238 = vsub.f32 %v8138, %v8216
        %v8239 = vsub.f32 %v8139, %v8216
        %v8240 = vsub.f32 %v8140, %v8217
        %v8241 = vsub.f32 %v8141, %v8217
        %v8242 = vsub.f32 %v8142, %v8218
        %v8243 = vsub.f32 %v8143, %v8218
        %v8244 = vsub.f32 %v8144, %v8219
        %v8245 = vsub.f32 %v8145, %v8219
        %v8246 = vsub.f32 %v8146, %v8220
        %v8247 = vsub.f32 %v8147, %v8220
        %v8248 = vsub.f32 %v8148, %v8221
        %v8249 = vsub.f32 %v8149, %v8221
        %v8250 = vsub.f32 %v8150, %v8222
        %v8251 = vsub.f32 %v8151, %v8222
        %v8252 = vsub.f32 %v8152, %v8223
        %v8253 = vsub.f32 %v8153, %v8223
        %v8254 = vsub.f32 %v8154, %v8224
        %v8255 = vsub.f32 %v8155, %v8224
        %v8256 = vsub.f32 %v8156, %v8225
        %v8257 = vsub.f32 %v8157, %v8225
        %v8258 = vmul.f32 %v8226, %v8226
        %v8259 = vmul.f32 %v8227, %v8227
        %v8260 = vmul.f32 %v8228, %v8228
        %v8261 = vmul.f32 %v8229, %v8229
        %v8262 = vmul.f32 %v8230, %v8230
        %v8263 = vmul.f32 %v8231, %v8231
        %v8264 = vmul.f32 %v8232, %v8232
        %v8265 = vmul.f32 %v8233, %v8233
        %v8266 = vmul.f32 %v8234, %v8234
        %v8267 = vmul.f32 %v8235, %v8235
        %v8268 = vmul.f32 %v8236, %v8236
        %v8269 = vmul.f32 %v8237, %v8237
        %v8270 = vmul.f32 %v8238, %v8238
        %v8271 = vmul.f32 %v8239, %v8239
        %v8272 = vmul.f32 %v8240, %v8240
        %v8273 = vmul.f32 %v8241, %v8241
        %v8274 = vmul.f32 %v8242, %v8242
        %v8275 = vmul.f32 %v8243, %v8243
        %v8276 = vmul.f32 %v8244, %v8244
        %v8277 = vmul.f32 %v8245, %v8245
        %v8278 = vmul.f32 %v8246, %v8246
        %v8279 = vmul.f32 %v8247, %v8247
        %v8280 = vmul.f32 %v8248, %v8248
        %v8281 = vmul.f32 %v8249, %v8249
        %v8282 = vmul.f32 %v8250, %v8250
        %v8283 = vmul.f32 %v8251, %v8251
        %v8284 = vmul.f32 %v8252, %v8252
        %v8285 = vmul.f32 %v8253, %v8253
        %v8286 = vmul.f32 %v8254, %v8254
        %v8287 = vmul.f32 %v8255, %v8255
        %v8288 = vmul.f32 %v8256, %v8256
        %v8289 = vmul.f32 %v8257, %v8257
        %v8290 = vadd.f32 %v8258, %v8259
        %8291 = vadd.xlane.f32.xlu0 %v8290
        %v8292 = vpop.xlane.xlu0 %8291
        %v8293 = vadd.f32 %v8260, %v8261
        %8294 = vadd.xlane.f32.xlu0 %v8293
        %v8295 = vpop.xlane.xlu0 %8294
        %v8296 = vadd.f32 %v8262, %v8263
        %8297 = vadd.xlane.f32.xlu0 %v8296
        %v8298 = vpop.xlane.xlu0 %8297
        %v8299 = vadd.f32 %v8264, %v8265
        %8300 = vadd.xlane.f32.xlu0 %v8299
        %v8301 = vpop.xlane.xlu0 %8300
        %v8302 = vadd.f32 %v8266, %v8267
        %8303 = vadd.xlane.f32.xlu0 %v8302
        %v8304 = vpop.xlane.xlu0 %8303
        %v8305 = vadd.f32 %v8268, %v8269
        %8306 = vadd.xlane.f32.xlu0 %v8305
        %v8307 = vpop.xlane.xlu0 %8306
        %v8308 = vadd.f32 %v8270, %v8271
        %8309 = vadd.xlane.f32.xlu0 %v8308
        %v8310 = vpop.xlane.xlu0 %8309
        %v8311 = vadd.f32 %v8272, %v8273
        %8312 = vadd.xlane.f32.xlu0 %v8311
        %v8313 = vpop.xlane.xlu0 %8312
        %v8314 = vadd.f32 %v8274, %v8275
        %8315 = vadd.xlane.f32.xlu0 %v8314
        %v8316 = vpop.xlane.xlu0 %8315
        %v8317 = vadd.f32 %v8276, %v8277
        %8318 = vadd.xlane.f32.xlu0 %v8317
        %v8319 = vpop.xlane.xlu0 %8318
        %v8320 = vadd.f32 %v8278, %v8279
        %8321 = vadd.xlane.f32.xlu0 %v8320
        %v8322 = vpop.xlane.xlu0 %8321
        %v8323 = vadd.f32 %v8280, %v8281
        %8324 = vadd.xlane.f32.xlu0 %v8323
        %v8325 = vpop.xlane.xlu0 %8324
        %v8326 = vadd.f32 %v8282, %v8283
        %8327 = vadd.xlane.f32.xlu0 %v8326
        %v8328 = vpop.xlane.xlu0 %8327
        %v8329 = vadd.f32 %v8284, %v8285
        %8330 = vadd.xlane.f32.xlu0 %v8329
        %v8331 = vpop.xlane.xlu0 %8330
        %v8332 = vadd.f32 %v8286, %v8287
        %8333 = vadd.xlane.f32.xlu0 %v8332
        %v8334 = vpop.xlane.xlu0 %8333
        %v8335 = vadd.f32 %v8288, %v8289
        %8336 = vadd.xlane.f32.xlu0 %v8335
        %v8337 = vpop.xlane.xlu0 %8336
        %v8338 = vmul.f32 %v8292, %v3423
        %v8339 = vmul.f32 %v8295, %v3423
        %v8340 = vmul.f32 %v8298, %v3423
        %v8341 = vmul.f32 %v8301, %v3423
        %v8342 = vmul.f32 %v8304, %v3423
        %v8343 = vmul.f32 %v8307, %v3423
        %v8344 = vmul.f32 %v8310, %v3423
        %v8345 = vmul.f32 %v8313, %v3423
        %v8346 = vmul.f32 %v8316, %v3423
        %v8347 = vmul.f32 %v8319, %v3423
        %v8348 = vmul.f32 %v8322, %v3423
        %v8349 = vmul.f32 %v8325, %v3423
        %v8350 = vmul.f32 %v8328, %v3423
        %v8351 = vmul.f32 %v8331, %v3423
        %v8352 = vmul.f32 %v8334, %v3423
        %v8353 = vmul.f32 %v8337, %v3423
        %v8354 = vadd.f32 %v8338, 1e-05
        %v8355 = vadd.f32 %v8339, 1e-05
        %v8356 = vadd.f32 %v8340, 1e-05
        %v8357 = vadd.f32 %v8341, 1e-05
        %v8358 = vadd.f32 %v8342, 1e-05
        %v8359 = vadd.f32 %v8343, 1e-05
        %v8360 = vadd.f32 %v8344, 1e-05
        %v8361 = vadd.f32 %v8345, 1e-05
        %v8362 = vadd.f32 %v8346, 1e-05
        %v8363 = vadd.f32 %v8347, 1e-05
        %v8364 = vadd.f32 %v8348, 1e-05
        %v8365 = vadd.f32 %v8349, 1e-05
        %v8366 = vadd.f32 %v8350, 1e-05
        %v8367 = vadd.f32 %v8351, 1e-05
        %v8368 = vadd.f32 %v8352, 1e-05
        %v8369 = vadd.f32 %v8353, 1e-05
        %v8370 = vrsqrt.pop %v8354
        %v8371 = vmul.f32 %v8370, %v8354
        %v8372 = vmul.f32 %v8371, %v8370
        %v8373 = vmul.f32 0.5, %v8372
        %v8374 = vsub.f32 1.5, %v8373
        %v8375 = vmul.f32 %v8370, %v8374
        %vm8376 = vweird.f32 %v8354
        %vm8377 = vweird.f32 %v8370
        %vm8378 = vmor %vm8376, %vm8377
        %v8379 = vsel %vm8378, %v8370, %v8375
        %v8380 = vrsqrt.pop %v8355
        %v8381 = vmul.f32 %v8380, %v8355
        %v8382 = vmul.f32 %v8381, %v8380
        %v8383 = vmul.f32 0.5, %v8382
        %v8384 = vsub.f32 1.5, %v8383
        %v8385 = vmul.f32 %v8380, %v8384
        %vm8386 = vweird.f32 %v8355
        %vm8387 = vweird.f32 %v8380
        %vm8388 = vmor %vm8386, %vm8387
        %v8389 = vsel %vm8388, %v8380, %v8385
        %v8390 = vrsqrt.pop %v8356
        %v8391 = vmul.f32 %v8390, %v8356
        %v8392 = vmul.f32 %v8391, %v8390
        %v8393 = vmul.f32 0.5, %v8392
        %v8394 = vsub.f32 1.5, %v8393
        %v8395 = vmul.f32 %v8390, %v8394
        %vm8396 = vweird.f32 %v8356
        %vm8397 = vweird.f32 %v8390
        %vm8398 = vmor %vm8396, %vm8397
        %v8399 = vsel %vm8398, %v8390, %v8395
        %v8400 = vrsqrt.pop %v8357
        %v8401 = vmul.f32 %v8400, %v8357
        %v8402 = vmul.f32 %v8401, %v8400
        %v8403 = vmul.f32 0.5, %v8402
        %v8404 = vsub.f32 1.5, %v8403
        %v8405 = vmul.f32 %v8400, %v8404
        %vm8406 = vweird.f32 %v8357
        %vm8407 = vweird.f32 %v8400
        %vm8408 = vmor %vm8406, %vm8407
        %v8409 = vsel %vm8408, %v8400, %v8405
        %v8410 = vrsqrt.pop %v8358
        %v8411 = vmul.f32 %v8410, %v8358
        %v8412 = vmul.f32 %v8411, %v8410
        %v8413 = vmul.f32 0.5, %v8412
        %v8414 = vsub.f32 1.5, %v8413
        %v8415 = vmul.f32 %v8410, %v8414
        %vm8416 = vweird.f32 %v8358
        %vm8417 = vweird.f32 %v8410
        %vm8418 = vmor %vm8416, %vm8417
        %v8419 = vsel %vm8418, %v8410, %v8415
        %v8420 = vrsqrt.pop %v8359
        %v8421 = vmul.f32 %v8420, %v8359
        %v8422 = vmul.f32 %v8421, %v8420
        %v8423 = vmul.f32 0.5, %v8422
        %v8424 = vsub.f32 1.5, %v8423
        %v8425 = vmul.f32 %v8420, %v8424
        %vm8426 = vweird.f32 %v8359
        %vm8427 = vweird.f32 %v8420
        %vm8428 = vmor %vm8426, %vm8427
        %v8429 = vsel %vm8428, %v8420, %v8425
        %v8430 = vrsqrt.pop %v8360
        %v8431 = vmul.f32 %v8430, %v8360
        %v8432 = vmul.f32 %v8431, %v8430
        %v8433 = vmul.f32 0.5, %v8432
        %v8434 = vsub.f32 1.5, %v8433
        %v8435 = vmul.f32 %v8430, %v8434
        %vm8436 = vweird.f32 %v8360
        %vm8437 = vweird.f32 %v8430
        %vm8438 = vmor %vm8436, %vm8437
        %v8439 = vsel %vm8438, %v8430, %v8435
        %v8440 = vrsqrt.pop %v8361
        %v8441 = vmul.f32 %v8440, %v8361
        %v8442 = vmul.f32 %v8441, %v8440
        %v8443 = vmul.f32 0.5, %v8442
        %v8444 = vsub.f32 1.5, %v8443
        %v8445 = vmul.f32 %v8440, %v8444
        %vm8446 = vweird.f32 %v8361
        %vm8447 = vweird.f32 %v8440
        %vm8448 = vmor %vm8446, %vm8447
        %v8449 = vsel %vm8448, %v8440, %v8445
        %v8450 = vrsqrt.pop %v8362
        %v8451 = vmul.f32 %v8450, %v8362
        %v8452 = vmul.f32 %v8451, %v8450
        %v8453 = vmul.f32 0.5, %v8452
        %v8454 = vsub.f32 1.5, %v8453
        %v8455 = vmul.f32 %v8450, %v8454
        %vm8456 = vweird.f32 %v8362
        %vm8457 = vweird.f32 %v8450
        %vm8458 = vmor %vm8456, %vm8457
        %v8459 = vsel %vm8458, %v8450, %v8455
        %v8460 = vrsqrt.pop %v8363
        %v8461 = vmul.f32 %v8460, %v8363
        %v8462 = vmul.f32 %v8461, %v8460
        %v8463 = vmul.f32 0.5, %v8462
        %v8464 = vsub.f32 1.5, %v8463
        %v8465 = vmul.f32 %v8460, %v8464
        %vm8466 = vweird.f32 %v8363
        %vm8467 = vweird.f32 %v8460
        %vm8468 = vmor %vm8466, %vm8467
        %v8469 = vsel %vm8468, %v8460, %v8465
        %v8470 = vrsqrt.pop %v8364
        %v8471 = vmul.f32 %v8470, %v8364
        %v8472 = vmul.f32 %v8471, %v8470
        %v8473 = vmul.f32 0.5, %v8472
        %v8474 = vsub.f32 1.5, %v8473
        %v8475 = vmul.f32 %v8470, %v8474
        %vm8476 = vweird.f32 %v8364
        %vm8477 = vweird.f32 %v8470
        %vm8478 = vmor %vm8476, %vm8477
        %v8479 = vsel %vm8478, %v8470, %v8475
        %v8480 = vrsqrt.pop %v8365
        %v8481 = vmul.f32 %v8480, %v8365
        %v8482 = vmul.f32 %v8481, %v8480
        %v8483 = vmul.f32 0.5, %v8482
        %v8484 = vsub.f32 1.5, %v8483
        %v8485 = vmul.f32 %v8480, %v8484
        %vm8486 = vweird.f32 %v8365
        %vm8487 = vweird.f32 %v8480
        %vm8488 = vmor %vm8486, %vm8487
        %v8489 = vsel %vm8488, %v8480, %v8485
        %v8490 = vrsqrt.pop %v8366
        %v8491 = vmul.f32 %v8490, %v8366
        %v8492 = vmul.f32 %v8491, %v8490
        %v8493 = vmul.f32 0.5, %v8492
        %v8494 = vsub.f32 1.5, %v8493
        %v8495 = vmul.f32 %v8490, %v8494
        %vm8496 = vweird.f32 %v8366
        %vm8497 = vweird.f32 %v8490
        %vm8498 = vmor %vm8496, %vm8497
        %v8499 = vsel %vm8498, %v8490, %v8495
        %v8500 = vrsqrt.pop %v8367
        %v8501 = vmul.f32 %v8500, %v8367
        %v8502 = vmul.f32 %v8501, %v8500
        %v8503 = vmul.f32 0.5, %v8502
        %v8504 = vsub.f32 1.5, %v8503
        %v8505 = vmul.f32 %v8500, %v8504
        %vm8506 = vweird.f32 %v8367
        %vm8507 = vweird.f32 %v8500
        %vm8508 = vmor %vm8506, %vm8507
        %v8509 = vsel %vm8508, %v8500, %v8505
        %v8510 = vrsqrt.pop %v8368
        %v8511 = vmul.f32 %v8510, %v8368
        %v8512 = vmul.f32 %v8511, %v8510
        %v8513 = vmul.f32 0.5, %v8512
        %v8514 = vsub.f32 1.5, %v8513
        %v8515 = vmul.f32 %v8510, %v8514
        %vm8516 = vweird.f32 %v8368
        %vm8517 = vweird.f32 %v8510
        %vm8518 = vmor %vm8516, %vm8517
        %v8519 = vsel %vm8518, %v8510, %v8515
        %v8520 = vrsqrt.pop %v8369
        %v8521 = vmul.f32 %v8520, %v8369
        %v8522 = vmul.f32 %v8521, %v8520
        %v8523 = vmul.f32 0.5, %v8522
        %v8524 = vsub.f32 1.5, %v8523
        %v8525 = vmul.f32 %v8520, %v8524
        %vm8526 = vweird.f32 %v8369
        %vm8527 = vweird.f32 %v8520
        %vm8528 = vmor %vm8526, %vm8527
        %v8529 = vsel %vm8528, %v8520, %v8525
        %v8530 = vmul.f32 %v8226, %v8379
        %v8531 = vmul.f32 %v8227, %v8379
        %v8532 = vmul.f32 %v8228, %v8389
        %v8533 = vmul.f32 %v8229, %v8389
        %v8534 = vmul.f32 %v8230, %v8399
        %v8535 = vmul.f32 %v8231, %v8399
        %v8536 = vmul.f32 %v8232, %v8409
        %v8537 = vmul.f32 %v8233, %v8409
        %v8538 = vmul.f32 %v8234, %v8419
        %v8539 = vmul.f32 %v8235, %v8419
        %v8540 = vmul.f32 %v8236, %v8429
        %v8541 = vmul.f32 %v8237, %v8429
        %v8542 = vmul.f32 %v8238, %v8439
        %v8543 = vmul.f32 %v8239, %v8439
        %v8544 = vmul.f32 %v8240, %v8449
        %v8545 = vmul.f32 %v8241, %v8449
        %v8546 = vmul.f32 %v8242, %v8459
        %v8547 = vmul.f32 %v8243, %v8459
        %v8548 = vmul.f32 %v8244, %v8469
        %v8549 = vmul.f32 %v8245, %v8469
        %v8550 = vmul.f32 %v8246, %v8479
        %v8551 = vmul.f32 %v8247, %v8479
        %v8552 = vmul.f32 %v8248, %v8489
        %v8553 = vmul.f32 %v8249, %v8489
        %v8554 = vmul.f32 %v8250, %v8499
        %v8555 = vmul.f32 %v8251, %v8499
        %v8556 = vmul.f32 %v8252, %v8509
        %v8557 = vmul.f32 %v8253, %v8509
        %v8558 = vmul.f32 %v8254, %v8519
        %v8559 = vmul.f32 %v8255, %v8519
        %v8560 = vmul.f32 %v8256, %v8529
        %v8561 = vmul.f32 %v8257, %v8529
        %v8563 = vperm.slane %v8159, 0
        %v8564 = vperm.slane %v8159, 1
        %v8567 = vmul.f32 %v8530, %v8563
        %v8568 = vmul.f32 %v8531, %v8564
        %v8569 = vmul.f32 %v8532, %v8563
        %v8570 = vmul.f32 %v8533, %v8564
        %v8571 = vmul.f32 %v8534, %v8563
        %v8572 = vmul.f32 %v8535, %v8564
        %v8573 = vmul.f32 %v8536, %v8563
        %v8574 = vmul.f32 %v8537, %v8564
        %v8575 = vmul.f32 %v8538, %v8563
        %v8576 = vmul.f32 %v8539, %v8564
        %v8577 = vmul.f32 %v8540, %v8563
        %v8578 = vmul.f32 %v8541, %v8564
        %v8579 = vmul.f32 %v8542, %v8563
        %v8580 = vmul.f32 %v8543, %v8564
        %v8581 = vmul.f32 %v8544, %v8563
        %v8582 = vmul.f32 %v8545, %v8564
        %v8583 = vmul.f32 %v8546, %v8563
        %v8584 = vmul.f32 %v8547, %v8564
        %v8585 = vmul.f32 %v8548, %v8563
        %v8586 = vmul.f32 %v8549, %v8564
        %v8587 = vmul.f32 %v8550, %v8563
        %v8588 = vmul.f32 %v8551, %v8564
        %v8589 = vmul.f32 %v8552, %v8563
        %v8590 = vmul.f32 %v8553, %v8564
        %v8591 = vmul.f32 %v8554, %v8563
        %v8592 = vmul.f32 %v8555, %v8564
        %v8593 = vmul.f32 %v8556, %v8563
        %v8594 = vmul.f32 %v8557, %v8564
        %v8595 = vmul.f32 %v8558, %v8563
        %v8596 = vmul.f32 %v8559, %v8564
        %v8597 = vmul.f32 %v8560, %v8563
        %v8598 = vmul.f32 %v8561, %v8564
        %v8600 = vperm.slane %v8161, 0
        %v8601 = vperm.slane %v8161, 1
        %v8604 = vadd.f32 %v8567, %v8600
        %v8605 = vadd.f32 %v8568, %v8601
        %v8606 = vadd.f32 %v8569, %v8600
        %v8607 = vadd.f32 %v8570, %v8601
        %v8608 = vadd.f32 %v8571, %v8600
        %v8609 = vadd.f32 %v8572, %v8601
        %v8610 = vadd.f32 %v8573, %v8600
        %v8611 = vadd.f32 %v8574, %v8601
        %v8612 = vadd.f32 %v8575, %v8600
        %v8613 = vadd.f32 %v8576, %v8601
        %v8614 = vadd.f32 %v8577, %v8600
        %v8615 = vadd.f32 %v8578, %v8601
        %v8616 = vadd.f32 %v8579, %v8600
        %v8617 = vadd.f32 %v8580, %v8601
        %v8618 = vadd.f32 %v8581, %v8600
        %v8619 = vadd.f32 %v8582, %v8601
        %v8620 = vadd.f32 %v8583, %v8600
        %v8621 = vadd.f32 %v8584, %v8601
        %v8622 = vadd.f32 %v8585, %v8600
        %v8623 = vadd.f32 %v8586, %v8601
        %v8624 = vadd.f32 %v8587, %v8600
        %v8625 = vadd.f32 %v8588, %v8601
        %v8626 = vadd.f32 %v8589, %v8600
        %v8627 = vadd.f32 %v8590, %v8601
        %v8628 = vadd.f32 %v8591, %v8600
        %v8629 = vadd.f32 %v8592, %v8601
        %v8630 = vadd.f32 %v8593, %v8600
        %v8631 = vadd.f32 %v8594, %v8601
        %v8632 = vadd.f32 %v8595, %v8600
        %v8633 = vadd.f32 %v8596, %v8601
        %v8634 = vadd.f32 %v8597, %v8600
        %v8635 = vadd.f32 %v8598, %v8601
        %v8636 = vpack.c.bf16 %v8605, %v8604
        %v8637 = vpack.c.bf16 %v8607, %v8606
        %v8638 = vpack.c.bf16 %v8609, %v8608
        %v8639 = vpack.c.bf16 %v8611, %v8610
        %v8640 = vpack.c.bf16 %v8613, %v8612
        %v8641 = vpack.c.bf16 %v8615, %v8614
        %v8642 = vpack.c.bf16 %v8617, %v8616
        %v8643 = vpack.c.bf16 %v8619, %v8618
        %v8644 = vpack.c.bf16 %v8621, %v8620
        %v8645 = vpack.c.bf16 %v8623, %v8622
        %v8646 = vpack.c.bf16 %v8625, %v8624
        %v8647 = vpack.c.bf16 %v8627, %v8626
        %v8648 = vpack.c.bf16 %v8629, %v8628
        %v8649 = vpack.c.bf16 %v8631, %v8630
        %v8650 = vpack.c.bf16 %v8633, %v8632
        %v8651 = vpack.c.bf16 %v8635, %v8634
        %8652 = vst [vmem:[%s711] sm:$0xff] %v8636
        %8653 = vst [vmem:[%s711 + $0x8] sm:$0xff] %v8637
        %8654 = vst [vmem:[%s711 + $0x10] sm:$0xff] %v8638
        %8655 = vst [vmem:[%s711 + $0x18] sm:$0xff] %v8639
        %8656 = vst [vmem:[%s711 + $0x20] sm:$0xff] %v8640
        %8657 = vst [vmem:[%s711 + $0x28] sm:$0xff] %v8641
        %8658 = vst [vmem:[%s711 + $0x30] sm:$0xff] %v8642
        %8659 = vst [vmem:[%s711 + $0x38] sm:$0xff] %v8643
        %8660 = vst [vmem:[%s711 + $0x40] sm:$0xff] %v8644
        %8661 = vst [vmem:[%s711 + $0x48] sm:$0xff] %v8645
        %8662 = vst [vmem:[%s711 + $0x50] sm:$0xff] %v8646
        %8663 = vst [vmem:[%s711 + $0x58] sm:$0xff] %v8647
        %8664 = vst [vmem:[%s711 + $0x60] sm:$0xff] %v8648
        %8665 = vst [vmem:[%s711 + $0x68] sm:$0xff] %v8649
        %8666 = vst [vmem:[%s711 + $0x70] sm:$0xff] %v8650
        %8667 = vst [vmem:[%s711 + $0x78] sm:$0xff] %v8651
        %s8668 = sand.u32 %s361, 1
        %s8669 = scalar_lea.sflag [#allocation4], %s8668
        %s8670 = sand.u32 %s361, 1
        %s8671 = smul.addr %s8670, 128
        %s8672 = scalar_lea.vmem [#allocation22], %s8671
        // Predicated region
        $region125: #{tpu_custom_call.1} parent=75 // pred_check
          %p8673 = pneg %p371
        $region126: #{tpu_custom_call.1} parent=75 // pred_check_branch
          %8675 = sbr.rel (%p8673) target = $region128
        $region127: #{tpu_custom_call.1} parent=75 // pred_region
          %8677 = vsyncadd %s8669, 0
          %s8678 = smul.addr %s39, 32
          %s8679 = smul.addr %s8678, 4
          %s8680 = scalar_lea.hbm %s14, %s8679
          %s8681 = sshll.u32 %s8672, 4
          %s8682 = int_to_ptr.vmem [resolvable:$true] %s8681
          %s8683 = sshll.u32 %s8680, 4
          %s8684 = int_to_ptr.hbm [resolvable:$true] %s8683
          %8689 = dma.vmem_to_hbm [thread:$0]  %s8682, 2048, %s8684, %s8669, 128, 128, 8
        $region128: #{tpu_custom_call.1} parent=75 // pred_fallthru
          _
      $region76: #{tpu_custom_call.1} parent=5 // pred_fallthru
        _
      %p8690 = scmp.le.s32.totalorder 2, %s34
      // Predicated region
      $region129: #{tpu_custom_call.1} parent=5 // pred_check
        %p8691 = pneg %p8690
      $region130: #{tpu_custom_call.1} parent=5 // pred_check_branch
        %8693 = sbr.rel (%p8691) target = $region132
      $region131: #{tpu_custom_call.1} parent=5 // pred_region
        %s8694 = ssub.s32 %s34, 2
        // Predicated region
        $region133: #{tpu_custom_call.1} parent=131 // pred_check
          %p8695 = pneg %p377
        $region134: #{tpu_custom_call.1} parent=131 // pred_check_branch
          %8697 = sbr.rel (%p8695) target = $region136
        $region135: #{tpu_custom_call.1} parent=131 // pred_region
          %s8698 = sand.u32 %s362, 1
          %s8699 = scalar_lea.sflag [#allocation4], %s8698
          %s8700 = sand.u32 %s362, 1
          %s8701 = smul.addr %s8700, 128
          %s8702 = scalar_lea.vmem [#allocation22], %s8701
          %8704 = dma.done %s8699, 2048
        $region136: #{tpu_custom_call.1} parent=131 // pred_fallthru
          _
      $region132: #{tpu_custom_call.1} parent=5 // pred_fallthru
        _
    $region6: #{tpu_custom_call.1} parent=1 // loop_footer
      %s38 = sadd.s32 1, %s34
    $region7: #{tpu_custom_call.1} parent=1 // loop_footer_branch
      %33 = sbr.rel target = $region3
    $region8: #{tpu_custom_call.1} parent=1 // loop_exit
      _
    %8705 = vsyncpa [#allocation3], 1
    %s8706 = scalar_lea.sflag [#allocation3], 1
    %8707 = vsyncpa %s8706, 1
    %8708 = vsyncpa [#allocation6], 1
    %s8709 = scalar_lea.sflag [#allocation6], 1
    %8710 = vsyncpa %s8709, 1
    %8711 = vsyncpa [#allocation9], 1
    %8712 = vsyncpa [#allocation12], 1
    %8713 = vsyncpa [#allocation15], 1
    %8714 = vsyncpa [#allocation18], 1
    %8715 = vsyncpa [#allocation21], 1
    %8716 = vsyncpa [#allocation4], 1
    %s8717 = scalar_lea.sflag [#allocation4], 1
    %8718 = vsyncpa %s8717, 1

</llo_original>
